<compile_context>
chip_gen: v6e
topology: v6e:2x2x1
jax: 0.10.0
libtpu: 0.0.40
codegen_flags: <defaults>
</compile_context>

<pallas_src>
import functools

import jax
import jax.numpy as jnp
from jax.experimental import pallas as pl
from jax.experimental.pallas import tpu as pltpu

EPS = 1e-5
NEG_INF = -1e30


# ----------------------------- in-kernel math helpers ------------------------------

def _gelu(x):
    # TODO(synk): tanh-approx GELU assumed; PyTorch default nn.GELU is exact erf.
    return 0.5 * x * (1.0 + jnp.tanh(jnp.sqrt(2.0 / jnp.pi) * (x + 0.044715 * x * x * x)))


def _layernorm(x, scale, shift):
    mean = jnp.mean(x, axis=-1, keepdims=True)
    var = jnp.mean(jnp.square(x - mean), axis=-1, keepdims=True)
    return (x - mean) * jax.lax.rsqrt(var + EPS) * scale + shift


def _bdot(a, w_bf16):
    # bf16 operands, f32 accumulation on the MXU.
    return jnp.dot(a.astype(jnp.bfloat16), w_bf16, preferred_element_type=jnp.float32)


def _mha_block(xf, wq, wk, wv, bq, bk, bv, wo_h, bo, *, batch, seq, num_heads, causal_neg):
    """Causal multi-head self-attention on flattened (batch*seq, D) activations.

    wq/wk/wv: (D, D) bf16, biases (1, D) f32, wo_h: (H, dh, D) bf16, bo (1, D) f32.
    TODO(synk): config.attention source not provided; assumed standard causal MHA
    (fused QKV linear, scaled dot-product w/ causal mask, output proj, no dropout).
    TODO(synk): for non-toy seq lengths convert to a flash-style KV-block loop.
    """
    M, D = xf.shape
    dh = D // num_heads
    xb = xf.astype(jnp.bfloat16)
    q = jnp.dot(xb, wq, preferred_element_type=jnp.float32) + bq
    k = jnp.dot(xb, wk, preferred_element_type=jnp.float32) + bk
    v = jnp.dot(xb, wv, preferred_element_type=jnp.float32) + bv
    q3 = q.reshape(batch, seq, D)
    k3 = k.reshape(batch, seq, D)
    v3 = v.reshape(batch, seq, D)
    scale = 1.0 / jnp.sqrt(jnp.float32(dh))

    rows = []
    for b in range(batch):
        qb, kb, vb = q3[b], k3[b], v3[b]
        acc = None
        for h in range(num_heads):
            sl = slice(h * dh, (h + 1) * dh)
            qh = qb[:, sl].astype(jnp.bfloat16)
            kh = kb[:, sl].astype(jnp.bfloat16)
            vh = vb[:, sl].astype(jnp.bfloat16)
            s = jnp.dot(qh, kh.T, preferred_element_type=jnp.float32) * scale
            s = s + causal_neg                       # additive causal mask (0 / -1e30)
            s = s - jnp.max(s, axis=-1, keepdims=True)
            e = jnp.exp(s)
            p = e * pl.reciprocal(jnp.sum(e, axis=-1, keepdims=True), approx=True)
            oh = jnp.dot(p.astype(jnp.bfloat16), vh, preferred_element_type=jnp.float32)
            # accumulate through per-head rows of the output projection (no lane concat)
            contrib = jnp.dot(oh.astype(jnp.bfloat16), wo_h[h],
                              preferred_element_type=jnp.float32)
            acc = contrib if acc is None else acc + contrib
        rows.append(acc)
    attn = rows[0] if batch == 1 else jnp.concatenate(rows, axis=0)
    return attn + bo


# ------------------------------------ kernel ---------------------------------------

def vf_block_kernel(x_ref,
                    n1_s, n1_b,
                    a1_wq, a1_wk, a1_wv, a1_bq, a1_bk, a1_bv, a1_wo, a1_bo,
                    a2_wq, a2_wk, a2_wv, a2_bq, a2_bk, a2_bv, a2_wo, a2_bo,
                    av_wq, av_wk, av_wv, av_bq, av_bk, av_bv, av_wo, av_bo,
                    sub_w, sub_b, vrb_w, vrb_b, obj_w, obj_b,
                    emb_w0, emb_w1, emb_w2, emb_b,
                    n2_s, n2_b,
                    mlp_w1, mlp_b1, mlp_w2, mlp_b2,
                    out_ref, *, num_heads):
    Bb, T, D = x_ref.shape
    x = x_ref[...]
    xf = x.reshape(Bb * T, D)                      # flatten: wide matmuls for all linears
    shortcut = xf

    # causal additive mask, built once and shared by the three attentions
    row = jax.lax.broadcasted_iota(jnp.int32, (T, T), 0)
    col = jax.lax.broadcasted_iota(jnp.int32, (T, T), 1)
    causal_neg = jnp.where(row >= col, 0.0, NEG_INF).astype(jnp.float32)

    # front_norm = True
    xn = _layernorm(xf, n1_s[...], n1_b[...])

    def attn(xin, wq, wk, wv, bq, bk, bv, wo, bo):
        return _mha_block(xin, wq[...], wk[...], wv[...], bq[...], bk[...], bv[...],
                          wo[...], bo[...], batch=Bb, seq=T, num_heads=num_heads,
                          causal_neg=causal_neg)

    # attention_window == 0 branch
    n1 = attn(xn, a1_wq, a1_wk, a1_wv, a1_bq, a1_bk, a1_bv, a1_wo, a1_bo)
    n2 = attn(n1, a2_wq, a2_wk, a2_wv, a2_bq, a2_bk, a2_bv, a2_wo, a2_bo)
    v = attn(n2, av_wq, av_wk, av_wv, av_bq, av_bk, av_bv, av_wo, av_bo)

    # subject / verb / object projections  (Linear + GELU)
    s_feat = _gelu(_bdot(n1, sub_w[...]) + sub_b[...])
    v_feat = _gelu(_bdot(v, vrb_w[...]) + vrb_b[...])
    o_feat = _gelu(_bdot(n2, obj_w[...]) + obj_b[...])

    # embed_after on cat([s,v,o]) / cat([o,v,s]) decomposed into slice-matmuls.
    # Weights are pre-split host-side and the dead (D+1)-th output column is dropped,
    # so svo/ovs are already the D-wide [:, :-1] slices and the selector is column D-1.
    w0, w1, w2, eb = emb_w0[...], emb_w1[...], emb_w2[...], emb_b[...]
    vmid = _bdot(v_feat, w1)                       # shared term: computed once, reused
    svo = _gelu(_bdot(s_feat, w0) + vmid + _bdot(o_feat, w2) + eb)
    ovs = _gelu(_bdot(o_feat, w0) + vmid + _bdot(s_feat, w2) + eb)
    svo_sel = svo[:, D - 1:D]
    ovs_sel = ovs[:, D - 1:D]

    x_attn = xn + svo_sel * svo + ovs_sel * ovs

    # forward_after_attn (dropout = identity in eval)
    x2 = x_attn + shortcut
    shortcut2 = x2
    xn2 = _layernorm(x2, n2_s[...], n2_b[...])
    h = _gelu(_bdot(xn2, mlp_w1[...]) + mlp_b1[...])
    h = _bdot(h, mlp_w2[...]) + mlp_b2[...]
    out = h + shortcut2
    out_ref[...] = out.reshape(Bb, T, D).astype(out_ref.dtype)


# ------------------------------------ wrapper ---------------------------------------

def _prepare_operands(params, *, num_heads, ff_dim, embed_dim):
    """Pre-split / pre-cast all weights host-side so no in-kernel weight slicing."""
    D, F, H = embed_dim, ff_dim, num_heads
    dh = D // H
    bf = jnp.bfloat16
    f32 = jnp.float32
    ops = [params['n1_s'].astype(f32), params['n1_b'].astype(f32)]
    for name in ('a1', 'a2', 'av'):
        wqkv = params[f'{name}_wqkv']
        bqkv = params[f'{name}_bqkv']
        wo = params[f'{name}_wo']
        bo = params[f'{name}_bo']
        ops += [wqkv[:, :D].astype(bf), wqkv[:, D:2 * D].astype(bf), wqkv[:, 2 * D:].astype(bf),
                bqkv[:, :D].astype(f32), bqkv[:, D:2 * D].astype(f32), bqkv[:, 2 * D:].astype(f32),
                wo.reshape(H, dh, D).astype(bf), bo.astype(f32)]
    for name in ('sub', 'vrb', 'obj'):
        ops += [params[f'{name}_w'].astype(bf), params[f'{name}_b'].astype(f32)]
    emb_w, emb_b = params['emb_w'], params['emb_b']
    # drop the (D+1)-th output column: it is sliced away and never used by the module
    ops += [emb_w[:F, :D].astype(bf), emb_w[F:2 * F, :D].astype(bf), emb_w[2 * F:, :D].astype(bf),
            emb_b[:, :D].astype(f32)]
    ops += [params['n2_s'].astype(f32), params['n2_b'].astype(f32)]
    ops += [params['mlp_w1'].astype(bf), params['mlp_b1'].astype(f32),
            params['mlp_w2'].astype(bf), params['mlp_b2'].astype(f32)]
    return ops


def _pick_batch_block(B, T, target_rows=256):
    """Largest batch block with Bb*T <= target_rows, keeping >= 2 grid steps when possible."""
    divisors = [d for d in range(1, B + 1) if B % d == 0]
    cands = [d for d in divisors if d * T <= target_rows] or [1]
    bb = max(cands)
    if bb == B and B > 1:                 # keep the parallel axis shardable (megacore / 2 TCs)
        smaller = [d for d in divisors if d < B]
        bb = max(smaller) if smaller else B
    return bb


def vf_transformer_block(x, params, *, num_heads, ff_dim, batch_block=None):
    B, T, D = x.shape
    Bb = batch_block or _pick_batch_block(B, T)
    assert B % Bb == 0
    ops = _prepare_operands(params, num_heads=num_heads, ff_dim=ff_dim, embed_dim=D)

    def full_spec(a):
        nd = a.ndim
        return pl.BlockSpec(a.shape, lambda b, _nd=nd: (0,) * _nd)

    in_specs = [pl.BlockSpec((Bb, T, D), lambda b: (b, 0, 0))] + [full_spec(o) for o in ops]
    out_spec = pl.BlockSpec((Bb, T, D), lambda b: (b, 0, 0))

    # explicit VMEM budget: double-buffered weights + generous activation slack
    # TODO(synk): at large D on v7x (64 MiB VMEM) stream mlp_w*/wq/wk/wv from HBM instead.
    weight_bytes = sum(o.size * o.dtype.itemsize for o in ops)
    block_bytes = Bb * T * D * 4
    vmem_limit = int(min(max(2 * weight_bytes + 64 * block_bytes + (2 << 20), 32 << 20), 64 << 20))

    kernel = functools.partial(vf_block_kernel, num_heads=num_heads)
    return pl.pallas_call(
        kernel,
        out_shape=jax.ShapeDtypeStruct((B, T, D), x.dtype),
        grid=(B // Bb,),
        in_specs=in_specs,
        out_specs=out_spec,
        compiler_params=pltpu.CompilerParams(
            dimension_semantics=("parallel",),
            vmem_limit_bytes=vmem_limit),
    )(x, *ops)


# ------------------------------- params & reference ---------------------------------

def init_params(key, D, F):
    keys = iter(jax.random.split(key, 64))

    def lin(in_d, out_d):
        w = jax.random.normal(next(keys), (in_d, out_d), jnp.float32) * 0.02
        b = jax.random.normal(next(keys), (1, out_d), jnp.float32) * 0.02
        return w, b

    p = {'n1_s': jnp.ones((1, D), jnp.float32), 'n1_b': jnp.zeros((1, D), jnp.float32)}
    for name in ('a1', 'a2', 'av'):
        wqkv, bqkv = lin(D, 3 * D)
        wo, bo = lin(D, D)
        p[f'{name}_wqkv'], p[f'{name}_bqkv'] = wqkv, bqkv
        p[f'{name}_wo'], p[f'{name}_bo'] = wo, bo
    for name in ('sub', 'vrb', 'obj'):
        w, b = lin(D, F)
        p[f'{name}_w'], p[f'{name}_b'] = w, b
    p['emb_w'], p['emb_b'] = lin(3 * F, D + 1)
    p['n2_s'] = jnp.ones((1, D), jnp.float32)
    p['n2_b'] = jnp.zeros((1, D), jnp.float32)
    p['mlp_w1'], p['mlp_b1'] = lin(D, 4 * D)
    p['mlp_w2'], p['mlp_b2'] = lin(4 * D, D)
    return p


def _ref_layernorm(x, scale, shift):
    mean = jnp.mean(x, axis=-1, keepdims=True)
    var = jnp.mean((x - mean) ** 2, axis=-1, keepdims=True)
    return (x - mean) / jnp.sqrt(var + EPS) * scale + shift


def _ref_mha(x, wqkv, bqkv, wo, bo, num_heads):
    T, D = x.shape
    dh = D // num_heads
    qkv = jnp.dot(x, wqkv) + bqkv
    q, k, v = qkv[:, :D], qkv[:, D:2 * D], qkv[:, 2 * D:]
    row = jax.lax.broadcasted_iota(jnp.int32, (T, T), 0)
    col = jax.lax.broadcasted_iota(jnp.int32, (T, T), 1)
    causal = row >= col
    scale = 1.0 / jnp.sqrt(jnp.float32(dh))
    outs = []
    for h in range(num_heads):
        qh = q[:, h * dh:(h + 1) * dh]
        kh = k[:, h * dh:(h + 1) * dh]
        vh = v[:, h * dh:(h + 1) * dh]
        s = jnp.dot(qh, kh.T) * scale
        s = jnp.where(causal, s, -jnp.inf)
        s = s - jnp.max(s, axis=-1, keepdims=True)
        p = jnp.exp(s)
        p = p / jnp.sum(p, axis=-1, keepdims=True)
        outs.append(jnp.dot(p, vh))
    o = jnp.concatenate(outs, axis=-1)
    return jnp.dot(o, wo) + bo


def reference_block(x, p, *, num_heads, ff_dim):
    # pure-JAX f32 reference mirroring the PyTorch forward, vmapped over batch
    def one(xb):
        shortcut = xb
        xn = _ref_layernorm(xb, p['n1_s'], p['n1_b'])
        n1 = _ref_mha(xn, p['a1_wqkv'], p['a1_bqkv'], p['a1_wo'], p['a1_bo'], num_heads)
        n2 = _ref_mha(n1, p['a2_wqkv'], p['a2_bqkv'], p['a2_wo'], p['a2_bo'], num_heads)
        v = _ref_mha(n2, p['av_wqkv'], p['av_bqkv'], p['av_wo'], p['av_bo'], num_heads)
        s = _gelu(jnp.dot(n1, p['sub_w']) + p['sub_b'])
        vb = _gelu(jnp.dot(v, p['vrb_w']) + p['vrb_b'])
        ob = _gelu(jnp.dot(n2, p['obj_w']) + p['obj_b'])
        svo = _gelu(jnp.dot(jnp.concatenate([s, vb, ob], -1), p['emb_w']) + p['emb_b'])
        ovs = _gelu(jnp.dot(jnp.concatenate([ob, vb, s], -1), p['emb_w']) + p['emb_b'])
        svo = svo[:, :-1]
        svo_sel = svo[:, -1:]
        ovs = ovs[:, :-1]
        ovs_sel = ovs[:, -1:]
        xa = xn + svo_sel * svo + ovs_sel * ovs
        x2 = xa + shortcut
        sc2 = x2
        xn2 = _ref_layernorm(x2, p['n2_s'], p['n2_b'])
        h = _gelu(jnp.dot(xn2, p['mlp_w1']) + p['mlp_b1'])
        h = jnp.dot(h, p['mlp_w2']) + p['mlp_b2']
        return h + sc2

    return jax.vmap(one)(x)


# -------------------------------------- main -----------------------------------------

if __name__ == "__main__":
    B, T, D = 2, 8, 32          # batch, seq, embed_dim
    NUM_HEADS = 4
    FF_DIM = 32                 # config.embed_dim_ff_dim

    key = jax.random.PRNGKey(0)
    kx, kp = jax.random.split(key)
    x = jax.random.normal(kx, (B, T, D), jnp.float32)
    params = init_params(kp, D, FF_DIM)

    out = vf_transformer_block(x, params, num_heads=NUM_HEADS, ff_dim=FF_DIM)
    out = jax.block_until_ready(out)

    ref = jax.block_until_ready(reference_block(x, params, num_heads=NUM_HEADS, ff_dim=FF_DIM))
    assert out.shape == (B, T, D)
    err = float(jnp.max(jnp.abs(out - ref)))
    assert err < 2e-2, err      # bf16 MXU operands vs f32 reference

    print("KERNEL_OK")
</pallas_src>

<mosaic_0001>
module attributes {stable_mosaic.version = 11 : i64} {
  func.func @vf_block_kernel(%arg0: i32, %arg1: memref<1x8x32xf32, #tpu.memory_space<vmem>>, %arg2: memref<1x32xf32, #tpu.memory_space<vmem>>, %arg3: memref<1x32xf32, #tpu.memory_space<vmem>>, %arg4: memref<32x32xbf16, #tpu.memory_space<vmem>>, %arg5: memref<32x32xbf16, #tpu.memory_space<vmem>>, %arg6: memref<32x32xbf16, #tpu.memory_space<vmem>>, %arg7: memref<1x32xf32, #tpu.memory_space<vmem>>, %arg8: memref<1x32xf32, #tpu.memory_space<vmem>>, %arg9: memref<1x32xf32, #tpu.memory_space<vmem>>, %arg10: memref<4x8x32xbf16, #tpu.memory_space<vmem>>, %arg11: memref<1x32xf32, #tpu.memory_space<vmem>>, %arg12: memref<32x32xbf16, #tpu.memory_space<vmem>>, %arg13: memref<32x32xbf16, #tpu.memory_space<vmem>>, %arg14: memref<32x32xbf16, #tpu.memory_space<vmem>>, %arg15: memref<1x32xf32, #tpu.memory_space<vmem>>, %arg16: memref<1x32xf32, #tpu.memory_space<vmem>>, %arg17: memref<1x32xf32, #tpu.memory_space<vmem>>, %arg18: memref<4x8x32xbf16, #tpu.memory_space<vmem>>, %arg19: memref<1x32xf32, #tpu.memory_space<vmem>>, %arg20: memref<32x32xbf16, #tpu.memory_space<vmem>>, %arg21: memref<32x32xbf16, #tpu.memory_space<vmem>>, %arg22: memref<32x32xbf16, #tpu.memory_space<vmem>>, %arg23: memref<1x32xf32, #tpu.memory_space<vmem>>, %arg24: memref<1x32xf32, #tpu.memory_space<vmem>>, %arg25: memref<1x32xf32, #tpu.memory_space<vmem>>, %arg26: memref<4x8x32xbf16, #tpu.memory_space<vmem>>, %arg27: memref<1x32xf32, #tpu.memory_space<vmem>>, %arg28: memref<32x32xbf16, #tpu.memory_space<vmem>>, %arg29: memref<1x32xf32, #tpu.memory_space<vmem>>, %arg30: memref<32x32xbf16, #tpu.memory_space<vmem>>, %arg31: memref<1x32xf32, #tpu.memory_space<vmem>>, %arg32: memref<32x32xbf16, #tpu.memory_space<vmem>>, %arg33: memref<1x32xf32, #tpu.memory_space<vmem>>, %arg34: memref<32x32xbf16, #tpu.memory_space<vmem>>, %arg35: memref<32x32xbf16, #tpu.memory_space<vmem>>, %arg36: memref<32x32xbf16, #tpu.memory_space<vmem>>, %arg37: memref<1x32xf32, #tpu.memory_space<vmem>>, %arg38: memref<1x32xf32, #tpu.memory_space<vmem>>, %arg39: memref<1x32xf32, #tpu.memory_space<vmem>>, %arg40: memref<32x128xbf16, #tpu.memory_space<vmem>>, %arg41: memref<1x128xf32, #tpu.memory_space<vmem>>, %arg42: memref<128x32xbf16, #tpu.memory_space<vmem>>, %arg43: memref<1x32xf32, #tpu.memory_space<vmem>>, %arg44: memref<1x8x32xf32, #tpu.memory_space<vmem>>) attributes {dimension_semantics = [#tpu.dimension_semantics<parallel>], iteration_bounds = array<i64: 2>, scalar_prefetch = 0 : i64, scratch_operands = 0 : i64, tpu.core_type = #tpu.core_type<tc>, window_params = [{transform_indices = @transform_0, window_bounds = array<i64: 1, 8, 32>}, {pipeline_mode = #tpu.pipeline_mode<synchronous>, transform_indices = @transform_1, window_bounds = array<i64: 1, 32>}, {pipeline_mode = #tpu.pipeline_mode<synchronous>, transform_indices = @transform_2, window_bounds = array<i64: 1, 32>}, {pipeline_mode = #tpu.pipeline_mode<synchronous>, transform_indices = @transform_3, window_bounds = array<i64: 32, 32>}, {pipeline_mode = #tpu.pipeline_mode<synchronous>, transform_indices = @transform_4, window_bounds = array<i64: 32, 32>}, {pipeline_mode = #tpu.pipeline_mode<synchronous>, transform_indices = @transform_5, window_bounds = array<i64: 32, 32>}, {pipeline_mode = #tpu.pipeline_mode<synchronous>, transform_indices = @transform_6, window_bounds = array<i64: 1, 32>}, {pipeline_mode = #tpu.pipeline_mode<synchronous>, transform_indices = @transform_7, window_bounds = array<i64: 1, 32>}, {pipeline_mode = #tpu.pipeline_mode<synchronous>, transform_indices = @transform_8, window_bounds = array<i64: 1, 32>}, {pipeline_mode = #tpu.pipeline_mode<synchronous>, transform_indices = @transform_9, window_bounds = array<i64: 4, 8, 32>}, {pipeline_mode = #tpu.pipeline_mode<synchronous>, transform_indices = @transform_10, window_bounds = array<i64: 1, 32>}, {pipeline_mode = #tpu.pipeline_mode<synchronous>, transform_indices = @transform_11, window_bounds = array<i64: 32, 32>}, {pipeline_mode = #tpu.pipeline_mode<synchronous>, transform_indices = @transform_12, window_bounds = array<i64: 32, 32>}, {pipeline_mode = #tpu.pipeline_mode<synchronous>, transform_indices = @transform_13, window_bounds = array<i64: 32, 32>}, {pipeline_mode = #tpu.pipeline_mode<synchronous>, transform_indices = @transform_14, window_bounds = array<i64: 1, 32>}, {pipeline_mode = #tpu.pipeline_mode<synchronous>, transform_indices = @transform_15, window_bounds = array<i64: 1, 32>}, {pipeline_mode = #tpu.pipeline_mode<synchronous>, transform_indices = @transform_16, window_bounds = array<i64: 1, 32>}, {pipeline_mode = #tpu.pipeline_mode<synchronous>, transform_indices = @transform_17, window_bounds = array<i64: 4, 8, 32>}, {pipeline_mode = #tpu.pipeline_mode<synchronous>, transform_indices = @transform_18, window_bounds = array<i64: 1, 32>}, {pipeline_mode = #tpu.pipeline_mode<synchronous>, transform_indices = @transform_19, window_bounds = array<i64: 32, 32>}, {pipeline_mode = #tpu.pipeline_mode<synchronous>, transform_indices = @transform_20, window_bounds = array<i64: 32, 32>}, {pipeline_mode = #tpu.pipeline_mode<synchronous>, transform_indices = @transform_21, window_bounds = array<i64: 32, 32>}, {pipeline_mode = #tpu.pipeline_mode<synchronous>, transform_indices = @transform_22, window_bounds = array<i64: 1, 32>}, {pipeline_mode = #tpu.pipeline_mode<synchronous>, transform_indices = @transform_23, window_bounds = array<i64: 1, 32>}, {pipeline_mode = #tpu.pipeline_mode<synchronous>, transform_indices = @transform_24, window_bounds = array<i64: 1, 32>}, {pipeline_mode = #tpu.pipeline_mode<synchronous>, transform_indices = @transform_25, window_bounds = array<i64: 4, 8, 32>}, {pipeline_mode = #tpu.pipeline_mode<synchronous>, transform_indices = @transform_26, window_bounds = array<i64: 1, 32>}, {pipeline_mode = #tpu.pipeline_mode<synchronous>, transform_indices = @transform_27, window_bounds = array<i64: 32, 32>}, {pipeline_mode = #tpu.pipeline_mode<synchronous>, transform_indices = @transform_28, window_bounds = array<i64: 1, 32>}, {pipeline_mode = #tpu.pipeline_mode<synchronous>, transform_indices = @transform_29, window_bounds = array<i64: 32, 32>}, {pipeline_mode = #tpu.pipeline_mode<synchronous>, transform_indices = @transform_30, window_bounds = array<i64: 1, 32>}, {pipeline_mode = #tpu.pipeline_mode<synchronous>, transform_indices = @transform_31, window_bounds = array<i64: 32, 32>}, {pipeline_mode = #tpu.pipeline_mode<synchronous>, transform_indices = @transform_32, window_bounds = array<i64: 1, 32>}, {pipeline_mode = #tpu.pipeline_mode<synchronous>, transform_indices = @transform_33, window_bounds = array<i64: 32, 32>}, {pipeline_mode = #tpu.pipeline_mode<synchronous>, transform_indices = @transform_34, window_bounds = array<i64: 32, 32>}, {pipeline_mode = #tpu.pipeline_mode<synchronous>, transform_indices = @transform_35, window_bounds = array<i64: 32, 32>}, {pipeline_mode = #tpu.pipeline_mode<synchronous>, transform_indices = @transform_36, window_bounds = array<i64: 1, 32>}, {pipeline_mode = #tpu.pipeline_mode<synchronous>, transform_indices = @transform_37, window_bounds = array<i64: 1, 32>}, {pipeline_mode = #tpu.pipeline_mode<synchronous>, transform_indices = @transform_38, window_bounds = array<i64: 1, 32>}, {pipeline_mode = #tpu.pipeline_mode<synchronous>, transform_indices = @transform_39, window_bounds = array<i64: 32, 128>}, {pipeline_mode = #tpu.pipeline_mode<synchronous>, transform_indices = @transform_40, window_bounds = array<i64: 1, 128>}, {pipeline_mode = #tpu.pipeline_mode<synchronous>, transform_indices = @transform_41, window_bounds = array<i64: 128, 32>}, {pipeline_mode = #tpu.pipeline_mode<synchronous>, transform_indices = @transform_42, window_bounds = array<i64: 1, 32>}, {transform_indices = @transform_43, window_bounds = array<i64: 1, 8, 32>}]} {
    %c0 = arith.constant 0 : index
    %c0_0 = arith.constant 0 : index
    %c0_1 = arith.constant 0 : index
    %0 = vector.load %arg1[%c0, %c0_0, %c0_1] : memref<1x8x32xf32, #tpu.memory_space<vmem>>, vector<1x8x32xf32>
    %1 = vector.shape_cast %0 : vector<1x8x32xf32> to vector<8x32xf32>
    %2 = tpu.iota {dimensions = array<i32: 0>} : vector<8x8xi32>
    %3 = tpu.iota {dimensions = array<i32: 1>} : vector<8x8xi32>
    %4 = arith.cmpi sge, %2, %3 : vector<8x8xi32>
    %cst = arith.constant 0.000000e+00 : f32
    %cst_2 = arith.constant -1.000000e+30 : f32
    %5 = vector.broadcast %cst : f32 to vector<8x8xf32>
    %6 = vector.broadcast %cst_2 : f32 to vector<8x8xf32>
    %7 = arith.select %4, %5, %6 : vector<8x8xi1>, vector<8x8xf32>
    %c0_3 = arith.constant 0 : index
    %c0_4 = arith.constant 0 : index
    %8 = vector.load %arg2[%c0_3, %c0_4] : memref<1x32xf32, #tpu.memory_space<vmem>>, vector<1x32xf32>
    %c0_5 = arith.constant 0 : index
    %c0_6 = arith.constant 0 : index
    %9 = vector.load %arg3[%c0_5, %c0_6] : memref<1x32xf32, #tpu.memory_space<vmem>>, vector<1x32xf32>
    %cst_7 = arith.constant dense<0.000000e+00> : vector<8xf32>
    %10 = vector.multi_reduction <add>, %1, %cst_7 [1] : vector<8x32xf32> to vector<8xf32>
    %11 = vector.shape_cast %10 : vector<8xf32> to vector<8x1xf32>
    %cst_8 = arith.constant 3.200000e+01 : f32
    %12 = vector.broadcast %cst_8 : f32 to vector<8x1xf32>
    %13 = arith.divf %11, %12 : vector<8x1xf32>
    %14 = vector.broadcast %13 : vector<8x1xf32> to vector<8x32xf32>
    %15 = arith.subf %1, %14 : vector<8x32xf32>
    %16 = arith.mulf %15, %15 : vector<8x32xf32>
    %cst_9 = arith.constant dense<0.000000e+00> : vector<8xf32>
    %17 = vector.multi_reduction <add>, %16, %cst_9 [1] : vector<8x32xf32> to vector<8xf32>
    %18 = vector.shape_cast %17 : vector<8xf32> to vector<8x1xf32>
    %cst_10 = arith.constant 3.200000e+01 : f32
    %19 = vector.broadcast %cst_10 : f32 to vector<8x1xf32>
    %20 = arith.divf %18, %19 : vector<8x1xf32>
    %21 = vector.broadcast %13 : vector<8x1xf32> to vector<8x32xf32>
    %22 = arith.subf %1, %21 : vector<8x32xf32>
    %cst_11 = arith.constant 9.99999974E-6 : f32
    %23 = vector.broadcast %cst_11 : f32 to vector<8x1xf32>
    %24 = arith.addf %20, %23 : vector<8x1xf32>
    %25 = math.rsqrt %24 : vector<8x1xf32>
    %26 = vector.broadcast %25 : vector<8x1xf32> to vector<8x32xf32>
    %27 = arith.mulf %22, %26 : vector<8x32xf32>
    %28 = vector.broadcast %8 : vector<1x32xf32> to vector<8x32xf32>
    %29 = arith.mulf %27, %28 : vector<8x32xf32>
    %30 = vector.broadcast %9 : vector<1x32xf32> to vector<8x32xf32>
    %31 = arith.addf %29, %30 : vector<8x32xf32>
    %c0_12 = arith.constant 0 : index
    %c0_13 = arith.constant 0 : index
    %32 = vector.load %arg4[%c0_12, %c0_13] : memref<32x32xbf16, #tpu.memory_space<vmem>>, vector<32x32xbf16>
    %c0_14 = arith.constant 0 : index
    %c0_15 = arith.constant 0 : index
    %33 = vector.load %arg5[%c0_14, %c0_15] : memref<32x32xbf16, #tpu.memory_space<vmem>>, vector<32x32xbf16>
    %c0_16 = arith.constant 0 : index
    %c0_17 = arith.constant 0 : index
    %34 = vector.load %arg6[%c0_16, %c0_17] : memref<32x32xbf16, #tpu.memory_space<vmem>>, vector<32x32xbf16>
    %c0_18 = arith.constant 0 : index
    %c0_19 = arith.constant 0 : index
    %35 = vector.load %arg7[%c0_18, %c0_19] : memref<1x32xf32, #tpu.memory_space<vmem>>, vector<1x32xf32>
    %c0_20 = arith.constant 0 : index
    %c0_21 = arith.constant 0 : index
    %36 = vector.load %arg8[%c0_20, %c0_21] : memref<1x32xf32, #tpu.memory_space<vmem>>, vector<1x32xf32>
    %c0_22 = arith.constant 0 : index
    %c0_23 = arith.constant 0 : index
    %37 = vector.load %arg9[%c0_22, %c0_23] : memref<1x32xf32, #tpu.memory_space<vmem>>, vector<1x32xf32>
    %c0_24 = arith.constant 0 : index
    %c0_25 = arith.constant 0 : index
    %c0_26 = arith.constant 0 : index
    %38 = vector.load %arg10[%c0_24, %c0_25, %c0_26] : memref<4x8x32xbf16, #tpu.memory_space<vmem>>, vector<4x8x32xbf16>
    %c0_27 = arith.constant 0 : index
    %c0_28 = arith.constant 0 : index
    %39 = vector.load %arg11[%c0_27, %c0_28] : memref<1x32xf32, #tpu.memory_space<vmem>>, vector<1x32xf32>
    %40 = arith.truncf %31 : vector<8x32xf32> to vector<8x32xbf16>
    %cst_29 = arith.constant dense<0.000000e+00> : vector<8x32xf32>
    %41 = tpu.matmul %40, %32, %cst_29 {dimension_numbers = #tpu.dot_dimension_numbers<[1], [0], [0], [1], [0, 0, 1, 1], [], []>} : vector<8x32xbf16>, vector<32x32xbf16>, vector<8x32xf32> -> vector<8x32xf32>
    %42 = vector.broadcast %35 : vector<1x32xf32> to vector<8x32xf32>
    %43 = arith.addf %41, %42 : vector<8x32xf32>
    %cst_30 = arith.constant dense<0.000000e+00> : vector<8x32xf32>
    %44 = tpu.matmul %40, %33, %cst_30 {dimension_numbers = #tpu.dot_dimension_numbers<[1], [0], [0], [1], [0, 0, 1, 1], [], []>} : vector<8x32xbf16>, vector<32x32xbf16>, vector<8x32xf32> -> vector<8x32xf32>
    %45 = vector.broadcast %36 : vector<1x32xf32> to vector<8x32xf32>
    %46 = arith.addf %44, %45 : vector<8x32xf32>
    %cst_31 = arith.constant dense<0.000000e+00> : vector<8x32xf32>
    %47 = tpu.matmul %40, %34, %cst_31 {dimension_numbers = #tpu.dot_dimension_numbers<[1], [0], [0], [1], [0, 0, 1, 1], [], []>} : vector<8x32xbf16>, vector<32x32xbf16>, vector<8x32xf32> -> vector<8x32xf32>
    %48 = vector.broadcast %37 : vector<1x32xf32> to vector<8x32xf32>
    %49 = arith.addf %47, %48 : vector<8x32xf32>
    %50 = vector.shape_cast %43 : vector<8x32xf32> to vector<1x8x32xf32>
    %51 = vector.shape_cast %46 : vector<8x32xf32> to vector<1x8x32xf32>
    %52 = vector.shape_cast %49 : vector<8x32xf32> to vector<1x8x32xf32>
    %cst_32 = arith.constant 8.000000e+00 : f32
    %53 = math.sqrt %cst_32 : f32
    %cst_33 = arith.constant 1.000000e+00 : f32
    %54 = arith.divf %cst_33, %53 : f32
    %55 = vector.shape_cast %50 : vector<1x8x32xf32> to vector<8x32xf32>
    %56 = vector.shape_cast %51 : vector<1x8x32xf32> to vector<8x32xf32>
    %57 = vector.shape_cast %52 : vector<1x8x32xf32> to vector<8x32xf32>
    %58 = vector.extract_strided_slice %55 {offsets = [0, 0], sizes = [8, 8], strides = [1, 1]} : vector<8x32xf32> to vector<8x8xf32>
    %59 = arith.truncf %58 : vector<8x8xf32> to vector<8x8xbf16>
    %60 = vector.extract_strided_slice %56 {offsets = [0, 0], sizes = [8, 8], strides = [1, 1]} : vector<8x32xf32> to vector<8x8xf32>
    %61 = arith.truncf %60 : vector<8x8xf32> to vector<8x8xbf16>
    %62 = vector.extract_strided_slice %57 {offsets = [0, 0], sizes = [8, 8], strides = [1, 1]} : vector<8x32xf32> to vector<8x8xf32>
    %63 = arith.truncf %62 : vector<8x8xf32> to vector<8x8xbf16>
    %64 = tpu.transpose %61, [1, 0] : vector<8x8xbf16> -> vector<8x8xbf16>
    %cst_34 = arith.constant dense<0.000000e+00> : vector<8x8xf32>
    %65 = tpu.matmul %59, %64, %cst_34 {dimension_numbers = #tpu.dot_dimension_numbers<[1], [0], [0], [1], [0, 0, 1, 1], [], []>} : vector<8x8xbf16>, vector<8x8xbf16>, vector<8x8xf32> -> vector<8x8xf32>
    %66 = vector.broadcast %54 : f32 to vector<8x8xf32>
    %67 = arith.mulf %65, %66 : vector<8x8xf32>
    %68 = arith.addf %67, %7 : vector<8x8xf32>
    %cst_35 = arith.constant dense<0xFF800000> : vector<8xf32>
    %69 = vector.multi_reduction <maximumf>, %68, %cst_35 [1] : vector<8x8xf32> to vector<8xf32>
    %70 = vector.shape_cast %69 : vector<8xf32> to vector<8x1xf32>
    %71 = vector.broadcast %70 : vector<8x1xf32> to vector<8x8xf32>
    %72 = arith.subf %68, %71 : vector<8x8xf32>
    %73 = math.exp %72 : vector<8x8xf32>
    %cst_36 = arith.constant dense<0.000000e+00> : vector<8xf32>
    %74 = vector.multi_reduction <add>, %73, %cst_36 [1] : vector<8x8xf32> to vector<8xf32>
    %75 = vector.shape_cast %74 : vector<8xf32> to vector<8x1xf32>
    %76 = tpu.reciprocal %75 {approx = true} : vector<8x1xf32> -> vector<8x1xf32>
    %77 = vector.broadcast %76 : vector<8x1xf32> to vector<8x8xf32>
    %78 = arith.mulf %73, %77 : vector<8x8xf32>
    %79 = arith.truncf %78 : vector<8x8xf32> to vector<8x8xbf16>
    %cst_37 = arith.constant dense<0.000000e+00> : vector<8x8xf32>
    %80 = tpu.matmul %79, %63, %cst_37 {dimension_numbers = #tpu.dot_dimension_numbers<[1], [0], [0], [1], [0, 0, 1, 1], [], []>} : vector<8x8xbf16>, vector<8x8xbf16>, vector<8x8xf32> -> vector<8x8xf32>
    %81 = arith.truncf %80 : vector<8x8xf32> to vector<8x8xbf16>
    %82 = vector.extract_strided_slice %38 {offsets = [0, 0, 0], sizes = [1, 8, 32], strides = [1, 1, 1]} : vector<4x8x32xbf16> to vector<1x8x32xbf16>
    %83 = vector.shape_cast %82 : vector<1x8x32xbf16> to vector<8x32xbf16>
    %cst_38 = arith.constant dense<0.000000e+00> : vector<8x32xf32>
    %84 = tpu.matmul %81, %83, %cst_38 {dimension_numbers = #tpu.dot_dimension_numbers<[1], [0], [0], [1], [0, 0, 1, 1], [], []>} : vector<8x8xbf16>, vector<8x32xbf16>, vector<8x32xf32> -> vector<8x32xf32>
    %85 = vector.extract_strided_slice %55 {offsets = [0, 8], sizes = [8, 8], strides = [1, 1]} : vector<8x32xf32> to vector<8x8xf32>
    %86 = arith.truncf %85 : vector<8x8xf32> to vector<8x8xbf16>
    %87 = vector.extract_strided_slice %56 {offsets = [0, 8], sizes = [8, 8], strides = [1, 1]} : vector<8x32xf32> to vector<8x8xf32>
    %88 = arith.truncf %87 : vector<8x8xf32> to vector<8x8xbf16>
    %89 = vector.extract_strided_slice %57 {offsets = [0, 8], sizes = [8, 8], strides = [1, 1]} : vector<8x32xf32> to vector<8x8xf32>
    %90 = arith.truncf %89 : vector<8x8xf32> to vector<8x8xbf16>
    %91 = tpu.transpose %88, [1, 0] : vector<8x8xbf16> -> vector<8x8xbf16>
    %cst_39 = arith.constant dense<0.000000e+00> : vector<8x8xf32>
    %92 = tpu.matmul %86, %91, %cst_39 {dimension_numbers = #tpu.dot_dimension_numbers<[1], [0], [0], [1], [0, 0, 1, 1], [], []>} : vector<8x8xbf16>, vector<8x8xbf16>, vector<8x8xf32> -> vector<8x8xf32>
    %93 = vector.broadcast %54 : f32 to vector<8x8xf32>
    %94 = arith.mulf %92, %93 : vector<8x8xf32>
    %95 = arith.addf %94, %7 : vector<8x8xf32>
    %cst_40 = arith.constant dense<0xFF800000> : vector<8xf32>
    %96 = vector.multi_reduction <maximumf>, %95, %cst_40 [1] : vector<8x8xf32> to vector<8xf32>
    %97 = vector.shape_cast %96 : vector<8xf32> to vector<8x1xf32>
    %98 = vector.broadcast %97 : vector<8x1xf32> to vector<8x8xf32>
    %99 = arith.subf %95, %98 : vector<8x8xf32>
    %100 = math.exp %99 : vector<8x8xf32>
    %cst_41 = arith.constant dense<0.000000e+00> : vector<8xf32>
    %101 = vector.multi_reduction <add>, %100, %cst_41 [1] : vector<8x8xf32> to vector<8xf32>
    %102 = vector.shape_cast %101 : vector<8xf32> to vector<8x1xf32>
    %103 = tpu.reciprocal %102 {approx = true} : vector<8x1xf32> -> vector<8x1xf32>
    %104 = vector.broadcast %103 : vector<8x1xf32> to vector<8x8xf32>
    %105 = arith.mulf %100, %104 : vector<8x8xf32>
    %106 = arith.truncf %105 : vector<8x8xf32> to vector<8x8xbf16>
    %cst_42 = arith.constant dense<0.000000e+00> : vector<8x8xf32>
    %107 = tpu.matmul %106, %90, %cst_42 {dimension_numbers = #tpu.dot_dimension_numbers<[1], [0], [0], [1], [0, 0, 1, 1], [], []>} : vector<8x8xbf16>, vector<8x8xbf16>, vector<8x8xf32> -> vector<8x8xf32>
    %108 = arith.truncf %107 : vector<8x8xf32> to vector<8x8xbf16>
    %109 = vector.extract_strided_slice %38 {offsets = [1, 0, 0], sizes = [1, 8, 32], strides = [1, 1, 1]} : vector<4x8x32xbf16> to vector<1x8x32xbf16>
    %110 = vector.shape_cast %109 : vector<1x8x32xbf16> to vector<8x32xbf16>
    %cst_43 = arith.constant dense<0.000000e+00> : vector<8x32xf32>
    %111 = tpu.matmul %108, %110, %cst_43 {dimension_numbers = #tpu.dot_dimension_numbers<[1], [0], [0], [1], [0, 0, 1, 1], [], []>} : vector<8x8xbf16>, vector<8x32xbf16>, vector<8x32xf32> -> vector<8x32xf32>
    %112 = arith.addf %84, %111 : vector<8x32xf32>
    %113 = vector.extract_strided_slice %55 {offsets = [0, 16], sizes = [8, 8], strides = [1, 1]} : vector<8x32xf32> to vector<8x8xf32>
    %114 = arith.truncf %113 : vector<8x8xf32> to vector<8x8xbf16>
    %115 = vector.extract_strided_slice %56 {offsets = [0, 16], sizes = [8, 8], strides = [1, 1]} : vector<8x32xf32> to vector<8x8xf32>
    %116 = arith.truncf %115 : vector<8x8xf32> to vector<8x8xbf16>
    %117 = vector.extract_strided_slice %57 {offsets = [0, 16], sizes = [8, 8], strides = [1, 1]} : vector<8x32xf32> to vector<8x8xf32>
    %118 = arith.truncf %117 : vector<8x8xf32> to vector<8x8xbf16>
    %119 = tpu.transpose %116, [1, 0] : vector<8x8xbf16> -> vector<8x8xbf16>
    %cst_44 = arith.constant dense<0.000000e+00> : vector<8x8xf32>
    %120 = tpu.matmul %114, %119, %cst_44 {dimension_numbers = #tpu.dot_dimension_numbers<[1], [0], [0], [1], [0, 0, 1, 1], [], []>} : vector<8x8xbf16>, vector<8x8xbf16>, vector<8x8xf32> -> vector<8x8xf32>
    %121 = vector.broadcast %54 : f32 to vector<8x8xf32>
    %122 = arith.mulf %120, %121 : vector<8x8xf32>
    %123 = arith.addf %122, %7 : vector<8x8xf32>
    %cst_45 = arith.constant dense<0xFF800000> : vector<8xf32>
    %124 = vector.multi_reduction <maximumf>, %123, %cst_45 [1] : vector<8x8xf32> to vector<8xf32>
    %125 = vector.shape_cast %124 : vector<8xf32> to vector<8x1xf32>
    %126 = vector.broadcast %125 : vector<8x1xf32> to vector<8x8xf32>
    %127 = arith.subf %123, %126 : vector<8x8xf32>
    %128 = math.exp %127 : vector<8x8xf32>
    %cst_46 = arith.constant dense<0.000000e+00> : vector<8xf32>
    %129 = vector.multi_reduction <add>, %128, %cst_46 [1] : vector<8x8xf32> to vector<8xf32>
    %130 = vector.shape_cast %129 : vector<8xf32> to vector<8x1xf32>
    %131 = tpu.reciprocal %130 {approx = true} : vector<8x1xf32> -> vector<8x1xf32>
    %132 = vector.broadcast %131 : vector<8x1xf32> to vector<8x8xf32>
    %133 = arith.mulf %128, %132 : vector<8x8xf32>
    %134 = arith.truncf %133 : vector<8x8xf32> to vector<8x8xbf16>
    %cst_47 = arith.constant dense<0.000000e+00> : vector<8x8xf32>
    %135 = tpu.matmul %134, %118, %cst_47 {dimension_numbers = #tpu.dot_dimension_numbers<[1], [0], [0], [1], [0, 0, 1, 1], [], []>} : vector<8x8xbf16>, vector<8x8xbf16>, vector<8x8xf32> -> vector<8x8xf32>
    %136 = arith.truncf %135 : vector<8x8xf32> to vector<8x8xbf16>
    %137 = vector.extract_strided_slice %38 {offsets = [2, 0, 0], sizes = [1, 8, 32], strides = [1, 1, 1]} : vector<4x8x32xbf16> to vector<1x8x32xbf16>
    %138 = vector.shape_cast %137 : vector<1x8x32xbf16> to vector<8x32xbf16>
    %cst_48 = arith.constant dense<0.000000e+00> : vector<8x32xf32>
    %139 = tpu.matmul %136, %138, %cst_48 {dimension_numbers = #tpu.dot_dimension_numbers<[1], [0], [0], [1], [0, 0, 1, 1], [], []>} : vector<8x8xbf16>, vector<8x32xbf16>, vector<8x32xf32> -> vector<8x32xf32>
    %140 = arith.addf %112, %139 : vector<8x32xf32>
    %141 = vector.extract_strided_slice %55 {offsets = [0, 24], sizes = [8, 8], strides = [1, 1]} : vector<8x32xf32> to vector<8x8xf32>
    %142 = arith.truncf %141 : vector<8x8xf32> to vector<8x8xbf16>
    %143 = vector.extract_strided_slice %56 {offsets = [0, 24], sizes = [8, 8], strides = [1, 1]} : vector<8x32xf32> to vector<8x8xf32>
    %144 = arith.truncf %143 : vector<8x8xf32> to vector<8x8xbf16>
    %145 = vector.extract_strided_slice %57 {offsets = [0, 24], sizes = [8, 8], strides = [1, 1]} : vector<8x32xf32> to vector<8x8xf32>
    %146 = arith.truncf %145 : vector<8x8xf32> to vector<8x8xbf16>
    %147 = tpu.transpose %144, [1, 0] : vector<8x8xbf16> -> vector<8x8xbf16>
    %cst_49 = arith.constant dense<0.000000e+00> : vector<8x8xf32>
    %148 = tpu.matmul %142, %147, %cst_49 {dimension_numbers = #tpu.dot_dimension_numbers<[1], [0], [0], [1], [0, 0, 1, 1], [], []>} : vector<8x8xbf16>, vector<8x8xbf16>, vector<8x8xf32> -> vector<8x8xf32>
    %149 = vector.broadcast %54 : f32 to vector<8x8xf32>
    %150 = arith.mulf %148, %149 : vector<8x8xf32>
    %151 = arith.addf %150, %7 : vector<8x8xf32>
    %cst_50 = arith.constant dense<0xFF800000> : vector<8xf32>
    %152 = vector.multi_reduction <maximumf>, %151, %cst_50 [1] : vector<8x8xf32> to vector<8xf32>
    %153 = vector.shape_cast %152 : vector<8xf32> to vector<8x1xf32>
    %154 = vector.broadcast %153 : vector<8x1xf32> to vector<8x8xf32>
    %155 = arith.subf %151, %154 : vector<8x8xf32>
    %156 = math.exp %155 : vector<8x8xf32>
    %cst_51 = arith.constant dense<0.000000e+00> : vector<8xf32>
    %157 = vector.multi_reduction <add>, %156, %cst_51 [1] : vector<8x8xf32> to vector<8xf32>
    %158 = vector.shape_cast %157 : vector<8xf32> to vector<8x1xf32>
    %159 = tpu.reciprocal %158 {approx = true} : vector<8x1xf32> -> vector<8x1xf32>
    %160 = vector.broadcast %159 : vector<8x1xf32> to vector<8x8xf32>
    %161 = arith.mulf %156, %160 : vector<8x8xf32>
    %162 = arith.truncf %161 : vector<8x8xf32> to vector<8x8xbf16>
    %cst_52 = arith.constant dense<0.000000e+00> : vector<8x8xf32>
    %163 = tpu.matmul %162, %146, %cst_52 {dimension_numbers = #tpu.dot_dimension_numbers<[1], [0], [0], [1], [0, 0, 1, 1], [], []>} : vector<8x8xbf16>, vector<8x8xbf16>, vector<8x8xf32> -> vector<8x8xf32>
    %164 = arith.truncf %163 : vector<8x8xf32> to vector<8x8xbf16>
    %165 = vector.extract_strided_slice %38 {offsets = [3, 0, 0], sizes = [1, 8, 32], strides = [1, 1, 1]} : vector<4x8x32xbf16> to vector<1x8x32xbf16>
    %166 = vector.shape_cast %165 : vector<1x8x32xbf16> to vector<8x32xbf16>
    %cst_53 = arith.constant dense<0.000000e+00> : vector<8x32xf32>
    %167 = tpu.matmul %164, %166, %cst_53 {dimension_numbers = #tpu.dot_dimension_numbers<[1], [0], [0], [1], [0, 0, 1, 1], [], []>} : vector<8x8xbf16>, vector<8x32xbf16>, vector<8x32xf32> -> vector<8x32xf32>
    %168 = arith.addf %140, %167 : vector<8x32xf32>
    %169 = vector.broadcast %39 : vector<1x32xf32> to vector<8x32xf32>
    %170 = arith.addf %168, %169 : vector<8x32xf32>
    %c0_54 = arith.constant 0 : index
    %c0_55 = arith.constant 0 : index
    %171 = vector.load %arg12[%c0_54, %c0_55] : memref<32x32xbf16, #tpu.memory_space<vmem>>, vector<32x32xbf16>
    %c0_56 = arith.constant 0 : index
    %c0_57 = arith.constant 0 : index
    %172 = vector.load %arg13[%c0_56, %c0_57] : memref<32x32xbf16, #tpu.memory_space<vmem>>, vector<32x32xbf16>
    %c0_58 = arith.constant 0 : index
    %c0_59 = arith.constant 0 : index
    %173 = vector.load %arg14[%c0_58, %c0_59] : memref<32x32xbf16, #tpu.memory_space<vmem>>, vector<32x32xbf16>
    %c0_60 = arith.constant 0 : index
    %c0_61 = arith.constant 0 : index
    %174 = vector.load %arg15[%c0_60, %c0_61] : memref<1x32xf32, #tpu.memory_space<vmem>>, vector<1x32xf32>
    %c0_62 = arith.constant 0 : index
    %c0_63 = arith.constant 0 : index
    %175 = vector.load %arg16[%c0_62, %c0_63] : memref<1x32xf32, #tpu.memory_space<vmem>>, vector<1x32xf32>
    %c0_64 = arith.constant 0 : index
    %c0_65 = arith.constant 0 : index
    %176 = vector.load %arg17[%c0_64, %c0_65] : memref<1x32xf32, #tpu.memory_space<vmem>>, vector<1x32xf32>
    %c0_66 = arith.constant 0 : index
    %c0_67 = arith.constant 0 : index
    %c0_68 = arith.constant 0 : index
    %177 = vector.load %arg18[%c0_66, %c0_67, %c0_68] : memref<4x8x32xbf16, #tpu.memory_space<vmem>>, vector<4x8x32xbf16>
    %c0_69 = arith.constant 0 : index
    %c0_70 = arith.constant 0 : index
    %178 = vector.load %arg19[%c0_69, %c0_70] : memref<1x32xf32, #tpu.memory_space<vmem>>, vector<1x32xf32>
    %179 = arith.truncf %170 : vector<8x32xf32> to vector<8x32xbf16>
    %cst_71 = arith.constant dense<0.000000e+00> : vector<8x32xf32>
    %180 = tpu.matmul %179, %171, %cst_71 {dimension_numbers = #tpu.dot_dimension_numbers<[1], [0], [0], [1], [0, 0, 1, 1], [], []>} : vector<8x32xbf16>, vector<32x32xbf16>, vector<8x32xf32> -> vector<8x32xf32>
    %181 = vector.broadcast %174 : vector<1x32xf32> to vector<8x32xf32>
    %182 = arith.addf %180, %181 : vector<8x32xf32>
    %cst_72 = arith.constant dense<0.000000e+00> : vector<8x32xf32>
    %183 = tpu.matmul %179, %172, %cst_72 {dimension_numbers = #tpu.dot_dimension_numbers<[1], [0], [0], [1], [0, 0, 1, 1], [], []>} : vector<8x32xbf16>, vector<32x32xbf16>, vector<8x32xf32> -> vector<8x32xf32>
    %184 = vector.broadcast %175 : vector<1x32xf32> to vector<8x32xf32>
    %185 = arith.addf %183, %184 : vector<8x32xf32>
    %cst_73 = arith.constant dense<0.000000e+00> : vector<8x32xf32>
    %186 = tpu.matmul %179, %173, %cst_73 {dimension_numbers = #tpu.dot_dimension_numbers<[1], [0], [0], [1], [0, 0, 1, 1], [], []>} : vector<8x32xbf16>, vector<32x32xbf16>, vector<8x32xf32> -> vector<8x32xf32>
    %187 = vector.broadcast %176 : vector<1x32xf32> to vector<8x32xf32>
    %188 = arith.addf %186, %187 : vector<8x32xf32>
    %189 = vector.shape_cast %182 : vector<8x32xf32> to vector<1x8x32xf32>
    %190 = vector.shape_cast %185 : vector<8x32xf32> to vector<1x8x32xf32>
    %191 = vector.shape_cast %188 : vector<8x32xf32> to vector<1x8x32xf32>
    %cst_74 = arith.constant 8.000000e+00 : f32
    %192 = math.sqrt %cst_74 : f32
    %cst_75 = arith.constant 1.000000e+00 : f32
    %193 = arith.divf %cst_75, %192 : f32
    %194 = vector.shape_cast %189 : vector<1x8x32xf32> to vector<8x32xf32>
    %195 = vector.shape_cast %190 : vector<1x8x32xf32> to vector<8x32xf32>
    %196 = vector.shape_cast %191 : vector<1x8x32xf32> to vector<8x32xf32>
    %197 = vector.extract_strided_slice %194 {offsets = [0, 0], sizes = [8, 8], strides = [1, 1]} : vector<8x32xf32> to vector<8x8xf32>
    %198 = arith.truncf %197 : vector<8x8xf32> to vector<8x8xbf16>
    %199 = vector.extract_strided_slice %195 {offsets = [0, 0], sizes = [8, 8], strides = [1, 1]} : vector<8x32xf32> to vector<8x8xf32>
    %200 = arith.truncf %199 : vector<8x8xf32> to vector<8x8xbf16>
    %201 = vector.extract_strided_slice %196 {offsets = [0, 0], sizes = [8, 8], strides = [1, 1]} : vector<8x32xf32> to vector<8x8xf32>
    %202 = arith.truncf %201 : vector<8x8xf32> to vector<8x8xbf16>
    %203 = tpu.transpose %200, [1, 0] : vector<8x8xbf16> -> vector<8x8xbf16>
    %cst_76 = arith.constant dense<0.000000e+00> : vector<8x8xf32>
    %204 = tpu.matmul %198, %203, %cst_76 {dimension_numbers = #tpu.dot_dimension_numbers<[1], [0], [0], [1], [0, 0, 1, 1], [], []>} : vector<8x8xbf16>, vector<8x8xbf16>, vector<8x8xf32> -> vector<8x8xf32>
    %205 = vector.broadcast %193 : f32 to vector<8x8xf32>
    %206 = arith.mulf %204, %205 : vector<8x8xf32>
    %207 = arith.addf %206, %7 : vector<8x8xf32>
    %cst_77 = arith.constant dense<0xFF800000> : vector<8xf32>
    %208 = vector.multi_reduction <maximumf>, %207, %cst_77 [1] : vector<8x8xf32> to vector<8xf32>
    %209 = vector.shape_cast %208 : vector<8xf32> to vector<8x1xf32>
    %210 = vector.broadcast %209 : vector<8x1xf32> to vector<8x8xf32>
    %211 = arith.subf %207, %210 : vector<8x8xf32>
    %212 = math.exp %211 : vector<8x8xf32>
    %cst_78 = arith.constant dense<0.000000e+00> : vector<8xf32>
    %213 = vector.multi_reduction <add>, %212, %cst_78 [1] : vector<8x8xf32> to vector<8xf32>
    %214 = vector.shape_cast %213 : vector<8xf32> to vector<8x1xf32>
    %215 = tpu.reciprocal %214 {approx = true} : vector<8x1xf32> -> vector<8x1xf32>
    %216 = vector.broadcast %215 : vector<8x1xf32> to vector<8x8xf32>
    %217 = arith.mulf %212, %216 : vector<8x8xf32>
    %218 = arith.truncf %217 : vector<8x8xf32> to vector<8x8xbf16>
    %cst_79 = arith.constant dense<0.000000e+00> : vector<8x8xf32>
    %219 = tpu.matmul %218, %202, %cst_79 {dimension_numbers = #tpu.dot_dimension_numbers<[1], [0], [0], [1], [0, 0, 1, 1], [], []>} : vector<8x8xbf16>, vector<8x8xbf16>, vector<8x8xf32> -> vector<8x8xf32>
    %220 = arith.truncf %219 : vector<8x8xf32> to vector<8x8xbf16>
    %221 = vector.extract_strided_slice %177 {offsets = [0, 0, 0], sizes = [1, 8, 32], strides = [1, 1, 1]} : vector<4x8x32xbf16> to vector<1x8x32xbf16>
    %222 = vector.shape_cast %221 : vector<1x8x32xbf16> to vector<8x32xbf16>
    %cst_80 = arith.constant dense<0.000000e+00> : vector<8x32xf32>
    %223 = tpu.matmul %220, %222, %cst_80 {dimension_numbers = #tpu.dot_dimension_numbers<[1], [0], [0], [1], [0, 0, 1, 1], [], []>} : vector<8x8xbf16>, vector<8x32xbf16>, vector<8x32xf32> -> vector<8x32xf32>
    %224 = vector.extract_strided_slice %194 {offsets = [0, 8], sizes = [8, 8], strides = [1, 1]} : vector<8x32xf32> to vector<8x8xf32>
    %225 = arith.truncf %224 : vector<8x8xf32> to vector<8x8xbf16>
    %226 = vector.extract_strided_slice %195 {offsets = [0, 8], sizes = [8, 8], strides = [1, 1]} : vector<8x32xf32> to vector<8x8xf32>
    %227 = arith.truncf %226 : vector<8x8xf32> to vector<8x8xbf16>
    %228 = vector.extract_strided_slice %196 {offsets = [0, 8], sizes = [8, 8], strides = [1, 1]} : vector<8x32xf32> to vector<8x8xf32>
    %229 = arith.truncf %228 : vector<8x8xf32> to vector<8x8xbf16>
    %230 = tpu.transpose %227, [1, 0] : vector<8x8xbf16> -> vector<8x8xbf16>
    %cst_81 = arith.constant dense<0.000000e+00> : vector<8x8xf32>
    %231 = tpu.matmul %225, %230, %cst_81 {dimension_numbers = #tpu.dot_dimension_numbers<[1], [0], [0], [1], [0, 0, 1, 1], [], []>} : vector<8x8xbf16>, vector<8x8xbf16>, vector<8x8xf32> -> vector<8x8xf32>
    %232 = vector.broadcast %193 : f32 to vector<8x8xf32>
    %233 = arith.mulf %231, %232 : vector<8x8xf32>
    %234 = arith.addf %233, %7 : vector<8x8xf32>
    %cst_82 = arith.constant dense<0xFF800000> : vector<8xf32>
    %235 = vector.multi_reduction <maximumf>, %234, %cst_82 [1] : vector<8x8xf32> to vector<8xf32>
    %236 = vector.shape_cast %235 : vector<8xf32> to vector<8x1xf32>
    %237 = vector.broadcast %236 : vector<8x1xf32> to vector<8x8xf32>
    %238 = arith.subf %234, %237 : vector<8x8xf32>
    %239 = math.exp %238 : vector<8x8xf32>
    %cst_83 = arith.constant dense<0.000000e+00> : vector<8xf32>
    %240 = vector.multi_reduction <add>, %239, %cst_83 [1] : vector<8x8xf32> to vector<8xf32>
    %241 = vector.shape_cast %240 : vector<8xf32> to vector<8x1xf32>
    %242 = tpu.reciprocal %241 {approx = true} : vector<8x1xf32> -> vector<8x1xf32>
    %243 = vector.broadcast %242 : vector<8x1xf32> to vector<8x8xf32>
    %244 = arith.mulf %239, %243 : vector<8x8xf32>
    %245 = arith.truncf %244 : vector<8x8xf32> to vector<8x8xbf16>
    %cst_84 = arith.constant dense<0.000000e+00> : vector<8x8xf32>
    %246 = tpu.matmul %245, %229, %cst_84 {dimension_numbers = #tpu.dot_dimension_numbers<[1], [0], [0], [1], [0, 0, 1, 1], [], []>} : vector<8x8xbf16>, vector<8x8xbf16>, vector<8x8xf32> -> vector<8x8xf32>
    %247 = arith.truncf %246 : vector<8x8xf32> to vector<8x8xbf16>
    %248 = vector.extract_strided_slice %177 {offsets = [1, 0, 0], sizes = [1, 8, 32], strides = [1, 1, 1]} : vector<4x8x32xbf16> to vector<1x8x32xbf16>
    %249 = vector.shape_cast %248 : vector<1x8x32xbf16> to vector<8x32xbf16>
    %cst_85 = arith.constant dense<0.000000e+00> : vector<8x32xf32>
    %250 = tpu.matmul %247, %249, %cst_85 {dimension_numbers = #tpu.dot_dimension_numbers<[1], [0], [0], [1], [0, 0, 1, 1], [], []>} : vector<8x8xbf16>, vector<8x32xbf16>, vector<8x32xf32> -> vector<8x32xf32>
    %251 = arith.addf %223, %250 : vector<8x32xf32>
    %252 = vector.extract_strided_slice %194 {offsets = [0, 16], sizes = [8, 8], strides = [1, 1]} : vector<8x32xf32> to vector<8x8xf32>
    %253 = arith.truncf %252 : vector<8x8xf32> to vector<8x8xbf16>
    %254 = vector.extract_strided_slice %195 {offsets = [0, 16], sizes = [8, 8], strides = [1, 1]} : vector<8x32xf32> to vector<8x8xf32>
    %255 = arith.truncf %254 : vector<8x8xf32> to vector<8x8xbf16>
    %256 = vector.extract_strided_slice %196 {offsets = [0, 16], sizes = [8, 8], strides = [1, 1]} : vector<8x32xf32> to vector<8x8xf32>
    %257 = arith.truncf %256 : vector<8x8xf32> to vector<8x8xbf16>
    %258 = tpu.transpose %255, [1, 0] : vector<8x8xbf16> -> vector<8x8xbf16>
    %cst_86 = arith.constant dense<0.000000e+00> : vector<8x8xf32>
    %259 = tpu.matmul %253, %258, %cst_86 {dimension_numbers = #tpu.dot_dimension_numbers<[1], [0], [0], [1], [0, 0, 1, 1], [], []>} : vector<8x8xbf16>, vector<8x8xbf16>, vector<8x8xf32> -> vector<8x8xf32>
    %260 = vector.broadcast %193 : f32 to vector<8x8xf32>
    %261 = arith.mulf %259, %260 : vector<8x8xf32>
    %262 = arith.addf %261, %7 : vector<8x8xf32>
    %cst_87 = arith.constant dense<0xFF800000> : vector<8xf32>
    %263 = vector.multi_reduction <maximumf>, %262, %cst_87 [1] : vector<8x8xf32> to vector<8xf32>
    %264 = vector.shape_cast %263 : vector<8xf32> to vector<8x1xf32>
    %265 = vector.broadcast %264 : vector<8x1xf32> to vector<8x8xf32>
    %266 = arith.subf %262, %265 : vector<8x8xf32>
    %267 = math.exp %266 : vector<8x8xf32>
    %cst_88 = arith.constant dense<0.000000e+00> : vector<8xf32>
    %268 = vector.multi_reduction <add>, %267, %cst_88 [1] : vector<8x8xf32> to vector<8xf32>
    %269 = vector.shape_cast %268 : vector<8xf32> to vector<8x1xf32>
    %270 = tpu.reciprocal %269 {approx = true} : vector<8x1xf32> -> vector<8x1xf32>
    %271 = vector.broadcast %270 : vector<8x1xf32> to vector<8x8xf32>
    %272 = arith.mulf %267, %271 : vector<8x8xf32>
    %273 = arith.truncf %272 : vector<8x8xf32> to vector<8x8xbf16>
    %cst_89 = arith.constant dense<0.000000e+00> : vector<8x8xf32>
    %274 = tpu.matmul %273, %257, %cst_89 {dimension_numbers = #tpu.dot_dimension_numbers<[1], [0], [0], [1], [0, 0, 1, 1], [], []>} : vector<8x8xbf16>, vector<8x8xbf16>, vector<8x8xf32> -> vector<8x8xf32>
    %275 = arith.truncf %274 : vector<8x8xf32> to vector<8x8xbf16>
    %276 = vector.extract_strided_slice %177 {offsets = [2, 0, 0], sizes = [1, 8, 32], strides = [1, 1, 1]} : vector<4x8x32xbf16> to vector<1x8x32xbf16>
    %277 = vector.shape_cast %276 : vector<1x8x32xbf16> to vector<8x32xbf16>
    %cst_90 = arith.constant dense<0.000000e+00> : vector<8x32xf32>
    %278 = tpu.matmul %275, %277, %cst_90 {dimension_numbers = #tpu.dot_dimension_numbers<[1], [0], [0], [1], [0, 0, 1, 1], [], []>} : vector<8x8xbf16>, vector<8x32xbf16>, vector<8x32xf32> -> vector<8x32xf32>
    %279 = arith.addf %251, %278 : vector<8x32xf32>
    %280 = vector.extract_strided_slice %194 {offsets = [0, 24], sizes = [8, 8], strides = [1, 1]} : vector<8x32xf32> to vector<8x8xf32>
    %281 = arith.truncf %280 : vector<8x8xf32> to vector<8x8xbf16>
    %282 = vector.extract_strided_slice %195 {offsets = [0, 24], sizes = [8, 8], strides = [1, 1]} : vector<8x32xf32> to vector<8x8xf32>
    %283 = arith.truncf %282 : vector<8x8xf32> to vector<8x8xbf16>
    %284 = vector.extract_strided_slice %196 {offsets = [0, 24], sizes = [8, 8], strides = [1, 1]} : vector<8x32xf32> to vector<8x8xf32>
    %285 = arith.truncf %284 : vector<8x8xf32> to vector<8x8xbf16>
    %286 = tpu.transpose %283, [1, 0] : vector<8x8xbf16> -> vector<8x8xbf16>
    %cst_91 = arith.constant dense<0.000000e+00> : vector<8x8xf32>
    %287 = tpu.matmul %281, %286, %cst_91 {dimension_numbers = #tpu.dot_dimension_numbers<[1], [0], [0], [1], [0, 0, 1, 1], [], []>} : vector<8x8xbf16>, vector<8x8xbf16>, vector<8x8xf32> -> vector<8x8xf32>
    %288 = vector.broadcast %193 : f32 to vector<8x8xf32>
    %289 = arith.mulf %287, %288 : vector<8x8xf32>
    %290 = arith.addf %289, %7 : vector<8x8xf32>
    %cst_92 = arith.constant dense<0xFF800000> : vector<8xf32>
    %291 = vector.multi_reduction <maximumf>, %290, %cst_92 [1] : vector<8x8xf32> to vector<8xf32>
    %292 = vector.shape_cast %291 : vector<8xf32> to vector<8x1xf32>
    %293 = vector.broadcast %292 : vector<8x1xf32> to vector<8x8xf32>
    %294 = arith.subf %290, %293 : vector<8x8xf32>
    %295 = math.exp %294 : vector<8x8xf32>
    %cst_93 = arith.constant dense<0.000000e+00> : vector<8xf32>
    %296 = vector.multi_reduction <add>, %295, %cst_93 [1] : vector<8x8xf32> to vector<8xf32>
    %297 = vector.shape_cast %296 : vector<8xf32> to vector<8x1xf32>
    %298 = tpu.reciprocal %297 {approx = true} : vector<8x1xf32> -> vector<8x1xf32>
    %299 = vector.broadcast %298 : vector<8x1xf32> to vector<8x8xf32>
    %300 = arith.mulf %295, %299 : vector<8x8xf32>
    %301 = arith.truncf %300 : vector<8x8xf32> to vector<8x8xbf16>
    %cst_94 = arith.constant dense<0.000000e+00> : vector<8x8xf32>
    %302 = tpu.matmul %301, %285, %cst_94 {dimension_numbers = #tpu.dot_dimension_numbers<[1], [0], [0], [1], [0, 0, 1, 1], [], []>} : vector<8x8xbf16>, vector<8x8xbf16>, vector<8x8xf32> -> vector<8x8xf32>
    %303 = arith.truncf %302 : vector<8x8xf32> to vector<8x8xbf16>
    %304 = vector.extract_strided_slice %177 {offsets = [3, 0, 0], sizes = [1, 8, 32], strides = [1, 1, 1]} : vector<4x8x32xbf16> to vector<1x8x32xbf16>
    %305 = vector.shape_cast %304 : vector<1x8x32xbf16> to vector<8x32xbf16>
    %cst_95 = arith.constant dense<0.000000e+00> : vector<8x32xf32>
    %306 = tpu.matmul %303, %305, %cst_95 {dimension_numbers = #tpu.dot_dimension_numbers<[1], [0], [0], [1], [0, 0, 1, 1], [], []>} : vector<8x8xbf16>, vector<8x32xbf16>, vector<8x32xf32> -> vector<8x32xf32>
    %307 = arith.addf %279, %306 : vector<8x32xf32>
    %308 = vector.broadcast %178 : vector<1x32xf32> to vector<8x32xf32>
    %309 = arith.addf %307, %308 : vector<8x32xf32>
    %c0_96 = arith.constant 0 : index
    %c0_97 = arith.constant 0 : index
    %310 = vector.load %arg20[%c0_96, %c0_97] : memref<32x32xbf16, #tpu.memory_space<vmem>>, vector<32x32xbf16>
    %c0_98 = arith.constant 0 : index
    %c0_99 = arith.constant 0 : index
    %311 = vector.load %arg21[%c0_98, %c0_99] : memref<32x32xbf16, #tpu.memory_space<vmem>>, vector<32x32xbf16>
    %c0_100 = arith.constant 0 : index
    %c0_101 = arith.constant 0 : index
    %312 = vector.load %arg22[%c0_100, %c0_101] : memref<32x32xbf16, #tpu.memory_space<vmem>>, vector<32x32xbf16>
    %c0_102 = arith.constant 0 : index
    %c0_103 = arith.constant 0 : index
    %313 = vector.load %arg23[%c0_102, %c0_103] : memref<1x32xf32, #tpu.memory_space<vmem>>, vector<1x32xf32>
    %c0_104 = arith.constant 0 : index
    %c0_105 = arith.constant 0 : index
    %314 = vector.load %arg24[%c0_104, %c0_105] : memref<1x32xf32, #tpu.memory_space<vmem>>, vector<1x32xf32>
    %c0_106 = arith.constant 0 : index
    %c0_107 = arith.constant 0 : index
    %315 = vector.load %arg25[%c0_106, %c0_107] : memref<1x32xf32, #tpu.memory_space<vmem>>, vector<1x32xf32>
    %c0_108 = arith.constant 0 : index
    %c0_109 = arith.constant 0 : index
    %c0_110 = arith.constant 0 : index
    %316 = vector.load %arg26[%c0_108, %c0_109, %c0_110] : memref<4x8x32xbf16, #tpu.memory_space<vmem>>, vector<4x8x32xbf16>
    %c0_111 = arith.constant 0 : index
    %c0_112 = arith.constant 0 : index
    %317 = vector.load %arg27[%c0_111, %c0_112] : memref<1x32xf32, #tpu.memory_space<vmem>>, vector<1x32xf32>
    %318 = arith.truncf %309 : vector<8x32xf32> to vector<8x32xbf16>
    %cst_113 = arith.constant dense<0.000000e+00> : vector<8x32xf32>
    %319 = tpu.matmul %318, %310, %cst_113 {dimension_numbers = #tpu.dot_dimension_numbers<[1], [0], [0], [1], [0, 0, 1, 1], [], []>} : vector<8x32xbf16>, vector<32x32xbf16>, vector<8x32xf32> -> vector<8x32xf32>
    %320 = vector.broadcast %313 : vector<1x32xf32> to vector<8x32xf32>
    %321 = arith.addf %319, %320 : vector<8x32xf32>
    %cst_114 = arith.constant dense<0.000000e+00> : vector<8x32xf32>
    %322 = tpu.matmul %318, %311, %cst_114 {dimension_numbers = #tpu.dot_dimension_numbers<[1], [0], [0], [1], [0, 0, 1, 1], [], []>} : vector<8x32xbf16>, vector<32x32xbf16>, vector<8x32xf32> -> vector<8x32xf32>
    %323 = vector.broadcast %314 : vector<1x32xf32> to vector<8x32xf32>
    %324 = arith.addf %322, %323 : vector<8x32xf32>
    %cst_115 = arith.constant dense<0.000000e+00> : vector<8x32xf32>
    %325 = tpu.matmul %318, %312, %cst_115 {dimension_numbers = #tpu.dot_dimension_numbers<[1], [0], [0], [1], [0, 0, 1, 1], [], []>} : vector<8x32xbf16>, vector<32x32xbf16>, vector<8x32xf32> -> vector<8x32xf32>
    %326 = vector.broadcast %315 : vector<1x32xf32> to vector<8x32xf32>
    %327 = arith.addf %325, %326 : vector<8x32xf32>
    %328 = vector.shape_cast %321 : vector<8x32xf32> to vector<1x8x32xf32>
    %329 = vector.shape_cast %324 : vector<8x32xf32> to vector<1x8x32xf32>
    %330 = vector.shape_cast %327 : vector<8x32xf32> to vector<1x8x32xf32>
    %cst_116 = arith.constant 8.000000e+00 : f32
    %331 = math.sqrt %cst_116 : f32
    %cst_117 = arith.constant 1.000000e+00 : f32
    %332 = arith.divf %cst_117, %331 : f32
    %333 = vector.shape_cast %328 : vector<1x8x32xf32> to vector<8x32xf32>
    %334 = vector.shape_cast %329 : vector<1x8x32xf32> to vector<8x32xf32>
    %335 = vector.shape_cast %330 : vector<1x8x32xf32> to vector<8x32xf32>
    %336 = vector.extract_strided_slice %333 {offsets = [0, 0], sizes = [8, 8], strides = [1, 1]} : vector<8x32xf32> to vector<8x8xf32>
    %337 = arith.truncf %336 : vector<8x8xf32> to vector<8x8xbf16>
    %338 = vector.extract_strided_slice %334 {offsets = [0, 0], sizes = [8, 8], strides = [1, 1]} : vector<8x32xf32> to vector<8x8xf32>
    %339 = arith.truncf %338 : vector<8x8xf32> to vector<8x8xbf16>
    %340 = vector.extract_strided_slice %335 {offsets = [0, 0], sizes = [8, 8], strides = [1, 1]} : vector<8x32xf32> to vector<8x8xf32>
    %341 = arith.truncf %340 : vector<8x8xf32> to vector<8x8xbf16>
    %342 = tpu.transpose %339, [1, 0] : vector<8x8xbf16> -> vector<8x8xbf16>
    %cst_118 = arith.constant dense<0.000000e+00> : vector<8x8xf32>
    %343 = tpu.matmul %337, %342, %cst_118 {dimension_numbers = #tpu.dot_dimension_numbers<[1], [0], [0], [1], [0, 0, 1, 1], [], []>} : vector<8x8xbf16>, vector<8x8xbf16>, vector<8x8xf32> -> vector<8x8xf32>
    %344 = vector.broadcast %332 : f32 to vector<8x8xf32>
    %345 = arith.mulf %343, %344 : vector<8x8xf32>
    %346 = arith.addf %345, %7 : vector<8x8xf32>
    %cst_119 = arith.constant dense<0xFF800000> : vector<8xf32>
    %347 = vector.multi_reduction <maximumf>, %346, %cst_119 [1] : vector<8x8xf32> to vector<8xf32>
    %348 = vector.shape_cast %347 : vector<8xf32> to vector<8x1xf32>
    %349 = vector.broadcast %348 : vector<8x1xf32> to vector<8x8xf32>
    %350 = arith.subf %346, %349 : vector<8x8xf32>
    %351 = math.exp %350 : vector<8x8xf32>
    %cst_120 = arith.constant dense<0.000000e+00> : vector<8xf32>
    %352 = vector.multi_reduction <add>, %351, %cst_120 [1] : vector<8x8xf32> to vector<8xf32>
    %353 = vector.shape_cast %352 : vector<8xf32> to vector<8x1xf32>
    %354 = tpu.reciprocal %353 {approx = true} : vector<8x1xf32> -> vector<8x1xf32>
    %355 = vector.broadcast %354 : vector<8x1xf32> to vector<8x8xf32>
    %356 = arith.mulf %351, %355 : vector<8x8xf32>
    %357 = arith.truncf %356 : vector<8x8xf32> to vector<8x8xbf16>
    %cst_121 = arith.constant dense<0.000000e+00> : vector<8x8xf32>
    %358 = tpu.matmul %357, %341, %cst_121 {dimension_numbers = #tpu.dot_dimension_numbers<[1], [0], [0], [1], [0, 0, 1, 1], [], []>} : vector<8x8xbf16>, vector<8x8xbf16>, vector<8x8xf32> -> vector<8x8xf32>
    %359 = arith.truncf %358 : vector<8x8xf32> to vector<8x8xbf16>
    %360 = vector.extract_strided_slice %316 {offsets = [0, 0, 0], sizes = [1, 8, 32], strides = [1, 1, 1]} : vector<4x8x32xbf16> to vector<1x8x32xbf16>
    %361 = vector.shape_cast %360 : vector<1x8x32xbf16> to vector<8x32xbf16>
    %cst_122 = arith.constant dense<0.000000e+00> : vector<8x32xf32>
    %362 = tpu.matmul %359, %361, %cst_122 {dimension_numbers = #tpu.dot_dimension_numbers<[1], [0], [0], [1], [0, 0, 1, 1], [], []>} : vector<8x8xbf16>, vector<8x32xbf16>, vector<8x32xf32> -> vector<8x32xf32>
    %363 = vector.extract_strided_slice %333 {offsets = [0, 8], sizes = [8, 8], strides = [1, 1]} : vector<8x32xf32> to vector<8x8xf32>
    %364 = arith.truncf %363 : vector<8x8xf32> to vector<8x8xbf16>
    %365 = vector.extract_strided_slice %334 {offsets = [0, 8], sizes = [8, 8], strides = [1, 1]} : vector<8x32xf32> to vector<8x8xf32>
    %366 = arith.truncf %365 : vector<8x8xf32> to vector<8x8xbf16>
    %367 = vector.extract_strided_slice %335 {offsets = [0, 8], sizes = [8, 8], strides = [1, 1]} : vector<8x32xf32> to vector<8x8xf32>
    %368 = arith.truncf %367 : vector<8x8xf32> to vector<8x8xbf16>
    %369 = tpu.transpose %366, [1, 0] : vector<8x8xbf16> -> vector<8x8xbf16>
    %cst_123 = arith.constant dense<0.000000e+00> : vector<8x8xf32>
    %370 = tpu.matmul %364, %369, %cst_123 {dimension_numbers = #tpu.dot_dimension_numbers<[1], [0], [0], [1], [0, 0, 1, 1], [], []>} : vector<8x8xbf16>, vector<8x8xbf16>, vector<8x8xf32> -> vector<8x8xf32>
    %371 = vector.broadcast %332 : f32 to vector<8x8xf32>
    %372 = arith.mulf %370, %371 : vector<8x8xf32>
    %373 = arith.addf %372, %7 : vector<8x8xf32>
    %cst_124 = arith.constant dense<0xFF800000> : vector<8xf32>
    %374 = vector.multi_reduction <maximumf>, %373, %cst_124 [1] : vector<8x8xf32> to vector<8xf32>
    %375 = vector.shape_cast %374 : vector<8xf32> to vector<8x1xf32>
    %376 = vector.broadcast %375 : vector<8x1xf32> to vector<8x8xf32>
    %377 = arith.subf %373, %376 : vector<8x8xf32>
    %378 = math.exp %377 : vector<8x8xf32>
    %cst_125 = arith.constant dense<0.000000e+00> : vector<8xf32>
    %379 = vector.multi_reduction <add>, %378, %cst_125 [1] : vector<8x8xf32> to vector<8xf32>
    %380 = vector.shape_cast %379 : vector<8xf32> to vector<8x1xf32>
    %381 = tpu.reciprocal %380 {approx = true} : vector<8x1xf32> -> vector<8x1xf32>
    %382 = vector.broadcast %381 : vector<8x1xf32> to vector<8x8xf32>
    %383 = arith.mulf %378, %382 : vector<8x8xf32>
    %384 = arith.truncf %383 : vector<8x8xf32> to vector<8x8xbf16>
    %cst_126 = arith.constant dense<0.000000e+00> : vector<8x8xf32>
    %385 = tpu.matmul %384, %368, %cst_126 {dimension_numbers = #tpu.dot_dimension_numbers<[1], [0], [0], [1], [0, 0, 1, 1], [], []>} : vector<8x8xbf16>, vector<8x8xbf16>, vector<8x8xf32> -> vector<8x8xf32>
    %386 = arith.truncf %385 : vector<8x8xf32> to vector<8x8xbf16>
    %387 = vector.extract_strided_slice %316 {offsets = [1, 0, 0], sizes = [1, 8, 32], strides = [1, 1, 1]} : vector<4x8x32xbf16> to vector<1x8x32xbf16>
    %388 = vector.shape_cast %387 : vector<1x8x32xbf16> to vector<8x32xbf16>
    %cst_127 = arith.constant dense<0.000000e+00> : vector<8x32xf32>
    %389 = tpu.matmul %386, %388, %cst_127 {dimension_numbers = #tpu.dot_dimension_numbers<[1], [0], [0], [1], [0, 0, 1, 1], [], []>} : vector<8x8xbf16>, vector<8x32xbf16>, vector<8x32xf32> -> vector<8x32xf32>
    %390 = arith.addf %362, %389 : vector<8x32xf32>
    %391 = vector.extract_strided_slice %333 {offsets = [0, 16], sizes = [8, 8], strides = [1, 1]} : vector<8x32xf32> to vector<8x8xf32>
    %392 = arith.truncf %391 : vector<8x8xf32> to vector<8x8xbf16>
    %393 = vector.extract_strided_slice %334 {offsets = [0, 16], sizes = [8, 8], strides = [1, 1]} : vector<8x32xf32> to vector<8x8xf32>
    %394 = arith.truncf %393 : vector<8x8xf32> to vector<8x8xbf16>
    %395 = vector.extract_strided_slice %335 {offsets = [0, 16], sizes = [8, 8], strides = [1, 1]} : vector<8x32xf32> to vector<8x8xf32>
    %396 = arith.truncf %395 : vector<8x8xf32> to vector<8x8xbf16>
    %397 = tpu.transpose %394, [1, 0] : vector<8x8xbf16> -> vector<8x8xbf16>
    %cst_128 = arith.constant dense<0.000000e+00> : vector<8x8xf32>
    %398 = tpu.matmul %392, %397, %cst_128 {dimension_numbers = #tpu.dot_dimension_numbers<[1], [0], [0], [1], [0, 0, 1, 1], [], []>} : vector<8x8xbf16>, vector<8x8xbf16>, vector<8x8xf32> -> vector<8x8xf32>
    %399 = vector.broadcast %332 : f32 to vector<8x8xf32>
    %400 = arith.mulf %398, %399 : vector<8x8xf32>
    %401 = arith.addf %400, %7 : vector<8x8xf32>
    %cst_129 = arith.constant dense<0xFF800000> : vector<8xf32>
    %402 = vector.multi_reduction <maximumf>, %401, %cst_129 [1] : vector<8x8xf32> to vector<8xf32>
    %403 = vector.shape_cast %402 : vector<8xf32> to vector<8x1xf32>
    %404 = vector.broadcast %403 : vector<8x1xf32> to vector<8x8xf32>
    %405 = arith.subf %401, %404 : vector<8x8xf32>
    %406 = math.exp %405 : vector<8x8xf32>
    %cst_130 = arith.constant dense<0.000000e+00> : vector<8xf32>
    %407 = vector.multi_reduction <add>, %406, %cst_130 [1] : vector<8x8xf32> to vector<8xf32>
    %408 = vector.shape_cast %407 : vector<8xf32> to vector<8x1xf32>
    %409 = tpu.reciprocal %408 {approx = true} : vector<8x1xf32> -> vector<8x1xf32>
    %410 = vector.broadcast %409 : vector<8x1xf32> to vector<8x8xf32>
    %411 = arith.mulf %406, %410 : vector<8x8xf32>
    %412 = arith.truncf %411 : vector<8x8xf32> to vector<8x8xbf16>
    %cst_131 = arith.constant dense<0.000000e+00> : vector<8x8xf32>
    %413 = tpu.matmul %412, %396, %cst_131 {dimension_numbers = #tpu.dot_dimension_numbers<[1], [0], [0], [1], [0, 0, 1, 1], [], []>} : vector<8x8xbf16>, vector<8x8xbf16>, vector<8x8xf32> -> vector<8x8xf32>
    %414 = arith.truncf %413 : vector<8x8xf32> to vector<8x8xbf16>
    %415 = vector.extract_strided_slice %316 {offsets = [2, 0, 0], sizes = [1, 8, 32], strides = [1, 1, 1]} : vector<4x8x32xbf16> to vector<1x8x32xbf16>
    %416 = vector.shape_cast %415 : vector<1x8x32xbf16> to vector<8x32xbf16>
    %cst_132 = arith.constant dense<0.000000e+00> : vector<8x32xf32>
    %417 = tpu.matmul %414, %416, %cst_132 {dimension_numbers = #tpu.dot_dimension_numbers<[1], [0], [0], [1], [0, 0, 1, 1], [], []>} : vector<8x8xbf16>, vector<8x32xbf16>, vector<8x32xf32> -> vector<8x32xf32>
    %418 = arith.addf %390, %417 : vector<8x32xf32>
    %419 = vector.extract_strided_slice %333 {offsets = [0, 24], sizes = [8, 8], strides = [1, 1]} : vector<8x32xf32> to vector<8x8xf32>
    %420 = arith.truncf %419 : vector<8x8xf32> to vector<8x8xbf16>
    %421 = vector.extract_strided_slice %334 {offsets = [0, 24], sizes = [8, 8], strides = [1, 1]} : vector<8x32xf32> to vector<8x8xf32>
    %422 = arith.truncf %421 : vector<8x8xf32> to vector<8x8xbf16>
    %423 = vector.extract_strided_slice %335 {offsets = [0, 24], sizes = [8, 8], strides = [1, 1]} : vector<8x32xf32> to vector<8x8xf32>
    %424 = arith.truncf %423 : vector<8x8xf32> to vector<8x8xbf16>
    %425 = tpu.transpose %422, [1, 0] : vector<8x8xbf16> -> vector<8x8xbf16>
    %cst_133 = arith.constant dense<0.000000e+00> : vector<8x8xf32>
    %426 = tpu.matmul %420, %425, %cst_133 {dimension_numbers = #tpu.dot_dimension_numbers<[1], [0], [0], [1], [0, 0, 1, 1], [], []>} : vector<8x8xbf16>, vector<8x8xbf16>, vector<8x8xf32> -> vector<8x8xf32>
    %427 = vector.broadcast %332 : f32 to vector<8x8xf32>
    %428 = arith.mulf %426, %427 : vector<8x8xf32>
    %429 = arith.addf %428, %7 : vector<8x8xf32>
    %cst_134 = arith.constant dense<0xFF800000> : vector<8xf32>
    %430 = vector.multi_reduction <maximumf>, %429, %cst_134 [1] : vector<8x8xf32> to vector<8xf32>
    %431 = vector.shape_cast %430 : vector<8xf32> to vector<8x1xf32>
    %432 = vector.broadcast %431 : vector<8x1xf32> to vector<8x8xf32>
    %433 = arith.subf %429, %432 : vector<8x8xf32>
    %434 = math.exp %433 : vector<8x8xf32>
    %cst_135 = arith.constant dense<0.000000e+00> : vector<8xf32>
    %435 = vector.multi_reduction <add>, %434, %cst_135 [1] : vector<8x8xf32> to vector<8xf32>
    %436 = vector.shape_cast %435 : vector<8xf32> to vector<8x1xf32>
    %437 = tpu.reciprocal %436 {approx = true} : vector<8x1xf32> -> vector<8x1xf32>
    %438 = vector.broadcast %437 : vector<8x1xf32> to vector<8x8xf32>
    %439 = arith.mulf %434, %438 : vector<8x8xf32>
    %440 = arith.truncf %439 : vector<8x8xf32> to vector<8x8xbf16>
    %cst_136 = arith.constant dense<0.000000e+00> : vector<8x8xf32>
    %441 = tpu.matmul %440, %424, %cst_136 {dimension_numbers = #tpu.dot_dimension_numbers<[1], [0], [0], [1], [0, 0, 1, 1], [], []>} : vector<8x8xbf16>, vector<8x8xbf16>, vector<8x8xf32> -> vector<8x8xf32>
    %442 = arith.truncf %441 : vector<8x8xf32> to vector<8x8xbf16>
    %443 = vector.extract_strided_slice %316 {offsets = [3, 0, 0], sizes = [1, 8, 32], strides = [1, 1, 1]} : vector<4x8x32xbf16> to vector<1x8x32xbf16>
    %444 = vector.shape_cast %443 : vector<1x8x32xbf16> to vector<8x32xbf16>
    %cst_137 = arith.constant dense<0.000000e+00> : vector<8x32xf32>
    %445 = tpu.matmul %442, %444, %cst_137 {dimension_numbers = #tpu.dot_dimension_numbers<[1], [0], [0], [1], [0, 0, 1, 1], [], []>} : vector<8x8xbf16>, vector<8x32xbf16>, vector<8x32xf32> -> vector<8x32xf32>
    %446 = arith.addf %418, %445 : vector<8x32xf32>
    %447 = vector.broadcast %317 : vector<1x32xf32> to vector<8x32xf32>
    %448 = arith.addf %446, %447 : vector<8x32xf32>
    %c0_138 = arith.constant 0 : index
    %c0_139 = arith.constant 0 : index
    %449 = vector.load %arg28[%c0_138, %c0_139] : memref<32x32xbf16, #tpu.memory_space<vmem>>, vector<32x32xbf16>
    %450 = arith.truncf %170 : vector<8x32xf32> to vector<8x32xbf16>
    %cst_140 = arith.constant dense<0.000000e+00> : vector<8x32xf32>
    %451 = tpu.matmul %450, %449, %cst_140 {dimension_numbers = #tpu.dot_dimension_numbers<[1], [0], [0], [1], [0, 0, 1, 1], [], []>} : vector<8x32xbf16>, vector<32x32xbf16>, vector<8x32xf32> -> vector<8x32xf32>
    %c0_141 = arith.constant 0 : index
    %c0_142 = arith.constant 0 : index
    %452 = vector.load %arg29[%c0_141, %c0_142] : memref<1x32xf32, #tpu.memory_space<vmem>>, vector<1x32xf32>
    %453 = vector.broadcast %452 : vector<1x32xf32> to vector<8x32xf32>
    %454 = arith.addf %451, %453 : vector<8x32xf32>
    %cst_143 = arith.constant 5.000000e-01 : f32
    %455 = vector.broadcast %cst_143 : f32 to vector<8x32xf32>
    %456 = arith.mulf %455, %454 : vector<8x32xf32>
    %cst_144 = arith.constant 0.636619746 : f32
    %457 = math.sqrt %cst_144 : f32
    %cst_145 = arith.constant 4.471500e-02 : f32
    %458 = vector.broadcast %cst_145 : f32 to vector<8x32xf32>
    %459 = arith.mulf %458, %454 : vector<8x32xf32>
    %460 = arith.mulf %459, %454 : vector<8x32xf32>
    %461 = arith.mulf %460, %454 : vector<8x32xf32>
    %462 = arith.addf %454, %461 : vector<8x32xf32>
    %463 = vector.broadcast %457 : f32 to vector<8x32xf32>
    %464 = arith.mulf %463, %462 : vector<8x32xf32>
    %465 = math.tanh %464 : vector<8x32xf32>
    %cst_146 = arith.constant 1.000000e+00 : f32
    %466 = vector.broadcast %cst_146 : f32 to vector<8x32xf32>
    %467 = arith.addf %466, %465 : vector<8x32xf32>
    %468 = arith.mulf %456, %467 : vector<8x32xf32>
    %c0_147 = arith.constant 0 : index
    %c0_148 = arith.constant 0 : index
    %469 = vector.load %arg30[%c0_147, %c0_148] : memref<32x32xbf16, #tpu.memory_space<vmem>>, vector<32x32xbf16>
    %470 = arith.truncf %448 : vector<8x32xf32> to vector<8x32xbf16>
    %cst_149 = arith.constant dense<0.000000e+00> : vector<8x32xf32>
    %471 = tpu.matmul %470, %469, %cst_149 {dimension_numbers = #tpu.dot_dimension_numbers<[1], [0], [0], [1], [0, 0, 1, 1], [], []>} : vector<8x32xbf16>, vector<32x32xbf16>, vector<8x32xf32> -> vector<8x32xf32>
    %c0_150 = arith.constant 0 : index
    %c0_151 = arith.constant 0 : index
    %472 = vector.load %arg31[%c0_150, %c0_151] : memref<1x32xf32, #tpu.memory_space<vmem>>, vector<1x32xf32>
    %473 = vector.broadcast %472 : vector<1x32xf32> to vector<8x32xf32>
    %474 = arith.addf %471, %473 : vector<8x32xf32>
    %cst_152 = arith.constant 5.000000e-01 : f32
    %475 = vector.broadcast %cst_152 : f32 to vector<8x32xf32>
    %476 = arith.mulf %475, %474 : vector<8x32xf32>
    %cst_153 = arith.constant 0.636619746 : f32
    %477 = math.sqrt %cst_153 : f32
    %cst_154 = arith.constant 4.471500e-02 : f32
    %478 = vector.broadcast %cst_154 : f32 to vector<8x32xf32>
    %479 = arith.mulf %478, %474 : vector<8x32xf32>
    %480 = arith.mulf %479, %474 : vector<8x32xf32>
    %481 = arith.mulf %480, %474 : vector<8x32xf32>
    %482 = arith.addf %474, %481 : vector<8x32xf32>
    %483 = vector.broadcast %477 : f32 to vector<8x32xf32>
    %484 = arith.mulf %483, %482 : vector<8x32xf32>
    %485 = math.tanh %484 : vector<8x32xf32>
    %cst_155 = arith.constant 1.000000e+00 : f32
    %486 = vector.broadcast %cst_155 : f32 to vector<8x32xf32>
    %487 = arith.addf %486, %485 : vector<8x32xf32>
    %488 = arith.mulf %476, %487 : vector<8x32xf32>
    %c0_156 = arith.constant 0 : index
    %c0_157 = arith.constant 0 : index
    %489 = vector.load %arg32[%c0_156, %c0_157] : memref<32x32xbf16, #tpu.memory_space<vmem>>, vector<32x32xbf16>
    %490 = arith.truncf %309 : vector<8x32xf32> to vector<8x32xbf16>
    %cst_158 = arith.constant dense<0.000000e+00> : vector<8x32xf32>
    %491 = tpu.matmul %490, %489, %cst_158 {dimension_numbers = #tpu.dot_dimension_numbers<[1], [0], [0], [1], [0, 0, 1, 1], [], []>} : vector<8x32xbf16>, vector<32x32xbf16>, vector<8x32xf32> -> vector<8x32xf32>
    %c0_159 = arith.constant 0 : index
    %c0_160 = arith.constant 0 : index
    %492 = vector.load %arg33[%c0_159, %c0_160] : memref<1x32xf32, #tpu.memory_space<vmem>>, vector<1x32xf32>
    %493 = vector.broadcast %492 : vector<1x32xf32> to vector<8x32xf32>
    %494 = arith.addf %491, %493 : vector<8x32xf32>
    %cst_161 = arith.constant 5.000000e-01 : f32
    %495 = vector.broadcast %cst_161 : f32 to vector<8x32xf32>
    %496 = arith.mulf %495, %494 : vector<8x32xf32>
    %cst_162 = arith.constant 0.636619746 : f32
    %497 = math.sqrt %cst_162 : f32
    %cst_163 = arith.constant 4.471500e-02 : f32
    %498 = vector.broadcast %cst_163 : f32 to vector<8x32xf32>
    %499 = arith.mulf %498, %494 : vector<8x32xf32>
    %500 = arith.mulf %499, %494 : vector<8x32xf32>
    %501 = arith.mulf %500, %494 : vector<8x32xf32>
    %502 = arith.addf %494, %501 : vector<8x32xf32>
    %503 = vector.broadcast %497 : f32 to vector<8x32xf32>
    %504 = arith.mulf %503, %502 : vector<8x32xf32>
    %505 = math.tanh %504 : vector<8x32xf32>
    %cst_164 = arith.constant 1.000000e+00 : f32
    %506 = vector.broadcast %cst_164 : f32 to vector<8x32xf32>
    %507 = arith.addf %506, %505 : vector<8x32xf32>
    %508 = arith.mulf %496, %507 : vector<8x32xf32>
    %c0_165 = arith.constant 0 : index
    %c0_166 = arith.constant 0 : index
    %509 = vector.load %arg34[%c0_165, %c0_166] : memref<32x32xbf16, #tpu.memory_space<vmem>>, vector<32x32xbf16>
    %c0_167 = arith.constant 0 : index
    %c0_168 = arith.constant 0 : index
    %510 = vector.load %arg35[%c0_167, %c0_168] : memref<32x32xbf16, #tpu.memory_space<vmem>>, vector<32x32xbf16>
    %c0_169 = arith.constant 0 : index
    %c0_170 = arith.constant 0 : index
    %511 = vector.load %arg36[%c0_169, %c0_170] : memref<32x32xbf16, #tpu.memory_space<vmem>>, vector<32x32xbf16>
    %c0_171 = arith.constant 0 : index
    %c0_172 = arith.constant 0 : index
    %512 = vector.load %arg37[%c0_171, %c0_172] : memref<1x32xf32, #tpu.memory_space<vmem>>, vector<1x32xf32>
    %513 = arith.truncf %488 : vector<8x32xf32> to vector<8x32xbf16>
    %cst_173 = arith.constant dense<0.000000e+00> : vector<8x32xf32>
    %514 = tpu.matmul %513, %510, %cst_173 {dimension_numbers = #tpu.dot_dimension_numbers<[1], [0], [0], [1], [0, 0, 1, 1], [], []>} : vector<8x32xbf16>, vector<32x32xbf16>, vector<8x32xf32> -> vector<8x32xf32>
    %515 = arith.truncf %468 : vector<8x32xf32> to vector<8x32xbf16>
    %cst_174 = arith.constant dense<0.000000e+00> : vector<8x32xf32>
    %516 = tpu.matmul %515, %509, %cst_174 {dimension_numbers = #tpu.dot_dimension_numbers<[1], [0], [0], [1], [0, 0, 1, 1], [], []>} : vector<8x32xbf16>, vector<32x32xbf16>, vector<8x32xf32> -> vector<8x32xf32>
    %517 = arith.addf %516, %514 : vector<8x32xf32>
    %518 = arith.truncf %508 : vector<8x32xf32> to vector<8x32xbf16>
    %cst_175 = arith.constant dense<0.000000e+00> : vector<8x32xf32>
    %519 = tpu.matmul %518, %511, %cst_175 {dimension_numbers = #tpu.dot_dimension_numbers<[1], [0], [0], [1], [0, 0, 1, 1], [], []>} : vector<8x32xbf16>, vector<32x32xbf16>, vector<8x32xf32> -> vector<8x32xf32>
    %520 = arith.addf %517, %519 : vector<8x32xf32>
    %521 = vector.broadcast %512 : vector<1x32xf32> to vector<8x32xf32>
    %522 = arith.addf %520, %521 : vector<8x32xf32>
    %cst_176 = arith.constant 5.000000e-01 : f32
    %523 = vector.broadcast %cst_176 : f32 to vector<8x32xf32>
    %524 = arith.mulf %523, %522 : vector<8x32xf32>
    %cst_177 = arith.constant 0.636619746 : f32
    %525 = math.sqrt %cst_177 : f32
    %cst_178 = arith.constant 4.471500e-02 : f32
    %526 = vector.broadcast %cst_178 : f32 to vector<8x32xf32>
    %527 = arith.mulf %526, %522 : vector<8x32xf32>
    %528 = arith.mulf %527, %522 : vector<8x32xf32>
    %529 = arith.mulf %528, %522 : vector<8x32xf32>
    %530 = arith.addf %522, %529 : vector<8x32xf32>
    %531 = vector.broadcast %525 : f32 to vector<8x32xf32>
    %532 = arith.mulf %531, %530 : vector<8x32xf32>
    %533 = math.tanh %532 : vector<8x32xf32>
    %cst_179 = arith.constant 1.000000e+00 : f32
    %534 = vector.broadcast %cst_179 : f32 to vector<8x32xf32>
    %535 = arith.addf %534, %533 : vector<8x32xf32>
    %536 = arith.mulf %524, %535 : vector<8x32xf32>
    %537 = arith.truncf %508 : vector<8x32xf32> to vector<8x32xbf16>
    %cst_180 = arith.constant dense<0.000000e+00> : vector<8x32xf32>
    %538 = tpu.matmul %537, %509, %cst_180 {dimension_numbers = #tpu.dot_dimension_numbers<[1], [0], [0], [1], [0, 0, 1, 1], [], []>} : vector<8x32xbf16>, vector<32x32xbf16>, vector<8x32xf32> -> vector<8x32xf32>
    %539 = arith.addf %538, %514 : vector<8x32xf32>
    %540 = arith.truncf %468 : vector<8x32xf32> to vector<8x32xbf16>
    %cst_181 = arith.constant dense<0.000000e+00> : vector<8x32xf32>
    %541 = tpu.matmul %540, %511, %cst_181 {dimension_numbers = #tpu.dot_dimension_numbers<[1], [0], [0], [1], [0, 0, 1, 1], [], []>} : vector<8x32xbf16>, vector<32x32xbf16>, vector<8x32xf32> -> vector<8x32xf32>
    %542 = arith.addf %539, %541 : vector<8x32xf32>
    %543 = vector.broadcast %512 : vector<1x32xf32> to vector<8x32xf32>
    %544 = arith.addf %542, %543 : vector<8x32xf32>
    %cst_182 = arith.constant 5.000000e-01 : f32
    %545 = vector.broadcast %cst_182 : f32 to vector<8x32xf32>
    %546 = arith.mulf %545, %544 : vector<8x32xf32>
    %cst_183 = arith.constant 0.636619746 : f32
    %547 = math.sqrt %cst_183 : f32
    %cst_184 = arith.constant 4.471500e-02 : f32
    %548 = vector.broadcast %cst_184 : f32 to vector<8x32xf32>
    %549 = arith.mulf %548, %544 : vector<8x32xf32>
    %550 = arith.mulf %549, %544 : vector<8x32xf32>
    %551 = arith.mulf %550, %544 : vector<8x32xf32>
    %552 = arith.addf %544, %551 : vector<8x32xf32>
    %553 = vector.broadcast %547 : f32 to vector<8x32xf32>
    %554 = arith.mulf %553, %552 : vector<8x32xf32>
    %555 = math.tanh %554 : vector<8x32xf32>
    %cst_185 = arith.constant 1.000000e+00 : f32
    %556 = vector.broadcast %cst_185 : f32 to vector<8x32xf32>
    %557 = arith.addf %556, %555 : vector<8x32xf32>
    %558 = arith.mulf %546, %557 : vector<8x32xf32>
    %559 = vector.extract_strided_slice %536 {offsets = [0, 31], sizes = [8, 1], strides = [1, 1]} : vector<8x32xf32> to vector<8x1xf32>
    %560 = vector.extract_strided_slice %558 {offsets = [0, 31], sizes = [8, 1], strides = [1, 1]} : vector<8x32xf32> to vector<8x1xf32>
    %561 = vector.broadcast %559 : vector<8x1xf32> to vector<8x32xf32>
    %562 = arith.mulf %561, %536 : vector<8x32xf32>
    %563 = arith.addf %31, %562 : vector<8x32xf32>
    %564 = vector.broadcast %560 : vector<8x1xf32> to vector<8x32xf32>
    %565 = arith.mulf %564, %558 : vector<8x32xf32>
    %566 = arith.addf %563, %565 : vector<8x32xf32>
    %567 = arith.addf %566, %1 : vector<8x32xf32>
    %c0_186 = arith.constant 0 : index
    %c0_187 = arith.constant 0 : index
    %568 = vector.load %arg38[%c0_186, %c0_187] : memref<1x32xf32, #tpu.memory_space<vmem>>, vector<1x32xf32>
    %c0_188 = arith.constant 0 : index
    %c0_189 = arith.constant 0 : index
    %569 = vector.load %arg39[%c0_188, %c0_189] : memref<1x32xf32, #tpu.memory_space<vmem>>, vector<1x32xf32>
    %cst_190 = arith.constant dense<0.000000e+00> : vector<8xf32>
    %570 = vector.multi_reduction <add>, %567, %cst_190 [1] : vector<8x32xf32> to vector<8xf32>
    %571 = vector.shape_cast %570 : vector<8xf32> to vector<8x1xf32>
    %cst_191 = arith.constant 3.200000e+01 : f32
    %572 = vector.broadcast %cst_191 : f32 to vector<8x1xf32>
    %573 = arith.divf %571, %572 : vector<8x1xf32>
    %574 = vector.broadcast %573 : vector<8x1xf32> to vector<8x32xf32>
    %575 = arith.subf %567, %574 : vector<8x32xf32>
    %576 = arith.mulf %575, %575 : vector<8x32xf32>
    %cst_192 = arith.constant dense<0.000000e+00> : vector<8xf32>
    %577 = vector.multi_reduction <add>, %576, %cst_192 [1] : vector<8x32xf32> to vector<8xf32>
    %578 = vector.shape_cast %577 : vector<8xf32> to vector<8x1xf32>
    %cst_193 = arith.constant 3.200000e+01 : f32
    %579 = vector.broadcast %cst_193 : f32 to vector<8x1xf32>
    %580 = arith.divf %578, %579 : vector<8x1xf32>
    %581 = vector.broadcast %573 : vector<8x1xf32> to vector<8x32xf32>
    %582 = arith.subf %567, %581 : vector<8x32xf32>
    %cst_194 = arith.constant 9.99999974E-6 : f32
    %583 = vector.broadcast %cst_194 : f32 to vector<8x1xf32>
    %584 = arith.addf %580, %583 : vector<8x1xf32>
    %585 = math.rsqrt %584 : vector<8x1xf32>
    %586 = vector.broadcast %585 : vector<8x1xf32> to vector<8x32xf32>
    %587 = arith.mulf %582, %586 : vector<8x32xf32>
    %588 = vector.broadcast %568 : vector<1x32xf32> to vector<8x32xf32>
    %589 = arith.mulf %587, %588 : vector<8x32xf32>
    %590 = vector.broadcast %569 : vector<1x32xf32> to vector<8x32xf32>
    %591 = arith.addf %589, %590 : vector<8x32xf32>
    %c0_195 = arith.constant 0 : index
    %c0_196 = arith.constant 0 : index
    %592 = vector.load %arg40[%c0_195, %c0_196] : memref<32x128xbf16, #tpu.memory_space<vmem>>, vector<32x128xbf16>
    %593 = arith.truncf %591 : vector<8x32xf32> to vector<8x32xbf16>
    %cst_197 = arith.constant dense<0.000000e+00> : vector<8x128xf32>
    %594 = tpu.matmul %593, %592, %cst_197 {dimension_numbers = #tpu.dot_dimension_numbers<[1], [0], [0], [1], [0, 0, 1, 1], [], []>} : vector<8x32xbf16>, vector<32x128xbf16>, vector<8x128xf32> -> vector<8x128xf32>
    %c0_198 = arith.constant 0 : index
    %c0_199 = arith.constant 0 : index
    %595 = vector.load %arg41[%c0_198, %c0_199] : memref<1x128xf32, #tpu.memory_space<vmem>>, vector<1x128xf32>
    %596 = vector.broadcast %595 : vector<1x128xf32> to vector<8x128xf32>
    %597 = arith.addf %594, %596 : vector<8x128xf32>
    %cst_200 = arith.constant 5.000000e-01 : f32
    %598 = vector.broadcast %cst_200 : f32 to vector<8x128xf32>
    %599 = arith.mulf %598, %597 : vector<8x128xf32>
    %cst_201 = arith.constant 0.636619746 : f32
    %600 = math.sqrt %cst_201 : f32
    %cst_202 = arith.constant 4.471500e-02 : f32
    %601 = vector.broadcast %cst_202 : f32 to vector<8x128xf32>
    %602 = arith.mulf %601, %597 : vector<8x128xf32>
    %603 = arith.mulf %602, %597 : vector<8x128xf32>
    %604 = arith.mulf %603, %597 : vector<8x128xf32>
    %605 = arith.addf %597, %604 : vector<8x128xf32>
    %606 = vector.broadcast %600 : f32 to vector<8x128xf32>
    %607 = arith.mulf %606, %605 : vector<8x128xf32>
    %608 = math.tanh %607 : vector<8x128xf32>
    %cst_203 = arith.constant 1.000000e+00 : f32
    %609 = vector.broadcast %cst_203 : f32 to vector<8x128xf32>
    %610 = arith.addf %609, %608 : vector<8x128xf32>
    %611 = arith.mulf %599, %610 : vector<8x128xf32>
    %c0_204 = arith.constant 0 : index
    %c0_205 = arith.constant 0 : index
    %612 = vector.load %arg42[%c0_204, %c0_205] : memref<128x32xbf16, #tpu.memory_space<vmem>>, vector<128x32xbf16>
    %613 = arith.truncf %611 : vector<8x128xf32> to vector<8x128xbf16>
    %cst_206 = arith.constant dense<0.000000e+00> : vector<8x32xf32>
    %614 = tpu.matmul %613, %612, %cst_206 {dimension_numbers = #tpu.dot_dimension_numbers<[1], [0], [0], [1], [0, 0, 1, 1], [], []>} : vector<8x128xbf16>, vector<128x32xbf16>, vector<8x32xf32> -> vector<8x32xf32>
    %c0_207 = arith.constant 0 : index
    %c0_208 = arith.constant 0 : index
    %615 = vector.load %arg43[%c0_207, %c0_208] : memref<1x32xf32, #tpu.memory_space<vmem>>, vector<1x32xf32>
    %616 = vector.broadcast %615 : vector<1x32xf32> to vector<8x32xf32>
    %617 = arith.addf %614, %616 : vector<8x32xf32>
    %618 = arith.addf %617, %567 : vector<8x32xf32>
    %619 = vector.shape_cast %618 : vector<8x32xf32> to vector<1x8x32xf32>
    %c0_209 = arith.constant 0 : index
    %c0_210 = arith.constant 0 : index
    %c0_211 = arith.constant 0 : index
    %620 = vector.load %arg44[%c0_209, %c0_210, %c0_211] : memref<1x8x32xf32, #tpu.memory_space<vmem>>, vector<1x8x32xf32>
    tpu.vector_store %arg44[%c0_209, %c0_210, %c0_211], %619 {strides = array<i32>} : memref<1x8x32xf32, #tpu.memory_space<vmem>>, vector<1x8x32xf32>,
    return
  }
  func.func @transform_0(%arg0: i32) -> (i32, i32, i32) {
    %c0_i32 = arith.constant 0 : i32
    %c0_i32_0 = arith.constant 0 : i32
    %c0_i32_1 = arith.constant 0 : i32
    return %arg0, %c0_i32, %c0_i32_0 : i32, i32, i32
  }
  func.func @transform_1(%arg0: i32) -> (i32, i32) {
    %c0_i32 = arith.constant 0 : i32
    %c0_i32_0 = arith.constant 0 : i32
    %c0_i32_1 = arith.constant 0 : i32
    return %c0_i32, %c0_i32_0 : i32, i32
  }
  func.func @transform_2(%arg0: i32) -> (i32, i32) {
    %c0_i32 = arith.constant 0 : i32
    %c0_i32_0 = arith.constant 0 : i32
    %c0_i32_1 = arith.constant 0 : i32
    return %c0_i32, %c0_i32_0 : i32, i32
  }
  func.func @transform_3(%arg0: i32) -> (i32, i32) {
    %c0_i32 = arith.constant 0 : i32
    %c0_i32_0 = arith.constant 0 : i32
    %c0_i32_1 = arith.constant 0 : i32
    return %c0_i32, %c0_i32_0 : i32, i32
  }
  func.func @transform_4(%arg0: i32) -> (i32, i32) {
    %c0_i32 = arith.constant 0 : i32
    %c0_i32_0 = arith.constant 0 : i32
    %c0_i32_1 = arith.constant 0 : i32
    return %c0_i32, %c0_i32_0 : i32, i32
  }
  func.func @transform_5(%arg0: i32) -> (i32, i32) {
    %c0_i32 = arith.constant 0 : i32
    %c0_i32_0 = arith.constant 0 : i32
    %c0_i32_1 = arith.constant 0 : i32
    return %c0_i32, %c0_i32_0 : i32, i32
  }
  func.func @transform_6(%arg0: i32) -> (i32, i32) {
    %c0_i32 = arith.constant 0 : i32
    %c0_i32_0 = arith.constant 0 : i32
    %c0_i32_1 = arith.constant 0 : i32
    return %c0_i32, %c0_i32_0 : i32, i32
  }
  func.func @transform_7(%arg0: i32) -> (i32, i32) {
    %c0_i32 = arith.constant 0 : i32
    %c0_i32_0 = arith.constant 0 : i32
    %c0_i32_1 = arith.constant 0 : i32
    return %c0_i32, %c0_i32_0 : i32, i32
  }
  func.func @transform_8(%arg0: i32) -> (i32, i32) {
    %c0_i32 = arith.constant 0 : i32
    %c0_i32_0 = arith.constant 0 : i32
    %c0_i32_1 = arith.constant 0 : i32
    return %c0_i32, %c0_i32_0 : i32, i32
  }
  func.func @transform_9(%arg0: i32) -> (i32, i32, i32) {
    %c0_i32 = arith.constant 0 : i32
    %c0_i32_0 = arith.constant 0 : i32
    %c0_i32_1 = arith.constant 0 : i32
    %c0_i32_2 = arith.constant 0 : i32
    return %c0_i32, %c0_i32_0, %c0_i32_1 : i32, i32, i32
  }
  func.func @transform_10(%arg0: i32) -> (i32, i32) {
    %c0_i32 = arith.constant 0 : i32
    %c0_i32_0 = arith.constant 0 : i32
    %c0_i32_1 = arith.constant 0 : i32
    return %c0_i32, %c0_i32_0 : i32, i32
  }
  func.func @transform_11(%arg0: i32) -> (i32, i32) {
    %c0_i32 = arith.constant 0 : i32
    %c0_i32_0 = arith.constant 0 : i32
    %c0_i32_1 = arith.constant 0 : i32
    return %c0_i32, %c0_i32_0 : i32, i32
  }
  func.func @transform_12(%arg0: i32) -> (i32, i32) {
    %c0_i32 = arith.constant 0 : i32
    %c0_i32_0 = arith.constant 0 : i32
    %c0_i32_1 = arith.constant 0 : i32
    return %c0_i32, %c0_i32_0 : i32, i32
  }
  func.func @transform_13(%arg0: i32) -> (i32, i32) {
    %c0_i32 = arith.constant 0 : i32
    %c0_i32_0 = arith.constant 0 : i32
    %c0_i32_1 = arith.constant 0 : i32
    return %c0_i32, %c0_i32_0 : i32, i32
  }
  func.func @transform_14(%arg0: i32) -> (i32, i32) {
    %c0_i32 = arith.constant 0 : i32
    %c0_i32_0 = arith.constant 0 : i32
    %c0_i32_1 = arith.constant 0 : i32
    return %c0_i32, %c0_i32_0 : i32, i32
  }
  func.func @transform_15(%arg0: i32) -> (i32, i32) {
    %c0_i32 = arith.constant 0 : i32
    %c0_i32_0 = arith.constant 0 : i32
    %c0_i32_1 = arith.constant 0 : i32
    return %c0_i32, %c0_i32_0 : i32, i32
  }
  func.func @transform_16(%arg0: i32) -> (i32, i32) {
    %c0_i32 = arith.constant 0 : i32
    %c0_i32_0 = arith.constant 0 : i32
    %c0_i32_1 = arith.constant 0 : i32
    return %c0_i32, %c0_i32_0 : i32, i32
  }
  func.func @transform_17(%arg0: i32) -> (i32, i32, i32) {
    %c0_i32 = arith.constant 0 : i32
    %c0_i32_0 = arith.constant 0 : i32
    %c0_i32_1 = arith.constant 0 : i32
    %c0_i32_2 = arith.constant 0 : i32
    return %c0_i32, %c0_i32_0, %c0_i32_1 : i32, i32, i32
  }
  func.func @transform_18(%arg0: i32) -> (i32, i32) {
    %c0_i32 = arith.constant 0 : i32
    %c0_i32_0 = arith.constant 0 : i32
    %c0_i32_1 = arith.constant 0 : i32
    return %c0_i32, %c0_i32_0 : i32, i32
  }
  func.func @transform_19(%arg0: i32) -> (i32, i32) {
    %c0_i32 = arith.constant 0 : i32
    %c0_i32_0 = arith.constant 0 : i32
    %c0_i32_1 = arith.constant 0 : i32
    return %c0_i32, %c0_i32_0 : i32, i32
  }
  func.func @transform_20(%arg0: i32) -> (i32, i32) {
    %c0_i32 = arith.constant 0 : i32
    %c0_i32_0 = arith.constant 0 : i32
    %c0_i32_1 = arith.constant 0 : i32
    return %c0_i32, %c0_i32_0 : i32, i32
  }
  func.func @transform_21(%arg0: i32) -> (i32, i32) {
    %c0_i32 = arith.constant 0 : i32
    %c0_i32_0 = arith.constant 0 : i32
    %c0_i32_1 = arith.constant 0 : i32
    return %c0_i32, %c0_i32_0 : i32, i32
  }
  func.func @transform_22(%arg0: i32) -> (i32, i32) {
    %c0_i32 = arith.constant 0 : i32
    %c0_i32_0 = arith.constant 0 : i32
    %c0_i32_1 = arith.constant 0 : i32
    return %c0_i32, %c0_i32_0 : i32, i32
  }
  func.func @transform_23(%arg0: i32) -> (i32, i32) {
    %c0_i32 = arith.constant 0 : i32
    %c0_i32_0 = arith.constant 0 : i32
    %c0_i32_1 = arith.constant 0 : i32
    return %c0_i32, %c0_i32_0 : i32, i32
  }
  func.func @transform_24(%arg0: i32) -> (i32, i32) {
    %c0_i32 = arith.constant 0 : i32
    %c0_i32_0 = arith.constant 0 : i32
    %c0_i32_1 = arith.constant 0 : i32
    return %c0_i32, %c0_i32_0 : i32, i32
  }
  func.func @transform_25(%arg0: i32) -> (i32, i32, i32) {
    %c0_i32 = arith.constant 0 : i32
    %c0_i32_0 = arith.constant 0 : i32
    %c0_i32_1 = arith.constant 0 : i32
    %c0_i32_2 = arith.constant 0 : i32
    return %c0_i32, %c0_i32_0, %c0_i32_1 : i32, i32, i32
  }
  func.func @transform_26(%arg0: i32) -> (i32, i32) {
    %c0_i32 = arith.constant 0 : i32
    %c0_i32_0 = arith.constant 0 : i32
    %c0_i32_1 = arith.constant 0 : i32
    return %c0_i32, %c0_i32_0 : i32, i32
  }
  func.func @transform_27(%arg0: i32) -> (i32, i32) {
    %c0_i32 = arith.constant 0 : i32
    %c0_i32_0 = arith.constant 0 : i32
    %c0_i32_1 = arith.constant 0 : i32
    return %c0_i32, %c0_i32_0 : i32, i32
  }
  func.func @transform_28(%arg0: i32) -> (i32, i32) {
    %c0_i32 = arith.constant 0 : i32
    %c0_i32_0 = arith.constant 0 : i32
    %c0_i32_1 = arith.constant 0 : i32
    return %c0_i32, %c0_i32_0 : i32, i32
  }
  func.func @transform_29(%arg0: i32) -> (i32, i32) {
    %c0_i32 = arith.constant 0 : i32
    %c0_i32_0 = arith.constant 0 : i32
    %c0_i32_1 = arith.constant 0 : i32
    return %c0_i32, %c0_i32_0 : i32, i32
  }
  func.func @transform_30(%arg0: i32) -> (i32, i32) {
    %c0_i32 = arith.constant 0 : i32
    %c0_i32_0 = arith.constant 0 : i32
    %c0_i32_1 = arith.constant 0 : i32
    return %c0_i32, %c0_i32_0 : i32, i32
  }
  func.func @transform_31(%arg0: i32) -> (i32, i32) {
    %c0_i32 = arith.constant 0 : i32
    %c0_i32_0 = arith.constant 0 : i32
    %c0_i32_1 = arith.constant 0 : i32
    return %c0_i32, %c0_i32_0 : i32, i32
  }
  func.func @transform_32(%arg0: i32) -> (i32, i32) {
    %c0_i32 = arith.constant 0 : i32
    %c0_i32_0 = arith.constant 0 : i32
    %c0_i32_1 = arith.constant 0 : i32
    return %c0_i32, %c0_i32_0 : i32, i32
  }
  func.func @transform_33(%arg0: i32) -> (i32, i32) {
    %c0_i32 = arith.constant 0 : i32
    %c0_i32_0 = arith.constant 0 : i32
    %c0_i32_1 = arith.constant 0 : i32
    return %c0_i32, %c0_i32_0 : i32, i32
  }
  func.func @transform_34(%arg0: i32) -> (i32, i32) {
    %c0_i32 = arith.constant 0 : i32
    %c0_i32_0 = arith.constant 0 : i32
    %c0_i32_1 = arith.constant 0 : i32
    return %c0_i32, %c0_i32_0 : i32, i32
  }
  func.func @transform_35(%arg0: i32) -> (i32, i32) {
    %c0_i32 = arith.constant 0 : i32
    %c0_i32_0 = arith.constant 0 : i32
    %c0_i32_1 = arith.constant 0 : i32
    return %c0_i32, %c0_i32_0 : i32, i32
  }
  func.func @transform_36(%arg0: i32) -> (i32, i32) {
    %c0_i32 = arith.constant 0 : i32
    %c0_i32_0 = arith.constant 0 : i32
    %c0_i32_1 = arith.constant 0 : i32
    return %c0_i32, %c0_i32_0 : i32, i32
  }
  func.func @transform_37(%arg0: i32) -> (i32, i32) {
    %c0_i32 = arith.constant 0 : i32
    %c0_i32_0 = arith.constant 0 : i32
    %c0_i32_1 = arith.constant 0 : i32
    return %c0_i32, %c0_i32_0 : i32, i32
  }
  func.func @transform_38(%arg0: i32) -> (i32, i32) {
    %c0_i32 = arith.constant 0 : i32
    %c0_i32_0 = arith.constant 0 : i32
    %c0_i32_1 = arith.constant 0 : i32
    return %c0_i32, %c0_i32_0 : i32, i32
  }
  func.func @transform_39(%arg0: i32) -> (i32, i32) {
    %c0_i32 = arith.constant 0 : i32
    %c0_i32_0 = arith.constant 0 : i32
    %c0_i32_1 = arith.constant 0 : i32
    return %c0_i32, %c0_i32_0 : i32, i32
  }
  func.func @transform_40(%arg0: i32) -> (i32, i32) {
    %c0_i32 = arith.constant 0 : i32
    %c0_i32_0 = arith.constant 0 : i32
    %c0_i32_1 = arith.constant 0 : i32
    return %c0_i32, %c0_i32_0 : i32, i32
  }
  func.func @transform_41(%arg0: i32) -> (i32, i32) {
    %c0_i32 = arith.constant 0 : i32
    %c0_i32_0 = arith.constant 0 : i32
    %c0_i32_1 = arith.constant 0 : i32
    return %c0_i32, %c0_i32_0 : i32, i32
  }
  func.func @transform_42(%arg0: i32) -> (i32, i32) {
    %c0_i32 = arith.constant 0 : i32
    %c0_i32_0 = arith.constant 0 : i32
    %c0_i32_1 = arith.constant 0 : i32
    return %c0_i32, %c0_i32_0 : i32, i32
  }
  func.func @transform_43(%arg0: i32) -> (i32, i32, i32) {
    %c0_i32 = arith.constant 0 : i32
    %c0_i32_0 = arith.constant 0 : i32
    %c0_i32_1 = arith.constant 0 : i32
    return %arg0, %c0_i32, %c0_i32_0 : i32, i32, i32
  }
}

</mosaic_0001>

<llo_original>
// kernel: tpu_custom_call.1
$region0: #{tpu_custom_call.1}
  #allocation0 [shape = 'u32[]', space=smem, size = 0x4, offset = 0x4, fixed_abs, tag = 'smem constant byte address 0x4 - core index']
  #allocation1 [shape = 'u32[144,128]{1,0:T(1,128)}', space=vmem, size = 0x12000, scoped, tag = 'internal scratch']
  %s0 = inlined_call_operand.smem [shape: u32[44], index: -1, kind: input, shape index: {}]
  %s1 = sld [smem:[%s0]]
  %s2 = scalar_lea.smem %s0, 1
  %s3 = sld [smem:[%s2]]
  %s4 = scalar_lea.smem %s0, 2
  %s5 = sld [smem:[%s4]]
  %s6 = scalar_lea.smem %s0, 3
  %s7 = sld [smem:[%s6]]
  %s8 = scalar_lea.smem %s0, 4
  %s9 = sld [smem:[%s8]]
  %s10 = scalar_lea.smem %s0, 5
  %s11 = sld [smem:[%s10]]
  %s12 = scalar_lea.smem %s0, 6
  %s13 = sld [smem:[%s12]]
  %s14 = scalar_lea.smem %s0, 7
  %s15 = sld [smem:[%s14]]
  %s16 = scalar_lea.smem %s0, 8
  %s17 = sld [smem:[%s16]]
  %s18 = scalar_lea.smem %s0, 9
  %s19 = sld [smem:[%s18]]
  %s20 = scalar_lea.smem %s0, 10
  %s21 = sld [smem:[%s20]]
  %s22 = scalar_lea.smem %s0, 11
  %s23 = sld [smem:[%s22]]
  %s24 = scalar_lea.smem %s0, 12
  %s25 = sld [smem:[%s24]]
  %s26 = scalar_lea.smem %s0, 13
  %s27 = sld [smem:[%s26]]
  %s28 = scalar_lea.smem %s0, 14
  %s29 = sld [smem:[%s28]]
  %s30 = scalar_lea.smem %s0, 15
  %s31 = sld [smem:[%s30]]
  %s32 = scalar_lea.smem %s0, 16
  %s33 = sld [smem:[%s32]]
  %s34 = scalar_lea.smem %s0, 17
  %s35 = sld [smem:[%s34]]
  %s36 = scalar_lea.smem %s0, 18
  %s37 = sld [smem:[%s36]]
  %s38 = scalar_lea.smem %s0, 19
  %s39 = sld [smem:[%s38]]
  %s40 = scalar_lea.smem %s0, 20
  %s41 = sld [smem:[%s40]]
  %s42 = scalar_lea.smem %s0, 21
  %s43 = sld [smem:[%s42]]
  %s44 = scalar_lea.smem %s0, 22
  %s45 = sld [smem:[%s44]]
  %s46 = scalar_lea.smem %s0, 23
  %s47 = sld [smem:[%s46]]
  %s48 = scalar_lea.smem %s0, 24
  %s49 = sld [smem:[%s48]]
  %s50 = scalar_lea.smem %s0, 25
  %s51 = sld [smem:[%s50]]
  %s52 = scalar_lea.smem %s0, 26
  %s53 = sld [smem:[%s52]]
  %s54 = scalar_lea.smem %s0, 27
  %s55 = sld [smem:[%s54]]
  %s56 = scalar_lea.smem %s0, 28
  %s57 = sld [smem:[%s56]]
  %s58 = scalar_lea.smem %s0, 29
  %s59 = sld [smem:[%s58]]
  %s60 = scalar_lea.smem %s0, 30
  %s61 = sld [smem:[%s60]]
  %s62 = scalar_lea.smem %s0, 31
  %s63 = sld [smem:[%s62]]
  %s64 = scalar_lea.smem %s0, 32
  %s65 = sld [smem:[%s64]]
  %s66 = scalar_lea.smem %s0, 33
  %s67 = sld [smem:[%s66]]
  %s68 = scalar_lea.smem %s0, 34
  %s69 = sld [smem:[%s68]]
  %s70 = scalar_lea.smem %s0, 35
  %s71 = sld [smem:[%s70]]
  %s72 = scalar_lea.smem %s0, 36
  %s73 = sld [smem:[%s72]]
  %s74 = scalar_lea.smem %s0, 37
  %s75 = sld [smem:[%s74]]
  %s76 = scalar_lea.smem %s0, 38
  %s77 = sld [smem:[%s76]]
  %s78 = scalar_lea.smem %s0, 39
  %s79 = sld [smem:[%s78]]
  %s80 = scalar_lea.smem %s0, 40
  %s81 = sld [smem:[%s80]]
  %s82 = scalar_lea.smem %s0, 41
  %s83 = sld [smem:[%s82]]
  %s84 = scalar_lea.smem %s0, 42
  %s85 = sld [smem:[%s84]]
  %s86 = scalar_lea.smem %s0, 43
  %s87 = sld [smem:[%s86]]
  %s88 = sld [smem:[#allocation0]]
  $region321: #{tpu_custom_call.1} parent=0
    _
  %s90 = ssub.s32 1, %s88
  %s91 = scalar_select 0, %s90, %s88
  $region1: #{tpu_custom_call.1} parent=0
    #allocation2 [shape = 'u8[512]{0}', space=vmem, size = 0x400, scoped, tag = 'input window, operand 1, single buffered']
    #allocation3 [shape = 's32[2]{0}', space=sflag, size = 0x8, scoped, tag = 'scoped memory for tpu_custom_call.1']
    #allocation4 [shape = 's32[2]{0}', space=sflag, size = 0x8, scoped, tag = 'scoped memory for tpu_custom_call.1']
    #allocation5 [shape = 'u8[512]{0}', space=vmem, size = 0x400, scoped, tag = 'input window, operand 2, single buffered']
    #allocation6 [shape = 's32[1]{0}', space=sflag, size = 0x4, scoped, tag = 'scoped memory for tpu_custom_call.1']
    #allocation7 [shape = 'u8[512]{0}', space=vmem, size = 0x400, scoped, tag = 'input window, operand 6, single buffered']
    #allocation8 [shape = 'u8[512]{0}', space=vmem, size = 0x400, scoped, tag = 'input window, operand 7, single buffered']
    #allocation9 [shape = 's32[1]{0}', space=sflag, size = 0x4, scoped, tag = 'scoped memory for tpu_custom_call.1']
    #allocation10 [shape = 'u8[512]{0}', space=vmem, size = 0x400, scoped, tag = 'input window, operand 8, single buffered']
    #allocation11 [shape = 'u8[512]{0}', space=vmem, size = 0x400, scoped, tag = 'input window, operand 10, single buffered']
    #allocation12 [shape = 's32[1]{0}', space=sflag, size = 0x4, scoped, tag = 'scoped memory for tpu_custom_call.1']
    #allocation13 [shape = 'u8[8192]{0}', space=vmem, size = 0x2000, scoped, tag = 'input window, operand 12, single buffered']
    #allocation14 [shape = 'u8[8192]{0}', space=vmem, size = 0x2000, scoped, tag = 'input window, operand 13, single buffered']
    #allocation15 [shape = 's32[1]{0}', space=sflag, size = 0x4, scoped, tag = 'scoped memory for tpu_custom_call.1']
    #allocation16 [shape = 'u8[512]{0}', space=vmem, size = 0x400, scoped, tag = 'input window, operand 14, single buffered']
    #allocation17 [shape = 'u8[512]{0}', space=vmem, size = 0x400, scoped, tag = 'input window, operand 15, single buffered']
    #allocation18 [shape = 's32[1]{0}', space=sflag, size = 0x4, scoped, tag = 'scoped memory for tpu_custom_call.1']
    #allocation19 [shape = 'u8[512]{0}', space=vmem, size = 0x400, scoped, tag = 'input window, operand 16, single buffered']
    #allocation20 [shape = 'u8[8192]{0}', space=vmem, size = 0x2000, scoped, tag = 'input window, operand 17, single buffered']
    #allocation21 [shape = 's32[1]{0}', space=sflag, size = 0x4, scoped, tag = 'scoped memory for tpu_custom_call.1']
    #allocation22 [shape = 'u8[512]{0}', space=vmem, size = 0x400, scoped, tag = 'input window, operand 18, single buffered']
    #allocation23 [shape = 'u8[8192]{0}', space=vmem, size = 0x2000, scoped, tag = 'input window, operand 19, single buffered']
    #allocation24 [shape = 's32[1]{0}', space=sflag, size = 0x4, scoped, tag = 'scoped memory for tpu_custom_call.1']
    #allocation25 [shape = 'u8[8192]{0}', space=vmem, size = 0x2000, scoped, tag = 'input window, operand 20, single buffered']
    #allocation26 [shape = 'u8[8192]{0}', space=vmem, size = 0x2000, scoped, tag = 'input window, operand 21, single buffered']
    #allocation27 [shape = 's32[1]{0}', space=sflag, size = 0x4, scoped, tag = 'scoped memory for tpu_custom_call.1']
    #allocation28 [shape = 'u8[512]{0}', space=vmem, size = 0x400, scoped, tag = 'input window, operand 23, single buffered']
    #allocation29 [shape = 'u8[512]{0}', space=vmem, size = 0x400, scoped, tag = 'input window, operand 24, single buffered']
    #allocation30 [shape = 's32[1]{0}', space=sflag, size = 0x4, scoped, tag = 'scoped memory for tpu_custom_call.1']
    #allocation31 [shape = 'u8[8192]{0}', space=vmem, size = 0x2000, scoped, tag = 'input window, operand 25, single buffered']
    #allocation32 [shape = 'u8[512]{0}', space=vmem, size = 0x400, scoped, tag = 'input window, operand 26, single buffered']
    #allocation33 [shape = 's32[1]{0}', space=sflag, size = 0x4, scoped, tag = 'scoped memory for tpu_custom_call.1']
    #allocation34 [shape = 'u8[512]{0}', space=vmem, size = 0x400, scoped, tag = 'input window, operand 28, single buffered']
    #allocation35 [shape = 'u8[8192]{0}', space=vmem, size = 0x2000, scoped, tag = 'input window, operand 29, single buffered']
    #allocation36 [shape = 's32[1]{0}', space=sflag, size = 0x4, scoped, tag = 'scoped memory for tpu_custom_call.1']
    #allocation37 [shape = 'u8[512]{0}', space=vmem, size = 0x400, scoped, tag = 'input window, operand 30, single buffered']
    #allocation38 [shape = 'u8[8192]{0}', space=vmem, size = 0x2000, scoped, tag = 'input window, operand 31, single buffered']
    #allocation39 [shape = 's32[1]{0}', space=sflag, size = 0x4, scoped, tag = 'scoped memory for tpu_custom_call.1']
    #allocation40 [shape = 'u8[512]{0}', space=vmem, size = 0x400, scoped, tag = 'input window, operand 32, single buffered']
    #allocation41 [shape = 'u8[8192]{0}', space=vmem, size = 0x2000, scoped, tag = 'input window, operand 33, single buffered']
    #allocation42 [shape = 's32[1]{0}', space=sflag, size = 0x4, scoped, tag = 'scoped memory for tpu_custom_call.1']
    #allocation43 [shape = 'u8[8192]{0}', space=vmem, size = 0x2000, scoped, tag = 'input window, operand 34, single buffered']
    #allocation44 [shape = 'u8[8192]{0}', space=vmem, size = 0x2000, scoped, tag = 'input window, operand 35, single buffered']
    #allocation45 [shape = 's32[1]{0}', space=sflag, size = 0x4, scoped, tag = 'scoped memory for tpu_custom_call.1']
    #allocation46 [shape = 'u8[512]{0}', space=vmem, size = 0x400, scoped, tag = 'input window, operand 36, single buffered']
    #allocation47 [shape = 'u8[8192]{0}', space=vmem, size = 0x2000, scoped, tag = 'output window, operand 0']
    %92 = vsyncpa [#allocation3], 0
    %93 = vsyncpa [#allocation6], 0
    %94 = vsyncpa [#allocation9], 0
    %95 = vsyncpa [#allocation12], 0
    %96 = vsyncpa [#allocation15], 0
    %97 = vsyncpa [#allocation18], 0
    %98 = vsyncpa [#allocation21], 0
    %99 = vsyncpa [#allocation24], 0
    %100 = vsyncpa [#allocation27], 0
    %101 = vsyncpa [#allocation30], 0
    %102 = vsyncpa [#allocation33], 0
    %103 = vsyncpa [#allocation36], 0
    %104 = vsyncpa [#allocation39], 0
    %105 = vsyncpa [#allocation42], 0
    %106 = vsyncpa [#allocation45], 0
    %107 = vsyncpa [#allocation4], 0
    %s108 = scalar_lea.sflag [#allocation4], 1
    %109 = vsyncpa %s108, 0
    loop: start=0, step=1, limit=4
    $region2: #{tpu_custom_call.1} parent=1 // loop_pre_header
      _
    $region3: #{tpu_custom_call.1} parent=1 // loop_header
      %s111 = sphi 0, %s115
      %p112 = scmp.ge.s32.totalorder %s111, 4
      %s121 = sphi 0, %s123
      %s124 = sphi 0, %s121
      %s125 = sphi 0, %s124
      %s141 = sphi 0, %s125
      %s145 = sphi 0, %s145
      %s147 = sphi 0, %s145
      %s148 = sphi 0, %s147
      %s162 = sphi 0, %s148
      %s166 = sphi 0, %s166
      %s168 = sphi 0, %s166
      %s169 = sphi 0, %s168
      %s183 = sphi 0, %s169
      %s187 = sphi 0, %s187
      %s189 = sphi 0, %s187
      %s190 = sphi 0, %s189
      %s204 = sphi 0, %s190
      %s208 = sphi 0, %s208
      %s210 = sphi 0, %s208
      %s211 = sphi 0, %s210
      %s225 = sphi 0, %s211
      %s229 = sphi 0, %s229
      %s231 = sphi 0, %s229
      %s232 = sphi 0, %s231
      %s246 = sphi 0, %s232
      %s250 = sphi 0, %s250
      %s252 = sphi 0, %s250
      %s253 = sphi 0, %s252
      %s267 = sphi 0, %s253
      %s271 = sphi 0, %s271
      %s273 = sphi 0, %s271
      %s274 = sphi 0, %s273
      %s288 = sphi 0, %s274
      %s292 = sphi 0, %s292
      %s294 = sphi 0, %s292
      %s295 = sphi 0, %s294
      %s309 = sphi 0, %s295
      %s313 = sphi 0, %s313
      %s315 = sphi 0, %s313
      %s316 = sphi 0, %s315
      %s330 = sphi 0, %s316
      %s334 = sphi 0, %s334
      %s336 = sphi 0, %s334
      %s337 = sphi 0, %s336
      %s351 = sphi 0, %s337
      %s355 = sphi 0, %s355
      %s357 = sphi 0, %s355
      %s358 = sphi 0, %s357
      %s372 = sphi 0, %s358
      %s376 = sphi 0, %s376
      %s378 = sphi 0, %s376
      %s379 = sphi 0, %s378
      %s393 = sphi 0, %s379
      %s397 = sphi 0, %s397
      %s399 = sphi 0, %s397
      %s400 = sphi 0, %s399
      %s414 = sphi 0, %s400
      %s418 = sphi 0, %s418
      %s420 = sphi 0, %s418
      %s421 = sphi 0, %s420
      %s435 = sphi 0, %s421
      %s439 = sphi 0, %s439
      %s441 = sphi 0, %s439
      %s442 = sphi 0, %s441
      %s456 = sphi 0, %s442
      %s460 = sphi 0, %s460
      %s462 = sphi 0, %s460
      %s463 = sphi 0, %s462
      %s477 = sphi 0, %s463
      %s481 = sphi 0, %s481
      %s483 = sphi 0, %s481
      %s484 = sphi 0, %s483
      %s498 = sphi 0, %s484
      %s502 = sphi 0, %s502
      %s504 = sphi 0, %s502
      %s505 = sphi 0, %s504
      %s519 = sphi 0, %s505
      %s523 = sphi 0, %s523
      %s525 = sphi 0, %s523
      %s526 = sphi 0, %s525
      %s540 = sphi 0, %s526
      %s544 = sphi 0, %s544
      %s546 = sphi 0, %s544
      %s547 = sphi 0, %s546
      %s561 = sphi 0, %s547
      %s565 = sphi 0, %s565
      %s567 = sphi 0, %s565
      %s568 = sphi 0, %s567
      %s582 = sphi 0, %s568
      %s586 = sphi 0, %s586
      %s588 = sphi 0, %s586
      %s589 = sphi 0, %s588
      %s603 = sphi 0, %s589
      %s607 = sphi 0, %s607
      %s609 = sphi 0, %s607
      %s610 = sphi 0, %s609
      %s624 = sphi 0, %s610
      %s628 = sphi 0, %s628
      %s630 = sphi 0, %s628
      %s631 = sphi 0, %s630
      %s645 = sphi 0, %s631
      %s649 = sphi 0, %s649
      %s651 = sphi 0, %s649
      %s652 = sphi 0, %s651
      %s666 = sphi 0, %s652
      %s670 = sphi 0, %s670
      %s672 = sphi 0, %s670
      %s673 = sphi 0, %s672
      %s687 = sphi 0, %s673
      %s691 = sphi 0, %s691
      %s693 = sphi 0, %s691
      %s694 = sphi 0, %s693
      %s708 = sphi 0, %s694
      %s712 = sphi 0, %s712
      %s714 = sphi 0, %s712
      %s715 = sphi 0, %s714
      %s729 = sphi 0, %s715
      %s733 = sphi 0, %s733
      %s735 = sphi 0, %s733
      %s736 = sphi 0, %s735
      %s750 = sphi 0, %s736
      %s754 = sphi 0, %s754
      %s756 = sphi 0, %s754
      %s757 = sphi 0, %s756
      %s771 = sphi 0, %s757
      %s775 = sphi 0, %s775
      %s777 = sphi 0, %s775
      %s778 = sphi 0, %s777
      %s792 = sphi 0, %s778
      %s796 = sphi 0, %s796
      %s798 = sphi 0, %s796
      %s799 = sphi 0, %s798
      %s813 = sphi 0, %s799
      %s817 = sphi 0, %s817
      %s819 = sphi 0, %s817
      %s820 = sphi 0, %s819
      %s834 = sphi 0, %s820
      %s838 = sphi 0, %s838
      %s840 = sphi 0, %s838
      %s841 = sphi 0, %s840
      %s855 = sphi 0, %s841
      %s859 = sphi 0, %s859
      %s861 = sphi 0, %s859
      %s862 = sphi 0, %s861
      %s876 = sphi 0, %s862
      %s880 = sphi 0, %s880
      %s882 = sphi 0, %s880
      %s883 = sphi 0, %s882
      %s897 = sphi 0, %s883
      %s901 = sphi 0, %s901
      %s903 = sphi 0, %s901
      %s904 = sphi 0, %s903
      %s918 = sphi 0, %s904
      %s922 = sphi 0, %s922
      %s924 = sphi 0, %s922
      %s925 = sphi 0, %s924
      %s939 = sphi 0, %s925
      %s943 = sphi 0, %s943
      %s945 = sphi 0, %s943
      %s946 = sphi 0, %s945
      %s960 = sphi 0, %s946
      %s964 = sphi 0, %s964
      %s966 = sphi 0, %s964
      %s967 = sphi 0, %s966
      %s981 = sphi 0, %s967
      %s985 = sphi 0, %s985
      %s987 = sphi 0, %s985
      %s988 = sphi 0, %s987
      %s1002 = sphi 0, %s988
      %s1006 = sphi 0, %s1006
      %s1008 = sphi 0, %s1006
      %s1009 = sphi 0, %s1008
      %s1023 = sphi 0, %s1009
      %s1029 = sphi 0, %s1031
      %s1032 = sphi 0, %s1029
      %s1033 = sphi 0, %s1032
      %s1049 = sphi 0, %s1033
    $region4: #{tpu_custom_call.1} parent=1 // loop_header_branch
      %114 = sbr.rel (%p112) target = $region8
    $region5: #{tpu_custom_call.1} parent=1 // loop_body
      %s116 = ssub.s32 %s111, 1
      %s117 = ssub.s32 %s111, 2
      %s118 = sadd.s32 %s111, 1
      %s119 = ssub.s32 %s111, %s118
      %p120 = scmp.eq.s32.totalorder %s119, 0
      %s122 = sadd.s32 %s121, 1
      %s123 = scalar_select %p120, %s121, %s122
      %p126 = pneg %p120
      %p127 = scmp.eq.s32.totalorder %s111, 1
      %p128 = por %p126, %p127
      %p129 = scmp.ne.s32.totalorder %s121, %s124
      %p130 = scmp.eq.s32.totalorder %s111, 0
      %p131 = por %p129, %p130
      %p132 = scmp.ne.s32.totalorder %s121, %s124
      %p133 = scmp.eq.s32.totalorder %s116, 1
      %p134 = por %p132, %p133
      %p135 = scmp.ne.s32.totalorder %s124, %s125
      %p136 = scmp.eq.s32.totalorder %s116, 0
      %p137 = por %p135, %p136
      %p138 = scmp.ne.s32.totalorder %s124, %s125
      %p139 = scmp.eq.s32.totalorder %s117, 1
      %p140 = por %p138, %p139
      %p142 = scmp.ne.s32.totalorder %s125, %s141
      %p143 = scmp.eq.s32.totalorder %s117, 0
      %p144 = por %p142, %p143
      %s146 = sadd.s32 %s145, 1
      %p149 = scmp.eq.s32.totalorder %s111, 1
      %p150 = scmp.ne.s32.totalorder %s145, %s147
      %p151 = scmp.eq.s32.totalorder %s111, 0
      %p152 = por %p150, %p151
      %p153 = scmp.ne.s32.totalorder %s145, %s147
      %p154 = scmp.eq.s32.totalorder %s116, 1
      %p155 = por %p153, %p154
      %p156 = scmp.ne.s32.totalorder %s147, %s148
      %p157 = scmp.eq.s32.totalorder %s116, 0
      %p158 = por %p156, %p157
      %p159 = scmp.ne.s32.totalorder %s147, %s148
      %p160 = scmp.eq.s32.totalorder %s117, 1
      %p161 = por %p159, %p160
      %p163 = scmp.ne.s32.totalorder %s148, %s162
      %p164 = scmp.eq.s32.totalorder %s117, 0
      %p165 = por %p163, %p164
      %s167 = sadd.s32 %s166, 1
      %p170 = scmp.eq.s32.totalorder %s111, 1
      %p171 = scmp.ne.s32.totalorder %s166, %s168
      %p172 = scmp.eq.s32.totalorder %s111, 0
      %p173 = por %p171, %p172
      %p174 = scmp.ne.s32.totalorder %s166, %s168
      %p175 = scmp.eq.s32.totalorder %s116, 1
      %p176 = por %p174, %p175
      %p177 = scmp.ne.s32.totalorder %s168, %s169
      %p178 = scmp.eq.s32.totalorder %s116, 0
      %p179 = por %p177, %p178
      %p180 = scmp.ne.s32.totalorder %s168, %s169
      %p181 = scmp.eq.s32.totalorder %s117, 1
      %p182 = por %p180, %p181
      %p184 = scmp.ne.s32.totalorder %s169, %s183
      %p185 = scmp.eq.s32.totalorder %s117, 0
      %p186 = por %p184, %p185
      %s188 = sadd.s32 %s187, 1
      %p191 = scmp.eq.s32.totalorder %s111, 1
      %p192 = scmp.ne.s32.totalorder %s187, %s189
      %p193 = scmp.eq.s32.totalorder %s111, 0
      %p194 = por %p192, %p193
      %p195 = scmp.ne.s32.totalorder %s187, %s189
      %p196 = scmp.eq.s32.totalorder %s116, 1
      %p197 = por %p195, %p196
      %p198 = scmp.ne.s32.totalorder %s189, %s190
      %p199 = scmp.eq.s32.totalorder %s116, 0
      %p200 = por %p198, %p199
      %p201 = scmp.ne.s32.totalorder %s189, %s190
      %p202 = scmp.eq.s32.totalorder %s117, 1
      %p203 = por %p201, %p202
      %p205 = scmp.ne.s32.totalorder %s190, %s204
      %p206 = scmp.eq.s32.totalorder %s117, 0
      %p207 = por %p205, %p206
      %s209 = sadd.s32 %s208, 1
      %p212 = scmp.eq.s32.totalorder %s111, 1
      %p213 = scmp.ne.s32.totalorder %s208, %s210
      %p214 = scmp.eq.s32.totalorder %s111, 0
      %p215 = por %p213, %p214
      %p216 = scmp.ne.s32.totalorder %s208, %s210
      %p217 = scmp.eq.s32.totalorder %s116, 1
      %p218 = por %p216, %p217
      %p219 = scmp.ne.s32.totalorder %s210, %s211
      %p220 = scmp.eq.s32.totalorder %s116, 0
      %p221 = por %p219, %p220
      %p222 = scmp.ne.s32.totalorder %s210, %s211
      %p223 = scmp.eq.s32.totalorder %s117, 1
      %p224 = por %p222, %p223
      %p226 = scmp.ne.s32.totalorder %s211, %s225
      %p227 = scmp.eq.s32.totalorder %s117, 0
      %p228 = por %p226, %p227
      %s230 = sadd.s32 %s229, 1
      %p233 = scmp.eq.s32.totalorder %s111, 1
      %p234 = scmp.ne.s32.totalorder %s229, %s231
      %p235 = scmp.eq.s32.totalorder %s111, 0
      %p236 = por %p234, %p235
      %p237 = scmp.ne.s32.totalorder %s229, %s231
      %p238 = scmp.eq.s32.totalorder %s116, 1
      %p239 = por %p237, %p238
      %p240 = scmp.ne.s32.totalorder %s231, %s232
      %p241 = scmp.eq.s32.totalorder %s116, 0
      %p242 = por %p240, %p241
      %p243 = scmp.ne.s32.totalorder %s231, %s232
      %p244 = scmp.eq.s32.totalorder %s117, 1
      %p245 = por %p243, %p244
      %p247 = scmp.ne.s32.totalorder %s232, %s246
      %p248 = scmp.eq.s32.totalorder %s117, 0
      %p249 = por %p247, %p248
      %s251 = sadd.s32 %s250, 1
      %p254 = scmp.eq.s32.totalorder %s111, 1
      %p255 = scmp.ne.s32.totalorder %s250, %s252
      %p256 = scmp.eq.s32.totalorder %s111, 0
      %p257 = por %p255, %p256
      %p258 = scmp.ne.s32.totalorder %s250, %s252
      %p259 = scmp.eq.s32.totalorder %s116, 1
      %p260 = por %p258, %p259
      %p261 = scmp.ne.s32.totalorder %s252, %s253
      %p262 = scmp.eq.s32.totalorder %s116, 0
      %p263 = por %p261, %p262
      %p264 = scmp.ne.s32.totalorder %s252, %s253
      %p265 = scmp.eq.s32.totalorder %s117, 1
      %p266 = por %p264, %p265
      %p268 = scmp.ne.s32.totalorder %s253, %s267
      %p269 = scmp.eq.s32.totalorder %s117, 0
      %p270 = por %p268, %p269
      %s272 = sadd.s32 %s271, 1
      %p275 = scmp.eq.s32.totalorder %s111, 1
      %p276 = scmp.ne.s32.totalorder %s271, %s273
      %p277 = scmp.eq.s32.totalorder %s111, 0
      %p278 = por %p276, %p277
      %p279 = scmp.ne.s32.totalorder %s271, %s273
      %p280 = scmp.eq.s32.totalorder %s116, 1
      %p281 = por %p279, %p280
      %p282 = scmp.ne.s32.totalorder %s273, %s274
      %p283 = scmp.eq.s32.totalorder %s116, 0
      %p284 = por %p282, %p283
      %p285 = scmp.ne.s32.totalorder %s273, %s274
      %p286 = scmp.eq.s32.totalorder %s117, 1
      %p287 = por %p285, %p286
      %p289 = scmp.ne.s32.totalorder %s274, %s288
      %p290 = scmp.eq.s32.totalorder %s117, 0
      %p291 = por %p289, %p290
      %s293 = sadd.s32 %s292, 1
      %p296 = scmp.eq.s32.totalorder %s111, 1
      %p297 = scmp.ne.s32.totalorder %s292, %s294
      %p298 = scmp.eq.s32.totalorder %s111, 0
      %p299 = por %p297, %p298
      %p300 = scmp.ne.s32.totalorder %s292, %s294
      %p301 = scmp.eq.s32.totalorder %s116, 1
      %p302 = por %p300, %p301
      %p303 = scmp.ne.s32.totalorder %s294, %s295
      %p304 = scmp.eq.s32.totalorder %s116, 0
      %p305 = por %p303, %p304
      %p306 = scmp.ne.s32.totalorder %s294, %s295
      %p307 = scmp.eq.s32.totalorder %s117, 1
      %p308 = por %p306, %p307
      %p310 = scmp.ne.s32.totalorder %s295, %s309
      %p311 = scmp.eq.s32.totalorder %s117, 0
      %p312 = por %p310, %p311
      %s314 = sadd.s32 %s313, 1
      %p317 = scmp.eq.s32.totalorder %s111, 1
      %p318 = scmp.ne.s32.totalorder %s313, %s315
      %p319 = scmp.eq.s32.totalorder %s111, 0
      %p320 = por %p318, %p319
      %p321 = scmp.ne.s32.totalorder %s313, %s315
      %p322 = scmp.eq.s32.totalorder %s116, 1
      %p323 = por %p321, %p322
      %p324 = scmp.ne.s32.totalorder %s315, %s316
      %p325 = scmp.eq.s32.totalorder %s116, 0
      %p326 = por %p324, %p325
      %p327 = scmp.ne.s32.totalorder %s315, %s316
      %p328 = scmp.eq.s32.totalorder %s117, 1
      %p329 = por %p327, %p328
      %p331 = scmp.ne.s32.totalorder %s316, %s330
      %p332 = scmp.eq.s32.totalorder %s117, 0
      %p333 = por %p331, %p332
      %s335 = sadd.s32 %s334, 1
      %p338 = scmp.eq.s32.totalorder %s111, 1
      %p339 = scmp.ne.s32.totalorder %s334, %s336
      %p340 = scmp.eq.s32.totalorder %s111, 0
      %p341 = por %p339, %p340
      %p342 = scmp.ne.s32.totalorder %s334, %s336
      %p343 = scmp.eq.s32.totalorder %s116, 1
      %p344 = por %p342, %p343
      %p345 = scmp.ne.s32.totalorder %s336, %s337
      %p346 = scmp.eq.s32.totalorder %s116, 0
      %p347 = por %p345, %p346
      %p348 = scmp.ne.s32.totalorder %s336, %s337
      %p349 = scmp.eq.s32.totalorder %s117, 1
      %p350 = por %p348, %p349
      %p352 = scmp.ne.s32.totalorder %s337, %s351
      %p353 = scmp.eq.s32.totalorder %s117, 0
      %p354 = por %p352, %p353
      %s356 = sadd.s32 %s355, 1
      %p359 = scmp.eq.s32.totalorder %s111, 1
      %p360 = scmp.ne.s32.totalorder %s355, %s357
      %p361 = scmp.eq.s32.totalorder %s111, 0
      %p362 = por %p360, %p361
      %p363 = scmp.ne.s32.totalorder %s355, %s357
      %p364 = scmp.eq.s32.totalorder %s116, 1
      %p365 = por %p363, %p364
      %p366 = scmp.ne.s32.totalorder %s357, %s358
      %p367 = scmp.eq.s32.totalorder %s116, 0
      %p368 = por %p366, %p367
      %p369 = scmp.ne.s32.totalorder %s357, %s358
      %p370 = scmp.eq.s32.totalorder %s117, 1
      %p371 = por %p369, %p370
      %p373 = scmp.ne.s32.totalorder %s358, %s372
      %p374 = scmp.eq.s32.totalorder %s117, 0
      %p375 = por %p373, %p374
      %s377 = sadd.s32 %s376, 1
      %p380 = scmp.eq.s32.totalorder %s111, 1
      %p381 = scmp.ne.s32.totalorder %s376, %s378
      %p382 = scmp.eq.s32.totalorder %s111, 0
      %p383 = por %p381, %p382
      %p384 = scmp.ne.s32.totalorder %s376, %s378
      %p385 = scmp.eq.s32.totalorder %s116, 1
      %p386 = por %p384, %p385
      %p387 = scmp.ne.s32.totalorder %s378, %s379
      %p388 = scmp.eq.s32.totalorder %s116, 0
      %p389 = por %p387, %p388
      %p390 = scmp.ne.s32.totalorder %s378, %s379
      %p391 = scmp.eq.s32.totalorder %s117, 1
      %p392 = por %p390, %p391
      %p394 = scmp.ne.s32.totalorder %s379, %s393
      %p395 = scmp.eq.s32.totalorder %s117, 0
      %p396 = por %p394, %p395
      %s398 = sadd.s32 %s397, 1
      %p401 = scmp.eq.s32.totalorder %s111, 1
      %p402 = scmp.ne.s32.totalorder %s397, %s399
      %p403 = scmp.eq.s32.totalorder %s111, 0
      %p404 = por %p402, %p403
      %p405 = scmp.ne.s32.totalorder %s397, %s399
      %p406 = scmp.eq.s32.totalorder %s116, 1
      %p407 = por %p405, %p406
      %p408 = scmp.ne.s32.totalorder %s399, %s400
      %p409 = scmp.eq.s32.totalorder %s116, 0
      %p410 = por %p408, %p409
      %p411 = scmp.ne.s32.totalorder %s399, %s400
      %p412 = scmp.eq.s32.totalorder %s117, 1
      %p413 = por %p411, %p412
      %p415 = scmp.ne.s32.totalorder %s400, %s414
      %p416 = scmp.eq.s32.totalorder %s117, 0
      %p417 = por %p415, %p416
      %s419 = sadd.s32 %s418, 1
      %p422 = scmp.eq.s32.totalorder %s111, 1
      %p423 = scmp.ne.s32.totalorder %s418, %s420
      %p424 = scmp.eq.s32.totalorder %s111, 0
      %p425 = por %p423, %p424
      %p426 = scmp.ne.s32.totalorder %s418, %s420
      %p427 = scmp.eq.s32.totalorder %s116, 1
      %p428 = por %p426, %p427
      %p429 = scmp.ne.s32.totalorder %s420, %s421
      %p430 = scmp.eq.s32.totalorder %s116, 0
      %p431 = por %p429, %p430
      %p432 = scmp.ne.s32.totalorder %s420, %s421
      %p433 = scmp.eq.s32.totalorder %s117, 1
      %p434 = por %p432, %p433
      %p436 = scmp.ne.s32.totalorder %s421, %s435
      %p437 = scmp.eq.s32.totalorder %s117, 0
      %p438 = por %p436, %p437
      %s440 = sadd.s32 %s439, 1
      %p443 = scmp.eq.s32.totalorder %s111, 1
      %p444 = scmp.ne.s32.totalorder %s439, %s441
      %p445 = scmp.eq.s32.totalorder %s111, 0
      %p446 = por %p444, %p445
      %p447 = scmp.ne.s32.totalorder %s439, %s441
      %p448 = scmp.eq.s32.totalorder %s116, 1
      %p449 = por %p447, %p448
      %p450 = scmp.ne.s32.totalorder %s441, %s442
      %p451 = scmp.eq.s32.totalorder %s116, 0
      %p452 = por %p450, %p451
      %p453 = scmp.ne.s32.totalorder %s441, %s442
      %p454 = scmp.eq.s32.totalorder %s117, 1
      %p455 = por %p453, %p454
      %p457 = scmp.ne.s32.totalorder %s442, %s456
      %p458 = scmp.eq.s32.totalorder %s117, 0
      %p459 = por %p457, %p458
      %s461 = sadd.s32 %s460, 1
      %p464 = scmp.eq.s32.totalorder %s111, 1
      %p465 = scmp.ne.s32.totalorder %s460, %s462
      %p466 = scmp.eq.s32.totalorder %s111, 0
      %p467 = por %p465, %p466
      %p468 = scmp.ne.s32.totalorder %s460, %s462
      %p469 = scmp.eq.s32.totalorder %s116, 1
      %p470 = por %p468, %p469
      %p471 = scmp.ne.s32.totalorder %s462, %s463
      %p472 = scmp.eq.s32.totalorder %s116, 0
      %p473 = por %p471, %p472
      %p474 = scmp.ne.s32.totalorder %s462, %s463
      %p475 = scmp.eq.s32.totalorder %s117, 1
      %p476 = por %p474, %p475
      %p478 = scmp.ne.s32.totalorder %s463, %s477
      %p479 = scmp.eq.s32.totalorder %s117, 0
      %p480 = por %p478, %p479
      %s482 = sadd.s32 %s481, 1
      %p485 = scmp.eq.s32.totalorder %s111, 1
      %p486 = scmp.ne.s32.totalorder %s481, %s483
      %p487 = scmp.eq.s32.totalorder %s111, 0
      %p488 = por %p486, %p487
      %p489 = scmp.ne.s32.totalorder %s481, %s483
      %p490 = scmp.eq.s32.totalorder %s116, 1
      %p491 = por %p489, %p490
      %p492 = scmp.ne.s32.totalorder %s483, %s484
      %p493 = scmp.eq.s32.totalorder %s116, 0
      %p494 = por %p492, %p493
      %p495 = scmp.ne.s32.totalorder %s483, %s484
      %p496 = scmp.eq.s32.totalorder %s117, 1
      %p497 = por %p495, %p496
      %p499 = scmp.ne.s32.totalorder %s484, %s498
      %p500 = scmp.eq.s32.totalorder %s117, 0
      %p501 = por %p499, %p500
      %s503 = sadd.s32 %s502, 1
      %p506 = scmp.eq.s32.totalorder %s111, 1
      %p507 = scmp.ne.s32.totalorder %s502, %s504
      %p508 = scmp.eq.s32.totalorder %s111, 0
      %p509 = por %p507, %p508
      %p510 = scmp.ne.s32.totalorder %s502, %s504
      %p511 = scmp.eq.s32.totalorder %s116, 1
      %p512 = por %p510, %p511
      %p513 = scmp.ne.s32.totalorder %s504, %s505
      %p514 = scmp.eq.s32.totalorder %s116, 0
      %p515 = por %p513, %p514
      %p516 = scmp.ne.s32.totalorder %s504, %s505
      %p517 = scmp.eq.s32.totalorder %s117, 1
      %p518 = por %p516, %p517
      %p520 = scmp.ne.s32.totalorder %s505, %s519
      %p521 = scmp.eq.s32.totalorder %s117, 0
      %p522 = por %p520, %p521
      %s524 = sadd.s32 %s523, 1
      %p527 = scmp.eq.s32.totalorder %s111, 1
      %p528 = scmp.ne.s32.totalorder %s523, %s525
      %p529 = scmp.eq.s32.totalorder %s111, 0
      %p530 = por %p528, %p529
      %p531 = scmp.ne.s32.totalorder %s523, %s525
      %p532 = scmp.eq.s32.totalorder %s116, 1
      %p533 = por %p531, %p532
      %p534 = scmp.ne.s32.totalorder %s525, %s526
      %p535 = scmp.eq.s32.totalorder %s116, 0
      %p536 = por %p534, %p535
      %p537 = scmp.ne.s32.totalorder %s525, %s526
      %p538 = scmp.eq.s32.totalorder %s117, 1
      %p539 = por %p537, %p538
      %p541 = scmp.ne.s32.totalorder %s526, %s540
      %p542 = scmp.eq.s32.totalorder %s117, 0
      %p543 = por %p541, %p542
      %s545 = sadd.s32 %s544, 1
      %p548 = scmp.eq.s32.totalorder %s111, 1
      %p549 = scmp.ne.s32.totalorder %s544, %s546
      %p550 = scmp.eq.s32.totalorder %s111, 0
      %p551 = por %p549, %p550
      %p552 = scmp.ne.s32.totalorder %s544, %s546
      %p553 = scmp.eq.s32.totalorder %s116, 1
      %p554 = por %p552, %p553
      %p555 = scmp.ne.s32.totalorder %s546, %s547
      %p556 = scmp.eq.s32.totalorder %s116, 0
      %p557 = por %p555, %p556
      %p558 = scmp.ne.s32.totalorder %s546, %s547
      %p559 = scmp.eq.s32.totalorder %s117, 1
      %p560 = por %p558, %p559
      %p562 = scmp.ne.s32.totalorder %s547, %s561
      %p563 = scmp.eq.s32.totalorder %s117, 0
      %p564 = por %p562, %p563
      %s566 = sadd.s32 %s565, 1
      %p569 = scmp.eq.s32.totalorder %s111, 1
      %p570 = scmp.ne.s32.totalorder %s565, %s567
      %p571 = scmp.eq.s32.totalorder %s111, 0
      %p572 = por %p570, %p571
      %p573 = scmp.ne.s32.totalorder %s565, %s567
      %p574 = scmp.eq.s32.totalorder %s116, 1
      %p575 = por %p573, %p574
      %p576 = scmp.ne.s32.totalorder %s567, %s568
      %p577 = scmp.eq.s32.totalorder %s116, 0
      %p578 = por %p576, %p577
      %p579 = scmp.ne.s32.totalorder %s567, %s568
      %p580 = scmp.eq.s32.totalorder %s117, 1
      %p581 = por %p579, %p580
      %p583 = scmp.ne.s32.totalorder %s568, %s582
      %p584 = scmp.eq.s32.totalorder %s117, 0
      %p585 = por %p583, %p584
      %s587 = sadd.s32 %s586, 1
      %p590 = scmp.eq.s32.totalorder %s111, 1
      %p591 = scmp.ne.s32.totalorder %s586, %s588
      %p592 = scmp.eq.s32.totalorder %s111, 0
      %p593 = por %p591, %p592
      %p594 = scmp.ne.s32.totalorder %s586, %s588
      %p595 = scmp.eq.s32.totalorder %s116, 1
      %p596 = por %p594, %p595
      %p597 = scmp.ne.s32.totalorder %s588, %s589
      %p598 = scmp.eq.s32.totalorder %s116, 0
      %p599 = por %p597, %p598
      %p600 = scmp.ne.s32.totalorder %s588, %s589
      %p601 = scmp.eq.s32.totalorder %s117, 1
      %p602 = por %p600, %p601
      %p604 = scmp.ne.s32.totalorder %s589, %s603
      %p605 = scmp.eq.s32.totalorder %s117, 0
      %p606 = por %p604, %p605
      %s608 = sadd.s32 %s607, 1
      %p611 = scmp.eq.s32.totalorder %s111, 1
      %p612 = scmp.ne.s32.totalorder %s607, %s609
      %p613 = scmp.eq.s32.totalorder %s111, 0
      %p614 = por %p612, %p613
      %p615 = scmp.ne.s32.totalorder %s607, %s609
      %p616 = scmp.eq.s32.totalorder %s116, 1
      %p617 = por %p615, %p616
      %p618 = scmp.ne.s32.totalorder %s609, %s610
      %p619 = scmp.eq.s32.totalorder %s116, 0
      %p620 = por %p618, %p619
      %p621 = scmp.ne.s32.totalorder %s609, %s610
      %p622 = scmp.eq.s32.totalorder %s117, 1
      %p623 = por %p621, %p622
      %p625 = scmp.ne.s32.totalorder %s610, %s624
      %p626 = scmp.eq.s32.totalorder %s117, 0
      %p627 = por %p625, %p626
      %s629 = sadd.s32 %s628, 1
      %p632 = scmp.eq.s32.totalorder %s111, 1
      %p633 = scmp.ne.s32.totalorder %s628, %s630
      %p634 = scmp.eq.s32.totalorder %s111, 0
      %p635 = por %p633, %p634
      %p636 = scmp.ne.s32.totalorder %s628, %s630
      %p637 = scmp.eq.s32.totalorder %s116, 1
      %p638 = por %p636, %p637
      %p639 = scmp.ne.s32.totalorder %s630, %s631
      %p640 = scmp.eq.s32.totalorder %s116, 0
      %p641 = por %p639, %p640
      %p642 = scmp.ne.s32.totalorder %s630, %s631
      %p643 = scmp.eq.s32.totalorder %s117, 1
      %p644 = por %p642, %p643
      %p646 = scmp.ne.s32.totalorder %s631, %s645
      %p647 = scmp.eq.s32.totalorder %s117, 0
      %p648 = por %p646, %p647
      %s650 = sadd.s32 %s649, 1
      %p653 = scmp.eq.s32.totalorder %s111, 1
      %p654 = scmp.ne.s32.totalorder %s649, %s651
      %p655 = scmp.eq.s32.totalorder %s111, 0
      %p656 = por %p654, %p655
      %p657 = scmp.ne.s32.totalorder %s649, %s651
      %p658 = scmp.eq.s32.totalorder %s116, 1
      %p659 = por %p657, %p658
      %p660 = scmp.ne.s32.totalorder %s651, %s652
      %p661 = scmp.eq.s32.totalorder %s116, 0
      %p662 = por %p660, %p661
      %p663 = scmp.ne.s32.totalorder %s651, %s652
      %p664 = scmp.eq.s32.totalorder %s117, 1
      %p665 = por %p663, %p664
      %p667 = scmp.ne.s32.totalorder %s652, %s666
      %p668 = scmp.eq.s32.totalorder %s117, 0
      %p669 = por %p667, %p668
      %s671 = sadd.s32 %s670, 1
      %p674 = scmp.eq.s32.totalorder %s111, 1
      %p675 = scmp.ne.s32.totalorder %s670, %s672
      %p676 = scmp.eq.s32.totalorder %s111, 0
      %p677 = por %p675, %p676
      %p678 = scmp.ne.s32.totalorder %s670, %s672
      %p679 = scmp.eq.s32.totalorder %s116, 1
      %p680 = por %p678, %p679
      %p681 = scmp.ne.s32.totalorder %s672, %s673
      %p682 = scmp.eq.s32.totalorder %s116, 0
      %p683 = por %p681, %p682
      %p684 = scmp.ne.s32.totalorder %s672, %s673
      %p685 = scmp.eq.s32.totalorder %s117, 1
      %p686 = por %p684, %p685
      %p688 = scmp.ne.s32.totalorder %s673, %s687
      %p689 = scmp.eq.s32.totalorder %s117, 0
      %p690 = por %p688, %p689
      %s692 = sadd.s32 %s691, 1
      %p695 = scmp.eq.s32.totalorder %s111, 1
      %p696 = scmp.ne.s32.totalorder %s691, %s693
      %p697 = scmp.eq.s32.totalorder %s111, 0
      %p698 = por %p696, %p697
      %p699 = scmp.ne.s32.totalorder %s691, %s693
      %p700 = scmp.eq.s32.totalorder %s116, 1
      %p701 = por %p699, %p700
      %p702 = scmp.ne.s32.totalorder %s693, %s694
      %p703 = scmp.eq.s32.totalorder %s116, 0
      %p704 = por %p702, %p703
      %p705 = scmp.ne.s32.totalorder %s693, %s694
      %p706 = scmp.eq.s32.totalorder %s117, 1
      %p707 = por %p705, %p706
      %p709 = scmp.ne.s32.totalorder %s694, %s708
      %p710 = scmp.eq.s32.totalorder %s117, 0
      %p711 = por %p709, %p710
      %s713 = sadd.s32 %s712, 1
      %p716 = scmp.eq.s32.totalorder %s111, 1
      %p717 = scmp.ne.s32.totalorder %s712, %s714
      %p718 = scmp.eq.s32.totalorder %s111, 0
      %p719 = por %p717, %p718
      %p720 = scmp.ne.s32.totalorder %s712, %s714
      %p721 = scmp.eq.s32.totalorder %s116, 1
      %p722 = por %p720, %p721
      %p723 = scmp.ne.s32.totalorder %s714, %s715
      %p724 = scmp.eq.s32.totalorder %s116, 0
      %p725 = por %p723, %p724
      %p726 = scmp.ne.s32.totalorder %s714, %s715
      %p727 = scmp.eq.s32.totalorder %s117, 1
      %p728 = por %p726, %p727
      %p730 = scmp.ne.s32.totalorder %s715, %s729
      %p731 = scmp.eq.s32.totalorder %s117, 0
      %p732 = por %p730, %p731
      %s734 = sadd.s32 %s733, 1
      %p737 = scmp.eq.s32.totalorder %s111, 1
      %p738 = scmp.ne.s32.totalorder %s733, %s735
      %p739 = scmp.eq.s32.totalorder %s111, 0
      %p740 = por %p738, %p739
      %p741 = scmp.ne.s32.totalorder %s733, %s735
      %p742 = scmp.eq.s32.totalorder %s116, 1
      %p743 = por %p741, %p742
      %p744 = scmp.ne.s32.totalorder %s735, %s736
      %p745 = scmp.eq.s32.totalorder %s116, 0
      %p746 = por %p744, %p745
      %p747 = scmp.ne.s32.totalorder %s735, %s736
      %p748 = scmp.eq.s32.totalorder %s117, 1
      %p749 = por %p747, %p748
      %p751 = scmp.ne.s32.totalorder %s736, %s750
      %p752 = scmp.eq.s32.totalorder %s117, 0
      %p753 = por %p751, %p752
      %s755 = sadd.s32 %s754, 1
      %p758 = scmp.eq.s32.totalorder %s111, 1
      %p759 = scmp.ne.s32.totalorder %s754, %s756
      %p760 = scmp.eq.s32.totalorder %s111, 0
      %p761 = por %p759, %p760
      %p762 = scmp.ne.s32.totalorder %s754, %s756
      %p763 = scmp.eq.s32.totalorder %s116, 1
      %p764 = por %p762, %p763
      %p765 = scmp.ne.s32.totalorder %s756, %s757
      %p766 = scmp.eq.s32.totalorder %s116, 0
      %p767 = por %p765, %p766
      %p768 = scmp.ne.s32.totalorder %s756, %s757
      %p769 = scmp.eq.s32.totalorder %s117, 1
      %p770 = por %p768, %p769
      %p772 = scmp.ne.s32.totalorder %s757, %s771
      %p773 = scmp.eq.s32.totalorder %s117, 0
      %p774 = por %p772, %p773
      %s776 = sadd.s32 %s775, 1
      %p779 = scmp.eq.s32.totalorder %s111, 1
      %p780 = scmp.ne.s32.totalorder %s775, %s777
      %p781 = scmp.eq.s32.totalorder %s111, 0
      %p782 = por %p780, %p781
      %p783 = scmp.ne.s32.totalorder %s775, %s777
      %p784 = scmp.eq.s32.totalorder %s116, 1
      %p785 = por %p783, %p784
      %p786 = scmp.ne.s32.totalorder %s777, %s778
      %p787 = scmp.eq.s32.totalorder %s116, 0
      %p788 = por %p786, %p787
      %p789 = scmp.ne.s32.totalorder %s777, %s778
      %p790 = scmp.eq.s32.totalorder %s117, 1
      %p791 = por %p789, %p790
      %p793 = scmp.ne.s32.totalorder %s778, %s792
      %p794 = scmp.eq.s32.totalorder %s117, 0
      %p795 = por %p793, %p794
      %s797 = sadd.s32 %s796, 1
      %p800 = scmp.eq.s32.totalorder %s111, 1
      %p801 = scmp.ne.s32.totalorder %s796, %s798
      %p802 = scmp.eq.s32.totalorder %s111, 0
      %p803 = por %p801, %p802
      %p804 = scmp.ne.s32.totalorder %s796, %s798
      %p805 = scmp.eq.s32.totalorder %s116, 1
      %p806 = por %p804, %p805
      %p807 = scmp.ne.s32.totalorder %s798, %s799
      %p808 = scmp.eq.s32.totalorder %s116, 0
      %p809 = por %p807, %p808
      %p810 = scmp.ne.s32.totalorder %s798, %s799
      %p811 = scmp.eq.s32.totalorder %s117, 1
      %p812 = por %p810, %p811
      %p814 = scmp.ne.s32.totalorder %s799, %s813
      %p815 = scmp.eq.s32.totalorder %s117, 0
      %p816 = por %p814, %p815
      %s818 = sadd.s32 %s817, 1
      %p821 = scmp.eq.s32.totalorder %s111, 1
      %p822 = scmp.ne.s32.totalorder %s817, %s819
      %p823 = scmp.eq.s32.totalorder %s111, 0
      %p824 = por %p822, %p823
      %p825 = scmp.ne.s32.totalorder %s817, %s819
      %p826 = scmp.eq.s32.totalorder %s116, 1
      %p827 = por %p825, %p826
      %p828 = scmp.ne.s32.totalorder %s819, %s820
      %p829 = scmp.eq.s32.totalorder %s116, 0
      %p830 = por %p828, %p829
      %p831 = scmp.ne.s32.totalorder %s819, %s820
      %p832 = scmp.eq.s32.totalorder %s117, 1
      %p833 = por %p831, %p832
      %p835 = scmp.ne.s32.totalorder %s820, %s834
      %p836 = scmp.eq.s32.totalorder %s117, 0
      %p837 = por %p835, %p836
      %s839 = sadd.s32 %s838, 1
      %p842 = scmp.eq.s32.totalorder %s111, 1
      %p843 = scmp.ne.s32.totalorder %s838, %s840
      %p844 = scmp.eq.s32.totalorder %s111, 0
      %p845 = por %p843, %p844
      %p846 = scmp.ne.s32.totalorder %s838, %s840
      %p847 = scmp.eq.s32.totalorder %s116, 1
      %p848 = por %p846, %p847
      %p849 = scmp.ne.s32.totalorder %s840, %s841
      %p850 = scmp.eq.s32.totalorder %s116, 0
      %p851 = por %p849, %p850
      %p852 = scmp.ne.s32.totalorder %s840, %s841
      %p853 = scmp.eq.s32.totalorder %s117, 1
      %p854 = por %p852, %p853
      %p856 = scmp.ne.s32.totalorder %s841, %s855
      %p857 = scmp.eq.s32.totalorder %s117, 0
      %p858 = por %p856, %p857
      %s860 = sadd.s32 %s859, 1
      %p863 = scmp.eq.s32.totalorder %s111, 1
      %p864 = scmp.ne.s32.totalorder %s859, %s861
      %p865 = scmp.eq.s32.totalorder %s111, 0
      %p866 = por %p864, %p865
      %p867 = scmp.ne.s32.totalorder %s859, %s861
      %p868 = scmp.eq.s32.totalorder %s116, 1
      %p869 = por %p867, %p868
      %p870 = scmp.ne.s32.totalorder %s861, %s862
      %p871 = scmp.eq.s32.totalorder %s116, 0
      %p872 = por %p870, %p871
      %p873 = scmp.ne.s32.totalorder %s861, %s862
      %p874 = scmp.eq.s32.totalorder %s117, 1
      %p875 = por %p873, %p874
      %p877 = scmp.ne.s32.totalorder %s862, %s876
      %p878 = scmp.eq.s32.totalorder %s117, 0
      %p879 = por %p877, %p878
      %s881 = sadd.s32 %s880, 1
      %p884 = scmp.eq.s32.totalorder %s111, 1
      %p885 = scmp.ne.s32.totalorder %s880, %s882
      %p886 = scmp.eq.s32.totalorder %s111, 0
      %p887 = por %p885, %p886
      %p888 = scmp.ne.s32.totalorder %s880, %s882
      %p889 = scmp.eq.s32.totalorder %s116, 1
      %p890 = por %p888, %p889
      %p891 = scmp.ne.s32.totalorder %s882, %s883
      %p892 = scmp.eq.s32.totalorder %s116, 0
      %p893 = por %p891, %p892
      %p894 = scmp.ne.s32.totalorder %s882, %s883
      %p895 = scmp.eq.s32.totalorder %s117, 1
      %p896 = por %p894, %p895
      %p898 = scmp.ne.s32.totalorder %s883, %s897
      %p899 = scmp.eq.s32.totalorder %s117, 0
      %p900 = por %p898, %p899
      %s902 = sadd.s32 %s901, 1
      %p905 = scmp.eq.s32.totalorder %s111, 1
      %p906 = scmp.ne.s32.totalorder %s901, %s903
      %p907 = scmp.eq.s32.totalorder %s111, 0
      %p908 = por %p906, %p907
      %p909 = scmp.ne.s32.totalorder %s901, %s903
      %p910 = scmp.eq.s32.totalorder %s116, 1
      %p911 = por %p909, %p910
      %p912 = scmp.ne.s32.totalorder %s903, %s904
      %p913 = scmp.eq.s32.totalorder %s116, 0
      %p914 = por %p912, %p913
      %p915 = scmp.ne.s32.totalorder %s903, %s904
      %p916 = scmp.eq.s32.totalorder %s117, 1
      %p917 = por %p915, %p916
      %p919 = scmp.ne.s32.totalorder %s904, %s918
      %p920 = scmp.eq.s32.totalorder %s117, 0
      %p921 = por %p919, %p920
      %s923 = sadd.s32 %s922, 1
      %p926 = scmp.eq.s32.totalorder %s111, 1
      %p927 = scmp.ne.s32.totalorder %s922, %s924
      %p928 = scmp.eq.s32.totalorder %s111, 0
      %p929 = por %p927, %p928
      %p930 = scmp.ne.s32.totalorder %s922, %s924
      %p931 = scmp.eq.s32.totalorder %s116, 1
      %p932 = por %p930, %p931
      %p933 = scmp.ne.s32.totalorder %s924, %s925
      %p934 = scmp.eq.s32.totalorder %s116, 0
      %p935 = por %p933, %p934
      %p936 = scmp.ne.s32.totalorder %s924, %s925
      %p937 = scmp.eq.s32.totalorder %s117, 1
      %p938 = por %p936, %p937
      %p940 = scmp.ne.s32.totalorder %s925, %s939
      %p941 = scmp.eq.s32.totalorder %s117, 0
      %p942 = por %p940, %p941
      %s944 = sadd.s32 %s943, 1
      %p947 = scmp.eq.s32.totalorder %s111, 1
      %p948 = scmp.ne.s32.totalorder %s943, %s945
      %p949 = scmp.eq.s32.totalorder %s111, 0
      %p950 = por %p948, %p949
      %p951 = scmp.ne.s32.totalorder %s943, %s945
      %p952 = scmp.eq.s32.totalorder %s116, 1
      %p953 = por %p951, %p952
      %p954 = scmp.ne.s32.totalorder %s945, %s946
      %p955 = scmp.eq.s32.totalorder %s116, 0
      %p956 = por %p954, %p955
      %p957 = scmp.ne.s32.totalorder %s945, %s946
      %p958 = scmp.eq.s32.totalorder %s117, 1
      %p959 = por %p957, %p958
      %p961 = scmp.ne.s32.totalorder %s946, %s960
      %p962 = scmp.eq.s32.totalorder %s117, 0
      %p963 = por %p961, %p962
      %s965 = sadd.s32 %s964, 1
      %p968 = scmp.eq.s32.totalorder %s111, 1
      %p969 = scmp.ne.s32.totalorder %s964, %s966
      %p970 = scmp.eq.s32.totalorder %s111, 0
      %p971 = por %p969, %p970
      %p972 = scmp.ne.s32.totalorder %s964, %s966
      %p973 = scmp.eq.s32.totalorder %s116, 1
      %p974 = por %p972, %p973
      %p975 = scmp.ne.s32.totalorder %s966, %s967
      %p976 = scmp.eq.s32.totalorder %s116, 0
      %p977 = por %p975, %p976
      %p978 = scmp.ne.s32.totalorder %s966, %s967
      %p979 = scmp.eq.s32.totalorder %s117, 1
      %p980 = por %p978, %p979
      %p982 = scmp.ne.s32.totalorder %s967, %s981
      %p983 = scmp.eq.s32.totalorder %s117, 0
      %p984 = por %p982, %p983
      %s986 = sadd.s32 %s985, 1
      %p989 = scmp.eq.s32.totalorder %s111, 1
      %p990 = scmp.ne.s32.totalorder %s985, %s987
      %p991 = scmp.eq.s32.totalorder %s111, 0
      %p992 = por %p990, %p991
      %p993 = scmp.ne.s32.totalorder %s985, %s987
      %p994 = scmp.eq.s32.totalorder %s116, 1
      %p995 = por %p993, %p994
      %p996 = scmp.ne.s32.totalorder %s987, %s988
      %p997 = scmp.eq.s32.totalorder %s116, 0
      %p998 = por %p996, %p997
      %p999 = scmp.ne.s32.totalorder %s987, %s988
      %p1000 = scmp.eq.s32.totalorder %s117, 1
      %p1001 = por %p999, %p1000
      %p1003 = scmp.ne.s32.totalorder %s988, %s1002
      %p1004 = scmp.eq.s32.totalorder %s117, 0
      %p1005 = por %p1003, %p1004
      %s1007 = sadd.s32 %s1006, 1
      %p1010 = scmp.eq.s32.totalorder %s111, 1
      %p1011 = scmp.ne.s32.totalorder %s1006, %s1008
      %p1012 = scmp.eq.s32.totalorder %s111, 0
      %p1013 = por %p1011, %p1012
      %p1014 = scmp.ne.s32.totalorder %s1006, %s1008
      %p1015 = scmp.eq.s32.totalorder %s116, 1
      %p1016 = por %p1014, %p1015
      %p1017 = scmp.ne.s32.totalorder %s1008, %s1009
      %p1018 = scmp.eq.s32.totalorder %s116, 0
      %p1019 = por %p1017, %p1018
      %p1020 = scmp.ne.s32.totalorder %s1008, %s1009
      %p1021 = scmp.eq.s32.totalorder %s117, 1
      %p1022 = por %p1020, %p1021
      %p1024 = scmp.ne.s32.totalorder %s1009, %s1023
      %p1025 = scmp.eq.s32.totalorder %s117, 0
      %p1026 = por %p1024, %p1025
      %s1027 = ssub.s32 %s111, %s118
      %p1028 = scmp.eq.s32.totalorder %s1027, 0
      %s1030 = sadd.s32 %s1029, 1
      %s1031 = scalar_select %p1028, %s1029, %s1030
      %p1034 = pneg %p1028
      %p1035 = scmp.eq.s32.totalorder %s111, 1
      %p1036 = por %p1034, %p1035
      %p1037 = scmp.ne.s32.totalorder %s1029, %s1032
      %p1038 = scmp.eq.s32.totalorder %s111, 0
      %p1039 = por %p1037, %p1038
      %p1040 = scmp.ne.s32.totalorder %s1029, %s1032
      %p1041 = scmp.eq.s32.totalorder %s116, 1
      %p1042 = por %p1040, %p1041
      %p1043 = scmp.ne.s32.totalorder %s1032, %s1033
      %p1044 = scmp.eq.s32.totalorder %s116, 0
      %p1045 = por %p1043, %p1044
      %p1046 = scmp.ne.s32.totalorder %s1032, %s1033
      %p1047 = scmp.eq.s32.totalorder %s117, 1
      %p1048 = por %p1046, %p1047
      %p1050 = scmp.ne.s32.totalorder %s1033, %s1049
      %p1051 = scmp.eq.s32.totalorder %s117, 0
      %p1052 = por %p1050, %p1051
      %p1053 = scmp.le.s32.totalorder 1, %s111
      %p1054 = scmp.lt.s32.totalorder %s111, 3
      %p1055 = pnand %p1053, %p1054
      %p1056 = pneg %p1055
      // Predicated region
      $region9: #{tpu_custom_call.1} parent=5 // pred_check
        _
      $region10: #{tpu_custom_call.1} parent=5 // pred_check_branch
        %1058 = sbr.rel (%p1055) target = $region12
      $region11: #{tpu_custom_call.1} parent=5 // pred_region
        %s1059 = ssub.s32 %s111, 1
        // Predicated region
        $region13: #{tpu_custom_call.1} parent=11 // pred_check
          %p1060 = pneg %p158
        $region14: #{tpu_custom_call.1} parent=11 // pred_check_branch
          %1062 = sbr.rel (%p1060) target = $region16
        $region15: #{tpu_custom_call.1} parent=11 // pred_region
          %s1064 = ssub.s32 16, 16
          %1065 = vsyncadd [#allocation3], %s1064
          %s1067 = sshll.u32 [#allocation2], 4
          %s1068 = int_to_ptr.vmem [resolvable:$true] %s1067
          %1070 = dma.hbm_to_vmem [thread:$0]  %s3, 16, %s1068, [#allocation3]
        $region16: #{tpu_custom_call.1} parent=11 // pred_fallthru
          _
        // Predicated region
        $region17: #{tpu_custom_call.1} parent=11 // pred_check
          %p1071 = pneg %p179
        $region18: #{tpu_custom_call.1} parent=11 // pred_check_branch
          %1073 = sbr.rel (%p1071) target = $region20
        $region19: #{tpu_custom_call.1} parent=11 // pred_region
          %s1075 = ssub.s32 16, 16
          %1076 = vsyncadd [#allocation6], %s1075
          %s1078 = sshll.u32 [#allocation5], 4
          %s1079 = int_to_ptr.vmem [resolvable:$true] %s1078
          %1081 = dma.hbm_to_vmem [thread:$0]  %s5, 16, %s1079, [#allocation6]
        $region20: #{tpu_custom_call.1} parent=11 // pred_fallthru
          _
        // Predicated region
        $region21: #{tpu_custom_call.1} parent=11 // pred_check
          %p1082 = pneg %p200
        $region22: #{tpu_custom_call.1} parent=11 // pred_check_branch
          %1084 = sbr.rel (%p1082) target = $region24
        $region23: #{tpu_custom_call.1} parent=11 // pred_region
          _
        $region24: #{tpu_custom_call.1} parent=11 // pred_fallthru
          _
        // Predicated region
        $region25: #{tpu_custom_call.1} parent=11 // pred_check
          %p1085 = pneg %p221
        $region26: #{tpu_custom_call.1} parent=11 // pred_check_branch
          %1087 = sbr.rel (%p1085) target = $region28
        $region27: #{tpu_custom_call.1} parent=11 // pred_region
          _
        $region28: #{tpu_custom_call.1} parent=11 // pred_fallthru
          _
        // Predicated region
        $region29: #{tpu_custom_call.1} parent=11 // pred_check
          %p1088 = pneg %p242
        $region30: #{tpu_custom_call.1} parent=11 // pred_check_branch
          %1090 = sbr.rel (%p1088) target = $region32
        $region31: #{tpu_custom_call.1} parent=11 // pred_region
          _
        $region32: #{tpu_custom_call.1} parent=11 // pred_fallthru
          _
        // Predicated region
        $region33: #{tpu_custom_call.1} parent=11 // pred_check
          %p1091 = pneg %p263
        $region34: #{tpu_custom_call.1} parent=11 // pred_check_branch
          %1093 = sbr.rel (%p1091) target = $region36
        $region35: #{tpu_custom_call.1} parent=11 // pred_region
          %s1095 = ssub.s32 16, 16
          %1096 = vsyncadd [#allocation6], %s1095
          %s1098 = sshll.u32 [#allocation7], 4
          %s1099 = int_to_ptr.vmem [resolvable:$true] %s1098
          %1101 = dma.hbm_to_vmem [thread:$0]  %s13, 16, %s1099, [#allocation6]
        $region36: #{tpu_custom_call.1} parent=11 // pred_fallthru
          _
        // Predicated region
        $region37: #{tpu_custom_call.1} parent=11 // pred_check
          %p1102 = pneg %p284
        $region38: #{tpu_custom_call.1} parent=11 // pred_check_branch
          %1104 = sbr.rel (%p1102) target = $region40
        $region39: #{tpu_custom_call.1} parent=11 // pred_region
          %s1106 = ssub.s32 16, 16
          %1107 = vsyncadd [#allocation9], %s1106
          %s1109 = sshll.u32 [#allocation8], 4
          %s1110 = int_to_ptr.vmem [resolvable:$true] %s1109
          %1112 = dma.hbm_to_vmem [thread:$0]  %s15, 16, %s1110, [#allocation9]
        $region40: #{tpu_custom_call.1} parent=11 // pred_fallthru
          _
        // Predicated region
        $region41: #{tpu_custom_call.1} parent=11 // pred_check
          %p1113 = pneg %p305
        $region42: #{tpu_custom_call.1} parent=11 // pred_check_branch
          %1115 = sbr.rel (%p1113) target = $region44
        $region43: #{tpu_custom_call.1} parent=11 // pred_region
          %s1117 = ssub.s32 16, 16
          %1118 = vsyncadd [#allocation9], %s1117
          %s1120 = sshll.u32 [#allocation10], 4
          %s1121 = int_to_ptr.vmem [resolvable:$true] %s1120
          %1123 = dma.hbm_to_vmem [thread:$0]  %s17, 16, %s1121, [#allocation9]
        $region44: #{tpu_custom_call.1} parent=11 // pred_fallthru
          _
        // Predicated region
        $region45: #{tpu_custom_call.1} parent=11 // pred_check
          %p1124 = pneg %p326
        $region46: #{tpu_custom_call.1} parent=11 // pred_check_branch
          %1126 = sbr.rel (%p1124) target = $region48
        $region47: #{tpu_custom_call.1} parent=11 // pred_region
          _
        $region48: #{tpu_custom_call.1} parent=11 // pred_fallthru
          _
        // Predicated region
        $region49: #{tpu_custom_call.1} parent=11 // pred_check
          %p1127 = pneg %p347
        $region50: #{tpu_custom_call.1} parent=11 // pred_check_branch
          %1129 = sbr.rel (%p1127) target = $region52
        $region51: #{tpu_custom_call.1} parent=11 // pred_region
          %s1131 = ssub.s32 16, 16
          %1132 = vsyncadd [#allocation12], %s1131
          %s1134 = sshll.u32 [#allocation11], 4
          %s1135 = int_to_ptr.vmem [resolvable:$true] %s1134
          %1137 = dma.hbm_to_vmem [thread:$0]  %s21, 16, %s1135, [#allocation12]
        $region52: #{tpu_custom_call.1} parent=11 // pred_fallthru
          _
        // Predicated region
        $region53: #{tpu_custom_call.1} parent=11 // pred_check
          %p1138 = pneg %p368
        $region54: #{tpu_custom_call.1} parent=11 // pred_check_branch
          %1140 = sbr.rel (%p1138) target = $region56
        $region55: #{tpu_custom_call.1} parent=11 // pred_region
          _
        $region56: #{tpu_custom_call.1} parent=11 // pred_fallthru
          _
        // Predicated region
        $region57: #{tpu_custom_call.1} parent=11 // pred_check
          %p1141 = pneg %p389
        $region58: #{tpu_custom_call.1} parent=11 // pred_check_branch
          %1143 = sbr.rel (%p1141) target = $region60
        $region59: #{tpu_custom_call.1} parent=11 // pred_region
          %s1145 = ssub.s32 256, 256
          %1146 = vsyncadd [#allocation12], %s1145
          %s1147 = sshll.u32 [#allocation13], 4
          %s1148 = int_to_ptr.vmem [resolvable:$true] %s1147
          %1153 = dma.hbm_to_vmem [thread:$0]  %s25, 256, %s1148, [#allocation12], 64, 64, 4
        $region60: #{tpu_custom_call.1} parent=11 // pred_fallthru
          _
        // Predicated region
        $region61: #{tpu_custom_call.1} parent=11 // pred_check
          %p1154 = pneg %p410
        $region62: #{tpu_custom_call.1} parent=11 // pred_check_branch
          %1156 = sbr.rel (%p1154) target = $region64
        $region63: #{tpu_custom_call.1} parent=11 // pred_region
          %s1158 = ssub.s32 256, 256
          %1159 = vsyncadd [#allocation15], %s1158
          %s1160 = sshll.u32 [#allocation14], 4
          %s1161 = int_to_ptr.vmem [resolvable:$true] %s1160
          %1166 = dma.hbm_to_vmem [thread:$0]  %s27, 256, %s1161, [#allocation15], 64, 64, 4
        $region64: #{tpu_custom_call.1} parent=11 // pred_fallthru
          _
        // Predicated region
        $region65: #{tpu_custom_call.1} parent=11 // pred_check
          %p1167 = pneg %p431
        $region66: #{tpu_custom_call.1} parent=11 // pred_check_branch
          %1169 = sbr.rel (%p1167) target = $region68
        $region67: #{tpu_custom_call.1} parent=11 // pred_region
          %s1171 = ssub.s32 16, 16
          %1172 = vsyncadd [#allocation15], %s1171
          %s1174 = sshll.u32 [#allocation16], 4
          %s1175 = int_to_ptr.vmem [resolvable:$true] %s1174
          %1177 = dma.hbm_to_vmem [thread:$0]  %s29, 16, %s1175, [#allocation15]
        $region68: #{tpu_custom_call.1} parent=11 // pred_fallthru
          _
        // Predicated region
        $region69: #{tpu_custom_call.1} parent=11 // pred_check
          %p1178 = pneg %p452
        $region70: #{tpu_custom_call.1} parent=11 // pred_check_branch
          %1180 = sbr.rel (%p1178) target = $region72
        $region71: #{tpu_custom_call.1} parent=11 // pred_region
          %s1182 = ssub.s32 16, 16
          %1183 = vsyncadd [#allocation18], %s1182
          %s1185 = sshll.u32 [#allocation17], 4
          %s1186 = int_to_ptr.vmem [resolvable:$true] %s1185
          %1188 = dma.hbm_to_vmem [thread:$0]  %s31, 16, %s1186, [#allocation18]
        $region72: #{tpu_custom_call.1} parent=11 // pred_fallthru
          _
        // Predicated region
        $region73: #{tpu_custom_call.1} parent=11 // pred_check
          %p1189 = pneg %p473
        $region74: #{tpu_custom_call.1} parent=11 // pred_check_branch
          %1191 = sbr.rel (%p1189) target = $region76
        $region75: #{tpu_custom_call.1} parent=11 // pred_region
          %s1193 = ssub.s32 16, 16
          %1194 = vsyncadd [#allocation18], %s1193
          %s1196 = sshll.u32 [#allocation19], 4
          %s1197 = int_to_ptr.vmem [resolvable:$true] %s1196
          %1199 = dma.hbm_to_vmem [thread:$0]  %s33, 16, %s1197, [#allocation18]
        $region76: #{tpu_custom_call.1} parent=11 // pred_fallthru
          _
        // Predicated region
        $region77: #{tpu_custom_call.1} parent=11 // pred_check
          %p1200 = pneg %p494
        $region78: #{tpu_custom_call.1} parent=11 // pred_check_branch
          %1202 = sbr.rel (%p1200) target = $region80
        $region79: #{tpu_custom_call.1} parent=11 // pred_region
          %s1204 = ssub.s32 256, 256
          %1205 = vsyncadd [#allocation21], %s1204
          %s1206 = sshll.u32 [#allocation20], 4
          %s1207 = int_to_ptr.vmem [resolvable:$true] %s1206
          %1212 = dma.hbm_to_vmem [thread:$0]  %s35, 256, %s1207, [#allocation21], 64, 64, 4
        $region80: #{tpu_custom_call.1} parent=11 // pred_fallthru
          _
        // Predicated region
        $region81: #{tpu_custom_call.1} parent=11 // pred_check
          %p1213 = pneg %p515
        $region82: #{tpu_custom_call.1} parent=11 // pred_check_branch
          %1215 = sbr.rel (%p1213) target = $region84
        $region83: #{tpu_custom_call.1} parent=11 // pred_region
          %s1217 = ssub.s32 16, 16
          %1218 = vsyncadd [#allocation21], %s1217
          %s1220 = sshll.u32 [#allocation22], 4
          %s1221 = int_to_ptr.vmem [resolvable:$true] %s1220
          %1223 = dma.hbm_to_vmem [thread:$0]  %s37, 16, %s1221, [#allocation21]
        $region84: #{tpu_custom_call.1} parent=11 // pred_fallthru
          _
        // Predicated region
        $region85: #{tpu_custom_call.1} parent=11 // pred_check
          %p1224 = pneg %p536
        $region86: #{tpu_custom_call.1} parent=11 // pred_check_branch
          %1226 = sbr.rel (%p1224) target = $region88
        $region87: #{tpu_custom_call.1} parent=11 // pred_region
          %s1228 = ssub.s32 256, 256
          %1229 = vsyncadd [#allocation24], %s1228
          %s1230 = sshll.u32 [#allocation23], 4
          %s1231 = int_to_ptr.vmem [resolvable:$true] %s1230
          %1236 = dma.hbm_to_vmem [thread:$0]  %s39, 256, %s1231, [#allocation24], 64, 64, 4
        $region88: #{tpu_custom_call.1} parent=11 // pred_fallthru
          _
        // Predicated region
        $region89: #{tpu_custom_call.1} parent=11 // pred_check
          %p1237 = pneg %p557
        $region90: #{tpu_custom_call.1} parent=11 // pred_check_branch
          %1239 = sbr.rel (%p1237) target = $region92
        $region91: #{tpu_custom_call.1} parent=11 // pred_region
          %s1241 = ssub.s32 256, 256
          %1242 = vsyncadd [#allocation24], %s1241
          %s1243 = sshll.u32 [#allocation25], 4
          %s1244 = int_to_ptr.vmem [resolvable:$true] %s1243
          %1249 = dma.hbm_to_vmem [thread:$0]  %s41, 256, %s1244, [#allocation24], 64, 64, 4
        $region92: #{tpu_custom_call.1} parent=11 // pred_fallthru
          _
        // Predicated region
        $region93: #{tpu_custom_call.1} parent=11 // pred_check
          %p1250 = pneg %p578
        $region94: #{tpu_custom_call.1} parent=11 // pred_check_branch
          %1252 = sbr.rel (%p1250) target = $region96
        $region95: #{tpu_custom_call.1} parent=11 // pred_region
          %s1254 = ssub.s32 256, 256
          %1255 = vsyncadd [#allocation27], %s1254
          %s1256 = sshll.u32 [#allocation26], 4
          %s1257 = int_to_ptr.vmem [resolvable:$true] %s1256
          %1262 = dma.hbm_to_vmem [thread:$0]  %s43, 256, %s1257, [#allocation27], 64, 64, 4
        $region96: #{tpu_custom_call.1} parent=11 // pred_fallthru
          _
        // Predicated region
        $region97: #{tpu_custom_call.1} parent=11 // pred_check
          %p1263 = pneg %p599
        $region98: #{tpu_custom_call.1} parent=11 // pred_check_branch
          %1265 = sbr.rel (%p1263) target = $region100
        $region99: #{tpu_custom_call.1} parent=11 // pred_region
          _
        $region100: #{tpu_custom_call.1} parent=11 // pred_fallthru
          _
        // Predicated region
        $region101: #{tpu_custom_call.1} parent=11 // pred_check
          %p1266 = pneg %p620
        $region102: #{tpu_custom_call.1} parent=11 // pred_check_branch
          %1268 = sbr.rel (%p1266) target = $region104
        $region103: #{tpu_custom_call.1} parent=11 // pred_region
          %s1270 = ssub.s32 16, 16
          %1271 = vsyncadd [#allocation27], %s1270
          %s1273 = sshll.u32 [#allocation28], 4
          %s1274 = int_to_ptr.vmem [resolvable:$true] %s1273
          %1276 = dma.hbm_to_vmem [thread:$0]  %s47, 16, %s1274, [#allocation27]
        $region104: #{tpu_custom_call.1} parent=11 // pred_fallthru
          _
        // Predicated region
        $region105: #{tpu_custom_call.1} parent=11 // pred_check
          %p1277 = pneg %p641
        $region106: #{tpu_custom_call.1} parent=11 // pred_check_branch
          %1279 = sbr.rel (%p1277) target = $region108
        $region107: #{tpu_custom_call.1} parent=11 // pred_region
          %s1281 = ssub.s32 16, 16
          %1282 = vsyncadd [#allocation30], %s1281
          %s1284 = sshll.u32 [#allocation29], 4
          %s1285 = int_to_ptr.vmem [resolvable:$true] %s1284
          %1287 = dma.hbm_to_vmem [thread:$0]  %s49, 16, %s1285, [#allocation30]
        $region108: #{tpu_custom_call.1} parent=11 // pred_fallthru
          _
        // Predicated region
        $region109: #{tpu_custom_call.1} parent=11 // pred_check
          %p1288 = pneg %p662
        $region110: #{tpu_custom_call.1} parent=11 // pred_check_branch
          %1290 = sbr.rel (%p1288) target = $region112
        $region111: #{tpu_custom_call.1} parent=11 // pred_region
          %s1292 = ssub.s32 256, 256
          %1293 = vsyncadd [#allocation30], %s1292
          %s1294 = sshll.u32 [#allocation31], 4
          %s1295 = int_to_ptr.vmem [resolvable:$true] %s1294
          %1300 = dma.hbm_to_vmem [thread:$0]  %s51, 256, %s1295, [#allocation30], 64, 64, 4
        $region112: #{tpu_custom_call.1} parent=11 // pred_fallthru
          _
        // Predicated region
        $region113: #{tpu_custom_call.1} parent=11 // pred_check
          %p1301 = pneg %p683
        $region114: #{tpu_custom_call.1} parent=11 // pred_check_branch
          %1303 = sbr.rel (%p1301) target = $region116
        $region115: #{tpu_custom_call.1} parent=11 // pred_region
          %s1305 = ssub.s32 16, 16
          %1306 = vsyncadd [#allocation33], %s1305
          %s1308 = sshll.u32 [#allocation32], 4
          %s1309 = int_to_ptr.vmem [resolvable:$true] %s1308
          %1311 = dma.hbm_to_vmem [thread:$0]  %s53, 16, %s1309, [#allocation33]
        $region116: #{tpu_custom_call.1} parent=11 // pred_fallthru
          _
        // Predicated region
        $region117: #{tpu_custom_call.1} parent=11 // pred_check
          %p1312 = pneg %p704
        $region118: #{tpu_custom_call.1} parent=11 // pred_check_branch
          %1314 = sbr.rel (%p1312) target = $region120
        $region119: #{tpu_custom_call.1} parent=11 // pred_region
          _
        $region120: #{tpu_custom_call.1} parent=11 // pred_fallthru
          _
        // Predicated region
        $region121: #{tpu_custom_call.1} parent=11 // pred_check
          %p1315 = pneg %p725
        $region122: #{tpu_custom_call.1} parent=11 // pred_check_branch
          %1317 = sbr.rel (%p1315) target = $region124
        $region123: #{tpu_custom_call.1} parent=11 // pred_region
          %s1319 = ssub.s32 16, 16
          %1320 = vsyncadd [#allocation33], %s1319
          %s1322 = sshll.u32 [#allocation34], 4
          %s1323 = int_to_ptr.vmem [resolvable:$true] %s1322
          %1325 = dma.hbm_to_vmem [thread:$0]  %s57, 16, %s1323, [#allocation33]
        $region124: #{tpu_custom_call.1} parent=11 // pred_fallthru
          _
        // Predicated region
        $region125: #{tpu_custom_call.1} parent=11 // pred_check
          %p1326 = pneg %p746
        $region126: #{tpu_custom_call.1} parent=11 // pred_check_branch
          %1328 = sbr.rel (%p1326) target = $region128
        $region127: #{tpu_custom_call.1} parent=11 // pred_region
          %s1330 = ssub.s32 256, 256
          %1331 = vsyncadd [#allocation36], %s1330
          %s1332 = sshll.u32 [#allocation35], 4
          %s1333 = int_to_ptr.vmem [resolvable:$true] %s1332
          %1338 = dma.hbm_to_vmem [thread:$0]  %s59, 256, %s1333, [#allocation36], 64, 64, 4
        $region128: #{tpu_custom_call.1} parent=11 // pred_fallthru
          _
        // Predicated region
        $region129: #{tpu_custom_call.1} parent=11 // pred_check
          %p1339 = pneg %p767
        $region130: #{tpu_custom_call.1} parent=11 // pred_check_branch
          %1341 = sbr.rel (%p1339) target = $region132
        $region131: #{tpu_custom_call.1} parent=11 // pred_region
          %s1343 = ssub.s32 16, 16
          %1344 = vsyncadd [#allocation36], %s1343
          %s1346 = sshll.u32 [#allocation37], 4
          %s1347 = int_to_ptr.vmem [resolvable:$true] %s1346
          %1349 = dma.hbm_to_vmem [thread:$0]  %s61, 16, %s1347, [#allocation36]
        $region132: #{tpu_custom_call.1} parent=11 // pred_fallthru
          _
        // Predicated region
        $region133: #{tpu_custom_call.1} parent=11 // pred_check
          %p1350 = pneg %p788
        $region134: #{tpu_custom_call.1} parent=11 // pred_check_branch
          %1352 = sbr.rel (%p1350) target = $region136
        $region135: #{tpu_custom_call.1} parent=11 // pred_region
          %s1354 = ssub.s32 256, 256
          %1355 = vsyncadd [#allocation39], %s1354
          %s1356 = sshll.u32 [#allocation38], 4
          %s1357 = int_to_ptr.vmem [resolvable:$true] %s1356
          %1362 = dma.hbm_to_vmem [thread:$0]  %s63, 256, %s1357, [#allocation39], 64, 64, 4
        $region136: #{tpu_custom_call.1} parent=11 // pred_fallthru
          _
        // Predicated region
        $region137: #{tpu_custom_call.1} parent=11 // pred_check
          %p1363 = pneg %p809
        $region138: #{tpu_custom_call.1} parent=11 // pred_check_branch
          %1365 = sbr.rel (%p1363) target = $region140
        $region139: #{tpu_custom_call.1} parent=11 // pred_region
          %s1367 = ssub.s32 16, 16
          %1368 = vsyncadd [#allocation39], %s1367
          %s1370 = sshll.u32 [#allocation40], 4
          %s1371 = int_to_ptr.vmem [resolvable:$true] %s1370
          %1373 = dma.hbm_to_vmem [thread:$0]  %s65, 16, %s1371, [#allocation39]
        $region140: #{tpu_custom_call.1} parent=11 // pred_fallthru
          _
        // Predicated region
        $region141: #{tpu_custom_call.1} parent=11 // pred_check
          %p1374 = pneg %p830
        $region142: #{tpu_custom_call.1} parent=11 // pred_check_branch
          %1376 = sbr.rel (%p1374) target = $region144
        $region143: #{tpu_custom_call.1} parent=11 // pred_region
          %s1378 = ssub.s32 256, 256
          %1379 = vsyncadd [#allocation42], %s1378
          %s1380 = sshll.u32 [#allocation41], 4
          %s1381 = int_to_ptr.vmem [resolvable:$true] %s1380
          %1386 = dma.hbm_to_vmem [thread:$0]  %s67, 256, %s1381, [#allocation42], 64, 64, 4
        $region144: #{tpu_custom_call.1} parent=11 // pred_fallthru
          _
        // Predicated region
        $region145: #{tpu_custom_call.1} parent=11 // pred_check
          %p1387 = pneg %p851
        $region146: #{tpu_custom_call.1} parent=11 // pred_check_branch
          %1389 = sbr.rel (%p1387) target = $region148
        $region147: #{tpu_custom_call.1} parent=11 // pred_region
          %s1391 = ssub.s32 256, 256
          %1392 = vsyncadd [#allocation42], %s1391
          %s1393 = sshll.u32 [#allocation43], 4
          %s1394 = int_to_ptr.vmem [resolvable:$true] %s1393
          %1399 = dma.hbm_to_vmem [thread:$0]  %s69, 256, %s1394, [#allocation42], 64, 64, 4
        $region148: #{tpu_custom_call.1} parent=11 // pred_fallthru
          _
        // Predicated region
        $region149: #{tpu_custom_call.1} parent=11 // pred_check
          %p1400 = pneg %p872
        $region150: #{tpu_custom_call.1} parent=11 // pred_check_branch
          %1402 = sbr.rel (%p1400) target = $region152
        $region151: #{tpu_custom_call.1} parent=11 // pred_region
          %s1404 = ssub.s32 256, 256
          %1405 = vsyncadd [#allocation45], %s1404
          %s1406 = sshll.u32 [#allocation44], 4
          %s1407 = int_to_ptr.vmem [resolvable:$true] %s1406
          %1412 = dma.hbm_to_vmem [thread:$0]  %s71, 256, %s1407, [#allocation45], 64, 64, 4
        $region152: #{tpu_custom_call.1} parent=11 // pred_fallthru
          _
        // Predicated region
        $region153: #{tpu_custom_call.1} parent=11 // pred_check
          %p1413 = pneg %p893
        $region154: #{tpu_custom_call.1} parent=11 // pred_check_branch
          %1415 = sbr.rel (%p1413) target = $region156
        $region155: #{tpu_custom_call.1} parent=11 // pred_region
          %s1417 = ssub.s32 16, 16
          %1418 = vsyncadd [#allocation45], %s1417
          %s1420 = sshll.u32 [#allocation46], 4
          %s1421 = int_to_ptr.vmem [resolvable:$true] %s1420
          %1423 = dma.hbm_to_vmem [thread:$0]  %s73, 16, %s1421, [#allocation45]
        $region156: #{tpu_custom_call.1} parent=11 // pred_fallthru
          _
        // Predicated region
        $region157: #{tpu_custom_call.1} parent=11 // pred_check
          %p1424 = pneg %p914
        $region158: #{tpu_custom_call.1} parent=11 // pred_check_branch
          %1426 = sbr.rel (%p1424) target = $region160
        $region159: #{tpu_custom_call.1} parent=11 // pred_region
          _
        $region160: #{tpu_custom_call.1} parent=11 // pred_fallthru
          _
        // Predicated region
        $region161: #{tpu_custom_call.1} parent=11 // pred_check
          %p1427 = pneg %p935
        $region162: #{tpu_custom_call.1} parent=11 // pred_check_branch
          %1429 = sbr.rel (%p1427) target = $region164
        $region163: #{tpu_custom_call.1} parent=11 // pred_region
          _
        $region164: #{tpu_custom_call.1} parent=11 // pred_fallthru
          _
        // Predicated region
        $region165: #{tpu_custom_call.1} parent=11 // pred_check
          %p1430 = pneg %p956
        $region166: #{tpu_custom_call.1} parent=11 // pred_check_branch
          %1432 = sbr.rel (%p1430) target = $region168
        $region167: #{tpu_custom_call.1} parent=11 // pred_region
          _
        $region168: #{tpu_custom_call.1} parent=11 // pred_fallthru
          _
        // Predicated region
        $region169: #{tpu_custom_call.1} parent=11 // pred_check
          %p1433 = pneg %p977
        $region170: #{tpu_custom_call.1} parent=11 // pred_check_branch
          %1435 = sbr.rel (%p1433) target = $region172
        $region171: #{tpu_custom_call.1} parent=11 // pred_region
          _
        $region172: #{tpu_custom_call.1} parent=11 // pred_fallthru
          _
        // Predicated region
        $region173: #{tpu_custom_call.1} parent=11 // pred_check
          %p1436 = pneg %p998
        $region174: #{tpu_custom_call.1} parent=11 // pred_check_branch
          %1438 = sbr.rel (%p1436) target = $region176
        $region175: #{tpu_custom_call.1} parent=11 // pred_region
          _
        $region176: #{tpu_custom_call.1} parent=11 // pred_fallthru
          _
        // Predicated region
        $region177: #{tpu_custom_call.1} parent=11 // pred_check
          %p1439 = pneg %p1019
        $region178: #{tpu_custom_call.1} parent=11 // pred_check_branch
          %1441 = sbr.rel (%p1439) target = $region180
        $region179: #{tpu_custom_call.1} parent=11 // pred_region
          _
        $region180: #{tpu_custom_call.1} parent=11 // pred_fallthru
          _
      $region12: #{tpu_custom_call.1} parent=5 // pred_fallthru
        _
      %p1442 = scmp.lt.s32.totalorder %s111, 2
      // Predicated region
      $region181: #{tpu_custom_call.1} parent=5 // pred_check
        %p1443 = pneg %p1442
      $region182: #{tpu_custom_call.1} parent=5 // pred_check_branch
        %1445 = sbr.rel (%p1443) target = $region184
      $region183: #{tpu_custom_call.1} parent=5 // pred_region
        // Predicated region
        $region185: #{tpu_custom_call.1} parent=183 // pred_check
          %p1446 = pneg %p131
        $region186: #{tpu_custom_call.1} parent=183 // pred_check_branch
          %1448 = sbr.rel (%p1446) target = $region188
        $region187: #{tpu_custom_call.1} parent=183 // pred_region
          %p1449 = scmp.lt.s32.totalorder %s111, 1
          %s1450 = scalar_select %p1449, %s111, 1
          %s1451 = smul.addr %s1450, 8
          %s1452 = scalar_lea.vmem %s1, %s1451
        $region188: #{tpu_custom_call.1} parent=183 // pred_fallthru
          _
      $region184: #{tpu_custom_call.1} parent=5 // pred_fallthru
        _
      %p1453 = scmp.le.s32.totalorder 1, %s111
      %p1454 = scmp.lt.s32.totalorder %s111, 3
      %p1455 = pnand %p1453, %p1454
      %p1456 = pneg %p1455
      // Predicated region
      $region189: #{tpu_custom_call.1} parent=5 // pred_check
        _
      $region190: #{tpu_custom_call.1} parent=5 // pred_check_branch
        %1458 = sbr.rel (%p1455) target = $region192
      $region191: #{tpu_custom_call.1} parent=5 // pred_region
        %s1459 = ssub.s32 %s111, 1
        // Predicated region
        $region193: #{tpu_custom_call.1} parent=191 // pred_check
          %p1460 = pneg %p158
        $region194: #{tpu_custom_call.1} parent=191 // pred_check_branch
          %1462 = sbr.rel (%p1460) target = $region196
        $region195: #{tpu_custom_call.1} parent=191 // pred_region
          %1463 = dma.done [#allocation3], 16
        $region196: #{tpu_custom_call.1} parent=191 // pred_fallthru
          _
        // Predicated region
        $region197: #{tpu_custom_call.1} parent=191 // pred_check
          %p1464 = pneg %p179
        $region198: #{tpu_custom_call.1} parent=191 // pred_check_branch
          %1466 = sbr.rel (%p1464) target = $region200
        $region199: #{tpu_custom_call.1} parent=191 // pred_region
          %1467 = dma.done [#allocation6], 16
        $region200: #{tpu_custom_call.1} parent=191 // pred_fallthru
          _
        // Predicated region
        $region201: #{tpu_custom_call.1} parent=191 // pred_check
          %p1468 = pneg %p263
        $region202: #{tpu_custom_call.1} parent=191 // pred_check_branch
          %1470 = sbr.rel (%p1468) target = $region204
        $region203: #{tpu_custom_call.1} parent=191 // pred_region
          %1471 = dma.done [#allocation6], 16
        $region204: #{tpu_custom_call.1} parent=191 // pred_fallthru
          _
        // Predicated region
        $region205: #{tpu_custom_call.1} parent=191 // pred_check
          %p1472 = pneg %p284
        $region206: #{tpu_custom_call.1} parent=191 // pred_check_branch
          %1474 = sbr.rel (%p1472) target = $region208
        $region207: #{tpu_custom_call.1} parent=191 // pred_region
          %1475 = dma.done [#allocation9], 16
        $region208: #{tpu_custom_call.1} parent=191 // pred_fallthru
          _
        // Predicated region
        $region209: #{tpu_custom_call.1} parent=191 // pred_check
          %p1476 = pneg %p305
        $region210: #{tpu_custom_call.1} parent=191 // pred_check_branch
          %1478 = sbr.rel (%p1476) target = $region212
        $region211: #{tpu_custom_call.1} parent=191 // pred_region
          %1479 = dma.done [#allocation9], 16
        $region212: #{tpu_custom_call.1} parent=191 // pred_fallthru
          _
        // Predicated region
        $region213: #{tpu_custom_call.1} parent=191 // pred_check
          %p1480 = pneg %p347
        $region214: #{tpu_custom_call.1} parent=191 // pred_check_branch
          %1482 = sbr.rel (%p1480) target = $region216
        $region215: #{tpu_custom_call.1} parent=191 // pred_region
          %1483 = dma.done [#allocation12], 16
        $region216: #{tpu_custom_call.1} parent=191 // pred_fallthru
          _
        // Predicated region
        $region217: #{tpu_custom_call.1} parent=191 // pred_check
          %p1484 = pneg %p389
        $region218: #{tpu_custom_call.1} parent=191 // pred_check_branch
          %1486 = sbr.rel (%p1484) target = $region220
        $region219: #{tpu_custom_call.1} parent=191 // pred_region
          %1487 = dma.done [#allocation12], 256
        $region220: #{tpu_custom_call.1} parent=191 // pred_fallthru
          _
        // Predicated region
        $region221: #{tpu_custom_call.1} parent=191 // pred_check
          %p1488 = pneg %p410
        $region222: #{tpu_custom_call.1} parent=191 // pred_check_branch
          %1490 = sbr.rel (%p1488) target = $region224
        $region223: #{tpu_custom_call.1} parent=191 // pred_region
          %1491 = dma.done [#allocation15], 256
        $region224: #{tpu_custom_call.1} parent=191 // pred_fallthru
          _
        // Predicated region
        $region225: #{tpu_custom_call.1} parent=191 // pred_check
          %p1492 = pneg %p431
        $region226: #{tpu_custom_call.1} parent=191 // pred_check_branch
          %1494 = sbr.rel (%p1492) target = $region228
        $region227: #{tpu_custom_call.1} parent=191 // pred_region
          %1495 = dma.done [#allocation15], 16
        $region228: #{tpu_custom_call.1} parent=191 // pred_fallthru
          _
        // Predicated region
        $region229: #{tpu_custom_call.1} parent=191 // pred_check
          %p1496 = pneg %p452
        $region230: #{tpu_custom_call.1} parent=191 // pred_check_branch
          %1498 = sbr.rel (%p1496) target = $region232
        $region231: #{tpu_custom_call.1} parent=191 // pred_region
          %1499 = dma.done [#allocation18], 16
        $region232: #{tpu_custom_call.1} parent=191 // pred_fallthru
          _
        // Predicated region
        $region233: #{tpu_custom_call.1} parent=191 // pred_check
          %p1500 = pneg %p473
        $region234: #{tpu_custom_call.1} parent=191 // pred_check_branch
          %1502 = sbr.rel (%p1500) target = $region236
        $region235: #{tpu_custom_call.1} parent=191 // pred_region
          %1503 = dma.done [#allocation18], 16
        $region236: #{tpu_custom_call.1} parent=191 // pred_fallthru
          _
        // Predicated region
        $region237: #{tpu_custom_call.1} parent=191 // pred_check
          %p1504 = pneg %p494
        $region238: #{tpu_custom_call.1} parent=191 // pred_check_branch
          %1506 = sbr.rel (%p1504) target = $region240
        $region239: #{tpu_custom_call.1} parent=191 // pred_region
          %1507 = dma.done [#allocation21], 256
        $region240: #{tpu_custom_call.1} parent=191 // pred_fallthru
          _
        // Predicated region
        $region241: #{tpu_custom_call.1} parent=191 // pred_check
          %p1508 = pneg %p515
        $region242: #{tpu_custom_call.1} parent=191 // pred_check_branch
          %1510 = sbr.rel (%p1508) target = $region244
        $region243: #{tpu_custom_call.1} parent=191 // pred_region
          %1511 = dma.done [#allocation21], 16
        $region244: #{tpu_custom_call.1} parent=191 // pred_fallthru
          _
        // Predicated region
        $region245: #{tpu_custom_call.1} parent=191 // pred_check
          %p1512 = pneg %p536
        $region246: #{tpu_custom_call.1} parent=191 // pred_check_branch
          %1514 = sbr.rel (%p1512) target = $region248
        $region247: #{tpu_custom_call.1} parent=191 // pred_region
          %1515 = dma.done [#allocation24], 256
        $region248: #{tpu_custom_call.1} parent=191 // pred_fallthru
          _
        // Predicated region
        $region249: #{tpu_custom_call.1} parent=191 // pred_check
          %p1516 = pneg %p557
        $region250: #{tpu_custom_call.1} parent=191 // pred_check_branch
          %1518 = sbr.rel (%p1516) target = $region252
        $region251: #{tpu_custom_call.1} parent=191 // pred_region
          %1519 = dma.done [#allocation24], 256
        $region252: #{tpu_custom_call.1} parent=191 // pred_fallthru
          _
        // Predicated region
        $region253: #{tpu_custom_call.1} parent=191 // pred_check
          %p1520 = pneg %p578
        $region254: #{tpu_custom_call.1} parent=191 // pred_check_branch
          %1522 = sbr.rel (%p1520) target = $region256
        $region255: #{tpu_custom_call.1} parent=191 // pred_region
          %1523 = dma.done [#allocation27], 256
        $region256: #{tpu_custom_call.1} parent=191 // pred_fallthru
          _
        // Predicated region
        $region257: #{tpu_custom_call.1} parent=191 // pred_check
          %p1524 = pneg %p620
        $region258: #{tpu_custom_call.1} parent=191 // pred_check_branch
          %1526 = sbr.rel (%p1524) target = $region260
        $region259: #{tpu_custom_call.1} parent=191 // pred_region
          %1527 = dma.done [#allocation27], 16
        $region260: #{tpu_custom_call.1} parent=191 // pred_fallthru
          _
        // Predicated region
        $region261: #{tpu_custom_call.1} parent=191 // pred_check
          %p1528 = pneg %p641
        $region262: #{tpu_custom_call.1} parent=191 // pred_check_branch
          %1530 = sbr.rel (%p1528) target = $region264
        $region263: #{tpu_custom_call.1} parent=191 // pred_region
          %1531 = dma.done [#allocation30], 16
        $region264: #{tpu_custom_call.1} parent=191 // pred_fallthru
          _
        // Predicated region
        $region265: #{tpu_custom_call.1} parent=191 // pred_check
          %p1532 = pneg %p662
        $region266: #{tpu_custom_call.1} parent=191 // pred_check_branch
          %1534 = sbr.rel (%p1532) target = $region268
        $region267: #{tpu_custom_call.1} parent=191 // pred_region
          %1535 = dma.done [#allocation30], 256
        $region268: #{tpu_custom_call.1} parent=191 // pred_fallthru
          _
        // Predicated region
        $region269: #{tpu_custom_call.1} parent=191 // pred_check
          %p1536 = pneg %p683
        $region270: #{tpu_custom_call.1} parent=191 // pred_check_branch
          %1538 = sbr.rel (%p1536) target = $region272
        $region271: #{tpu_custom_call.1} parent=191 // pred_region
          %1539 = dma.done [#allocation33], 16
        $region272: #{tpu_custom_call.1} parent=191 // pred_fallthru
          _
        // Predicated region
        $region273: #{tpu_custom_call.1} parent=191 // pred_check
          %p1540 = pneg %p725
        $region274: #{tpu_custom_call.1} parent=191 // pred_check_branch
          %1542 = sbr.rel (%p1540) target = $region276
        $region275: #{tpu_custom_call.1} parent=191 // pred_region
          %1543 = dma.done [#allocation33], 16
        $region276: #{tpu_custom_call.1} parent=191 // pred_fallthru
          _
        // Predicated region
        $region277: #{tpu_custom_call.1} parent=191 // pred_check
          %p1544 = pneg %p746
        $region278: #{tpu_custom_call.1} parent=191 // pred_check_branch
          %1546 = sbr.rel (%p1544) target = $region280
        $region279: #{tpu_custom_call.1} parent=191 // pred_region
          %1547 = dma.done [#allocation36], 256
        $region280: #{tpu_custom_call.1} parent=191 // pred_fallthru
          _
        // Predicated region
        $region281: #{tpu_custom_call.1} parent=191 // pred_check
          %p1548 = pneg %p767
        $region282: #{tpu_custom_call.1} parent=191 // pred_check_branch
          %1550 = sbr.rel (%p1548) target = $region284
        $region283: #{tpu_custom_call.1} parent=191 // pred_region
          %1551 = dma.done [#allocation36], 16
        $region284: #{tpu_custom_call.1} parent=191 // pred_fallthru
          _
        // Predicated region
        $region285: #{tpu_custom_call.1} parent=191 // pred_check
          %p1552 = pneg %p788
        $region286: #{tpu_custom_call.1} parent=191 // pred_check_branch
          %1554 = sbr.rel (%p1552) target = $region288
        $region287: #{tpu_custom_call.1} parent=191 // pred_region
          %1555 = dma.done [#allocation39], 256
        $region288: #{tpu_custom_call.1} parent=191 // pred_fallthru
          _
        // Predicated region
        $region289: #{tpu_custom_call.1} parent=191 // pred_check
          %p1556 = pneg %p809
        $region290: #{tpu_custom_call.1} parent=191 // pred_check_branch
          %1558 = sbr.rel (%p1556) target = $region292
        $region291: #{tpu_custom_call.1} parent=191 // pred_region
          %1559 = dma.done [#allocation39], 16
        $region292: #{tpu_custom_call.1} parent=191 // pred_fallthru
          _
        // Predicated region
        $region293: #{tpu_custom_call.1} parent=191 // pred_check
          %p1560 = pneg %p830
        $region294: #{tpu_custom_call.1} parent=191 // pred_check_branch
          %1562 = sbr.rel (%p1560) target = $region296
        $region295: #{tpu_custom_call.1} parent=191 // pred_region
          %1563 = dma.done [#allocation42], 256
        $region296: #{tpu_custom_call.1} parent=191 // pred_fallthru
          _
        // Predicated region
        $region297: #{tpu_custom_call.1} parent=191 // pred_check
          %p1564 = pneg %p851
        $region298: #{tpu_custom_call.1} parent=191 // pred_check_branch
          %1566 = sbr.rel (%p1564) target = $region300
        $region299: #{tpu_custom_call.1} parent=191 // pred_region
          %1567 = dma.done [#allocation42], 256
        $region300: #{tpu_custom_call.1} parent=191 // pred_fallthru
          _
        // Predicated region
        $region301: #{tpu_custom_call.1} parent=191 // pred_check
          %p1568 = pneg %p872
        $region302: #{tpu_custom_call.1} parent=191 // pred_check_branch
          %1570 = sbr.rel (%p1568) target = $region304
        $region303: #{tpu_custom_call.1} parent=191 // pred_region
          %1571 = dma.done [#allocation45], 256
        $region304: #{tpu_custom_call.1} parent=191 // pred_fallthru
          _
        // Predicated region
        $region305: #{tpu_custom_call.1} parent=191 // pred_check
          %p1572 = pneg %p893
        $region306: #{tpu_custom_call.1} parent=191 // pred_check_branch
          %1574 = sbr.rel (%p1572) target = $region308
        $region307: #{tpu_custom_call.1} parent=191 // pred_region
          %1575 = dma.done [#allocation45], 16
        $region308: #{tpu_custom_call.1} parent=191 // pred_fallthru
          _
        %p1576 = scmp.lt.s32.totalorder %s116, 1
        %s1577 = scalar_select %p1576, %s116, 1
        %s1578 = smul.addr %s1577, 8
        %s1579 = scalar_lea.vmem %s1, %s1578
        %p1580 = pneg %p137
        %p1581 = pneg %p134
        %p1582 = pneg %p158
        %p1583 = pneg %p155
        %p1584 = pneg %p179
        %p1585 = pneg %p176
        %p1586 = pneg %p200
        %p1587 = pneg %p197
        %p1588 = pneg %p221
        %p1589 = pneg %p218
        %p1590 = pneg %p242
        %p1591 = pneg %p239
        %p1592 = pneg %p263
        %p1593 = pneg %p260
        %p1594 = pneg %p284
        %p1595 = pneg %p281
        %p1596 = pneg %p305
        %p1597 = pneg %p302
        %p1598 = pneg %p326
        %p1599 = pneg %p323
        %p1600 = pneg %p347
        %p1601 = pneg %p344
        %p1602 = pneg %p368
        %p1603 = pneg %p365
        %p1604 = pneg %p389
        %p1605 = pneg %p386
        %p1606 = pneg %p410
        %p1607 = pneg %p407
        %p1608 = pneg %p431
        %p1609 = pneg %p428
        %p1610 = pneg %p452
        %p1611 = pneg %p449
        %p1612 = pneg %p473
        %p1613 = pneg %p470
        %p1614 = pneg %p494
        %p1615 = pneg %p491
        %p1616 = pneg %p515
        %p1617 = pneg %p512
        %p1618 = pneg %p536
        %p1619 = pneg %p533
        %p1620 = pneg %p557
        %p1621 = pneg %p554
        %p1622 = pneg %p578
        %p1623 = pneg %p575
        %p1624 = pneg %p599
        %p1625 = pneg %p596
        %p1626 = pneg %p620
        %p1627 = pneg %p617
        %p1628 = pneg %p641
        %p1629 = pneg %p638
        %p1630 = pneg %p662
        %p1631 = pneg %p659
        %p1632 = pneg %p683
        %p1633 = pneg %p680
        %p1634 = pneg %p704
        %p1635 = pneg %p701
        %p1636 = pneg %p725
        %p1637 = pneg %p722
        %p1638 = pneg %p746
        %p1639 = pneg %p743
        %p1640 = pneg %p767
        %p1641 = pneg %p764
        %p1642 = pneg %p788
        %p1643 = pneg %p785
        %p1644 = pneg %p809
        %p1645 = pneg %p806
        %p1646 = pneg %p830
        %p1647 = pneg %p827
        %p1648 = pneg %p851
        %p1649 = pneg %p848
        %p1650 = pneg %p872
        %p1651 = pneg %p869
        %p1652 = pneg %p893
        %p1653 = pneg %p890
        %p1654 = pneg %p914
        %p1655 = pneg %p911
        %p1656 = pneg %p935
        %p1657 = pneg %p932
        %p1658 = pneg %p956
        %p1659 = pneg %p953
        %p1660 = pneg %p977
        %p1661 = pneg %p974
        %p1662 = pneg %p998
        %p1663 = pneg %p995
        %p1664 = pneg %p1019
        %p1665 = pneg %p1016
        %p1666 = pneg %p1045
        %p1667 = pneg %p1042
        %s1668 = sand.u32 %s1032, 1
        %s1669 = scalar_lea.sflag [#allocation4], %s1668
        %s1670 = sand.u32 %s1032, 1
        %s1671 = smul.addr %s1670, 8
        %s1672 = scalar_lea.vmem [#allocation47], %s1671
        %p1673 = scmp.lt.s32.totalorder %s116, 1
        %s1674 = scalar_select %p1673, %s116, 1
        %s1675 = smul.addr %s1674, 8
        %s1676 = scalar_lea.vmem %s1, %s1675
        %v1678 = vld [vmem:[%s1676] sm:$0xff]
        %v1679 = vlaneseq
        %v1680 = vshrl.u32 %v1679, 7
        %v1681 = vlaneseq
        %v1682 = vand.u32 %v1681, 127
        %vm1683 = vcmp.ge.s32.totalorder %v1680, %v1682
        %v1684 = vsel %vm1683, 0.0, -1e+30
        %v1685 = vld [vmem:[#allocation2] sm:$0x1]
        %v1686 = vld [vmem:[#allocation5] sm:$0x1]
        %vm1687 = vcmask 261120
        %v1688 = vsel %vm1687, %v1678, 0.0
        %1689 = vadd.xlane.f32.xlu0 %v1688
        %v1690 = vpop.xlane.xlu0 %1689
        %v1691 = vrcp.pop 32.0
        %v1692 = vmul.f32 %v1690, %v1691
        %v1693 = vsub.f32 %v1678, %v1692
        %v1694 = vmul.f32 %v1693, %v1693
        %v1695 = vsel %vm1687, %v1694, 0.0
        %1696 = vadd.xlane.f32.xlu0 %v1695
        %v1697 = vpop.xlane.xlu0 %1696
        %v1698 = vmul.f32 %v1697, %v1691
        %v1699 = vadd.f32 %v1698, 1e-05
        %v1700 = vrsqrt.pop %v1699
        %v1701 = vmul.f32 %v1693, %v1700
        %v1703 = vlaneseq
        %v1704 = vshrl.u32 %v1703, 7
        %v1705 = vsub.s32 0, %v1704
        %v1706 = vrot.slane %v1685, %v1705
        %v1708 = vmul.f32 %v1701, %v1706
        %v1710 = vlaneseq
        %v1711 = vshrl.u32 %v1710, 7
        %v1712 = vsub.s32 0, %v1711
        %v1713 = vrot.slane %v1686, %v1712
        %v1715 = vadd.f32 %v1708, %v1713
        %v1716 = vld [vmem:[%s7] sm:$0xf]
        %v1717 = vld [vmem:[%s7 + $0x4] sm:$0xf]
        %v1718 = vld [vmem:[%s7 + $0x8] sm:$0xf]
        %v1719 = vld [vmem:[%s7 + $0xc] sm:$0xf]
        %v1720 = vld [vmem:[%s9] sm:$0xf]
        %v1721 = vld [vmem:[%s9 + $0x4] sm:$0xf]
        %v1722 = vld [vmem:[%s9 + $0x8] sm:$0xf]
        %v1723 = vld [vmem:[%s9 + $0xc] sm:$0xf]
        %v1724 = vld [vmem:[%s11] sm:$0xf]
        %v1725 = vld [vmem:[%s11 + $0x4] sm:$0xf]
        %v1726 = vld [vmem:[%s11 + $0x8] sm:$0xf]
        %v1727 = vld [vmem:[%s11 + $0xc] sm:$0xf]
        %v1728 = vld [vmem:[#allocation7] sm:$0x1]
        %v1729 = vld [vmem:[#allocation8] sm:$0x1]
        %v1730 = vld [vmem:[#allocation10] sm:$0x1]
        %v1731 = vld [vmem:[%s19] sm:$0xf]
        %v1732 = vld [vmem:[%s19 + $0x4] sm:$0xf]
        %v1733 = vld [vmem:[%s19 + $0x8] sm:$0xf]
        %v1734 = vld [vmem:[%s19 + $0xc] sm:$0xf]
        %v1735 = vld [vmem:[#allocation11] sm:$0x1]
        %v1736 = vpack.c.bf16 %v1715, %v1715
        %v1738 = vlaneseq
        %v1739 = vshrl.u32 %v1738, 7
        %v1740 = vsub.s32 0, %v1739
        %v1741 = vrot.slane %v1728, %v1740
        %v1747 = vunpack.c.l.b16 %v1716
        %v1748 = vunpack.c.l.b16 %v1717
        %v1749 = vunpack.c.l.b16 %v1718
        %v1750 = vunpack.c.l.b16 %v1719
        %v1751 = vpack.c.b16 %v1748, %v1747
        %v1752 = vpack.c.b16 %v1750, %v1749
        %v1756 = vsel %vm1687, %v1736, 0
        %1758 = vmatprep.subr.bf16.mxu0 0
        %1759 = vmatpush1.bf16.msra.mxu0 0
        %1760 = vmatprep.subr.bf16.mxu0 0
        %1761 = vmatpush1.bf16.msra.mxu0 0
        %1762 = vmatprep.subr.bf16.mxu0 0
        %1763 = vmatpush1.bf16.msra.mxu0 0
        %1764 = vmatprep.subr.bf16.mxu0 0
        %1765 = vmatpush1.bf16.msra.mxu0 0
        %1766 = vmatprep.subr.bf16.mxu0 0
        %1767 = vmatpush1.bf16.msra.mxu0 0
        %1768 = vmatprep.subr.bf16.mxu0 0
        %1769 = vmatpush1.bf16.msra.mxu0 0
        %1770 = vmatprep.subr.bf16.mxu0 0
        %1771 = vmatpush1.bf16.msra.mxu0 %v1752
        %1772 = vmatprep.subr.bf16.mxu0 0
        %1773 = vmatpush1.bf16.msra.mxu0 %v1751
        %1774 = vmatprep.subr.bf16.mxu0 0
        %1775 = vmatpush2.bf16.msra.mxu0 0
        %1776 = vmatprep.subr.bf16.mxu0 0
        %1777 = vmatpush2.bf16.msra.mxu0 0
        %1778 = vmatprep.subr.bf16.mxu0 0
        %1779 = vmatpush2.bf16.msra.mxu0 0
        %1780 = vmatprep.subr.bf16.mxu0 0
        %1781 = vmatpush2.bf16.msra.mxu0 0
        %1782 = vmatprep.subr.bf16.mxu0 0
        %1783 = vmatpush2.bf16.msra.mxu0 0
        %1784 = vmatprep.subr.bf16.mxu0 0
        %1785 = vmatpush2.bf16.msra.mxu0 0
        %1786 = vmatprep.subr.bf16.mxu0 0
        %1787 = vmatpush2.bf16.msra.mxu0 0
        %1788 = vmatprep.subr.bf16.mxu0 0
        %1789 = vmatpush2.bf16.msra.mxu0 0
        %1790 = vmatprep.mubr.bf16.mxu0 0
        %1791 = vmatmul.mubr.bf16.gmra.mxu0 %v1756
        %v1792 = vpop.f32.mrf.mxu0
        %v1793 = vadd.f32 %v1741, %v1792
        %v1794 = vpop.f32.mrf.mxu0
        %v1795 = vpop.f32.mrf.mxu0
        %v1796 = vpop.f32.mrf.mxu0
        %1797 = vdwg.mxu0
        %v1799 = vlaneseq
        %v1800 = vshrl.u32 %v1799, 7
        %v1801 = vsub.s32 0, %v1800
        %v1802 = vrot.slane %v1729, %v1801
        %v1808 = vunpack.c.l.b16 %v1720
        %v1809 = vunpack.c.l.b16 %v1721
        %v1810 = vunpack.c.l.b16 %v1722
        %v1811 = vunpack.c.l.b16 %v1723
        %v1812 = vpack.c.b16 %v1809, %v1808
        %v1813 = vpack.c.b16 %v1811, %v1810
        %1816 = vmatprep.subr.bf16.mxu0 0
        %1817 = vmatpush1.bf16.msra.mxu0 0
        %1818 = vmatprep.subr.bf16.mxu0 0
        %1819 = vmatpush1.bf16.msra.mxu0 0
        %1820 = vmatprep.subr.bf16.mxu0 0
        %1821 = vmatpush1.bf16.msra.mxu0 0
        %1822 = vmatprep.subr.bf16.mxu0 0
        %1823 = vmatpush1.bf16.msra.mxu0 0
        %1824 = vmatprep.subr.bf16.mxu0 0
        %1825 = vmatpush1.bf16.msra.mxu0 0
        %1826 = vmatprep.subr.bf16.mxu0 0
        %1827 = vmatpush1.bf16.msra.mxu0 0
        %1828 = vmatprep.subr.bf16.mxu0 0
        %1829 = vmatpush1.bf16.msra.mxu0 %v1813
        %1830 = vmatprep.subr.bf16.mxu0 0
        %1831 = vmatpush1.bf16.msra.mxu0 %v1812
        %1832 = vmatprep.subr.bf16.mxu0 0
        %1833 = vmatpush2.bf16.msra.mxu0 0
        %1834 = vmatprep.subr.bf16.mxu0 0
        %1835 = vmatpush2.bf16.msra.mxu0 0
        %1836 = vmatprep.subr.bf16.mxu0 0
        %1837 = vmatpush2.bf16.msra.mxu0 0
        %1838 = vmatprep.subr.bf16.mxu0 0
        %1839 = vmatpush2.bf16.msra.mxu0 0
        %1840 = vmatprep.subr.bf16.mxu0 0
        %1841 = vmatpush2.bf16.msra.mxu0 0
        %1842 = vmatprep.subr.bf16.mxu0 0
        %1843 = vmatpush2.bf16.msra.mxu0 0
        %1844 = vmatprep.subr.bf16.mxu0 0
        %1845 = vmatpush2.bf16.msra.mxu0 0
        %1846 = vmatprep.subr.bf16.mxu0 0
        %1847 = vmatpush2.bf16.msra.mxu0 0
        %1848 = vmatprep.mubr.bf16.mxu0 0
        %1849 = vmatmul.mubr.bf16.gmra.mxu0 %v1756
        %v1850 = vpop.f32.mrf.mxu0
        %v1851 = vadd.f32 %v1802, %v1850
        %v1852 = vpop.f32.mrf.mxu0
        %v1853 = vpop.f32.mrf.mxu0
        %v1854 = vpop.f32.mrf.mxu0
        %1855 = vdwg.mxu0
        %v1857 = vlaneseq
        %v1858 = vshrl.u32 %v1857, 7
        %v1859 = vsub.s32 0, %v1858
        %v1860 = vrot.slane %v1730, %v1859
        %v1866 = vunpack.c.l.b16 %v1724
        %v1867 = vunpack.c.l.b16 %v1725
        %v1868 = vunpack.c.l.b16 %v1726
        %v1869 = vunpack.c.l.b16 %v1727
        %v1870 = vpack.c.b16 %v1867, %v1866
        %v1871 = vpack.c.b16 %v1869, %v1868
        %1874 = vmatprep.subr.bf16.mxu0 0
        %1875 = vmatpush1.bf16.msra.mxu0 0
        %1876 = vmatprep.subr.bf16.mxu0 0
        %1877 = vmatpush1.bf16.msra.mxu0 0
        %1878 = vmatprep.subr.bf16.mxu0 0
        %1879 = vmatpush1.bf16.msra.mxu0 0
        %1880 = vmatprep.subr.bf16.mxu0 0
        %1881 = vmatpush1.bf16.msra.mxu0 0
        %1882 = vmatprep.subr.bf16.mxu0 0
        %1883 = vmatpush1.bf16.msra.mxu0 0
        %1884 = vmatprep.subr.bf16.mxu0 0
        %1885 = vmatpush1.bf16.msra.mxu0 0
        %1886 = vmatprep.subr.bf16.mxu0 0
        %1887 = vmatpush1.bf16.msra.mxu0 %v1871
        %1888 = vmatprep.subr.bf16.mxu0 0
        %1889 = vmatpush1.bf16.msra.mxu0 %v1870
        %1890 = vmatprep.subr.bf16.mxu0 0
        %1891 = vmatpush2.bf16.msra.mxu0 0
        %1892 = vmatprep.subr.bf16.mxu0 0
        %1893 = vmatpush2.bf16.msra.mxu0 0
        %1894 = vmatprep.subr.bf16.mxu0 0
        %1895 = vmatpush2.bf16.msra.mxu0 0
        %1896 = vmatprep.subr.bf16.mxu0 0
        %1897 = vmatpush2.bf16.msra.mxu0 0
        %1898 = vmatprep.subr.bf16.mxu0 0
        %1899 = vmatpush2.bf16.msra.mxu0 0
        %1900 = vmatprep.subr.bf16.mxu0 0
        %1901 = vmatpush2.bf16.msra.mxu0 0
        %1902 = vmatprep.subr.bf16.mxu0 0
        %1903 = vmatpush2.bf16.msra.mxu0 0
        %1904 = vmatprep.subr.bf16.mxu0 0
        %1905 = vmatpush2.bf16.msra.mxu0 0
        %1906 = vmatprep.mubr.bf16.mxu0 0
        %1907 = vmatmul.mubr.bf16.gmra.mxu0 %v1756
        %v1908 = vpop.f32.mrf.mxu0
        %v1909 = vadd.f32 %v1860, %v1908
        %v1910 = vpop.f32.mrf.mxu0
        %v1911 = vpop.f32.mrf.mxu0
        %v1912 = vpop.f32.mrf.mxu0
        %1913 = vdwg.mxu0
        %v1914 = vpack.c.bf16 %v1793, %v1793
        %v1915 = vpack.c.bf16 %v1851, %v1851
        %v1916 = vpack.c.bf16 %v1909, %v1909
        %vm1917 = vcmask 64512
        %v1919 = vsel %vm1917, %v1914, 0
        %v1922 = vsel %vm1917, %v1915, 0
        %1924 = vmatprep.subr.bf16.mxu0 0
        %1925 = vmatpush1.bf16.xpose.msra.mxu0 0
        %1926 = vmatprep.subr.bf16.mxu0 0
        %1927 = vmatpush1.bf16.xpose.msra.mxu0 0
        %1928 = vmatprep.subr.bf16.mxu0 0
        %1929 = vmatpush1.bf16.xpose.msra.mxu0 0
        %1930 = vmatprep.subr.bf16.mxu0 0
        %1931 = vmatpush1.bf16.xpose.msra.mxu0 0
        %1932 = vmatprep.subr.bf16.mxu0 0
        %1933 = vmatpush1.bf16.xpose.msra.mxu0 0
        %1934 = vmatprep.subr.bf16.mxu0 0
        %1935 = vmatpush1.bf16.xpose.msra.mxu0 0
        %1936 = vmatprep.subr.bf16.mxu0 0
        %1937 = vmatpush1.bf16.xpose.msra.mxu0 0
        %1938 = vmatprep.subr.bf16.mxu0 0
        %1939 = vmatpush1.bf16.xpose.msra.mxu0 %v1922
        %1940 = vmatprep.subr.bf16.mxu0 0
        %1941 = vmatpush2.bf16.xpose.msra.mxu0 0
        %1942 = vmatprep.subr.bf16.mxu0 0
        %1943 = vmatpush2.bf16.xpose.msra.mxu0 0
        %1944 = vmatprep.subr.bf16.mxu0 0
        %1945 = vmatpush2.bf16.xpose.msra.mxu0 0
        %1946 = vmatprep.subr.bf16.mxu0 0
        %1947 = vmatpush2.bf16.xpose.msra.mxu0 0
        %1948 = vmatprep.subr.bf16.mxu0 0
        %1949 = vmatpush2.bf16.xpose.msra.mxu0 0
        %1950 = vmatprep.subr.bf16.mxu0 0
        %1951 = vmatpush2.bf16.xpose.msra.mxu0 0
        %1952 = vmatprep.subr.bf16.mxu0 0
        %1953 = vmatpush2.bf16.xpose.msra.mxu0 0
        %1954 = vmatprep.subr.bf16.mxu0 0
        %1955 = vmatpush2.bf16.xpose.msra.mxu0 0
        %1956 = vmatprep.mubr.bf16.mxu0 0
        %1957 = vmatmul.mubr.bf16.gmra.mxu0 %v1919
        %v1958 = vpop.f32.mrf.mxu0
        %v1959 = vadd.f32 0.0, %v1958
        %v1960 = vpop.f32.mrf.mxu0
        %v1961 = vpop.f32.mrf.mxu0
        %v1962 = vpop.f32.mrf.mxu0
        %1963 = vdwg.mxu0
        %v1964 = vmul.f32 %v1959, 0.35355338
        %v1965 = vadd.f32 %v1964, %v1684
        %v1966 = vsel %vm1917, %v1965, -inf
        %1967 = vmax.xlane.f32.xlu0 %v1966
        %v1968 = vpop.xlane.xlu0 %1967
        %v1969 = vsub.f32 %v1965, %v1968
        %v1970 = vmul.f32 %v1969, 1.442695
        %v1971 = vpow.pop %v1970
        %v1972 = vsel %vm1917, %v1971, 0.0
        %1973 = vadd.xlane.f32.xlu0 %v1972
        %v1974 = vpop.xlane.xlu0 %1973
        %v1975 = vrcp.pop %v1974
        %v1976 = vmul.f32 %v1971, %v1975
        %v1977 = vpack.c.bf16 %v1976, %v1976
        %v1979 = vsel %vm1917, %v1977, 0
        %vm1981 = vcmask 1043456
        %v1983 = vsel %vm1981, %v1916, 0
        %1985 = vmatprep.subr.bf16.mxu0 0
        %1986 = vmatpush1.bf16.msra.mxu0 0
        %1987 = vmatprep.subr.bf16.mxu0 0
        %1988 = vmatpush1.bf16.msra.mxu0 0
        %1989 = vmatprep.subr.bf16.mxu0 0
        %1990 = vmatpush1.bf16.msra.mxu0 0
        %1991 = vmatprep.subr.bf16.mxu0 0
        %1992 = vmatpush1.bf16.msra.mxu0 0
        %1993 = vmatprep.subr.bf16.mxu0 0
        %1994 = vmatpush1.bf16.msra.mxu0 0
        %1995 = vmatprep.subr.bf16.mxu0 0
        %1996 = vmatpush1.bf16.msra.mxu0 0
        %1997 = vmatprep.subr.bf16.mxu0 0
        %1998 = vmatpush1.bf16.msra.mxu0 0
        %1999 = vmatprep.subr.bf16.mxu0 0
        %2000 = vmatpush1.bf16.msra.mxu0 %v1983
        %2001 = vmatprep.subr.bf16.mxu0 0
        %2002 = vmatpush2.bf16.msra.mxu0 0
        %2003 = vmatprep.subr.bf16.mxu0 0
        %2004 = vmatpush2.bf16.msra.mxu0 0
        %2005 = vmatprep.subr.bf16.mxu0 0
        %2006 = vmatpush2.bf16.msra.mxu0 0
        %2007 = vmatprep.subr.bf16.mxu0 0
        %2008 = vmatpush2.bf16.msra.mxu0 0
        %2009 = vmatprep.subr.bf16.mxu0 0
        %2010 = vmatpush2.bf16.msra.mxu0 0
        %2011 = vmatprep.subr.bf16.mxu0 0
        %2012 = vmatpush2.bf16.msra.mxu0 0
        %2013 = vmatprep.subr.bf16.mxu0 0
        %2014 = vmatpush2.bf16.msra.mxu0 0
        %2015 = vmatprep.subr.bf16.mxu0 0
        %2016 = vmatpush2.bf16.msra.mxu0 0
        %2017 = vmatprep.mubr.bf16.mxu0 0
        %2018 = vmatmul.mubr.bf16.gmra.mxu0 %v1979
        %v2019 = vpop.f32.mrf.mxu0
        %v2020 = vadd.f32 0.0, %v2019
        %v2021 = vpop.f32.mrf.mxu0
        %v2022 = vpop.f32.mrf.mxu0
        %v2023 = vpop.f32.mrf.mxu0
        %2024 = vdwg.mxu0
        %v2025 = vpack.c.bf16 %v2020, %v2020
        %2027 = vrot.lane.b32.xlu0 %v1914, 120
        %v2028 = vpop.permute.xlu0 %2027
        %2030 = vrot.lane.b32.xlu0 %v1915, 120
        %v2031 = vpop.permute.xlu0 %2030
        %v2033 = vsel %vm1917, %v2028, 0
        %v2036 = vsel %vm1917, %v2031, 0
        %2038 = vmatprep.subr.bf16.mxu0 0
        %2039 = vmatpush1.bf16.xpose.msra.mxu0 0
        %2040 = vmatprep.subr.bf16.mxu0 0
        %2041 = vmatpush1.bf16.xpose.msra.mxu0 0
        %2042 = vmatprep.subr.bf16.mxu0 0
        %2043 = vmatpush1.bf16.xpose.msra.mxu0 0
        %2044 = vmatprep.subr.bf16.mxu0 0
        %2045 = vmatpush1.bf16.xpose.msra.mxu0 0
        %2046 = vmatprep.subr.bf16.mxu0 0
        %2047 = vmatpush1.bf16.xpose.msra.mxu0 0
        %2048 = vmatprep.subr.bf16.mxu0 0
        %2049 = vmatpush1.bf16.xpose.msra.mxu0 0
        %2050 = vmatprep.subr.bf16.mxu0 0
        %2051 = vmatpush1.bf16.xpose.msra.mxu0 0
        %2052 = vmatprep.subr.bf16.mxu0 0
        %2053 = vmatpush1.bf16.xpose.msra.mxu0 %v2036
        %2054 = vmatprep.subr.bf16.mxu0 0
        %2055 = vmatpush2.bf16.xpose.msra.mxu0 0
        %2056 = vmatprep.subr.bf16.mxu0 0
        %2057 = vmatpush2.bf16.xpose.msra.mxu0 0
        %2058 = vmatprep.subr.bf16.mxu0 0
        %2059 = vmatpush2.bf16.xpose.msra.mxu0 0
        %2060 = vmatprep.subr.bf16.mxu0 0
        %2061 = vmatpush2.bf16.xpose.msra.mxu0 0
        %2062 = vmatprep.subr.bf16.mxu0 0
        %2063 = vmatpush2.bf16.xpose.msra.mxu0 0
        %2064 = vmatprep.subr.bf16.mxu0 0
        %2065 = vmatpush2.bf16.xpose.msra.mxu0 0
        %2066 = vmatprep.subr.bf16.mxu0 0
        %2067 = vmatpush2.bf16.xpose.msra.mxu0 0
        %2068 = vmatprep.subr.bf16.mxu0 0
        %2069 = vmatpush2.bf16.xpose.msra.mxu0 0
        %2070 = vmatprep.mubr.bf16.mxu0 0
        %2071 = vmatmul.mubr.bf16.gmra.mxu0 %v2033
        %v2072 = vpop.f32.mrf.mxu0
        %v2073 = vadd.f32 0.0, %v2072
        %v2074 = vpop.f32.mrf.mxu0
        %v2075 = vpop.f32.mrf.mxu0
        %v2076 = vpop.f32.mrf.mxu0
        %2077 = vdwg.mxu0
        %v2078 = vmul.f32 %v2073, 0.35355338
        %v2079 = vadd.f32 %v2078, %v1684
        %v2080 = vsel %vm1917, %v2079, -inf
        %2081 = vmax.xlane.f32.xlu0 %v2080
        %v2082 = vpop.xlane.xlu0 %2081
        %v2083 = vsub.f32 %v2079, %v2082
        %v2084 = vmul.f32 %v2083, 1.442695
        %v2085 = vpow.pop %v2084
        %v2086 = vsel %vm1917, %v2085, 0.0
        %2087 = vadd.xlane.f32.xlu0 %v2086
        %v2088 = vpop.xlane.xlu0 %2087
        %v2089 = vrcp.pop %v2088
        %v2090 = vmul.f32 %v2085, %v2089
        %v2091 = vpack.c.bf16 %v2090, %v2090
        %2093 = vrot.lane.b32.xlu0 %v1916, 120
        %v2094 = vpop.permute.xlu0 %2093
        %v2096 = vsel %vm1917, %v2091, 0
        %v2099 = vsel %vm1981, %v2094, 0
        %2101 = vmatprep.subr.bf16.mxu0 0
        %2102 = vmatpush1.bf16.msra.mxu0 0
        %2103 = vmatprep.subr.bf16.mxu0 0
        %2104 = vmatpush1.bf16.msra.mxu0 0
        %2105 = vmatprep.subr.bf16.mxu0 0
        %2106 = vmatpush1.bf16.msra.mxu0 0
        %2107 = vmatprep.subr.bf16.mxu0 0
        %2108 = vmatpush1.bf16.msra.mxu0 0
        %2109 = vmatprep.subr.bf16.mxu0 0
        %2110 = vmatpush1.bf16.msra.mxu0 0
        %2111 = vmatprep.subr.bf16.mxu0 0
        %2112 = vmatpush1.bf16.msra.mxu0 0
        %2113 = vmatprep.subr.bf16.mxu0 0
        %2114 = vmatpush1.bf16.msra.mxu0 0
        %2115 = vmatprep.subr.bf16.mxu0 0
        %2116 = vmatpush1.bf16.msra.mxu0 %v2099
        %2117 = vmatprep.subr.bf16.mxu0 0
        %2118 = vmatpush2.bf16.msra.mxu0 0
        %2119 = vmatprep.subr.bf16.mxu0 0
        %2120 = vmatpush2.bf16.msra.mxu0 0
        %2121 = vmatprep.subr.bf16.mxu0 0
        %2122 = vmatpush2.bf16.msra.mxu0 0
        %2123 = vmatprep.subr.bf16.mxu0 0
        %2124 = vmatpush2.bf16.msra.mxu0 0
        %2125 = vmatprep.subr.bf16.mxu0 0
        %2126 = vmatpush2.bf16.msra.mxu0 0
        %2127 = vmatprep.subr.bf16.mxu0 0
        %2128 = vmatpush2.bf16.msra.mxu0 0
        %2129 = vmatprep.subr.bf16.mxu0 0
        %2130 = vmatpush2.bf16.msra.mxu0 0
        %2131 = vmatprep.subr.bf16.mxu0 0
        %2132 = vmatpush2.bf16.msra.mxu0 0
        %2133 = vmatprep.mubr.bf16.mxu0 0
        %2134 = vmatmul.mubr.bf16.gmra.mxu0 %v2096
        %v2135 = vpop.f32.mrf.mxu0
        %v2136 = vadd.f32 0.0, %v2135
        %v2137 = vpop.f32.mrf.mxu0
        %v2138 = vpop.f32.mrf.mxu0
        %v2139 = vpop.f32.mrf.mxu0
        %2140 = vdwg.mxu0
        %v2141 = vpack.c.bf16 %v2136, %v2136
        %v2143 = vsel %vm1917, %v2141, 0
        %v2146 = vsel %vm1981, %v1732, 0
        %2148 = vmatprep.subr.bf16.mxu0 0
        %2149 = vmatpush1.bf16.msra.mxu0 0
        %2150 = vmatprep.subr.bf16.mxu0 0
        %2151 = vmatpush1.bf16.msra.mxu0 0
        %2152 = vmatprep.subr.bf16.mxu0 0
        %2153 = vmatpush1.bf16.msra.mxu0 0
        %2154 = vmatprep.subr.bf16.mxu0 0
        %2155 = vmatpush1.bf16.msra.mxu0 0
        %2156 = vmatprep.subr.bf16.mxu0 0
        %2157 = vmatpush1.bf16.msra.mxu0 0
        %2158 = vmatprep.subr.bf16.mxu0 0
        %2159 = vmatpush1.bf16.msra.mxu0 0
        %2160 = vmatprep.subr.bf16.mxu0 0
        %2161 = vmatpush1.bf16.msra.mxu0 0
        %2162 = vmatprep.subr.bf16.mxu0 0
        %2163 = vmatpush1.bf16.msra.mxu0 %v2146
        %2164 = vmatprep.subr.bf16.mxu0 0
        %2165 = vmatpush2.bf16.msra.mxu0 0
        %2166 = vmatprep.subr.bf16.mxu0 0
        %2167 = vmatpush2.bf16.msra.mxu0 0
        %2168 = vmatprep.subr.bf16.mxu0 0
        %2169 = vmatpush2.bf16.msra.mxu0 0
        %2170 = vmatprep.subr.bf16.mxu0 0
        %2171 = vmatpush2.bf16.msra.mxu0 0
        %2172 = vmatprep.subr.bf16.mxu0 0
        %2173 = vmatpush2.bf16.msra.mxu0 0
        %2174 = vmatprep.subr.bf16.mxu0 0
        %2175 = vmatpush2.bf16.msra.mxu0 0
        %2176 = vmatprep.subr.bf16.mxu0 0
        %2177 = vmatpush2.bf16.msra.mxu0 0
        %2178 = vmatprep.subr.bf16.mxu0 0
        %2179 = vmatpush2.bf16.msra.mxu0 0
        %2180 = vmatprep.mubr.bf16.mxu0 0
        %2181 = vmatmul.mubr.bf16.gmra.mxu0 %v2143
        %v2182 = vpop.f32.mrf.mxu0
        %v2183 = vadd.f32 0.0, %v2182
        %v2184 = vpop.f32.mrf.mxu0
        %v2185 = vpop.f32.mrf.mxu0
        %v2186 = vpop.f32.mrf.mxu0
        %2187 = vdwg.mxu0
        %v2189 = vsel %vm1917, %v2025, 0
        %v2192 = vsel %vm1981, %v1731, 0
        %2194 = vmatprep.subr.bf16.mxu0 0
        %2195 = vmatpush1.bf16.msra.mxu0 0
        %2196 = vmatprep.subr.bf16.mxu0 0
        %2197 = vmatpush1.bf16.msra.mxu0 0
        %2198 = vmatprep.subr.bf16.mxu0 0
        %2199 = vmatpush1.bf16.msra.mxu0 0
        %2200 = vmatprep.subr.bf16.mxu0 0
        %2201 = vmatpush1.bf16.msra.mxu0 0
        %2202 = vmatprep.subr.bf16.mxu0 0
        %2203 = vmatpush1.bf16.msra.mxu0 0
        %2204 = vmatprep.subr.bf16.mxu0 0
        %2205 = vmatpush1.bf16.msra.mxu0 0
        %2206 = vmatprep.subr.bf16.mxu0 0
        %2207 = vmatpush1.bf16.msra.mxu0 0
        %2208 = vmatprep.subr.bf16.mxu0 0
        %2209 = vmatpush1.bf16.msra.mxu0 %v2192
        %2210 = vmatprep.subr.bf16.mxu0 0
        %2211 = vmatpush2.bf16.msra.mxu0 0
        %2212 = vmatprep.subr.bf16.mxu0 0
        %2213 = vmatpush2.bf16.msra.mxu0 0
        %2214 = vmatprep.subr.bf16.mxu0 0
        %2215 = vmatpush2.bf16.msra.mxu0 0
        %2216 = vmatprep.subr.bf16.mxu0 0
        %2217 = vmatpush2.bf16.msra.mxu0 0
        %2218 = vmatprep.subr.bf16.mxu0 0
        %2219 = vmatpush2.bf16.msra.mxu0 0
        %2220 = vmatprep.subr.bf16.mxu0 0
        %2221 = vmatpush2.bf16.msra.mxu0 0
        %2222 = vmatprep.subr.bf16.mxu0 0
        %2223 = vmatpush2.bf16.msra.mxu0 0
        %2224 = vmatprep.subr.bf16.mxu0 0
        %2225 = vmatpush2.bf16.msra.mxu0 0
        %2226 = vmatprep.mubr.bf16.mxu0 0
        %2227 = vmatmul.mubr.bf16.gmra.mxu0 %v2189
        %v2228 = vpop.f32.mrf.mxu0
        %v2229 = vadd.f32 %v2183, %v2228
        %v2230 = vpop.f32.mrf.mxu0
        %v2231 = vpop.f32.mrf.mxu0
        %v2232 = vpop.f32.mrf.mxu0
        %2233 = vdwg.mxu0
        %2234 = vrot.lane.b32.xlu0 %v1914, 112
        %v2235 = vpop.permute.xlu0 %2234
        %2236 = vrot.lane.b32.xlu0 %v1915, 112
        %v2237 = vpop.permute.xlu0 %2236
        %v2239 = vsel %vm1917, %v2235, 0
        %v2242 = vsel %vm1917, %v2237, 0
        %2244 = vmatprep.subr.bf16.mxu0 0
        %2245 = vmatpush1.bf16.xpose.msra.mxu0 0
        %2246 = vmatprep.subr.bf16.mxu0 0
        %2247 = vmatpush1.bf16.xpose.msra.mxu0 0
        %2248 = vmatprep.subr.bf16.mxu0 0
        %2249 = vmatpush1.bf16.xpose.msra.mxu0 0
        %2250 = vmatprep.subr.bf16.mxu0 0
        %2251 = vmatpush1.bf16.xpose.msra.mxu0 0
        %2252 = vmatprep.subr.bf16.mxu0 0
        %2253 = vmatpush1.bf16.xpose.msra.mxu0 0
        %2254 = vmatprep.subr.bf16.mxu0 0
        %2255 = vmatpush1.bf16.xpose.msra.mxu0 0
        %2256 = vmatprep.subr.bf16.mxu0 0
        %2257 = vmatpush1.bf16.xpose.msra.mxu0 0
        %2258 = vmatprep.subr.bf16.mxu0 0
        %2259 = vmatpush1.bf16.xpose.msra.mxu0 %v2242
        %2260 = vmatprep.subr.bf16.mxu0 0
        %2261 = vmatpush2.bf16.xpose.msra.mxu0 0
        %2262 = vmatprep.subr.bf16.mxu0 0
        %2263 = vmatpush2.bf16.xpose.msra.mxu0 0
        %2264 = vmatprep.subr.bf16.mxu0 0
        %2265 = vmatpush2.bf16.xpose.msra.mxu0 0
        %2266 = vmatprep.subr.bf16.mxu0 0
        %2267 = vmatpush2.bf16.xpose.msra.mxu0 0
        %2268 = vmatprep.subr.bf16.mxu0 0
        %2269 = vmatpush2.bf16.xpose.msra.mxu0 0
        %2270 = vmatprep.subr.bf16.mxu0 0
        %2271 = vmatpush2.bf16.xpose.msra.mxu0 0
        %2272 = vmatprep.subr.bf16.mxu0 0
        %2273 = vmatpush2.bf16.xpose.msra.mxu0 0
        %2274 = vmatprep.subr.bf16.mxu0 0
        %2275 = vmatpush2.bf16.xpose.msra.mxu0 0
        %2276 = vmatprep.mubr.bf16.mxu0 0
        %2277 = vmatmul.mubr.bf16.gmra.mxu0 %v2239
        %v2278 = vpop.f32.mrf.mxu0
        %v2279 = vadd.f32 0.0, %v2278
        %v2280 = vpop.f32.mrf.mxu0
        %v2281 = vpop.f32.mrf.mxu0
        %v2282 = vpop.f32.mrf.mxu0
        %2283 = vdwg.mxu0
        %v2284 = vmul.f32 %v2279, 0.35355338
        %v2285 = vadd.f32 %v2284, %v1684
        %v2286 = vsel %vm1917, %v2285, -inf
        %2287 = vmax.xlane.f32.xlu0 %v2286
        %v2288 = vpop.xlane.xlu0 %2287
        %v2289 = vsub.f32 %v2285, %v2288
        %v2290 = vmul.f32 %v2289, 1.442695
        %v2291 = vpow.pop %v2290
        %v2292 = vsel %vm1917, %v2291, 0.0
        %2293 = vadd.xlane.f32.xlu0 %v2292
        %v2294 = vpop.xlane.xlu0 %2293
        %v2295 = vrcp.pop %v2294
        %v2296 = vmul.f32 %v2291, %v2295
        %v2297 = vpack.c.bf16 %v2296, %v2296
        %2298 = vrot.lane.b32.xlu0 %v1916, 112
        %v2299 = vpop.permute.xlu0 %2298
        %v2301 = vsel %vm1917, %v2297, 0
        %v2304 = vsel %vm1981, %v2299, 0
        %2306 = vmatprep.subr.bf16.mxu0 0
        %2307 = vmatpush1.bf16.msra.mxu0 0
        %2308 = vmatprep.subr.bf16.mxu0 0
        %2309 = vmatpush1.bf16.msra.mxu0 0
        %2310 = vmatprep.subr.bf16.mxu0 0
        %2311 = vmatpush1.bf16.msra.mxu0 0
        %2312 = vmatprep.subr.bf16.mxu0 0
        %2313 = vmatpush1.bf16.msra.mxu0 0
        %2314 = vmatprep.subr.bf16.mxu0 0
        %2315 = vmatpush1.bf16.msra.mxu0 0
        %2316 = vmatprep.subr.bf16.mxu0 0
        %2317 = vmatpush1.bf16.msra.mxu0 0
        %2318 = vmatprep.subr.bf16.mxu0 0
        %2319 = vmatpush1.bf16.msra.mxu0 0
        %2320 = vmatprep.subr.bf16.mxu0 0
        %2321 = vmatpush1.bf16.msra.mxu0 %v2304
        %2322 = vmatprep.subr.bf16.mxu0 0
        %2323 = vmatpush2.bf16.msra.mxu0 0
        %2324 = vmatprep.subr.bf16.mxu0 0
        %2325 = vmatpush2.bf16.msra.mxu0 0
        %2326 = vmatprep.subr.bf16.mxu0 0
        %2327 = vmatpush2.bf16.msra.mxu0 0
        %2328 = vmatprep.subr.bf16.mxu0 0
        %2329 = vmatpush2.bf16.msra.mxu0 0
        %2330 = vmatprep.subr.bf16.mxu0 0
        %2331 = vmatpush2.bf16.msra.mxu0 0
        %2332 = vmatprep.subr.bf16.mxu0 0
        %2333 = vmatpush2.bf16.msra.mxu0 0
        %2334 = vmatprep.subr.bf16.mxu0 0
        %2335 = vmatpush2.bf16.msra.mxu0 0
        %2336 = vmatprep.subr.bf16.mxu0 0
        %2337 = vmatpush2.bf16.msra.mxu0 0
        %2338 = vmatprep.mubr.bf16.mxu0 0
        %2339 = vmatmul.mubr.bf16.gmra.mxu0 %v2301
        %v2340 = vpop.f32.mrf.mxu0
        %v2341 = vadd.f32 0.0, %v2340
        %v2342 = vpop.f32.mrf.mxu0
        %v2343 = vpop.f32.mrf.mxu0
        %v2344 = vpop.f32.mrf.mxu0
        %2345 = vdwg.mxu0
        %v2346 = vpack.c.bf16 %v2341, %v2341
        %v2348 = vsel %vm1917, %v2346, 0
        %v2351 = vsel %vm1981, %v1733, 0
        %2353 = vmatprep.subr.bf16.mxu0 0
        %2354 = vmatpush1.bf16.msra.mxu0 0
        %2355 = vmatprep.subr.bf16.mxu0 0
        %2356 = vmatpush1.bf16.msra.mxu0 0
        %2357 = vmatprep.subr.bf16.mxu0 0
        %2358 = vmatpush1.bf16.msra.mxu0 0
        %2359 = vmatprep.subr.bf16.mxu0 0
        %2360 = vmatpush1.bf16.msra.mxu0 0
        %2361 = vmatprep.subr.bf16.mxu0 0
        %2362 = vmatpush1.bf16.msra.mxu0 0
        %2363 = vmatprep.subr.bf16.mxu0 0
        %2364 = vmatpush1.bf16.msra.mxu0 0
        %2365 = vmatprep.subr.bf16.mxu0 0
        %2366 = vmatpush1.bf16.msra.mxu0 0
        %2367 = vmatprep.subr.bf16.mxu0 0
        %2368 = vmatpush1.bf16.msra.mxu0 %v2351
        %2369 = vmatprep.subr.bf16.mxu0 0
        %2370 = vmatpush2.bf16.msra.mxu0 0
        %2371 = vmatprep.subr.bf16.mxu0 0
        %2372 = vmatpush2.bf16.msra.mxu0 0
        %2373 = vmatprep.subr.bf16.mxu0 0
        %2374 = vmatpush2.bf16.msra.mxu0 0
        %2375 = vmatprep.subr.bf16.mxu0 0
        %2376 = vmatpush2.bf16.msra.mxu0 0
        %2377 = vmatprep.subr.bf16.mxu0 0
        %2378 = vmatpush2.bf16.msra.mxu0 0
        %2379 = vmatprep.subr.bf16.mxu0 0
        %2380 = vmatpush2.bf16.msra.mxu0 0
        %2381 = vmatprep.subr.bf16.mxu0 0
        %2382 = vmatpush2.bf16.msra.mxu0 0
        %2383 = vmatprep.subr.bf16.mxu0 0
        %2384 = vmatpush2.bf16.msra.mxu0 0
        %2385 = vmatprep.mubr.bf16.mxu0 0
        %2386 = vmatmul.mubr.bf16.gmra.mxu0 %v2348
        %v2387 = vpop.f32.mrf.mxu0
        %v2388 = vadd.f32 0.0, %v2387
        %v2389 = vpop.f32.mrf.mxu0
        %v2390 = vpop.f32.mrf.mxu0
        %v2391 = vpop.f32.mrf.mxu0
        %2392 = vdwg.mxu0
        %v2393 = vadd.f32 %v2229, %v2388
        %2394 = vrot.lane.b32.xlu0 %v1914, 104
        %v2395 = vpop.permute.xlu0 %2394
        %2396 = vrot.lane.b32.xlu0 %v1915, 104
        %v2397 = vpop.permute.xlu0 %2396
        %v2399 = vsel %vm1917, %v2395, 0
        %v2402 = vsel %vm1917, %v2397, 0
        %2404 = vmatprep.subr.bf16.mxu0 0
        %2405 = vmatpush1.bf16.xpose.msra.mxu0 0
        %2406 = vmatprep.subr.bf16.mxu0 0
        %2407 = vmatpush1.bf16.xpose.msra.mxu0 0
        %2408 = vmatprep.subr.bf16.mxu0 0
        %2409 = vmatpush1.bf16.xpose.msra.mxu0 0
        %2410 = vmatprep.subr.bf16.mxu0 0
        %2411 = vmatpush1.bf16.xpose.msra.mxu0 0
        %2412 = vmatprep.subr.bf16.mxu0 0
        %2413 = vmatpush1.bf16.xpose.msra.mxu0 0
        %2414 = vmatprep.subr.bf16.mxu0 0
        %2415 = vmatpush1.bf16.xpose.msra.mxu0 0
        %2416 = vmatprep.subr.bf16.mxu0 0
        %2417 = vmatpush1.bf16.xpose.msra.mxu0 0
        %2418 = vmatprep.subr.bf16.mxu0 0
        %2419 = vmatpush1.bf16.xpose.msra.mxu0 %v2402
        %2420 = vmatprep.subr.bf16.mxu0 0
        %2421 = vmatpush2.bf16.xpose.msra.mxu0 0
        %2422 = vmatprep.subr.bf16.mxu0 0
        %2423 = vmatpush2.bf16.xpose.msra.mxu0 0
        %2424 = vmatprep.subr.bf16.mxu0 0
        %2425 = vmatpush2.bf16.xpose.msra.mxu0 0
        %2426 = vmatprep.subr.bf16.mxu0 0
        %2427 = vmatpush2.bf16.xpose.msra.mxu0 0
        %2428 = vmatprep.subr.bf16.mxu0 0
        %2429 = vmatpush2.bf16.xpose.msra.mxu0 0
        %2430 = vmatprep.subr.bf16.mxu0 0
        %2431 = vmatpush2.bf16.xpose.msra.mxu0 0
        %2432 = vmatprep.subr.bf16.mxu0 0
        %2433 = vmatpush2.bf16.xpose.msra.mxu0 0
        %2434 = vmatprep.subr.bf16.mxu0 0
        %2435 = vmatpush2.bf16.xpose.msra.mxu0 0
        %2436 = vmatprep.mubr.bf16.mxu0 0
        %2437 = vmatmul.mubr.bf16.gmra.mxu0 %v2399
        %v2438 = vpop.f32.mrf.mxu0
        %v2439 = vadd.f32 0.0, %v2438
        %v2440 = vpop.f32.mrf.mxu0
        %v2441 = vpop.f32.mrf.mxu0
        %v2442 = vpop.f32.mrf.mxu0
        %2443 = vdwg.mxu0
        %v2444 = vmul.f32 %v2439, 0.35355338
        %v2445 = vadd.f32 %v2444, %v1684
        %v2446 = vsel %vm1917, %v2445, -inf
        %2447 = vmax.xlane.f32.xlu0 %v2446
        %v2448 = vpop.xlane.xlu0 %2447
        %v2449 = vsub.f32 %v2445, %v2448
        %v2450 = vmul.f32 %v2449, 1.442695
        %v2451 = vpow.pop %v2450
        %v2452 = vsel %vm1917, %v2451, 0.0
        %2453 = vadd.xlane.f32.xlu0 %v2452
        %v2454 = vpop.xlane.xlu0 %2453
        %v2455 = vrcp.pop %v2454
        %v2456 = vmul.f32 %v2451, %v2455
        %v2457 = vpack.c.bf16 %v2456, %v2456
        %2458 = vrot.lane.b32.xlu0 %v1916, 104
        %v2459 = vpop.permute.xlu0 %2458
        %v2461 = vsel %vm1917, %v2457, 0
        %v2464 = vsel %vm1981, %v2459, 0
        %2466 = vmatprep.subr.bf16.mxu0 0
        %2467 = vmatpush1.bf16.msra.mxu0 0
        %2468 = vmatprep.subr.bf16.mxu0 0
        %2469 = vmatpush1.bf16.msra.mxu0 0
        %2470 = vmatprep.subr.bf16.mxu0 0
        %2471 = vmatpush1.bf16.msra.mxu0 0
        %2472 = vmatprep.subr.bf16.mxu0 0
        %2473 = vmatpush1.bf16.msra.mxu0 0
        %2474 = vmatprep.subr.bf16.mxu0 0
        %2475 = vmatpush1.bf16.msra.mxu0 0
        %2476 = vmatprep.subr.bf16.mxu0 0
        %2477 = vmatpush1.bf16.msra.mxu0 0
        %2478 = vmatprep.subr.bf16.mxu0 0
        %2479 = vmatpush1.bf16.msra.mxu0 0
        %2480 = vmatprep.subr.bf16.mxu0 0
        %2481 = vmatpush1.bf16.msra.mxu0 %v2464
        %2482 = vmatprep.subr.bf16.mxu0 0
        %2483 = vmatpush2.bf16.msra.mxu0 0
        %2484 = vmatprep.subr.bf16.mxu0 0
        %2485 = vmatpush2.bf16.msra.mxu0 0
        %2486 = vmatprep.subr.bf16.mxu0 0
        %2487 = vmatpush2.bf16.msra.mxu0 0
        %2488 = vmatprep.subr.bf16.mxu0 0
        %2489 = vmatpush2.bf16.msra.mxu0 0
        %2490 = vmatprep.subr.bf16.mxu0 0
        %2491 = vmatpush2.bf16.msra.mxu0 0
        %2492 = vmatprep.subr.bf16.mxu0 0
        %2493 = vmatpush2.bf16.msra.mxu0 0
        %2494 = vmatprep.subr.bf16.mxu0 0
        %2495 = vmatpush2.bf16.msra.mxu0 0
        %2496 = vmatprep.subr.bf16.mxu0 0
        %2497 = vmatpush2.bf16.msra.mxu0 0
        %2498 = vmatprep.mubr.bf16.mxu0 0
        %2499 = vmatmul.mubr.bf16.gmra.mxu0 %v2461
        %v2500 = vpop.f32.mrf.mxu0
        %v2501 = vadd.f32 0.0, %v2500
        %v2502 = vpop.f32.mrf.mxu0
        %v2503 = vpop.f32.mrf.mxu0
        %v2504 = vpop.f32.mrf.mxu0
        %2505 = vdwg.mxu0
        %v2506 = vpack.c.bf16 %v2501, %v2501
        %v2508 = vsel %vm1917, %v2506, 0
        %v2511 = vsel %vm1981, %v1734, 0
        %2513 = vmatprep.subr.bf16.mxu0 0
        %2514 = vmatpush1.bf16.msra.mxu0 0
        %2515 = vmatprep.subr.bf16.mxu0 0
        %2516 = vmatpush1.bf16.msra.mxu0 0
        %2517 = vmatprep.subr.bf16.mxu0 0
        %2518 = vmatpush1.bf16.msra.mxu0 0
        %2519 = vmatprep.subr.bf16.mxu0 0
        %2520 = vmatpush1.bf16.msra.mxu0 0
        %2521 = vmatprep.subr.bf16.mxu0 0
        %2522 = vmatpush1.bf16.msra.mxu0 0
        %2523 = vmatprep.subr.bf16.mxu0 0
        %2524 = vmatpush1.bf16.msra.mxu0 0
        %2525 = vmatprep.subr.bf16.mxu0 0
        %2526 = vmatpush1.bf16.msra.mxu0 0
        %2527 = vmatprep.subr.bf16.mxu0 0
        %2528 = vmatpush1.bf16.msra.mxu0 %v2511
        %2529 = vmatprep.subr.bf16.mxu0 0
        %2530 = vmatpush2.bf16.msra.mxu0 0
        %2531 = vmatprep.subr.bf16.mxu0 0
        %2532 = vmatpush2.bf16.msra.mxu0 0
        %2533 = vmatprep.subr.bf16.mxu0 0
        %2534 = vmatpush2.bf16.msra.mxu0 0
        %2535 = vmatprep.subr.bf16.mxu0 0
        %2536 = vmatpush2.bf16.msra.mxu0 0
        %2537 = vmatprep.subr.bf16.mxu0 0
        %2538 = vmatpush2.bf16.msra.mxu0 0
        %2539 = vmatprep.subr.bf16.mxu0 0
        %2540 = vmatpush2.bf16.msra.mxu0 0
        %2541 = vmatprep.subr.bf16.mxu0 0
        %2542 = vmatpush2.bf16.msra.mxu0 0
        %2543 = vmatprep.subr.bf16.mxu0 0
        %2544 = vmatpush2.bf16.msra.mxu0 0
        %2545 = vmatprep.mubr.bf16.mxu0 0
        %2546 = vmatmul.mubr.bf16.gmra.mxu0 %v2508
        %v2547 = vpop.f32.mrf.mxu0
        %v2548 = vadd.f32 0.0, %v2547
        %v2549 = vpop.f32.mrf.mxu0
        %v2550 = vpop.f32.mrf.mxu0
        %v2551 = vpop.f32.mrf.mxu0
        %2552 = vdwg.mxu0
        %v2553 = vadd.f32 %v2393, %v2548
        %v2555 = vlaneseq
        %v2556 = vshrl.u32 %v2555, 7
        %v2557 = vsub.s32 0, %v2556
        %v2558 = vrot.slane %v1735, %v2557
        %v2560 = vadd.f32 %v2553, %v2558
        %v2561 = vld [vmem:[%s23] sm:$0xf]
        %v2562 = vld [vmem:[%s23 + $0x4] sm:$0xf]
        %v2563 = vld [vmem:[%s23 + $0x8] sm:$0xf]
        %v2564 = vld [vmem:[%s23 + $0xc] sm:$0xf]
        %v2565 = vld [vmem:[#allocation13] sm:$0xf]
        %v2566 = vld [vmem:[#allocation13 + $0x4] sm:$0xf]
        %v2567 = vld [vmem:[#allocation13 + $0x8] sm:$0xf]
        %v2568 = vld [vmem:[#allocation13 + $0xc] sm:$0xf]
        %v2569 = vld [vmem:[#allocation14] sm:$0xf]
        %v2570 = vld [vmem:[#allocation14 + $0x4] sm:$0xf]
        %v2571 = vld [vmem:[#allocation14 + $0x8] sm:$0xf]
        %v2572 = vld [vmem:[#allocation14 + $0xc] sm:$0xf]
        %v2573 = vld [vmem:[#allocation16] sm:$0x1]
        %v2574 = vld [vmem:[#allocation17] sm:$0x1]
        %v2575 = vld [vmem:[#allocation19] sm:$0x1]
        %v2576 = vld [vmem:[#allocation20] sm:$0xf]
        %v2577 = vld [vmem:[#allocation20 + $0x4] sm:$0xf]
        %v2578 = vld [vmem:[#allocation20 + $0x8] sm:$0xf]
        %v2579 = vld [vmem:[#allocation20 + $0xc] sm:$0xf]
        %v2580 = vld [vmem:[#allocation22] sm:$0x1]
        %v2581 = vpack.c.bf16 %v2560, %v2560
        %v2583 = vlaneseq
        %v2584 = vshrl.u32 %v2583, 7
        %v2585 = vsub.s32 0, %v2584
        %v2586 = vrot.slane %v2573, %v2585
        %v2592 = vunpack.c.l.b16 %v2561
        %v2593 = vunpack.c.l.b16 %v2562
        %v2594 = vunpack.c.l.b16 %v2563
        %v2595 = vunpack.c.l.b16 %v2564
        %v2596 = vpack.c.b16 %v2593, %v2592
        %v2597 = vpack.c.b16 %v2595, %v2594
        %v2601 = vsel %vm1687, %v2581, 0
        %2603 = vmatprep.subr.bf16.mxu0 0
        %2604 = vmatpush1.bf16.msra.mxu0 0
        %2605 = vmatprep.subr.bf16.mxu0 0
        %2606 = vmatpush1.bf16.msra.mxu0 0
        %2607 = vmatprep.subr.bf16.mxu0 0
        %2608 = vmatpush1.bf16.msra.mxu0 0
        %2609 = vmatprep.subr.bf16.mxu0 0
        %2610 = vmatpush1.bf16.msra.mxu0 0
        %2611 = vmatprep.subr.bf16.mxu0 0
        %2612 = vmatpush1.bf16.msra.mxu0 0
        %2613 = vmatprep.subr.bf16.mxu0 0
        %2614 = vmatpush1.bf16.msra.mxu0 0
        %2615 = vmatprep.subr.bf16.mxu0 0
        %2616 = vmatpush1.bf16.msra.mxu0 %v2597
        %2617 = vmatprep.subr.bf16.mxu0 0
        %2618 = vmatpush1.bf16.msra.mxu0 %v2596
        %2619 = vmatprep.subr.bf16.mxu0 0
        %2620 = vmatpush2.bf16.msra.mxu0 0
        %2621 = vmatprep.subr.bf16.mxu0 0
        %2622 = vmatpush2.bf16.msra.mxu0 0
        %2623 = vmatprep.subr.bf16.mxu0 0
        %2624 = vmatpush2.bf16.msra.mxu0 0
        %2625 = vmatprep.subr.bf16.mxu0 0
        %2626 = vmatpush2.bf16.msra.mxu0 0
        %2627 = vmatprep.subr.bf16.mxu0 0
        %2628 = vmatpush2.bf16.msra.mxu0 0
        %2629 = vmatprep.subr.bf16.mxu0 0
        %2630 = vmatpush2.bf16.msra.mxu0 0
        %2631 = vmatprep.subr.bf16.mxu0 0
        %2632 = vmatpush2.bf16.msra.mxu0 0
        %2633 = vmatprep.subr.bf16.mxu0 0
        %2634 = vmatpush2.bf16.msra.mxu0 0
        %2635 = vmatprep.mubr.bf16.mxu0 0
        %2636 = vmatmul.mubr.bf16.gmra.mxu0 %v2601
        %v2637 = vpop.f32.mrf.mxu0
        %v2638 = vadd.f32 %v2586, %v2637
        %v2639 = vpop.f32.mrf.mxu0
        %v2640 = vpop.f32.mrf.mxu0
        %v2641 = vpop.f32.mrf.mxu0
        %2642 = vdwg.mxu0
        %v2644 = vlaneseq
        %v2645 = vshrl.u32 %v2644, 7
        %v2646 = vsub.s32 0, %v2645
        %v2647 = vrot.slane %v2574, %v2646
        %v2653 = vunpack.c.l.b16 %v2565
        %v2654 = vunpack.c.l.b16 %v2566
        %v2655 = vunpack.c.l.b16 %v2567
        %v2656 = vunpack.c.l.b16 %v2568
        %v2657 = vpack.c.b16 %v2654, %v2653
        %v2658 = vpack.c.b16 %v2656, %v2655
        %2661 = vmatprep.subr.bf16.mxu0 0
        %2662 = vmatpush1.bf16.msra.mxu0 0
        %2663 = vmatprep.subr.bf16.mxu0 0
        %2664 = vmatpush1.bf16.msra.mxu0 0
        %2665 = vmatprep.subr.bf16.mxu0 0
        %2666 = vmatpush1.bf16.msra.mxu0 0
        %2667 = vmatprep.subr.bf16.mxu0 0
        %2668 = vmatpush1.bf16.msra.mxu0 0
        %2669 = vmatprep.subr.bf16.mxu0 0
        %2670 = vmatpush1.bf16.msra.mxu0 0
        %2671 = vmatprep.subr.bf16.mxu0 0
        %2672 = vmatpush1.bf16.msra.mxu0 0
        %2673 = vmatprep.subr.bf16.mxu0 0
        %2674 = vmatpush1.bf16.msra.mxu0 %v2658
        %2675 = vmatprep.subr.bf16.mxu0 0
        %2676 = vmatpush1.bf16.msra.mxu0 %v2657
        %2677 = vmatprep.subr.bf16.mxu0 0
        %2678 = vmatpush2.bf16.msra.mxu0 0
        %2679 = vmatprep.subr.bf16.mxu0 0
        %2680 = vmatpush2.bf16.msra.mxu0 0
        %2681 = vmatprep.subr.bf16.mxu0 0
        %2682 = vmatpush2.bf16.msra.mxu0 0
        %2683 = vmatprep.subr.bf16.mxu0 0
        %2684 = vmatpush2.bf16.msra.mxu0 0
        %2685 = vmatprep.subr.bf16.mxu0 0
        %2686 = vmatpush2.bf16.msra.mxu0 0
        %2687 = vmatprep.subr.bf16.mxu0 0
        %2688 = vmatpush2.bf16.msra.mxu0 0
        %2689 = vmatprep.subr.bf16.mxu0 0
        %2690 = vmatpush2.bf16.msra.mxu0 0
        %2691 = vmatprep.subr.bf16.mxu0 0
        %2692 = vmatpush2.bf16.msra.mxu0 0
        %2693 = vmatprep.mubr.bf16.mxu0 0
        %2694 = vmatmul.mubr.bf16.gmra.mxu0 %v2601
        %v2695 = vpop.f32.mrf.mxu0
        %v2696 = vadd.f32 %v2647, %v2695
        %v2697 = vpop.f32.mrf.mxu0
        %v2698 = vpop.f32.mrf.mxu0
        %v2699 = vpop.f32.mrf.mxu0
        %2700 = vdwg.mxu0
        %v2702 = vlaneseq
        %v2703 = vshrl.u32 %v2702, 7
        %v2704 = vsub.s32 0, %v2703
        %v2705 = vrot.slane %v2575, %v2704
        %v2711 = vunpack.c.l.b16 %v2569
        %v2712 = vunpack.c.l.b16 %v2570
        %v2713 = vunpack.c.l.b16 %v2571
        %v2714 = vunpack.c.l.b16 %v2572
        %v2715 = vpack.c.b16 %v2712, %v2711
        %v2716 = vpack.c.b16 %v2714, %v2713
        %2719 = vmatprep.subr.bf16.mxu0 0
        %2720 = vmatpush1.bf16.msra.mxu0 0
        %2721 = vmatprep.subr.bf16.mxu0 0
        %2722 = vmatpush1.bf16.msra.mxu0 0
        %2723 = vmatprep.subr.bf16.mxu0 0
        %2724 = vmatpush1.bf16.msra.mxu0 0
        %2725 = vmatprep.subr.bf16.mxu0 0
        %2726 = vmatpush1.bf16.msra.mxu0 0
        %2727 = vmatprep.subr.bf16.mxu0 0
        %2728 = vmatpush1.bf16.msra.mxu0 0
        %2729 = vmatprep.subr.bf16.mxu0 0
        %2730 = vmatpush1.bf16.msra.mxu0 0
        %2731 = vmatprep.subr.bf16.mxu0 0
        %2732 = vmatpush1.bf16.msra.mxu0 %v2716
        %2733 = vmatprep.subr.bf16.mxu0 0
        %2734 = vmatpush1.bf16.msra.mxu0 %v2715
        %2735 = vmatprep.subr.bf16.mxu0 0
        %2736 = vmatpush2.bf16.msra.mxu0 0
        %2737 = vmatprep.subr.bf16.mxu0 0
        %2738 = vmatpush2.bf16.msra.mxu0 0
        %2739 = vmatprep.subr.bf16.mxu0 0
        %2740 = vmatpush2.bf16.msra.mxu0 0
        %2741 = vmatprep.subr.bf16.mxu0 0
        %2742 = vmatpush2.bf16.msra.mxu0 0
        %2743 = vmatprep.subr.bf16.mxu0 0
        %2744 = vmatpush2.bf16.msra.mxu0 0
        %2745 = vmatprep.subr.bf16.mxu0 0
        %2746 = vmatpush2.bf16.msra.mxu0 0
        %2747 = vmatprep.subr.bf16.mxu0 0
        %2748 = vmatpush2.bf16.msra.mxu0 0
        %2749 = vmatprep.subr.bf16.mxu0 0
        %2750 = vmatpush2.bf16.msra.mxu0 0
        %2751 = vmatprep.mubr.bf16.mxu0 0
        %2752 = vmatmul.mubr.bf16.gmra.mxu0 %v2601
        %v2753 = vpop.f32.mrf.mxu0
        %v2754 = vadd.f32 %v2705, %v2753
        %v2755 = vpop.f32.mrf.mxu0
        %v2756 = vpop.f32.mrf.mxu0
        %v2757 = vpop.f32.mrf.mxu0
        %2758 = vdwg.mxu0
        %v2759 = vpack.c.bf16 %v2638, %v2638
        %v2760 = vpack.c.bf16 %v2696, %v2696
        %v2761 = vpack.c.bf16 %v2754, %v2754
        %v2763 = vsel %vm1917, %v2759, 0
        %v2766 = vsel %vm1917, %v2760, 0
        %2768 = vmatprep.subr.bf16.mxu0 0
        %2769 = vmatpush1.bf16.xpose.msra.mxu0 0
        %2770 = vmatprep.subr.bf16.mxu0 0
        %2771 = vmatpush1.bf16.xpose.msra.mxu0 0
        %2772 = vmatprep.subr.bf16.mxu0 0
        %2773 = vmatpush1.bf16.xpose.msra.mxu0 0
        %2774 = vmatprep.subr.bf16.mxu0 0
        %2775 = vmatpush1.bf16.xpose.msra.mxu0 0
        %2776 = vmatprep.subr.bf16.mxu0 0
        %2777 = vmatpush1.bf16.xpose.msra.mxu0 0
        %2778 = vmatprep.subr.bf16.mxu0 0
        %2779 = vmatpush1.bf16.xpose.msra.mxu0 0
        %2780 = vmatprep.subr.bf16.mxu0 0
        %2781 = vmatpush1.bf16.xpose.msra.mxu0 0
        %2782 = vmatprep.subr.bf16.mxu0 0
        %2783 = vmatpush1.bf16.xpose.msra.mxu0 %v2766
        %2784 = vmatprep.subr.bf16.mxu0 0
        %2785 = vmatpush2.bf16.xpose.msra.mxu0 0
        %2786 = vmatprep.subr.bf16.mxu0 0
        %2787 = vmatpush2.bf16.xpose.msra.mxu0 0
        %2788 = vmatprep.subr.bf16.mxu0 0
        %2789 = vmatpush2.bf16.xpose.msra.mxu0 0
        %2790 = vmatprep.subr.bf16.mxu0 0
        %2791 = vmatpush2.bf16.xpose.msra.mxu0 0
        %2792 = vmatprep.subr.bf16.mxu0 0
        %2793 = vmatpush2.bf16.xpose.msra.mxu0 0
        %2794 = vmatprep.subr.bf16.mxu0 0
        %2795 = vmatpush2.bf16.xpose.msra.mxu0 0
        %2796 = vmatprep.subr.bf16.mxu0 0
        %2797 = vmatpush2.bf16.xpose.msra.mxu0 0
        %2798 = vmatprep.subr.bf16.mxu0 0
        %2799 = vmatpush2.bf16.xpose.msra.mxu0 0
        %2800 = vmatprep.mubr.bf16.mxu0 0
        %2801 = vmatmul.mubr.bf16.gmra.mxu0 %v2763
        %v2802 = vpop.f32.mrf.mxu0
        %v2803 = vadd.f32 0.0, %v2802
        %v2804 = vpop.f32.mrf.mxu0
        %v2805 = vpop.f32.mrf.mxu0
        %v2806 = vpop.f32.mrf.mxu0
        %2807 = vdwg.mxu0
        %v2808 = vmul.f32 %v2803, 0.35355338
        %v2809 = vadd.f32 %v2808, %v1684
        %v2810 = vsel %vm1917, %v2809, -inf
        %2811 = vmax.xlane.f32.xlu0 %v2810
        %v2812 = vpop.xlane.xlu0 %2811
        %v2813 = vsub.f32 %v2809, %v2812
        %v2814 = vmul.f32 %v2813, 1.442695
        %v2815 = vpow.pop %v2814
        %v2816 = vsel %vm1917, %v2815, 0.0
        %2817 = vadd.xlane.f32.xlu0 %v2816
        %v2818 = vpop.xlane.xlu0 %2817
        %v2819 = vrcp.pop %v2818
        %v2820 = vmul.f32 %v2815, %v2819
        %v2821 = vpack.c.bf16 %v2820, %v2820
        %v2823 = vsel %vm1917, %v2821, 0
        %v2826 = vsel %vm1981, %v2761, 0
        %2828 = vmatprep.subr.bf16.mxu0 0
        %2829 = vmatpush1.bf16.msra.mxu0 0
        %2830 = vmatprep.subr.bf16.mxu0 0
        %2831 = vmatpush1.bf16.msra.mxu0 0
        %2832 = vmatprep.subr.bf16.mxu0 0
        %2833 = vmatpush1.bf16.msra.mxu0 0
        %2834 = vmatprep.subr.bf16.mxu0 0
        %2835 = vmatpush1.bf16.msra.mxu0 0
        %2836 = vmatprep.subr.bf16.mxu0 0
        %2837 = vmatpush1.bf16.msra.mxu0 0
        %2838 = vmatprep.subr.bf16.mxu0 0
        %2839 = vmatpush1.bf16.msra.mxu0 0
        %2840 = vmatprep.subr.bf16.mxu0 0
        %2841 = vmatpush1.bf16.msra.mxu0 0
        %2842 = vmatprep.subr.bf16.mxu0 0
        %2843 = vmatpush1.bf16.msra.mxu0 %v2826
        %2844 = vmatprep.subr.bf16.mxu0 0
        %2845 = vmatpush2.bf16.msra.mxu0 0
        %2846 = vmatprep.subr.bf16.mxu0 0
        %2847 = vmatpush2.bf16.msra.mxu0 0
        %2848 = vmatprep.subr.bf16.mxu0 0
        %2849 = vmatpush2.bf16.msra.mxu0 0
        %2850 = vmatprep.subr.bf16.mxu0 0
        %2851 = vmatpush2.bf16.msra.mxu0 0
        %2852 = vmatprep.subr.bf16.mxu0 0
        %2853 = vmatpush2.bf16.msra.mxu0 0
        %2854 = vmatprep.subr.bf16.mxu0 0
        %2855 = vmatpush2.bf16.msra.mxu0 0
        %2856 = vmatprep.subr.bf16.mxu0 0
        %2857 = vmatpush2.bf16.msra.mxu0 0
        %2858 = vmatprep.subr.bf16.mxu0 0
        %2859 = vmatpush2.bf16.msra.mxu0 0
        %2860 = vmatprep.mubr.bf16.mxu0 0
        %2861 = vmatmul.mubr.bf16.gmra.mxu0 %v2823
        %v2862 = vpop.f32.mrf.mxu0
        %v2863 = vadd.f32 0.0, %v2862
        %v2864 = vpop.f32.mrf.mxu0
        %v2865 = vpop.f32.mrf.mxu0
        %v2866 = vpop.f32.mrf.mxu0
        %2867 = vdwg.mxu0
        %v2868 = vpack.c.bf16 %v2863, %v2863
        %2870 = vrot.lane.b32.xlu0 %v2759, 120
        %v2871 = vpop.permute.xlu0 %2870
        %2873 = vrot.lane.b32.xlu0 %v2760, 120
        %v2874 = vpop.permute.xlu0 %2873
        %v2876 = vsel %vm1917, %v2871, 0
        %v2879 = vsel %vm1917, %v2874, 0
        %2881 = vmatprep.subr.bf16.mxu0 0
        %2882 = vmatpush1.bf16.xpose.msra.mxu0 0
        %2883 = vmatprep.subr.bf16.mxu0 0
        %2884 = vmatpush1.bf16.xpose.msra.mxu0 0
        %2885 = vmatprep.subr.bf16.mxu0 0
        %2886 = vmatpush1.bf16.xpose.msra.mxu0 0
        %2887 = vmatprep.subr.bf16.mxu0 0
        %2888 = vmatpush1.bf16.xpose.msra.mxu0 0
        %2889 = vmatprep.subr.bf16.mxu0 0
        %2890 = vmatpush1.bf16.xpose.msra.mxu0 0
        %2891 = vmatprep.subr.bf16.mxu0 0
        %2892 = vmatpush1.bf16.xpose.msra.mxu0 0
        %2893 = vmatprep.subr.bf16.mxu0 0
        %2894 = vmatpush1.bf16.xpose.msra.mxu0 0
        %2895 = vmatprep.subr.bf16.mxu0 0
        %2896 = vmatpush1.bf16.xpose.msra.mxu0 %v2879
        %2897 = vmatprep.subr.bf16.mxu0 0
        %2898 = vmatpush2.bf16.xpose.msra.mxu0 0
        %2899 = vmatprep.subr.bf16.mxu0 0
        %2900 = vmatpush2.bf16.xpose.msra.mxu0 0
        %2901 = vmatprep.subr.bf16.mxu0 0
        %2902 = vmatpush2.bf16.xpose.msra.mxu0 0
        %2903 = vmatprep.subr.bf16.mxu0 0
        %2904 = vmatpush2.bf16.xpose.msra.mxu0 0
        %2905 = vmatprep.subr.bf16.mxu0 0
        %2906 = vmatpush2.bf16.xpose.msra.mxu0 0
        %2907 = vmatprep.subr.bf16.mxu0 0
        %2908 = vmatpush2.bf16.xpose.msra.mxu0 0
        %2909 = vmatprep.subr.bf16.mxu0 0
        %2910 = vmatpush2.bf16.xpose.msra.mxu0 0
        %2911 = vmatprep.subr.bf16.mxu0 0
        %2912 = vmatpush2.bf16.xpose.msra.mxu0 0
        %2913 = vmatprep.mubr.bf16.mxu0 0
        %2914 = vmatmul.mubr.bf16.gmra.mxu0 %v2876
        %v2915 = vpop.f32.mrf.mxu0
        %v2916 = vadd.f32 0.0, %v2915
        %v2917 = vpop.f32.mrf.mxu0
        %v2918 = vpop.f32.mrf.mxu0
        %v2919 = vpop.f32.mrf.mxu0
        %2920 = vdwg.mxu0
        %v2921 = vmul.f32 %v2916, 0.35355338
        %v2922 = vadd.f32 %v2921, %v1684
        %v2923 = vsel %vm1917, %v2922, -inf
        %2924 = vmax.xlane.f32.xlu0 %v2923
        %v2925 = vpop.xlane.xlu0 %2924
        %v2926 = vsub.f32 %v2922, %v2925
        %v2927 = vmul.f32 %v2926, 1.442695
        %v2928 = vpow.pop %v2927
        %v2929 = vsel %vm1917, %v2928, 0.0
        %2930 = vadd.xlane.f32.xlu0 %v2929
        %v2931 = vpop.xlane.xlu0 %2930
        %v2932 = vrcp.pop %v2931
        %v2933 = vmul.f32 %v2928, %v2932
        %v2934 = vpack.c.bf16 %v2933, %v2933
        %2936 = vrot.lane.b32.xlu0 %v2761, 120
        %v2937 = vpop.permute.xlu0 %2936
        %v2939 = vsel %vm1917, %v2934, 0
        %v2942 = vsel %vm1981, %v2937, 0
        %2944 = vmatprep.subr.bf16.mxu0 0
        %2945 = vmatpush1.bf16.msra.mxu0 0
        %2946 = vmatprep.subr.bf16.mxu0 0
        %2947 = vmatpush1.bf16.msra.mxu0 0
        %2948 = vmatprep.subr.bf16.mxu0 0
        %2949 = vmatpush1.bf16.msra.mxu0 0
        %2950 = vmatprep.subr.bf16.mxu0 0
        %2951 = vmatpush1.bf16.msra.mxu0 0
        %2952 = vmatprep.subr.bf16.mxu0 0
        %2953 = vmatpush1.bf16.msra.mxu0 0
        %2954 = vmatprep.subr.bf16.mxu0 0
        %2955 = vmatpush1.bf16.msra.mxu0 0
        %2956 = vmatprep.subr.bf16.mxu0 0
        %2957 = vmatpush1.bf16.msra.mxu0 0
        %2958 = vmatprep.subr.bf16.mxu0 0
        %2959 = vmatpush1.bf16.msra.mxu0 %v2942
        %2960 = vmatprep.subr.bf16.mxu0 0
        %2961 = vmatpush2.bf16.msra.mxu0 0
        %2962 = vmatprep.subr.bf16.mxu0 0
        %2963 = vmatpush2.bf16.msra.mxu0 0
        %2964 = vmatprep.subr.bf16.mxu0 0
        %2965 = vmatpush2.bf16.msra.mxu0 0
        %2966 = vmatprep.subr.bf16.mxu0 0
        %2967 = vmatpush2.bf16.msra.mxu0 0
        %2968 = vmatprep.subr.bf16.mxu0 0
        %2969 = vmatpush2.bf16.msra.mxu0 0
        %2970 = vmatprep.subr.bf16.mxu0 0
        %2971 = vmatpush2.bf16.msra.mxu0 0
        %2972 = vmatprep.subr.bf16.mxu0 0
        %2973 = vmatpush2.bf16.msra.mxu0 0
        %2974 = vmatprep.subr.bf16.mxu0 0
        %2975 = vmatpush2.bf16.msra.mxu0 0
        %2976 = vmatprep.mubr.bf16.mxu0 0
        %2977 = vmatmul.mubr.bf16.gmra.mxu0 %v2939
        %v2978 = vpop.f32.mrf.mxu0
        %v2979 = vadd.f32 0.0, %v2978
        %v2980 = vpop.f32.mrf.mxu0
        %v2981 = vpop.f32.mrf.mxu0
        %v2982 = vpop.f32.mrf.mxu0
        %2983 = vdwg.mxu0
        %v2984 = vpack.c.bf16 %v2979, %v2979
        %v2986 = vsel %vm1917, %v2984, 0
        %v2989 = vsel %vm1981, %v2577, 0
        %2991 = vmatprep.subr.bf16.mxu0 0
        %2992 = vmatpush1.bf16.msra.mxu0 0
        %2993 = vmatprep.subr.bf16.mxu0 0
        %2994 = vmatpush1.bf16.msra.mxu0 0
        %2995 = vmatprep.subr.bf16.mxu0 0
        %2996 = vmatpush1.bf16.msra.mxu0 0
        %2997 = vmatprep.subr.bf16.mxu0 0
        %2998 = vmatpush1.bf16.msra.mxu0 0
        %2999 = vmatprep.subr.bf16.mxu0 0
        %3000 = vmatpush1.bf16.msra.mxu0 0
        %3001 = vmatprep.subr.bf16.mxu0 0
        %3002 = vmatpush1.bf16.msra.mxu0 0
        %3003 = vmatprep.subr.bf16.mxu0 0
        %3004 = vmatpush1.bf16.msra.mxu0 0
        %3005 = vmatprep.subr.bf16.mxu0 0
        %3006 = vmatpush1.bf16.msra.mxu0 %v2989
        %3007 = vmatprep.subr.bf16.mxu0 0
        %3008 = vmatpush2.bf16.msra.mxu0 0
        %3009 = vmatprep.subr.bf16.mxu0 0
        %3010 = vmatpush2.bf16.msra.mxu0 0
        %3011 = vmatprep.subr.bf16.mxu0 0
        %3012 = vmatpush2.bf16.msra.mxu0 0
        %3013 = vmatprep.subr.bf16.mxu0 0
        %3014 = vmatpush2.bf16.msra.mxu0 0
        %3015 = vmatprep.subr.bf16.mxu0 0
        %3016 = vmatpush2.bf16.msra.mxu0 0
        %3017 = vmatprep.subr.bf16.mxu0 0
        %3018 = vmatpush2.bf16.msra.mxu0 0
        %3019 = vmatprep.subr.bf16.mxu0 0
        %3020 = vmatpush2.bf16.msra.mxu0 0
        %3021 = vmatprep.subr.bf16.mxu0 0
        %3022 = vmatpush2.bf16.msra.mxu0 0
        %3023 = vmatprep.mubr.bf16.mxu0 0
        %3024 = vmatmul.mubr.bf16.gmra.mxu0 %v2986
        %v3025 = vpop.f32.mrf.mxu0
        %v3026 = vadd.f32 0.0, %v3025
        %v3027 = vpop.f32.mrf.mxu0
        %v3028 = vpop.f32.mrf.mxu0
        %v3029 = vpop.f32.mrf.mxu0
        %3030 = vdwg.mxu0
        %v3032 = vsel %vm1917, %v2868, 0
        %v3035 = vsel %vm1981, %v2576, 0
        %3037 = vmatprep.subr.bf16.mxu0 0
        %3038 = vmatpush1.bf16.msra.mxu0 0
        %3039 = vmatprep.subr.bf16.mxu0 0
        %3040 = vmatpush1.bf16.msra.mxu0 0
        %3041 = vmatprep.subr.bf16.mxu0 0
        %3042 = vmatpush1.bf16.msra.mxu0 0
        %3043 = vmatprep.subr.bf16.mxu0 0
        %3044 = vmatpush1.bf16.msra.mxu0 0
        %3045 = vmatprep.subr.bf16.mxu0 0
        %3046 = vmatpush1.bf16.msra.mxu0 0
        %3047 = vmatprep.subr.bf16.mxu0 0
        %3048 = vmatpush1.bf16.msra.mxu0 0
        %3049 = vmatprep.subr.bf16.mxu0 0
        %3050 = vmatpush1.bf16.msra.mxu0 0
        %3051 = vmatprep.subr.bf16.mxu0 0
        %3052 = vmatpush1.bf16.msra.mxu0 %v3035
        %3053 = vmatprep.subr.bf16.mxu0 0
        %3054 = vmatpush2.bf16.msra.mxu0 0
        %3055 = vmatprep.subr.bf16.mxu0 0
        %3056 = vmatpush2.bf16.msra.mxu0 0
        %3057 = vmatprep.subr.bf16.mxu0 0
        %3058 = vmatpush2.bf16.msra.mxu0 0
        %3059 = vmatprep.subr.bf16.mxu0 0
        %3060 = vmatpush2.bf16.msra.mxu0 0
        %3061 = vmatprep.subr.bf16.mxu0 0
        %3062 = vmatpush2.bf16.msra.mxu0 0
        %3063 = vmatprep.subr.bf16.mxu0 0
        %3064 = vmatpush2.bf16.msra.mxu0 0
        %3065 = vmatprep.subr.bf16.mxu0 0
        %3066 = vmatpush2.bf16.msra.mxu0 0
        %3067 = vmatprep.subr.bf16.mxu0 0
        %3068 = vmatpush2.bf16.msra.mxu0 0
        %3069 = vmatprep.mubr.bf16.mxu0 0
        %3070 = vmatmul.mubr.bf16.gmra.mxu0 %v3032
        %v3071 = vpop.f32.mrf.mxu0
        %v3072 = vadd.f32 %v3026, %v3071
        %v3073 = vpop.f32.mrf.mxu0
        %v3074 = vpop.f32.mrf.mxu0
        %v3075 = vpop.f32.mrf.mxu0
        %3076 = vdwg.mxu0
        %3077 = vrot.lane.b32.xlu0 %v2759, 112
        %v3078 = vpop.permute.xlu0 %3077
        %3079 = vrot.lane.b32.xlu0 %v2760, 112
        %v3080 = vpop.permute.xlu0 %3079
        %v3082 = vsel %vm1917, %v3078, 0
        %v3085 = vsel %vm1917, %v3080, 0
        %3087 = vmatprep.subr.bf16.mxu0 0
        %3088 = vmatpush1.bf16.xpose.msra.mxu0 0
        %3089 = vmatprep.subr.bf16.mxu0 0
        %3090 = vmatpush1.bf16.xpose.msra.mxu0 0
        %3091 = vmatprep.subr.bf16.mxu0 0
        %3092 = vmatpush1.bf16.xpose.msra.mxu0 0
        %3093 = vmatprep.subr.bf16.mxu0 0
        %3094 = vmatpush1.bf16.xpose.msra.mxu0 0
        %3095 = vmatprep.subr.bf16.mxu0 0
        %3096 = vmatpush1.bf16.xpose.msra.mxu0 0
        %3097 = vmatprep.subr.bf16.mxu0 0
        %3098 = vmatpush1.bf16.xpose.msra.mxu0 0
        %3099 = vmatprep.subr.bf16.mxu0 0
        %3100 = vmatpush1.bf16.xpose.msra.mxu0 0
        %3101 = vmatprep.subr.bf16.mxu0 0
        %3102 = vmatpush1.bf16.xpose.msra.mxu0 %v3085
        %3103 = vmatprep.subr.bf16.mxu0 0
        %3104 = vmatpush2.bf16.xpose.msra.mxu0 0
        %3105 = vmatprep.subr.bf16.mxu0 0
        %3106 = vmatpush2.bf16.xpose.msra.mxu0 0
        %3107 = vmatprep.subr.bf16.mxu0 0
        %3108 = vmatpush2.bf16.xpose.msra.mxu0 0
        %3109 = vmatprep.subr.bf16.mxu0 0
        %3110 = vmatpush2.bf16.xpose.msra.mxu0 0
        %3111 = vmatprep.subr.bf16.mxu0 0
        %3112 = vmatpush2.bf16.xpose.msra.mxu0 0
        %3113 = vmatprep.subr.bf16.mxu0 0
        %3114 = vmatpush2.bf16.xpose.msra.mxu0 0
        %3115 = vmatprep.subr.bf16.mxu0 0
        %3116 = vmatpush2.bf16.xpose.msra.mxu0 0
        %3117 = vmatprep.subr.bf16.mxu0 0
        %3118 = vmatpush2.bf16.xpose.msra.mxu0 0
        %3119 = vmatprep.mubr.bf16.mxu0 0
        %3120 = vmatmul.mubr.bf16.gmra.mxu0 %v3082
        %v3121 = vpop.f32.mrf.mxu0
        %v3122 = vadd.f32 0.0, %v3121
        %v3123 = vpop.f32.mrf.mxu0
        %v3124 = vpop.f32.mrf.mxu0
        %v3125 = vpop.f32.mrf.mxu0
        %3126 = vdwg.mxu0
        %v3127 = vmul.f32 %v3122, 0.35355338
        %v3128 = vadd.f32 %v3127, %v1684
        %v3129 = vsel %vm1917, %v3128, -inf
        %3130 = vmax.xlane.f32.xlu0 %v3129
        %v3131 = vpop.xlane.xlu0 %3130
        %v3132 = vsub.f32 %v3128, %v3131
        %v3133 = vmul.f32 %v3132, 1.442695
        %v3134 = vpow.pop %v3133
        %v3135 = vsel %vm1917, %v3134, 0.0
        %3136 = vadd.xlane.f32.xlu0 %v3135
        %v3137 = vpop.xlane.xlu0 %3136
        %v3138 = vrcp.pop %v3137
        %v3139 = vmul.f32 %v3134, %v3138
        %v3140 = vpack.c.bf16 %v3139, %v3139
        %3141 = vrot.lane.b32.xlu0 %v2761, 112
        %v3142 = vpop.permute.xlu0 %3141
        %v3144 = vsel %vm1917, %v3140, 0
        %v3147 = vsel %vm1981, %v3142, 0
        %3149 = vmatprep.subr.bf16.mxu0 0
        %3150 = vmatpush1.bf16.msra.mxu0 0
        %3151 = vmatprep.subr.bf16.mxu0 0
        %3152 = vmatpush1.bf16.msra.mxu0 0
        %3153 = vmatprep.subr.bf16.mxu0 0
        %3154 = vmatpush1.bf16.msra.mxu0 0
        %3155 = vmatprep.subr.bf16.mxu0 0
        %3156 = vmatpush1.bf16.msra.mxu0 0
        %3157 = vmatprep.subr.bf16.mxu0 0
        %3158 = vmatpush1.bf16.msra.mxu0 0
        %3159 = vmatprep.subr.bf16.mxu0 0
        %3160 = vmatpush1.bf16.msra.mxu0 0
        %3161 = vmatprep.subr.bf16.mxu0 0
        %3162 = vmatpush1.bf16.msra.mxu0 0
        %3163 = vmatprep.subr.bf16.mxu0 0
        %3164 = vmatpush1.bf16.msra.mxu0 %v3147
        %3165 = vmatprep.subr.bf16.mxu0 0
        %3166 = vmatpush2.bf16.msra.mxu0 0
        %3167 = vmatprep.subr.bf16.mxu0 0
        %3168 = vmatpush2.bf16.msra.mxu0 0
        %3169 = vmatprep.subr.bf16.mxu0 0
        %3170 = vmatpush2.bf16.msra.mxu0 0
        %3171 = vmatprep.subr.bf16.mxu0 0
        %3172 = vmatpush2.bf16.msra.mxu0 0
        %3173 = vmatprep.subr.bf16.mxu0 0
        %3174 = vmatpush2.bf16.msra.mxu0 0
        %3175 = vmatprep.subr.bf16.mxu0 0
        %3176 = vmatpush2.bf16.msra.mxu0 0
        %3177 = vmatprep.subr.bf16.mxu0 0
        %3178 = vmatpush2.bf16.msra.mxu0 0
        %3179 = vmatprep.subr.bf16.mxu0 0
        %3180 = vmatpush2.bf16.msra.mxu0 0
        %3181 = vmatprep.mubr.bf16.mxu0 0
        %3182 = vmatmul.mubr.bf16.gmra.mxu0 %v3144
        %v3183 = vpop.f32.mrf.mxu0
        %v3184 = vadd.f32 0.0, %v3183
        %v3185 = vpop.f32.mrf.mxu0
        %v3186 = vpop.f32.mrf.mxu0
        %v3187 = vpop.f32.mrf.mxu0
        %3188 = vdwg.mxu0
        %v3189 = vpack.c.bf16 %v3184, %v3184
        %v3191 = vsel %vm1917, %v3189, 0
        %v3194 = vsel %vm1981, %v2578, 0
        %3196 = vmatprep.subr.bf16.mxu0 0
        %3197 = vmatpush1.bf16.msra.mxu0 0
        %3198 = vmatprep.subr.bf16.mxu0 0
        %3199 = vmatpush1.bf16.msra.mxu0 0
        %3200 = vmatprep.subr.bf16.mxu0 0
        %3201 = vmatpush1.bf16.msra.mxu0 0
        %3202 = vmatprep.subr.bf16.mxu0 0
        %3203 = vmatpush1.bf16.msra.mxu0 0
        %3204 = vmatprep.subr.bf16.mxu0 0
        %3205 = vmatpush1.bf16.msra.mxu0 0
        %3206 = vmatprep.subr.bf16.mxu0 0
        %3207 = vmatpush1.bf16.msra.mxu0 0
        %3208 = vmatprep.subr.bf16.mxu0 0
        %3209 = vmatpush1.bf16.msra.mxu0 0
        %3210 = vmatprep.subr.bf16.mxu0 0
        %3211 = vmatpush1.bf16.msra.mxu0 %v3194
        %3212 = vmatprep.subr.bf16.mxu0 0
        %3213 = vmatpush2.bf16.msra.mxu0 0
        %3214 = vmatprep.subr.bf16.mxu0 0
        %3215 = vmatpush2.bf16.msra.mxu0 0
        %3216 = vmatprep.subr.bf16.mxu0 0
        %3217 = vmatpush2.bf16.msra.mxu0 0
        %3218 = vmatprep.subr.bf16.mxu0 0
        %3219 = vmatpush2.bf16.msra.mxu0 0
        %3220 = vmatprep.subr.bf16.mxu0 0
        %3221 = vmatpush2.bf16.msra.mxu0 0
        %3222 = vmatprep.subr.bf16.mxu0 0
        %3223 = vmatpush2.bf16.msra.mxu0 0
        %3224 = vmatprep.subr.bf16.mxu0 0
        %3225 = vmatpush2.bf16.msra.mxu0 0
        %3226 = vmatprep.subr.bf16.mxu0 0
        %3227 = vmatpush2.bf16.msra.mxu0 0
        %3228 = vmatprep.mubr.bf16.mxu0 0
        %3229 = vmatmul.mubr.bf16.gmra.mxu0 %v3191
        %v3230 = vpop.f32.mrf.mxu0
        %v3231 = vadd.f32 0.0, %v3230
        %v3232 = vpop.f32.mrf.mxu0
        %v3233 = vpop.f32.mrf.mxu0
        %v3234 = vpop.f32.mrf.mxu0
        %3235 = vdwg.mxu0
        %v3236 = vadd.f32 %v3072, %v3231
        %3237 = vrot.lane.b32.xlu0 %v2759, 104
        %v3238 = vpop.permute.xlu0 %3237
        %3239 = vrot.lane.b32.xlu0 %v2760, 104
        %v3240 = vpop.permute.xlu0 %3239
        %v3242 = vsel %vm1917, %v3238, 0
        %v3245 = vsel %vm1917, %v3240, 0
        %3247 = vmatprep.subr.bf16.mxu0 0
        %3248 = vmatpush1.bf16.xpose.msra.mxu0 0
        %3249 = vmatprep.subr.bf16.mxu0 0
        %3250 = vmatpush1.bf16.xpose.msra.mxu0 0
        %3251 = vmatprep.subr.bf16.mxu0 0
        %3252 = vmatpush1.bf16.xpose.msra.mxu0 0
        %3253 = vmatprep.subr.bf16.mxu0 0
        %3254 = vmatpush1.bf16.xpose.msra.mxu0 0
        %3255 = vmatprep.subr.bf16.mxu0 0
        %3256 = vmatpush1.bf16.xpose.msra.mxu0 0
        %3257 = vmatprep.subr.bf16.mxu0 0
        %3258 = vmatpush1.bf16.xpose.msra.mxu0 0
        %3259 = vmatprep.subr.bf16.mxu0 0
        %3260 = vmatpush1.bf16.xpose.msra.mxu0 0
        %3261 = vmatprep.subr.bf16.mxu0 0
        %3262 = vmatpush1.bf16.xpose.msra.mxu0 %v3245
        %3263 = vmatprep.subr.bf16.mxu0 0
        %3264 = vmatpush2.bf16.xpose.msra.mxu0 0
        %3265 = vmatprep.subr.bf16.mxu0 0
        %3266 = vmatpush2.bf16.xpose.msra.mxu0 0
        %3267 = vmatprep.subr.bf16.mxu0 0
        %3268 = vmatpush2.bf16.xpose.msra.mxu0 0
        %3269 = vmatprep.subr.bf16.mxu0 0
        %3270 = vmatpush2.bf16.xpose.msra.mxu0 0
        %3271 = vmatprep.subr.bf16.mxu0 0
        %3272 = vmatpush2.bf16.xpose.msra.mxu0 0
        %3273 = vmatprep.subr.bf16.mxu0 0
        %3274 = vmatpush2.bf16.xpose.msra.mxu0 0
        %3275 = vmatprep.subr.bf16.mxu0 0
        %3276 = vmatpush2.bf16.xpose.msra.mxu0 0
        %3277 = vmatprep.subr.bf16.mxu0 0
        %3278 = vmatpush2.bf16.xpose.msra.mxu0 0
        %3279 = vmatprep.mubr.bf16.mxu0 0
        %3280 = vmatmul.mubr.bf16.gmra.mxu0 %v3242
        %v3281 = vpop.f32.mrf.mxu0
        %v3282 = vadd.f32 0.0, %v3281
        %v3283 = vpop.f32.mrf.mxu0
        %v3284 = vpop.f32.mrf.mxu0
        %v3285 = vpop.f32.mrf.mxu0
        %3286 = vdwg.mxu0
        %v3287 = vmul.f32 %v3282, 0.35355338
        %v3288 = vadd.f32 %v3287, %v1684
        %v3289 = vsel %vm1917, %v3288, -inf
        %3290 = vmax.xlane.f32.xlu0 %v3289
        %v3291 = vpop.xlane.xlu0 %3290
        %v3292 = vsub.f32 %v3288, %v3291
        %v3293 = vmul.f32 %v3292, 1.442695
        %v3294 = vpow.pop %v3293
        %v3295 = vsel %vm1917, %v3294, 0.0
        %3296 = vadd.xlane.f32.xlu0 %v3295
        %v3297 = vpop.xlane.xlu0 %3296
        %v3298 = vrcp.pop %v3297
        %v3299 = vmul.f32 %v3294, %v3298
        %v3300 = vpack.c.bf16 %v3299, %v3299
        %3301 = vrot.lane.b32.xlu0 %v2761, 104
        %v3302 = vpop.permute.xlu0 %3301
        %v3304 = vsel %vm1917, %v3300, 0
        %v3307 = vsel %vm1981, %v3302, 0
        %3309 = vmatprep.subr.bf16.mxu0 0
        %3310 = vmatpush1.bf16.msra.mxu0 0
        %3311 = vmatprep.subr.bf16.mxu0 0
        %3312 = vmatpush1.bf16.msra.mxu0 0
        %3313 = vmatprep.subr.bf16.mxu0 0
        %3314 = vmatpush1.bf16.msra.mxu0 0
        %3315 = vmatprep.subr.bf16.mxu0 0
        %3316 = vmatpush1.bf16.msra.mxu0 0
        %3317 = vmatprep.subr.bf16.mxu0 0
        %3318 = vmatpush1.bf16.msra.mxu0 0
        %3319 = vmatprep.subr.bf16.mxu0 0
        %3320 = vmatpush1.bf16.msra.mxu0 0
        %3321 = vmatprep.subr.bf16.mxu0 0
        %3322 = vmatpush1.bf16.msra.mxu0 0
        %3323 = vmatprep.subr.bf16.mxu0 0
        %3324 = vmatpush1.bf16.msra.mxu0 %v3307
        %3325 = vmatprep.subr.bf16.mxu0 0
        %3326 = vmatpush2.bf16.msra.mxu0 0
        %3327 = vmatprep.subr.bf16.mxu0 0
        %3328 = vmatpush2.bf16.msra.mxu0 0
        %3329 = vmatprep.subr.bf16.mxu0 0
        %3330 = vmatpush2.bf16.msra.mxu0 0
        %3331 = vmatprep.subr.bf16.mxu0 0
        %3332 = vmatpush2.bf16.msra.mxu0 0
        %3333 = vmatprep.subr.bf16.mxu0 0
        %3334 = vmatpush2.bf16.msra.mxu0 0
        %3335 = vmatprep.subr.bf16.mxu0 0
        %3336 = vmatpush2.bf16.msra.mxu0 0
        %3337 = vmatprep.subr.bf16.mxu0 0
        %3338 = vmatpush2.bf16.msra.mxu0 0
        %3339 = vmatprep.subr.bf16.mxu0 0
        %3340 = vmatpush2.bf16.msra.mxu0 0
        %3341 = vmatprep.mubr.bf16.mxu0 0
        %3342 = vmatmul.mubr.bf16.gmra.mxu0 %v3304
        %v3343 = vpop.f32.mrf.mxu0
        %v3344 = vadd.f32 0.0, %v3343
        %v3345 = vpop.f32.mrf.mxu0
        %v3346 = vpop.f32.mrf.mxu0
        %v3347 = vpop.f32.mrf.mxu0
        %3348 = vdwg.mxu0
        %v3349 = vpack.c.bf16 %v3344, %v3344
        %v3351 = vsel %vm1917, %v3349, 0
        %v3354 = vsel %vm1981, %v2579, 0
        %3356 = vmatprep.subr.bf16.mxu0 0
        %3357 = vmatpush1.bf16.msra.mxu0 0
        %3358 = vmatprep.subr.bf16.mxu0 0
        %3359 = vmatpush1.bf16.msra.mxu0 0
        %3360 = vmatprep.subr.bf16.mxu0 0
        %3361 = vmatpush1.bf16.msra.mxu0 0
        %3362 = vmatprep.subr.bf16.mxu0 0
        %3363 = vmatpush1.bf16.msra.mxu0 0
        %3364 = vmatprep.subr.bf16.mxu0 0
        %3365 = vmatpush1.bf16.msra.mxu0 0
        %3366 = vmatprep.subr.bf16.mxu0 0
        %3367 = vmatpush1.bf16.msra.mxu0 0
        %3368 = vmatprep.subr.bf16.mxu0 0
        %3369 = vmatpush1.bf16.msra.mxu0 0
        %3370 = vmatprep.subr.bf16.mxu0 0
        %3371 = vmatpush1.bf16.msra.mxu0 %v3354
        %3372 = vmatprep.subr.bf16.mxu0 0
        %3373 = vmatpush2.bf16.msra.mxu0 0
        %3374 = vmatprep.subr.bf16.mxu0 0
        %3375 = vmatpush2.bf16.msra.mxu0 0
        %3376 = vmatprep.subr.bf16.mxu0 0
        %3377 = vmatpush2.bf16.msra.mxu0 0
        %3378 = vmatprep.subr.bf16.mxu0 0
        %3379 = vmatpush2.bf16.msra.mxu0 0
        %3380 = vmatprep.subr.bf16.mxu0 0
        %3381 = vmatpush2.bf16.msra.mxu0 0
        %3382 = vmatprep.subr.bf16.mxu0 0
        %3383 = vmatpush2.bf16.msra.mxu0 0
        %3384 = vmatprep.subr.bf16.mxu0 0
        %3385 = vmatpush2.bf16.msra.mxu0 0
        %3386 = vmatprep.subr.bf16.mxu0 0
        %3387 = vmatpush2.bf16.msra.mxu0 0
        %3388 = vmatprep.mubr.bf16.mxu0 0
        %3389 = vmatmul.mubr.bf16.gmra.mxu0 %v3351
        %v3390 = vpop.f32.mrf.mxu0
        %v3391 = vadd.f32 0.0, %v3390
        %v3392 = vpop.f32.mrf.mxu0
        %v3393 = vpop.f32.mrf.mxu0
        %v3394 = vpop.f32.mrf.mxu0
        %3395 = vdwg.mxu0
        %v3396 = vadd.f32 %v3236, %v3391
        %v3398 = vlaneseq
        %v3399 = vshrl.u32 %v3398, 7
        %v3400 = vsub.s32 0, %v3399
        %v3401 = vrot.slane %v2580, %v3400
        %v3403 = vadd.f32 %v3396, %v3401
        %v3404 = vld [vmem:[#allocation23] sm:$0xf]
        %v3405 = vld [vmem:[#allocation23 + $0x4] sm:$0xf]
        %v3406 = vld [vmem:[#allocation23 + $0x8] sm:$0xf]
        %v3407 = vld [vmem:[#allocation23 + $0xc] sm:$0xf]
        %v3408 = vld [vmem:[#allocation25] sm:$0xf]
        %v3409 = vld [vmem:[#allocation25 + $0x4] sm:$0xf]
        %v3410 = vld [vmem:[#allocation25 + $0x8] sm:$0xf]
        %v3411 = vld [vmem:[#allocation25 + $0xc] sm:$0xf]
        %v3412 = vld [vmem:[#allocation26] sm:$0xf]
        %v3413 = vld [vmem:[#allocation26 + $0x4] sm:$0xf]
        %v3414 = vld [vmem:[#allocation26 + $0x8] sm:$0xf]
        %v3415 = vld [vmem:[#allocation26 + $0xc] sm:$0xf]
        %v3416 = vld [vmem:[%s45] sm:$0x1]
        %v3417 = vld [vmem:[#allocation28] sm:$0x1]
        %v3418 = vld [vmem:[#allocation29] sm:$0x1]
        %v3419 = vld [vmem:[#allocation31] sm:$0xf]
        %v3420 = vld [vmem:[#allocation31 + $0x4] sm:$0xf]
        %v3421 = vld [vmem:[#allocation31 + $0x8] sm:$0xf]
        %v3422 = vld [vmem:[#allocation31 + $0xc] sm:$0xf]
        %v3423 = vld [vmem:[#allocation32] sm:$0x1]
        %v3424 = vpack.c.bf16 %v3403, %v3403
        %v3426 = vlaneseq
        %v3427 = vshrl.u32 %v3426, 7
        %v3428 = vsub.s32 0, %v3427
        %v3429 = vrot.slane %v3416, %v3428
        %v3435 = vunpack.c.l.b16 %v3404
        %v3436 = vunpack.c.l.b16 %v3405
        %v3437 = vunpack.c.l.b16 %v3406
        %v3438 = vunpack.c.l.b16 %v3407
        %v3439 = vpack.c.b16 %v3436, %v3435
        %v3440 = vpack.c.b16 %v3438, %v3437
        %v3444 = vsel %vm1687, %v3424, 0
        %3446 = vmatprep.subr.bf16.mxu0 0
        %3447 = vmatpush1.bf16.msra.mxu0 0
        %3448 = vmatprep.subr.bf16.mxu0 0
        %3449 = vmatpush1.bf16.msra.mxu0 0
        %3450 = vmatprep.subr.bf16.mxu0 0
        %3451 = vmatpush1.bf16.msra.mxu0 0
        %3452 = vmatprep.subr.bf16.mxu0 0
        %3453 = vmatpush1.bf16.msra.mxu0 0
        %3454 = vmatprep.subr.bf16.mxu0 0
        %3455 = vmatpush1.bf16.msra.mxu0 0
        %3456 = vmatprep.subr.bf16.mxu0 0
        %3457 = vmatpush1.bf16.msra.mxu0 0
        %3458 = vmatprep.subr.bf16.mxu0 0
        %3459 = vmatpush1.bf16.msra.mxu0 %v3440
        %3460 = vmatprep.subr.bf16.mxu0 0
        %3461 = vmatpush1.bf16.msra.mxu0 %v3439
        %3462 = vmatprep.subr.bf16.mxu0 0
        %3463 = vmatpush2.bf16.msra.mxu0 0
        %3464 = vmatprep.subr.bf16.mxu0 0
        %3465 = vmatpush2.bf16.msra.mxu0 0
        %3466 = vmatprep.subr.bf16.mxu0 0
        %3467 = vmatpush2.bf16.msra.mxu0 0
        %3468 = vmatprep.subr.bf16.mxu0 0
        %3469 = vmatpush2.bf16.msra.mxu0 0
        %3470 = vmatprep.subr.bf16.mxu0 0
        %3471 = vmatpush2.bf16.msra.mxu0 0
        %3472 = vmatprep.subr.bf16.mxu0 0
        %3473 = vmatpush2.bf16.msra.mxu0 0
        %3474 = vmatprep.subr.bf16.mxu0 0
        %3475 = vmatpush2.bf16.msra.mxu0 0
        %3476 = vmatprep.subr.bf16.mxu0 0
        %3477 = vmatpush2.bf16.msra.mxu0 0
        %3478 = vmatprep.mubr.bf16.mxu0 0
        %3479 = vmatmul.mubr.bf16.gmra.mxu0 %v3444
        %v3480 = vpop.f32.mrf.mxu0
        %v3481 = vadd.f32 %v3429, %v3480
        %v3482 = vpop.f32.mrf.mxu0
        %v3483 = vpop.f32.mrf.mxu0
        %v3484 = vpop.f32.mrf.mxu0
        %3485 = vdwg.mxu0
        %v3487 = vlaneseq
        %v3488 = vshrl.u32 %v3487, 7
        %v3489 = vsub.s32 0, %v3488
        %v3490 = vrot.slane %v3417, %v3489
        %v3496 = vunpack.c.l.b16 %v3408
        %v3497 = vunpack.c.l.b16 %v3409
        %v3498 = vunpack.c.l.b16 %v3410
        %v3499 = vunpack.c.l.b16 %v3411
        %v3500 = vpack.c.b16 %v3497, %v3496
        %v3501 = vpack.c.b16 %v3499, %v3498
        %3504 = vmatprep.subr.bf16.mxu0 0
        %3505 = vmatpush1.bf16.msra.mxu0 0
        %3506 = vmatprep.subr.bf16.mxu0 0
        %3507 = vmatpush1.bf16.msra.mxu0 0
        %3508 = vmatprep.subr.bf16.mxu0 0
        %3509 = vmatpush1.bf16.msra.mxu0 0
        %3510 = vmatprep.subr.bf16.mxu0 0
        %3511 = vmatpush1.bf16.msra.mxu0 0
        %3512 = vmatprep.subr.bf16.mxu0 0
        %3513 = vmatpush1.bf16.msra.mxu0 0
        %3514 = vmatprep.subr.bf16.mxu0 0
        %3515 = vmatpush1.bf16.msra.mxu0 0
        %3516 = vmatprep.subr.bf16.mxu0 0
        %3517 = vmatpush1.bf16.msra.mxu0 %v3501
        %3518 = vmatprep.subr.bf16.mxu0 0
        %3519 = vmatpush1.bf16.msra.mxu0 %v3500
        %3520 = vmatprep.subr.bf16.mxu0 0
        %3521 = vmatpush2.bf16.msra.mxu0 0
        %3522 = vmatprep.subr.bf16.mxu0 0
        %3523 = vmatpush2.bf16.msra.mxu0 0
        %3524 = vmatprep.subr.bf16.mxu0 0
        %3525 = vmatpush2.bf16.msra.mxu0 0
        %3526 = vmatprep.subr.bf16.mxu0 0
        %3527 = vmatpush2.bf16.msra.mxu0 0
        %3528 = vmatprep.subr.bf16.mxu0 0
        %3529 = vmatpush2.bf16.msra.mxu0 0
        %3530 = vmatprep.subr.bf16.mxu0 0
        %3531 = vmatpush2.bf16.msra.mxu0 0
        %3532 = vmatprep.subr.bf16.mxu0 0
        %3533 = vmatpush2.bf16.msra.mxu0 0
        %3534 = vmatprep.subr.bf16.mxu0 0
        %3535 = vmatpush2.bf16.msra.mxu0 0
        %3536 = vmatprep.mubr.bf16.mxu0 0
        %3537 = vmatmul.mubr.bf16.gmra.mxu0 %v3444
        %v3538 = vpop.f32.mrf.mxu0
        %v3539 = vadd.f32 %v3490, %v3538
        %v3540 = vpop.f32.mrf.mxu0
        %v3541 = vpop.f32.mrf.mxu0
        %v3542 = vpop.f32.mrf.mxu0
        %3543 = vdwg.mxu0
        %v3545 = vlaneseq
        %v3546 = vshrl.u32 %v3545, 7
        %v3547 = vsub.s32 0, %v3546
        %v3548 = vrot.slane %v3418, %v3547
        %v3554 = vunpack.c.l.b16 %v3412
        %v3555 = vunpack.c.l.b16 %v3413
        %v3556 = vunpack.c.l.b16 %v3414
        %v3557 = vunpack.c.l.b16 %v3415
        %v3558 = vpack.c.b16 %v3555, %v3554
        %v3559 = vpack.c.b16 %v3557, %v3556
        %3562 = vmatprep.subr.bf16.mxu0 0
        %3563 = vmatpush1.bf16.msra.mxu0 0
        %3564 = vmatprep.subr.bf16.mxu0 0
        %3565 = vmatpush1.bf16.msra.mxu0 0
        %3566 = vmatprep.subr.bf16.mxu0 0
        %3567 = vmatpush1.bf16.msra.mxu0 0
        %3568 = vmatprep.subr.bf16.mxu0 0
        %3569 = vmatpush1.bf16.msra.mxu0 0
        %3570 = vmatprep.subr.bf16.mxu0 0
        %3571 = vmatpush1.bf16.msra.mxu0 0
        %3572 = vmatprep.subr.bf16.mxu0 0
        %3573 = vmatpush1.bf16.msra.mxu0 0
        %3574 = vmatprep.subr.bf16.mxu0 0
        %3575 = vmatpush1.bf16.msra.mxu0 %v3559
        %3576 = vmatprep.subr.bf16.mxu0 0
        %3577 = vmatpush1.bf16.msra.mxu0 %v3558
        %3578 = vmatprep.subr.bf16.mxu0 0
        %3579 = vmatpush2.bf16.msra.mxu0 0
        %3580 = vmatprep.subr.bf16.mxu0 0
        %3581 = vmatpush2.bf16.msra.mxu0 0
        %3582 = vmatprep.subr.bf16.mxu0 0
        %3583 = vmatpush2.bf16.msra.mxu0 0
        %3584 = vmatprep.subr.bf16.mxu0 0
        %3585 = vmatpush2.bf16.msra.mxu0 0
        %3586 = vmatprep.subr.bf16.mxu0 0
        %3587 = vmatpush2.bf16.msra.mxu0 0
        %3588 = vmatprep.subr.bf16.mxu0 0
        %3589 = vmatpush2.bf16.msra.mxu0 0
        %3590 = vmatprep.subr.bf16.mxu0 0
        %3591 = vmatpush2.bf16.msra.mxu0 0
        %3592 = vmatprep.subr.bf16.mxu0 0
        %3593 = vmatpush2.bf16.msra.mxu0 0
        %3594 = vmatprep.mubr.bf16.mxu0 0
        %3595 = vmatmul.mubr.bf16.gmra.mxu0 %v3444
        %v3596 = vpop.f32.mrf.mxu0
        %v3597 = vadd.f32 %v3548, %v3596
        %v3598 = vpop.f32.mrf.mxu0
        %v3599 = vpop.f32.mrf.mxu0
        %v3600 = vpop.f32.mrf.mxu0
        %3601 = vdwg.mxu0
        %v3602 = vpack.c.bf16 %v3481, %v3481
        %v3603 = vpack.c.bf16 %v3539, %v3539
        %v3604 = vpack.c.bf16 %v3597, %v3597
        %v3606 = vsel %vm1917, %v3602, 0
        %v3609 = vsel %vm1917, %v3603, 0
        %3611 = vmatprep.subr.bf16.mxu0 0
        %3612 = vmatpush1.bf16.xpose.msra.mxu0 0
        %3613 = vmatprep.subr.bf16.mxu0 0
        %3614 = vmatpush1.bf16.xpose.msra.mxu0 0
        %3615 = vmatprep.subr.bf16.mxu0 0
        %3616 = vmatpush1.bf16.xpose.msra.mxu0 0
        %3617 = vmatprep.subr.bf16.mxu0 0
        %3618 = vmatpush1.bf16.xpose.msra.mxu0 0
        %3619 = vmatprep.subr.bf16.mxu0 0
        %3620 = vmatpush1.bf16.xpose.msra.mxu0 0
        %3621 = vmatprep.subr.bf16.mxu0 0
        %3622 = vmatpush1.bf16.xpose.msra.mxu0 0
        %3623 = vmatprep.subr.bf16.mxu0 0
        %3624 = vmatpush1.bf16.xpose.msra.mxu0 0
        %3625 = vmatprep.subr.bf16.mxu0 0
        %3626 = vmatpush1.bf16.xpose.msra.mxu0 %v3609
        %3627 = vmatprep.subr.bf16.mxu0 0
        %3628 = vmatpush2.bf16.xpose.msra.mxu0 0
        %3629 = vmatprep.subr.bf16.mxu0 0
        %3630 = vmatpush2.bf16.xpose.msra.mxu0 0
        %3631 = vmatprep.subr.bf16.mxu0 0
        %3632 = vmatpush2.bf16.xpose.msra.mxu0 0
        %3633 = vmatprep.subr.bf16.mxu0 0
        %3634 = vmatpush2.bf16.xpose.msra.mxu0 0
        %3635 = vmatprep.subr.bf16.mxu0 0
        %3636 = vmatpush2.bf16.xpose.msra.mxu0 0
        %3637 = vmatprep.subr.bf16.mxu0 0
        %3638 = vmatpush2.bf16.xpose.msra.mxu0 0
        %3639 = vmatprep.subr.bf16.mxu0 0
        %3640 = vmatpush2.bf16.xpose.msra.mxu0 0
        %3641 = vmatprep.subr.bf16.mxu0 0
        %3642 = vmatpush2.bf16.xpose.msra.mxu0 0
        %3643 = vmatprep.mubr.bf16.mxu0 0
        %3644 = vmatmul.mubr.bf16.gmra.mxu0 %v3606
        %v3645 = vpop.f32.mrf.mxu0
        %v3646 = vadd.f32 0.0, %v3645
        %v3647 = vpop.f32.mrf.mxu0
        %v3648 = vpop.f32.mrf.mxu0
        %v3649 = vpop.f32.mrf.mxu0
        %3650 = vdwg.mxu0
        %v3651 = vmul.f32 %v3646, 0.35355338
        %v3652 = vadd.f32 %v3651, %v1684
        %v3653 = vsel %vm1917, %v3652, -inf
        %3654 = vmax.xlane.f32.xlu0 %v3653
        %v3655 = vpop.xlane.xlu0 %3654
        %v3656 = vsub.f32 %v3652, %v3655
        %v3657 = vmul.f32 %v3656, 1.442695
        %v3658 = vpow.pop %v3657
        %v3659 = vsel %vm1917, %v3658, 0.0
        %3660 = vadd.xlane.f32.xlu0 %v3659
        %v3661 = vpop.xlane.xlu0 %3660
        %v3662 = vrcp.pop %v3661
        %v3663 = vmul.f32 %v3658, %v3662
        %v3664 = vpack.c.bf16 %v3663, %v3663
        %v3666 = vsel %vm1917, %v3664, 0
        %v3669 = vsel %vm1981, %v3604, 0
        %3671 = vmatprep.subr.bf16.mxu0 0
        %3672 = vmatpush1.bf16.msra.mxu0 0
        %3673 = vmatprep.subr.bf16.mxu0 0
        %3674 = vmatpush1.bf16.msra.mxu0 0
        %3675 = vmatprep.subr.bf16.mxu0 0
        %3676 = vmatpush1.bf16.msra.mxu0 0
        %3677 = vmatprep.subr.bf16.mxu0 0
        %3678 = vmatpush1.bf16.msra.mxu0 0
        %3679 = vmatprep.subr.bf16.mxu0 0
        %3680 = vmatpush1.bf16.msra.mxu0 0
        %3681 = vmatprep.subr.bf16.mxu0 0
        %3682 = vmatpush1.bf16.msra.mxu0 0
        %3683 = vmatprep.subr.bf16.mxu0 0
        %3684 = vmatpush1.bf16.msra.mxu0 0
        %3685 = vmatprep.subr.bf16.mxu0 0
        %3686 = vmatpush1.bf16.msra.mxu0 %v3669
        %3687 = vmatprep.subr.bf16.mxu0 0
        %3688 = vmatpush2.bf16.msra.mxu0 0
        %3689 = vmatprep.subr.bf16.mxu0 0
        %3690 = vmatpush2.bf16.msra.mxu0 0
        %3691 = vmatprep.subr.bf16.mxu0 0
        %3692 = vmatpush2.bf16.msra.mxu0 0
        %3693 = vmatprep.subr.bf16.mxu0 0
        %3694 = vmatpush2.bf16.msra.mxu0 0
        %3695 = vmatprep.subr.bf16.mxu0 0
        %3696 = vmatpush2.bf16.msra.mxu0 0
        %3697 = vmatprep.subr.bf16.mxu0 0
        %3698 = vmatpush2.bf16.msra.mxu0 0
        %3699 = vmatprep.subr.bf16.mxu0 0
        %3700 = vmatpush2.bf16.msra.mxu0 0
        %3701 = vmatprep.subr.bf16.mxu0 0
        %3702 = vmatpush2.bf16.msra.mxu0 0
        %3703 = vmatprep.mubr.bf16.mxu0 0
        %3704 = vmatmul.mubr.bf16.gmra.mxu0 %v3666
        %v3705 = vpop.f32.mrf.mxu0
        %v3706 = vadd.f32 0.0, %v3705
        %v3707 = vpop.f32.mrf.mxu0
        %v3708 = vpop.f32.mrf.mxu0
        %v3709 = vpop.f32.mrf.mxu0
        %3710 = vdwg.mxu0
        %v3711 = vpack.c.bf16 %v3706, %v3706
        %3713 = vrot.lane.b32.xlu0 %v3602, 120
        %v3714 = vpop.permute.xlu0 %3713
        %3716 = vrot.lane.b32.xlu0 %v3603, 120
        %v3717 = vpop.permute.xlu0 %3716
        %v3719 = vsel %vm1917, %v3714, 0
        %v3722 = vsel %vm1917, %v3717, 0
        %3724 = vmatprep.subr.bf16.mxu0 0
        %3725 = vmatpush1.bf16.xpose.msra.mxu0 0
        %3726 = vmatprep.subr.bf16.mxu0 0
        %3727 = vmatpush1.bf16.xpose.msra.mxu0 0
        %3728 = vmatprep.subr.bf16.mxu0 0
        %3729 = vmatpush1.bf16.xpose.msra.mxu0 0
        %3730 = vmatprep.subr.bf16.mxu0 0
        %3731 = vmatpush1.bf16.xpose.msra.mxu0 0
        %3732 = vmatprep.subr.bf16.mxu0 0
        %3733 = vmatpush1.bf16.xpose.msra.mxu0 0
        %3734 = vmatprep.subr.bf16.mxu0 0
        %3735 = vmatpush1.bf16.xpose.msra.mxu0 0
        %3736 = vmatprep.subr.bf16.mxu0 0
        %3737 = vmatpush1.bf16.xpose.msra.mxu0 0
        %3738 = vmatprep.subr.bf16.mxu0 0
        %3739 = vmatpush1.bf16.xpose.msra.mxu0 %v3722
        %3740 = vmatprep.subr.bf16.mxu0 0
        %3741 = vmatpush2.bf16.xpose.msra.mxu0 0
        %3742 = vmatprep.subr.bf16.mxu0 0
        %3743 = vmatpush2.bf16.xpose.msra.mxu0 0
        %3744 = vmatprep.subr.bf16.mxu0 0
        %3745 = vmatpush2.bf16.xpose.msra.mxu0 0
        %3746 = vmatprep.subr.bf16.mxu0 0
        %3747 = vmatpush2.bf16.xpose.msra.mxu0 0
        %3748 = vmatprep.subr.bf16.mxu0 0
        %3749 = vmatpush2.bf16.xpose.msra.mxu0 0
        %3750 = vmatprep.subr.bf16.mxu0 0
        %3751 = vmatpush2.bf16.xpose.msra.mxu0 0
        %3752 = vmatprep.subr.bf16.mxu0 0
        %3753 = vmatpush2.bf16.xpose.msra.mxu0 0
        %3754 = vmatprep.subr.bf16.mxu0 0
        %3755 = vmatpush2.bf16.xpose.msra.mxu0 0
        %3756 = vmatprep.mubr.bf16.mxu0 0
        %3757 = vmatmul.mubr.bf16.gmra.mxu0 %v3719
        %v3758 = vpop.f32.mrf.mxu0
        %v3759 = vadd.f32 0.0, %v3758
        %v3760 = vpop.f32.mrf.mxu0
        %v3761 = vpop.f32.mrf.mxu0
        %v3762 = vpop.f32.mrf.mxu0
        %3763 = vdwg.mxu0
        %v3764 = vmul.f32 %v3759, 0.35355338
        %v3765 = vadd.f32 %v3764, %v1684
        %v3766 = vsel %vm1917, %v3765, -inf
        %3767 = vmax.xlane.f32.xlu0 %v3766
        %v3768 = vpop.xlane.xlu0 %3767
        %v3769 = vsub.f32 %v3765, %v3768
        %v3770 = vmul.f32 %v3769, 1.442695
        %v3771 = vpow.pop %v3770
        %v3772 = vsel %vm1917, %v3771, 0.0
        %3773 = vadd.xlane.f32.xlu0 %v3772
        %v3774 = vpop.xlane.xlu0 %3773
        %v3775 = vrcp.pop %v3774
        %v3776 = vmul.f32 %v3771, %v3775
        %v3777 = vpack.c.bf16 %v3776, %v3776
        %3779 = vrot.lane.b32.xlu0 %v3604, 120
        %v3780 = vpop.permute.xlu0 %3779
        %v3782 = vsel %vm1917, %v3777, 0
        %v3785 = vsel %vm1981, %v3780, 0
        %3787 = vmatprep.subr.bf16.mxu0 0
        %3788 = vmatpush1.bf16.msra.mxu0 0
        %3789 = vmatprep.subr.bf16.mxu0 0
        %3790 = vmatpush1.bf16.msra.mxu0 0
        %3791 = vmatprep.subr.bf16.mxu0 0
        %3792 = vmatpush1.bf16.msra.mxu0 0
        %3793 = vmatprep.subr.bf16.mxu0 0
        %3794 = vmatpush1.bf16.msra.mxu0 0
        %3795 = vmatprep.subr.bf16.mxu0 0
        %3796 = vmatpush1.bf16.msra.mxu0 0
        %3797 = vmatprep.subr.bf16.mxu0 0
        %3798 = vmatpush1.bf16.msra.mxu0 0
        %3799 = vmatprep.subr.bf16.mxu0 0
        %3800 = vmatpush1.bf16.msra.mxu0 0
        %3801 = vmatprep.subr.bf16.mxu0 0
        %3802 = vmatpush1.bf16.msra.mxu0 %v3785
        %3803 = vmatprep.subr.bf16.mxu0 0
        %3804 = vmatpush2.bf16.msra.mxu0 0
        %3805 = vmatprep.subr.bf16.mxu0 0
        %3806 = vmatpush2.bf16.msra.mxu0 0
        %3807 = vmatprep.subr.bf16.mxu0 0
        %3808 = vmatpush2.bf16.msra.mxu0 0
        %3809 = vmatprep.subr.bf16.mxu0 0
        %3810 = vmatpush2.bf16.msra.mxu0 0
        %3811 = vmatprep.subr.bf16.mxu0 0
        %3812 = vmatpush2.bf16.msra.mxu0 0
        %3813 = vmatprep.subr.bf16.mxu0 0
        %3814 = vmatpush2.bf16.msra.mxu0 0
        %3815 = vmatprep.subr.bf16.mxu0 0
        %3816 = vmatpush2.bf16.msra.mxu0 0
        %3817 = vmatprep.subr.bf16.mxu0 0
        %3818 = vmatpush2.bf16.msra.mxu0 0
        %3819 = vmatprep.mubr.bf16.mxu0 0
        %3820 = vmatmul.mubr.bf16.gmra.mxu0 %v3782
        %v3821 = vpop.f32.mrf.mxu0
        %v3822 = vadd.f32 0.0, %v3821
        %v3823 = vpop.f32.mrf.mxu0
        %v3824 = vpop.f32.mrf.mxu0
        %v3825 = vpop.f32.mrf.mxu0
        %3826 = vdwg.mxu0
        %v3827 = vpack.c.bf16 %v3822, %v3822
        %v3829 = vsel %vm1917, %v3827, 0
        %v3832 = vsel %vm1981, %v3420, 0
        %3834 = vmatprep.subr.bf16.mxu0 0
        %3835 = vmatpush1.bf16.msra.mxu0 0
        %3836 = vmatprep.subr.bf16.mxu0 0
        %3837 = vmatpush1.bf16.msra.mxu0 0
        %3838 = vmatprep.subr.bf16.mxu0 0
        %3839 = vmatpush1.bf16.msra.mxu0 0
        %3840 = vmatprep.subr.bf16.mxu0 0
        %3841 = vmatpush1.bf16.msra.mxu0 0
        %3842 = vmatprep.subr.bf16.mxu0 0
        %3843 = vmatpush1.bf16.msra.mxu0 0
        %3844 = vmatprep.subr.bf16.mxu0 0
        %3845 = vmatpush1.bf16.msra.mxu0 0
        %3846 = vmatprep.subr.bf16.mxu0 0
        %3847 = vmatpush1.bf16.msra.mxu0 0
        %3848 = vmatprep.subr.bf16.mxu0 0
        %3849 = vmatpush1.bf16.msra.mxu0 %v3832
        %3850 = vmatprep.subr.bf16.mxu0 0
        %3851 = vmatpush2.bf16.msra.mxu0 0
        %3852 = vmatprep.subr.bf16.mxu0 0
        %3853 = vmatpush2.bf16.msra.mxu0 0
        %3854 = vmatprep.subr.bf16.mxu0 0
        %3855 = vmatpush2.bf16.msra.mxu0 0
        %3856 = vmatprep.subr.bf16.mxu0 0
        %3857 = vmatpush2.bf16.msra.mxu0 0
        %3858 = vmatprep.subr.bf16.mxu0 0
        %3859 = vmatpush2.bf16.msra.mxu0 0
        %3860 = vmatprep.subr.bf16.mxu0 0
        %3861 = vmatpush2.bf16.msra.mxu0 0
        %3862 = vmatprep.subr.bf16.mxu0 0
        %3863 = vmatpush2.bf16.msra.mxu0 0
        %3864 = vmatprep.subr.bf16.mxu0 0
        %3865 = vmatpush2.bf16.msra.mxu0 0
        %3866 = vmatprep.mubr.bf16.mxu0 0
        %3867 = vmatmul.mubr.bf16.gmra.mxu0 %v3829
        %v3868 = vpop.f32.mrf.mxu0
        %v3869 = vadd.f32 0.0, %v3868
        %v3870 = vpop.f32.mrf.mxu0
        %v3871 = vpop.f32.mrf.mxu0
        %v3872 = vpop.f32.mrf.mxu0
        %3873 = vdwg.mxu0
        %v3875 = vsel %vm1917, %v3711, 0
        %v3878 = vsel %vm1981, %v3419, 0
        %3880 = vmatprep.subr.bf16.mxu0 0
        %3881 = vmatpush1.bf16.msra.mxu0 0
        %3882 = vmatprep.subr.bf16.mxu0 0
        %3883 = vmatpush1.bf16.msra.mxu0 0
        %3884 = vmatprep.subr.bf16.mxu0 0
        %3885 = vmatpush1.bf16.msra.mxu0 0
        %3886 = vmatprep.subr.bf16.mxu0 0
        %3887 = vmatpush1.bf16.msra.mxu0 0
        %3888 = vmatprep.subr.bf16.mxu0 0
        %3889 = vmatpush1.bf16.msra.mxu0 0
        %3890 = vmatprep.subr.bf16.mxu0 0
        %3891 = vmatpush1.bf16.msra.mxu0 0
        %3892 = vmatprep.subr.bf16.mxu0 0
        %3893 = vmatpush1.bf16.msra.mxu0 0
        %3894 = vmatprep.subr.bf16.mxu0 0
        %3895 = vmatpush1.bf16.msra.mxu0 %v3878
        %3896 = vmatprep.subr.bf16.mxu0 0
        %3897 = vmatpush2.bf16.msra.mxu0 0
        %3898 = vmatprep.subr.bf16.mxu0 0
        %3899 = vmatpush2.bf16.msra.mxu0 0
        %3900 = vmatprep.subr.bf16.mxu0 0
        %3901 = vmatpush2.bf16.msra.mxu0 0
        %3902 = vmatprep.subr.bf16.mxu0 0
        %3903 = vmatpush2.bf16.msra.mxu0 0
        %3904 = vmatprep.subr.bf16.mxu0 0
        %3905 = vmatpush2.bf16.msra.mxu0 0
        %3906 = vmatprep.subr.bf16.mxu0 0
        %3907 = vmatpush2.bf16.msra.mxu0 0
        %3908 = vmatprep.subr.bf16.mxu0 0
        %3909 = vmatpush2.bf16.msra.mxu0 0
        %3910 = vmatprep.subr.bf16.mxu0 0
        %3911 = vmatpush2.bf16.msra.mxu0 0
        %3912 = vmatprep.mubr.bf16.mxu0 0
        %3913 = vmatmul.mubr.bf16.gmra.mxu0 %v3875
        %v3914 = vpop.f32.mrf.mxu0
        %v3915 = vadd.f32 %v3869, %v3914
        %v3916 = vpop.f32.mrf.mxu0
        %v3917 = vpop.f32.mrf.mxu0
        %v3918 = vpop.f32.mrf.mxu0
        %3919 = vdwg.mxu0
        %3920 = vrot.lane.b32.xlu0 %v3602, 112
        %v3921 = vpop.permute.xlu0 %3920
        %3922 = vrot.lane.b32.xlu0 %v3603, 112
        %v3923 = vpop.permute.xlu0 %3922
        %v3925 = vsel %vm1917, %v3921, 0
        %v3928 = vsel %vm1917, %v3923, 0
        %3930 = vmatprep.subr.bf16.mxu0 0
        %3931 = vmatpush1.bf16.xpose.msra.mxu0 0
        %3932 = vmatprep.subr.bf16.mxu0 0
        %3933 = vmatpush1.bf16.xpose.msra.mxu0 0
        %3934 = vmatprep.subr.bf16.mxu0 0
        %3935 = vmatpush1.bf16.xpose.msra.mxu0 0
        %3936 = vmatprep.subr.bf16.mxu0 0
        %3937 = vmatpush1.bf16.xpose.msra.mxu0 0
        %3938 = vmatprep.subr.bf16.mxu0 0
        %3939 = vmatpush1.bf16.xpose.msra.mxu0 0
        %3940 = vmatprep.subr.bf16.mxu0 0
        %3941 = vmatpush1.bf16.xpose.msra.mxu0 0
        %3942 = vmatprep.subr.bf16.mxu0 0
        %3943 = vmatpush1.bf16.xpose.msra.mxu0 0
        %3944 = vmatprep.subr.bf16.mxu0 0
        %3945 = vmatpush1.bf16.xpose.msra.mxu0 %v3928
        %3946 = vmatprep.subr.bf16.mxu0 0
        %3947 = vmatpush2.bf16.xpose.msra.mxu0 0
        %3948 = vmatprep.subr.bf16.mxu0 0
        %3949 = vmatpush2.bf16.xpose.msra.mxu0 0
        %3950 = vmatprep.subr.bf16.mxu0 0
        %3951 = vmatpush2.bf16.xpose.msra.mxu0 0
        %3952 = vmatprep.subr.bf16.mxu0 0
        %3953 = vmatpush2.bf16.xpose.msra.mxu0 0
        %3954 = vmatprep.subr.bf16.mxu0 0
        %3955 = vmatpush2.bf16.xpose.msra.mxu0 0
        %3956 = vmatprep.subr.bf16.mxu0 0
        %3957 = vmatpush2.bf16.xpose.msra.mxu0 0
        %3958 = vmatprep.subr.bf16.mxu0 0
        %3959 = vmatpush2.bf16.xpose.msra.mxu0 0
        %3960 = vmatprep.subr.bf16.mxu0 0
        %3961 = vmatpush2.bf16.xpose.msra.mxu0 0
        %3962 = vmatprep.mubr.bf16.mxu0 0
        %3963 = vmatmul.mubr.bf16.gmra.mxu0 %v3925
        %v3964 = vpop.f32.mrf.mxu0
        %v3965 = vadd.f32 0.0, %v3964
        %v3966 = vpop.f32.mrf.mxu0
        %v3967 = vpop.f32.mrf.mxu0
        %v3968 = vpop.f32.mrf.mxu0
        %3969 = vdwg.mxu0
        %v3970 = vmul.f32 %v3965, 0.35355338
        %v3971 = vadd.f32 %v3970, %v1684
        %v3972 = vsel %vm1917, %v3971, -inf
        %3973 = vmax.xlane.f32.xlu0 %v3972
        %v3974 = vpop.xlane.xlu0 %3973
        %v3975 = vsub.f32 %v3971, %v3974
        %v3976 = vmul.f32 %v3975, 1.442695
        %v3977 = vpow.pop %v3976
        %v3978 = vsel %vm1917, %v3977, 0.0
        %3979 = vadd.xlane.f32.xlu0 %v3978
        %v3980 = vpop.xlane.xlu0 %3979
        %v3981 = vrcp.pop %v3980
        %v3982 = vmul.f32 %v3977, %v3981
        %v3983 = vpack.c.bf16 %v3982, %v3982
        %3984 = vrot.lane.b32.xlu0 %v3604, 112
        %v3985 = vpop.permute.xlu0 %3984
        %v3987 = vsel %vm1917, %v3983, 0
        %v3990 = vsel %vm1981, %v3985, 0
        %3992 = vmatprep.subr.bf16.mxu0 0
        %3993 = vmatpush1.bf16.msra.mxu0 0
        %3994 = vmatprep.subr.bf16.mxu0 0
        %3995 = vmatpush1.bf16.msra.mxu0 0
        %3996 = vmatprep.subr.bf16.mxu0 0
        %3997 = vmatpush1.bf16.msra.mxu0 0
        %3998 = vmatprep.subr.bf16.mxu0 0
        %3999 = vmatpush1.bf16.msra.mxu0 0
        %4000 = vmatprep.subr.bf16.mxu0 0
        %4001 = vmatpush1.bf16.msra.mxu0 0
        %4002 = vmatprep.subr.bf16.mxu0 0
        %4003 = vmatpush1.bf16.msra.mxu0 0
        %4004 = vmatprep.subr.bf16.mxu0 0
        %4005 = vmatpush1.bf16.msra.mxu0 0
        %4006 = vmatprep.subr.bf16.mxu0 0
        %4007 = vmatpush1.bf16.msra.mxu0 %v3990
        %4008 = vmatprep.subr.bf16.mxu0 0
        %4009 = vmatpush2.bf16.msra.mxu0 0
        %4010 = vmatprep.subr.bf16.mxu0 0
        %4011 = vmatpush2.bf16.msra.mxu0 0
        %4012 = vmatprep.subr.bf16.mxu0 0
        %4013 = vmatpush2.bf16.msra.mxu0 0
        %4014 = vmatprep.subr.bf16.mxu0 0
        %4015 = vmatpush2.bf16.msra.mxu0 0
        %4016 = vmatprep.subr.bf16.mxu0 0
        %4017 = vmatpush2.bf16.msra.mxu0 0
        %4018 = vmatprep.subr.bf16.mxu0 0
        %4019 = vmatpush2.bf16.msra.mxu0 0
        %4020 = vmatprep.subr.bf16.mxu0 0
        %4021 = vmatpush2.bf16.msra.mxu0 0
        %4022 = vmatprep.subr.bf16.mxu0 0
        %4023 = vmatpush2.bf16.msra.mxu0 0
        %4024 = vmatprep.mubr.bf16.mxu0 0
        %4025 = vmatmul.mubr.bf16.gmra.mxu0 %v3987
        %v4026 = vpop.f32.mrf.mxu0
        %v4027 = vadd.f32 0.0, %v4026
        %v4028 = vpop.f32.mrf.mxu0
        %v4029 = vpop.f32.mrf.mxu0
        %v4030 = vpop.f32.mrf.mxu0
        %4031 = vdwg.mxu0
        %v4032 = vpack.c.bf16 %v4027, %v4027
        %v4034 = vsel %vm1917, %v4032, 0
        %v4037 = vsel %vm1981, %v3421, 0
        %4039 = vmatprep.subr.bf16.mxu0 0
        %4040 = vmatpush1.bf16.msra.mxu0 0
        %4041 = vmatprep.subr.bf16.mxu0 0
        %4042 = vmatpush1.bf16.msra.mxu0 0
        %4043 = vmatprep.subr.bf16.mxu0 0
        %4044 = vmatpush1.bf16.msra.mxu0 0
        %4045 = vmatprep.subr.bf16.mxu0 0
        %4046 = vmatpush1.bf16.msra.mxu0 0
        %4047 = vmatprep.subr.bf16.mxu0 0
        %4048 = vmatpush1.bf16.msra.mxu0 0
        %4049 = vmatprep.subr.bf16.mxu0 0
        %4050 = vmatpush1.bf16.msra.mxu0 0
        %4051 = vmatprep.subr.bf16.mxu0 0
        %4052 = vmatpush1.bf16.msra.mxu0 0
        %4053 = vmatprep.subr.bf16.mxu0 0
        %4054 = vmatpush1.bf16.msra.mxu0 %v4037
        %4055 = vmatprep.subr.bf16.mxu0 0
        %4056 = vmatpush2.bf16.msra.mxu0 0
        %4057 = vmatprep.subr.bf16.mxu0 0
        %4058 = vmatpush2.bf16.msra.mxu0 0
        %4059 = vmatprep.subr.bf16.mxu0 0
        %4060 = vmatpush2.bf16.msra.mxu0 0
        %4061 = vmatprep.subr.bf16.mxu0 0
        %4062 = vmatpush2.bf16.msra.mxu0 0
        %4063 = vmatprep.subr.bf16.mxu0 0
        %4064 = vmatpush2.bf16.msra.mxu0 0
        %4065 = vmatprep.subr.bf16.mxu0 0
        %4066 = vmatpush2.bf16.msra.mxu0 0
        %4067 = vmatprep.subr.bf16.mxu0 0
        %4068 = vmatpush2.bf16.msra.mxu0 0
        %4069 = vmatprep.subr.bf16.mxu0 0
        %4070 = vmatpush2.bf16.msra.mxu0 0
        %4071 = vmatprep.mubr.bf16.mxu0 0
        %4072 = vmatmul.mubr.bf16.gmra.mxu0 %v4034
        %v4073 = vpop.f32.mrf.mxu0
        %v4074 = vadd.f32 0.0, %v4073
        %v4075 = vpop.f32.mrf.mxu0
        %v4076 = vpop.f32.mrf.mxu0
        %v4077 = vpop.f32.mrf.mxu0
        %4078 = vdwg.mxu0
        %v4079 = vadd.f32 %v3915, %v4074
        %4080 = vrot.lane.b32.xlu0 %v3602, 104
        %v4081 = vpop.permute.xlu0 %4080
        %4082 = vrot.lane.b32.xlu0 %v3603, 104
        %v4083 = vpop.permute.xlu0 %4082
        %v4085 = vsel %vm1917, %v4081, 0
        %v4088 = vsel %vm1917, %v4083, 0
        %4090 = vmatprep.subr.bf16.mxu0 0
        %4091 = vmatpush1.bf16.xpose.msra.mxu0 0
        %4092 = vmatprep.subr.bf16.mxu0 0
        %4093 = vmatpush1.bf16.xpose.msra.mxu0 0
        %4094 = vmatprep.subr.bf16.mxu0 0
        %4095 = vmatpush1.bf16.xpose.msra.mxu0 0
        %4096 = vmatprep.subr.bf16.mxu0 0
        %4097 = vmatpush1.bf16.xpose.msra.mxu0 0
        %4098 = vmatprep.subr.bf16.mxu0 0
        %4099 = vmatpush1.bf16.xpose.msra.mxu0 0
        %4100 = vmatprep.subr.bf16.mxu0 0
        %4101 = vmatpush1.bf16.xpose.msra.mxu0 0
        %4102 = vmatprep.subr.bf16.mxu0 0
        %4103 = vmatpush1.bf16.xpose.msra.mxu0 0
        %4104 = vmatprep.subr.bf16.mxu0 0
        %4105 = vmatpush1.bf16.xpose.msra.mxu0 %v4088
        %4106 = vmatprep.subr.bf16.mxu0 0
        %4107 = vmatpush2.bf16.xpose.msra.mxu0 0
        %4108 = vmatprep.subr.bf16.mxu0 0
        %4109 = vmatpush2.bf16.xpose.msra.mxu0 0
        %4110 = vmatprep.subr.bf16.mxu0 0
        %4111 = vmatpush2.bf16.xpose.msra.mxu0 0
        %4112 = vmatprep.subr.bf16.mxu0 0
        %4113 = vmatpush2.bf16.xpose.msra.mxu0 0
        %4114 = vmatprep.subr.bf16.mxu0 0
        %4115 = vmatpush2.bf16.xpose.msra.mxu0 0
        %4116 = vmatprep.subr.bf16.mxu0 0
        %4117 = vmatpush2.bf16.xpose.msra.mxu0 0
        %4118 = vmatprep.subr.bf16.mxu0 0
        %4119 = vmatpush2.bf16.xpose.msra.mxu0 0
        %4120 = vmatprep.subr.bf16.mxu0 0
        %4121 = vmatpush2.bf16.xpose.msra.mxu0 0
        %4122 = vmatprep.mubr.bf16.mxu0 0
        %4123 = vmatmul.mubr.bf16.gmra.mxu0 %v4085
        %v4124 = vpop.f32.mrf.mxu0
        %v4125 = vadd.f32 0.0, %v4124
        %v4126 = vpop.f32.mrf.mxu0
        %v4127 = vpop.f32.mrf.mxu0
        %v4128 = vpop.f32.mrf.mxu0
        %4129 = vdwg.mxu0
        %v4130 = vmul.f32 %v4125, 0.35355338
        %v4131 = vadd.f32 %v4130, %v1684
        %v4132 = vsel %vm1917, %v4131, -inf
        %4133 = vmax.xlane.f32.xlu0 %v4132
        %v4134 = vpop.xlane.xlu0 %4133
        %v4135 = vsub.f32 %v4131, %v4134
        %v4136 = vmul.f32 %v4135, 1.442695
        %v4137 = vpow.pop %v4136
        %v4138 = vsel %vm1917, %v4137, 0.0
        %4139 = vadd.xlane.f32.xlu0 %v4138
        %v4140 = vpop.xlane.xlu0 %4139
        %v4141 = vrcp.pop %v4140
        %v4142 = vmul.f32 %v4137, %v4141
        %v4143 = vpack.c.bf16 %v4142, %v4142
        %4144 = vrot.lane.b32.xlu0 %v3604, 104
        %v4145 = vpop.permute.xlu0 %4144
        %v4147 = vsel %vm1917, %v4143, 0
        %v4150 = vsel %vm1981, %v4145, 0
        %4152 = vmatprep.subr.bf16.mxu0 0
        %4153 = vmatpush1.bf16.msra.mxu0 0
        %4154 = vmatprep.subr.bf16.mxu0 0
        %4155 = vmatpush1.bf16.msra.mxu0 0
        %4156 = vmatprep.subr.bf16.mxu0 0
        %4157 = vmatpush1.bf16.msra.mxu0 0
        %4158 = vmatprep.subr.bf16.mxu0 0
        %4159 = vmatpush1.bf16.msra.mxu0 0
        %4160 = vmatprep.subr.bf16.mxu0 0
        %4161 = vmatpush1.bf16.msra.mxu0 0
        %4162 = vmatprep.subr.bf16.mxu0 0
        %4163 = vmatpush1.bf16.msra.mxu0 0
        %4164 = vmatprep.subr.bf16.mxu0 0
        %4165 = vmatpush1.bf16.msra.mxu0 0
        %4166 = vmatprep.subr.bf16.mxu0 0
        %4167 = vmatpush1.bf16.msra.mxu0 %v4150
        %4168 = vmatprep.subr.bf16.mxu0 0
        %4169 = vmatpush2.bf16.msra.mxu0 0
        %4170 = vmatprep.subr.bf16.mxu0 0
        %4171 = vmatpush2.bf16.msra.mxu0 0
        %4172 = vmatprep.subr.bf16.mxu0 0
        %4173 = vmatpush2.bf16.msra.mxu0 0
        %4174 = vmatprep.subr.bf16.mxu0 0
        %4175 = vmatpush2.bf16.msra.mxu0 0
        %4176 = vmatprep.subr.bf16.mxu0 0
        %4177 = vmatpush2.bf16.msra.mxu0 0
        %4178 = vmatprep.subr.bf16.mxu0 0
        %4179 = vmatpush2.bf16.msra.mxu0 0
        %4180 = vmatprep.subr.bf16.mxu0 0
        %4181 = vmatpush2.bf16.msra.mxu0 0
        %4182 = vmatprep.subr.bf16.mxu0 0
        %4183 = vmatpush2.bf16.msra.mxu0 0
        %4184 = vmatprep.mubr.bf16.mxu0 0
        %4185 = vmatmul.mubr.bf16.gmra.mxu0 %v4147
        %v4186 = vpop.f32.mrf.mxu0
        %v4187 = vadd.f32 0.0, %v4186
        %v4188 = vpop.f32.mrf.mxu0
        %v4189 = vpop.f32.mrf.mxu0
        %v4190 = vpop.f32.mrf.mxu0
        %4191 = vdwg.mxu0
        %v4192 = vpack.c.bf16 %v4187, %v4187
        %v4194 = vsel %vm1917, %v4192, 0
        %v4197 = vsel %vm1981, %v3422, 0
        %4199 = vmatprep.subr.bf16.mxu0 0
        %4200 = vmatpush1.bf16.msra.mxu0 0
        %4201 = vmatprep.subr.bf16.mxu0 0
        %4202 = vmatpush1.bf16.msra.mxu0 0
        %4203 = vmatprep.subr.bf16.mxu0 0
        %4204 = vmatpush1.bf16.msra.mxu0 0
        %4205 = vmatprep.subr.bf16.mxu0 0
        %4206 = vmatpush1.bf16.msra.mxu0 0
        %4207 = vmatprep.subr.bf16.mxu0 0
        %4208 = vmatpush1.bf16.msra.mxu0 0
        %4209 = vmatprep.subr.bf16.mxu0 0
        %4210 = vmatpush1.bf16.msra.mxu0 0
        %4211 = vmatprep.subr.bf16.mxu0 0
        %4212 = vmatpush1.bf16.msra.mxu0 0
        %4213 = vmatprep.subr.bf16.mxu0 0
        %4214 = vmatpush1.bf16.msra.mxu0 %v4197
        %4215 = vmatprep.subr.bf16.mxu0 0
        %4216 = vmatpush2.bf16.msra.mxu0 0
        %4217 = vmatprep.subr.bf16.mxu0 0
        %4218 = vmatpush2.bf16.msra.mxu0 0
        %4219 = vmatprep.subr.bf16.mxu0 0
        %4220 = vmatpush2.bf16.msra.mxu0 0
        %4221 = vmatprep.subr.bf16.mxu0 0
        %4222 = vmatpush2.bf16.msra.mxu0 0
        %4223 = vmatprep.subr.bf16.mxu0 0
        %4224 = vmatpush2.bf16.msra.mxu0 0
        %4225 = vmatprep.subr.bf16.mxu0 0
        %4226 = vmatpush2.bf16.msra.mxu0 0
        %4227 = vmatprep.subr.bf16.mxu0 0
        %4228 = vmatpush2.bf16.msra.mxu0 0
        %4229 = vmatprep.subr.bf16.mxu0 0
        %4230 = vmatpush2.bf16.msra.mxu0 0
        %4231 = vmatprep.mubr.bf16.mxu0 0
        %4232 = vmatmul.mubr.bf16.gmra.mxu0 %v4194
        %v4233 = vpop.f32.mrf.mxu0
        %v4234 = vadd.f32 0.0, %v4233
        %v4235 = vpop.f32.mrf.mxu0
        %v4236 = vpop.f32.mrf.mxu0
        %v4237 = vpop.f32.mrf.mxu0
        %4238 = vdwg.mxu0
        %v4239 = vadd.f32 %v4079, %v4234
        %v4241 = vlaneseq
        %v4242 = vshrl.u32 %v4241, 7
        %v4243 = vsub.s32 0, %v4242
        %v4244 = vrot.slane %v3423, %v4243
        %v4246 = vadd.f32 %v4239, %v4244
        %v4247 = vld [vmem:[%s55] sm:$0xf]
        %v4248 = vld [vmem:[%s55 + $0x4] sm:$0xf]
        %v4249 = vld [vmem:[%s55 + $0x8] sm:$0xf]
        %v4250 = vld [vmem:[%s55 + $0xc] sm:$0xf]
        %v4251 = vld [vmem:[#allocation34] sm:$0x1]
        %v4253 = vlaneseq
        %v4254 = vshrl.u32 %v4253, 7
        %v4255 = vsub.s32 0, %v4254
        %v4256 = vrot.slane %v4251, %v4255
        %v4262 = vunpack.c.l.b16 %v4247
        %v4263 = vunpack.c.l.b16 %v4248
        %v4264 = vunpack.c.l.b16 %v4249
        %v4265 = vunpack.c.l.b16 %v4250
        %v4266 = vpack.c.b16 %v4263, %v4262
        %v4267 = vpack.c.b16 %v4265, %v4264
        %4270 = vmatprep.subr.bf16.mxu0 0
        %4271 = vmatpush1.bf16.msra.mxu0 0
        %4272 = vmatprep.subr.bf16.mxu0 0
        %4273 = vmatpush1.bf16.msra.mxu0 0
        %4274 = vmatprep.subr.bf16.mxu0 0
        %4275 = vmatpush1.bf16.msra.mxu0 0
        %4276 = vmatprep.subr.bf16.mxu0 0
        %4277 = vmatpush1.bf16.msra.mxu0 0
        %4278 = vmatprep.subr.bf16.mxu0 0
        %4279 = vmatpush1.bf16.msra.mxu0 0
        %4280 = vmatprep.subr.bf16.mxu0 0
        %4281 = vmatpush1.bf16.msra.mxu0 0
        %4282 = vmatprep.subr.bf16.mxu0 0
        %4283 = vmatpush1.bf16.msra.mxu0 %v4267
        %4284 = vmatprep.subr.bf16.mxu0 0
        %4285 = vmatpush1.bf16.msra.mxu0 %v4266
        %4286 = vmatprep.subr.bf16.mxu0 0
        %4287 = vmatpush2.bf16.msra.mxu0 0
        %4288 = vmatprep.subr.bf16.mxu0 0
        %4289 = vmatpush2.bf16.msra.mxu0 0
        %4290 = vmatprep.subr.bf16.mxu0 0
        %4291 = vmatpush2.bf16.msra.mxu0 0
        %4292 = vmatprep.subr.bf16.mxu0 0
        %4293 = vmatpush2.bf16.msra.mxu0 0
        %4294 = vmatprep.subr.bf16.mxu0 0
        %4295 = vmatpush2.bf16.msra.mxu0 0
        %4296 = vmatprep.subr.bf16.mxu0 0
        %4297 = vmatpush2.bf16.msra.mxu0 0
        %4298 = vmatprep.subr.bf16.mxu0 0
        %4299 = vmatpush2.bf16.msra.mxu0 0
        %4300 = vmatprep.subr.bf16.mxu0 0
        %4301 = vmatpush2.bf16.msra.mxu0 0
        %4302 = vmatprep.mubr.bf16.mxu0 0
        %4303 = vmatmul.mubr.bf16.gmra.mxu0 %v2601
        %v4304 = vpop.f32.mrf.mxu0
        %v4305 = vadd.f32 %v4256, %v4304
        %v4306 = vpop.f32.mrf.mxu0
        %v4307 = vpop.f32.mrf.mxu0
        %v4308 = vpop.f32.mrf.mxu0
        %4309 = vdwg.mxu0
        %v4310 = vmul.f32 %v4305, 0.5
        %v4311 = vmul.f32 %v4305, 0.044715
        %v4312 = vmul.f32 %v4311, %v4305
        %v4313 = vmul.f32 %v4312, %v4305
        %v4314 = vadd.f32 %v4305, %v4313
        %v4315 = vmul.f32 %v4314, 0.7978845
        %v4316 = vtanh.pop %v4315
        %v4317 = vadd.f32 %v4316, 1.0
        %v4318 = vmul.f32 %v4310, %v4317
        %v4319 = vld [vmem:[#allocation35] sm:$0xf]
        %v4320 = vld [vmem:[#allocation35 + $0x4] sm:$0xf]
        %v4321 = vld [vmem:[#allocation35 + $0x8] sm:$0xf]
        %v4322 = vld [vmem:[#allocation35 + $0xc] sm:$0xf]
        %v4323 = vpack.c.bf16 %v4246, %v4246
        %v4324 = vld [vmem:[#allocation37] sm:$0x1]
        %v4326 = vlaneseq
        %v4327 = vshrl.u32 %v4326, 7
        %v4328 = vsub.s32 0, %v4327
        %v4329 = vrot.slane %v4324, %v4328
        %v4335 = vunpack.c.l.b16 %v4319
        %v4336 = vunpack.c.l.b16 %v4320
        %v4337 = vunpack.c.l.b16 %v4321
        %v4338 = vunpack.c.l.b16 %v4322
        %v4339 = vpack.c.b16 %v4336, %v4335
        %v4340 = vpack.c.b16 %v4338, %v4337
        %v4344 = vsel %vm1687, %v4323, 0
        %4346 = vmatprep.subr.bf16.mxu0 0
        %4347 = vmatpush1.bf16.msra.mxu0 0
        %4348 = vmatprep.subr.bf16.mxu0 0
        %4349 = vmatpush1.bf16.msra.mxu0 0
        %4350 = vmatprep.subr.bf16.mxu0 0
        %4351 = vmatpush1.bf16.msra.mxu0 0
        %4352 = vmatprep.subr.bf16.mxu0 0
        %4353 = vmatpush1.bf16.msra.mxu0 0
        %4354 = vmatprep.subr.bf16.mxu0 0
        %4355 = vmatpush1.bf16.msra.mxu0 0
        %4356 = vmatprep.subr.bf16.mxu0 0
        %4357 = vmatpush1.bf16.msra.mxu0 0
        %4358 = vmatprep.subr.bf16.mxu0 0
        %4359 = vmatpush1.bf16.msra.mxu0 %v4340
        %4360 = vmatprep.subr.bf16.mxu0 0
        %4361 = vmatpush1.bf16.msra.mxu0 %v4339
        %4362 = vmatprep.subr.bf16.mxu0 0
        %4363 = vmatpush2.bf16.msra.mxu0 0
        %4364 = vmatprep.subr.bf16.mxu0 0
        %4365 = vmatpush2.bf16.msra.mxu0 0
        %4366 = vmatprep.subr.bf16.mxu0 0
        %4367 = vmatpush2.bf16.msra.mxu0 0
        %4368 = vmatprep.subr.bf16.mxu0 0
        %4369 = vmatpush2.bf16.msra.mxu0 0
        %4370 = vmatprep.subr.bf16.mxu0 0
        %4371 = vmatpush2.bf16.msra.mxu0 0
        %4372 = vmatprep.subr.bf16.mxu0 0
        %4373 = vmatpush2.bf16.msra.mxu0 0
        %4374 = vmatprep.subr.bf16.mxu0 0
        %4375 = vmatpush2.bf16.msra.mxu0 0
        %4376 = vmatprep.subr.bf16.mxu0 0
        %4377 = vmatpush2.bf16.msra.mxu0 0
        %4378 = vmatprep.mubr.bf16.mxu0 0
        %4379 = vmatmul.mubr.bf16.gmra.mxu0 %v4344
        %v4380 = vpop.f32.mrf.mxu0
        %v4381 = vadd.f32 %v4329, %v4380
        %v4382 = vpop.f32.mrf.mxu0
        %v4383 = vpop.f32.mrf.mxu0
        %v4384 = vpop.f32.mrf.mxu0
        %4385 = vdwg.mxu0
        %v4386 = vmul.f32 %v4381, 0.5
        %v4387 = vmul.f32 %v4381, 0.044715
        %v4388 = vmul.f32 %v4387, %v4381
        %v4389 = vmul.f32 %v4388, %v4381
        %v4390 = vadd.f32 %v4381, %v4389
        %v4391 = vmul.f32 %v4390, 0.7978845
        %v4392 = vtanh.pop %v4391
        %v4393 = vadd.f32 %v4392, 1.0
        %v4394 = vmul.f32 %v4386, %v4393
        %v4395 = vld [vmem:[#allocation38] sm:$0xf]
        %v4396 = vld [vmem:[#allocation38 + $0x4] sm:$0xf]
        %v4397 = vld [vmem:[#allocation38 + $0x8] sm:$0xf]
        %v4398 = vld [vmem:[#allocation38 + $0xc] sm:$0xf]
        %v4399 = vld [vmem:[#allocation40] sm:$0x1]
        %v4401 = vlaneseq
        %v4402 = vshrl.u32 %v4401, 7
        %v4403 = vsub.s32 0, %v4402
        %v4404 = vrot.slane %v4399, %v4403
        %v4410 = vunpack.c.l.b16 %v4395
        %v4411 = vunpack.c.l.b16 %v4396
        %v4412 = vunpack.c.l.b16 %v4397
        %v4413 = vunpack.c.l.b16 %v4398
        %v4414 = vpack.c.b16 %v4411, %v4410
        %v4415 = vpack.c.b16 %v4413, %v4412
        %4418 = vmatprep.subr.bf16.mxu0 0
        %4419 = vmatpush1.bf16.msra.mxu0 0
        %4420 = vmatprep.subr.bf16.mxu0 0
        %4421 = vmatpush1.bf16.msra.mxu0 0
        %4422 = vmatprep.subr.bf16.mxu0 0
        %4423 = vmatpush1.bf16.msra.mxu0 0
        %4424 = vmatprep.subr.bf16.mxu0 0
        %4425 = vmatpush1.bf16.msra.mxu0 0
        %4426 = vmatprep.subr.bf16.mxu0 0
        %4427 = vmatpush1.bf16.msra.mxu0 0
        %4428 = vmatprep.subr.bf16.mxu0 0
        %4429 = vmatpush1.bf16.msra.mxu0 0
        %4430 = vmatprep.subr.bf16.mxu0 0
        %4431 = vmatpush1.bf16.msra.mxu0 %v4415
        %4432 = vmatprep.subr.bf16.mxu0 0
        %4433 = vmatpush1.bf16.msra.mxu0 %v4414
        %4434 = vmatprep.subr.bf16.mxu0 0
        %4435 = vmatpush2.bf16.msra.mxu0 0
        %4436 = vmatprep.subr.bf16.mxu0 0
        %4437 = vmatpush2.bf16.msra.mxu0 0
        %4438 = vmatprep.subr.bf16.mxu0 0
        %4439 = vmatpush2.bf16.msra.mxu0 0
        %4440 = vmatprep.subr.bf16.mxu0 0
        %4441 = vmatpush2.bf16.msra.mxu0 0
        %4442 = vmatprep.subr.bf16.mxu0 0
        %4443 = vmatpush2.bf16.msra.mxu0 0
        %4444 = vmatprep.subr.bf16.mxu0 0
        %4445 = vmatpush2.bf16.msra.mxu0 0
        %4446 = vmatprep.subr.bf16.mxu0 0
        %4447 = vmatpush2.bf16.msra.mxu0 0
        %4448 = vmatprep.subr.bf16.mxu0 0
        %4449 = vmatpush2.bf16.msra.mxu0 0
        %4450 = vmatprep.mubr.bf16.mxu0 0
        %4451 = vmatmul.mubr.bf16.gmra.mxu0 %v3444
        %v4452 = vpop.f32.mrf.mxu0
        %v4453 = vadd.f32 %v4404, %v4452
        %v4454 = vpop.f32.mrf.mxu0
        %v4455 = vpop.f32.mrf.mxu0
        %v4456 = vpop.f32.mrf.mxu0
        %4457 = vdwg.mxu0
        %v4458 = vmul.f32 %v4453, 0.5
        %v4459 = vmul.f32 %v4453, 0.044715
        %v4460 = vmul.f32 %v4459, %v4453
        %v4461 = vmul.f32 %v4460, %v4453
        %v4462 = vadd.f32 %v4453, %v4461
        %v4463 = vmul.f32 %v4462, 0.7978845
        %v4464 = vtanh.pop %v4463
        %v4465 = vadd.f32 %v4464, 1.0
        %v4466 = vmul.f32 %v4458, %v4465
        %v4467 = vld [vmem:[#allocation41] sm:$0xf]
        %v4468 = vld [vmem:[#allocation41 + $0x4] sm:$0xf]
        %v4469 = vld [vmem:[#allocation41 + $0x8] sm:$0xf]
        %v4470 = vld [vmem:[#allocation41 + $0xc] sm:$0xf]
        %v4471 = vld [vmem:[#allocation43] sm:$0xf]
        %v4472 = vld [vmem:[#allocation43 + $0x4] sm:$0xf]
        %v4473 = vld [vmem:[#allocation43 + $0x8] sm:$0xf]
        %v4474 = vld [vmem:[#allocation43 + $0xc] sm:$0xf]
        %v4475 = vld [vmem:[#allocation44] sm:$0xf]
        %v4476 = vld [vmem:[#allocation44 + $0x4] sm:$0xf]
        %v4477 = vld [vmem:[#allocation44 + $0x8] sm:$0xf]
        %v4478 = vld [vmem:[#allocation44 + $0xc] sm:$0xf]
        %v4479 = vld [vmem:[#allocation46] sm:$0x1]
        %v4480 = vpack.c.bf16 %v4394, %v4394
        %v4485 = vunpack.c.l.b16 %v4471
        %v4486 = vunpack.c.l.b16 %v4472
        %v4487 = vunpack.c.l.b16 %v4473
        %v4488 = vunpack.c.l.b16 %v4474
        %v4489 = vpack.c.b16 %v4486, %v4485
        %v4490 = vpack.c.b16 %v4488, %v4487
        %v4494 = vsel %vm1687, %v4480, 0
        %4496 = vmatprep.subr.bf16.mxu0 0
        %4497 = vmatpush1.bf16.msra.mxu0 0
        %4498 = vmatprep.subr.bf16.mxu0 0
        %4499 = vmatpush1.bf16.msra.mxu0 0
        %4500 = vmatprep.subr.bf16.mxu0 0
        %4501 = vmatpush1.bf16.msra.mxu0 0
        %4502 = vmatprep.subr.bf16.mxu0 0
        %4503 = vmatpush1.bf16.msra.mxu0 0
        %4504 = vmatprep.subr.bf16.mxu0 0
        %4505 = vmatpush1.bf16.msra.mxu0 0
        %4506 = vmatprep.subr.bf16.mxu0 0
        %4507 = vmatpush1.bf16.msra.mxu0 0
        %4508 = vmatprep.subr.bf16.mxu0 0
        %4509 = vmatpush1.bf16.msra.mxu0 %v4490
        %4510 = vmatprep.subr.bf16.mxu0 0
        %4511 = vmatpush1.bf16.msra.mxu0 %v4489
        %4512 = vmatprep.subr.bf16.mxu0 0
        %4513 = vmatpush2.bf16.msra.mxu0 0
        %4514 = vmatprep.subr.bf16.mxu0 0
        %4515 = vmatpush2.bf16.msra.mxu0 0
        %4516 = vmatprep.subr.bf16.mxu0 0
        %4517 = vmatpush2.bf16.msra.mxu0 0
        %4518 = vmatprep.subr.bf16.mxu0 0
        %4519 = vmatpush2.bf16.msra.mxu0 0
        %4520 = vmatprep.subr.bf16.mxu0 0
        %4521 = vmatpush2.bf16.msra.mxu0 0
        %4522 = vmatprep.subr.bf16.mxu0 0
        %4523 = vmatpush2.bf16.msra.mxu0 0
        %4524 = vmatprep.subr.bf16.mxu0 0
        %4525 = vmatpush2.bf16.msra.mxu0 0
        %4526 = vmatprep.subr.bf16.mxu0 0
        %4527 = vmatpush2.bf16.msra.mxu0 0
        %4528 = vmatprep.mubr.bf16.mxu0 0
        %4529 = vmatmul.mubr.bf16.gmra.mxu0 %v4494
        %v4530 = vpop.f32.mrf.mxu0
        %v4531 = vadd.f32 0.0, %v4530
        %v4532 = vpop.f32.mrf.mxu0
        %v4533 = vpop.f32.mrf.mxu0
        %v4534 = vpop.f32.mrf.mxu0
        %4535 = vdwg.mxu0
        %v4536 = vpack.c.bf16 %v4318, %v4318
        %v4541 = vunpack.c.l.b16 %v4467
        %v4542 = vunpack.c.l.b16 %v4468
        %v4543 = vunpack.c.l.b16 %v4469
        %v4544 = vunpack.c.l.b16 %v4470
        %v4545 = vpack.c.b16 %v4542, %v4541
        %v4546 = vpack.c.b16 %v4544, %v4543
        %v4550 = vsel %vm1687, %v4536, 0
        %4552 = vmatprep.subr.bf16.mxu0 0
        %4553 = vmatpush1.bf16.msra.mxu0 0
        %4554 = vmatprep.subr.bf16.mxu0 0
        %4555 = vmatpush1.bf16.msra.mxu0 0
        %4556 = vmatprep.subr.bf16.mxu0 0
        %4557 = vmatpush1.bf16.msra.mxu0 0
        %4558 = vmatprep.subr.bf16.mxu0 0
        %4559 = vmatpush1.bf16.msra.mxu0 0
        %4560 = vmatprep.subr.bf16.mxu0 0
        %4561 = vmatpush1.bf16.msra.mxu0 0
        %4562 = vmatprep.subr.bf16.mxu0 0
        %4563 = vmatpush1.bf16.msra.mxu0 0
        %4564 = vmatprep.subr.bf16.mxu0 0
        %4565 = vmatpush1.bf16.msra.mxu0 %v4546
        %4566 = vmatprep.subr.bf16.mxu0 0
        %4567 = vmatpush1.bf16.msra.mxu0 %v4545
        %4568 = vmatprep.subr.bf16.mxu0 0
        %4569 = vmatpush2.bf16.msra.mxu0 0
        %4570 = vmatprep.subr.bf16.mxu0 0
        %4571 = vmatpush2.bf16.msra.mxu0 0
        %4572 = vmatprep.subr.bf16.mxu0 0
        %4573 = vmatpush2.bf16.msra.mxu0 0
        %4574 = vmatprep.subr.bf16.mxu0 0
        %4575 = vmatpush2.bf16.msra.mxu0 0
        %4576 = vmatprep.subr.bf16.mxu0 0
        %4577 = vmatpush2.bf16.msra.mxu0 0
        %4578 = vmatprep.subr.bf16.mxu0 0
        %4579 = vmatpush2.bf16.msra.mxu0 0
        %4580 = vmatprep.subr.bf16.mxu0 0
        %4581 = vmatpush2.bf16.msra.mxu0 0
        %4582 = vmatprep.subr.bf16.mxu0 0
        %4583 = vmatpush2.bf16.msra.mxu0 0
        %4584 = vmatprep.mubr.bf16.mxu0 0
        %4585 = vmatmul.mubr.bf16.gmra.mxu0 %v4550
        %v4586 = vpop.f32.mrf.mxu0
        %v4587 = vadd.f32 %v4531, %v4586
        %v4588 = vpop.f32.mrf.mxu0
        %v4589 = vpop.f32.mrf.mxu0
        %v4590 = vpop.f32.mrf.mxu0
        %4591 = vdwg.mxu0
        %v4592 = vpack.c.bf16 %v4466, %v4466
        %v4597 = vunpack.c.l.b16 %v4475
        %v4598 = vunpack.c.l.b16 %v4476
        %v4599 = vunpack.c.l.b16 %v4477
        %v4600 = vunpack.c.l.b16 %v4478
        %v4601 = vpack.c.b16 %v4598, %v4597
        %v4602 = vpack.c.b16 %v4600, %v4599
        %v4606 = vsel %vm1687, %v4592, 0
        %4608 = vmatprep.subr.bf16.mxu0 0
        %4609 = vmatpush1.bf16.msra.mxu0 0
        %4610 = vmatprep.subr.bf16.mxu0 0
        %4611 = vmatpush1.bf16.msra.mxu0 0
        %4612 = vmatprep.subr.bf16.mxu0 0
        %4613 = vmatpush1.bf16.msra.mxu0 0
        %4614 = vmatprep.subr.bf16.mxu0 0
        %4615 = vmatpush1.bf16.msra.mxu0 0
        %4616 = vmatprep.subr.bf16.mxu0 0
        %4617 = vmatpush1.bf16.msra.mxu0 0
        %4618 = vmatprep.subr.bf16.mxu0 0
        %4619 = vmatpush1.bf16.msra.mxu0 0
        %4620 = vmatprep.subr.bf16.mxu0 0
        %4621 = vmatpush1.bf16.msra.mxu0 %v4602
        %4622 = vmatprep.subr.bf16.mxu0 0
        %4623 = vmatpush1.bf16.msra.mxu0 %v4601
        %4624 = vmatprep.subr.bf16.mxu0 0
        %4625 = vmatpush2.bf16.msra.mxu0 0
        %4626 = vmatprep.subr.bf16.mxu0 0
        %4627 = vmatpush2.bf16.msra.mxu0 0
        %4628 = vmatprep.subr.bf16.mxu0 0
        %4629 = vmatpush2.bf16.msra.mxu0 0
        %4630 = vmatprep.subr.bf16.mxu0 0
        %4631 = vmatpush2.bf16.msra.mxu0 0
        %4632 = vmatprep.subr.bf16.mxu0 0
        %4633 = vmatpush2.bf16.msra.mxu0 0
        %4634 = vmatprep.subr.bf16.mxu0 0
        %4635 = vmatpush2.bf16.msra.mxu0 0
        %4636 = vmatprep.subr.bf16.mxu0 0
        %4637 = vmatpush2.bf16.msra.mxu0 0
        %4638 = vmatprep.subr.bf16.mxu0 0
        %4639 = vmatpush2.bf16.msra.mxu0 0
        %4640 = vmatprep.mubr.bf16.mxu0 0
        %4641 = vmatmul.mubr.bf16.gmra.mxu0 %v4606
        %v4642 = vpop.f32.mrf.mxu0
        %v4643 = vadd.f32 0.0, %v4642
        %v4644 = vpop.f32.mrf.mxu0
        %v4645 = vpop.f32.mrf.mxu0
        %v4646 = vpop.f32.mrf.mxu0
        %4647 = vdwg.mxu0
        %v4648 = vadd.f32 %v4587, %v4643
        %v4650 = vlaneseq
        %v4651 = vshrl.u32 %v4650, 7
        %v4652 = vsub.s32 0, %v4651
        %v4653 = vrot.slane %v4479, %v4652
        %v4655 = vadd.f32 %v4648, %v4653
        %v4656 = vmul.f32 %v4655, 0.5
        %v4657 = vmul.f32 %v4655, 0.044715
        %v4658 = vmul.f32 %v4657, %v4655
        %v4659 = vmul.f32 %v4658, %v4655
        %v4660 = vadd.f32 %v4655, %v4659
        %v4661 = vmul.f32 %v4660, 0.7978845
        %v4662 = vtanh.pop %v4661
        %v4663 = vadd.f32 %v4662, 1.0
        %v4664 = vmul.f32 %v4656, %v4663
        %4665 = vmatprep.subr.bf16.mxu0 0
        %4666 = vmatpush1.bf16.msra.mxu0 0
        %4667 = vmatprep.subr.bf16.mxu0 0
        %4668 = vmatpush1.bf16.msra.mxu0 0
        %4669 = vmatprep.subr.bf16.mxu0 0
        %4670 = vmatpush1.bf16.msra.mxu0 0
        %4671 = vmatprep.subr.bf16.mxu0 0
        %4672 = vmatpush1.bf16.msra.mxu0 0
        %4673 = vmatprep.subr.bf16.mxu0 0
        %4674 = vmatpush1.bf16.msra.mxu0 0
        %4675 = vmatprep.subr.bf16.mxu0 0
        %4676 = vmatpush1.bf16.msra.mxu0 0
        %4677 = vmatprep.subr.bf16.mxu0 0
        %4678 = vmatpush1.bf16.msra.mxu0 %v4546
        %4679 = vmatprep.subr.bf16.mxu0 0
        %4680 = vmatpush1.bf16.msra.mxu0 %v4545
        %4681 = vmatprep.subr.bf16.mxu0 0
        %4682 = vmatpush2.bf16.msra.mxu0 0
        %4683 = vmatprep.subr.bf16.mxu0 0
        %4684 = vmatpush2.bf16.msra.mxu0 0
        %4685 = vmatprep.subr.bf16.mxu0 0
        %4686 = vmatpush2.bf16.msra.mxu0 0
        %4687 = vmatprep.subr.bf16.mxu0 0
        %4688 = vmatpush2.bf16.msra.mxu0 0
        %4689 = vmatprep.subr.bf16.mxu0 0
        %4690 = vmatpush2.bf16.msra.mxu0 0
        %4691 = vmatprep.subr.bf16.mxu0 0
        %4692 = vmatpush2.bf16.msra.mxu0 0
        %4693 = vmatprep.subr.bf16.mxu0 0
        %4694 = vmatpush2.bf16.msra.mxu0 0
        %4695 = vmatprep.subr.bf16.mxu0 0
        %4696 = vmatpush2.bf16.msra.mxu0 0
        %4697 = vmatprep.mubr.bf16.mxu0 0
        %4698 = vmatmul.mubr.bf16.gmra.mxu0 %v4606
        %v4699 = vpop.f32.mrf.mxu0
        %v4700 = vadd.f32 %v4531, %v4699
        %v4701 = vpop.f32.mrf.mxu0
        %v4702 = vpop.f32.mrf.mxu0
        %v4703 = vpop.f32.mrf.mxu0
        %4704 = vdwg.mxu0
        %4705 = vmatprep.subr.bf16.mxu0 0
        %4706 = vmatpush1.bf16.msra.mxu0 0
        %4707 = vmatprep.subr.bf16.mxu0 0
        %4708 = vmatpush1.bf16.msra.mxu0 0
        %4709 = vmatprep.subr.bf16.mxu0 0
        %4710 = vmatpush1.bf16.msra.mxu0 0
        %4711 = vmatprep.subr.bf16.mxu0 0
        %4712 = vmatpush1.bf16.msra.mxu0 0
        %4713 = vmatprep.subr.bf16.mxu0 0
        %4714 = vmatpush1.bf16.msra.mxu0 0
        %4715 = vmatprep.subr.bf16.mxu0 0
        %4716 = vmatpush1.bf16.msra.mxu0 0
        %4717 = vmatprep.subr.bf16.mxu0 0
        %4718 = vmatpush1.bf16.msra.mxu0 %v4602
        %4719 = vmatprep.subr.bf16.mxu0 0
        %4720 = vmatpush1.bf16.msra.mxu0 %v4601
        %4721 = vmatprep.subr.bf16.mxu0 0
        %4722 = vmatpush2.bf16.msra.mxu0 0
        %4723 = vmatprep.subr.bf16.mxu0 0
        %4724 = vmatpush2.bf16.msra.mxu0 0
        %4725 = vmatprep.subr.bf16.mxu0 0
        %4726 = vmatpush2.bf16.msra.mxu0 0
        %4727 = vmatprep.subr.bf16.mxu0 0
        %4728 = vmatpush2.bf16.msra.mxu0 0
        %4729 = vmatprep.subr.bf16.mxu0 0
        %4730 = vmatpush2.bf16.msra.mxu0 0
        %4731 = vmatprep.subr.bf16.mxu0 0
        %4732 = vmatpush2.bf16.msra.mxu0 0
        %4733 = vmatprep.subr.bf16.mxu0 0
        %4734 = vmatpush2.bf16.msra.mxu0 0
        %4735 = vmatprep.subr.bf16.mxu0 0
        %4736 = vmatpush2.bf16.msra.mxu0 0
        %4737 = vmatprep.mubr.bf16.mxu0 0
        %4738 = vmatmul.mubr.bf16.gmra.mxu0 %v4550
        %v4739 = vpop.f32.mrf.mxu0
        %v4740 = vadd.f32 0.0, %v4739
        %v4741 = vpop.f32.mrf.mxu0
        %v4742 = vpop.f32.mrf.mxu0
        %v4743 = vpop.f32.mrf.mxu0
        %4744 = vdwg.mxu0
        %v4745 = vadd.f32 %v4700, %v4740
        %v4746 = vadd.f32 %v4745, %v4653
        %v4747 = vmul.f32 %v4746, 0.5
        %v4748 = vmul.f32 %v4746, 0.044715
        %v4749 = vmul.f32 %v4748, %v4746
        %v4750 = vmul.f32 %v4749, %v4746
        %v4751 = vadd.f32 %v4746, %v4750
        %v4752 = vmul.f32 %v4751, 0.7978845
        %v4753 = vtanh.pop %v4752
        %v4754 = vadd.f32 %v4753, 1.0
        %v4755 = vmul.f32 %v4747, %v4754
        %4757 = vset.pattern.permute.xlu0 31
        %4758 = vperm.xlu0 %4757, %v4664
        %v4759 = vpop.permute.xlu0 %4758
        %v4761 = vmul.f32 %v4759, %v4664
        %v4762 = vadd.f32 %v1715, %v4761
        %4764 = vset.pattern.permute.xlu0 31
        %4765 = vperm.xlu0 %4764, %v4755
        %v4766 = vpop.permute.xlu0 %4765
        %v4768 = vmul.f32 %v4766, %v4755
        %v4769 = vadd.f32 %v4762, %v4768
        %v4770 = vadd.f32 %v4769, %v1678
        %v4771 = vld [vmem:[%s75] sm:$0x1]
        %v4772 = vld [vmem:[%s77] sm:$0x1]
        %v4773 = vsel %vm1687, %v4770, 0.0
        %4774 = vadd.xlane.f32.xlu0 %v4773
        %v4775 = vpop.xlane.xlu0 %4774
        %v4776 = vmul.f32 %v4775, %v1691
        %v4777 = vsub.f32 %v4770, %v4776
        %v4778 = vmul.f32 %v4777, %v4777
        %v4779 = vsel %vm1687, %v4778, 0.0
        %4780 = vadd.xlane.f32.xlu0 %v4779
        %v4781 = vpop.xlane.xlu0 %4780
        %v4782 = vmul.f32 %v4781, %v1691
        %v4783 = vadd.f32 %v4782, 1e-05
        %v4784 = vrsqrt.pop %v4783
        %v4785 = vmul.f32 %v4777, %v4784
        %v4787 = vlaneseq
        %v4788 = vshrl.u32 %v4787, 7
        %v4789 = vsub.s32 0, %v4788
        %v4790 = vrot.slane %v4771, %v4789
        %v4792 = vmul.f32 %v4785, %v4790
        %v4794 = vlaneseq
        %v4795 = vshrl.u32 %v4794, 7
        %v4796 = vsub.s32 0, %v4795
        %v4797 = vrot.slane %v4772, %v4796
        %v4799 = vadd.f32 %v4792, %v4797
        %v4800 = vld [vmem:[%s79] sm:$0xf]
        %v4801 = vld [vmem:[%s79 + $0x4] sm:$0xf]
        %v4802 = vld [vmem:[%s79 + $0x8] sm:$0xf]
        %v4803 = vld [vmem:[%s79 + $0xc] sm:$0xf]
        %v4804 = vpack.c.bf16 %v4799, %v4799
        %v4805 = vld [vmem:[%s81] sm:$0x1]
        %v4807 = vlaneseq
        %v4808 = vshrl.u32 %v4807, 7
        %v4809 = vsub.s32 0, %v4808
        %v4810 = vrot.slane %v4805, %v4809
        %v4816 = vunpack.c.l.b16 %v4800
        %v4817 = vunpack.c.l.b16 %v4801
        %v4818 = vunpack.c.l.b16 %v4802
        %v4819 = vunpack.c.l.b16 %v4803
        %v4820 = vpack.c.b16 %v4817, %v4816
        %v4821 = vpack.c.b16 %v4819, %v4818
        %v4825 = vsel %vm1687, %v4804, 0
        %4827 = vmatprep.subr.bf16.mxu0 0
        %4828 = vmatpush1.bf16.msra.mxu0 0
        %4829 = vmatprep.subr.bf16.mxu0 0
        %4830 = vmatpush1.bf16.msra.mxu0 0
        %4831 = vmatprep.subr.bf16.mxu0 0
        %4832 = vmatpush1.bf16.msra.mxu0 0
        %4833 = vmatprep.subr.bf16.mxu0 0
        %4834 = vmatpush1.bf16.msra.mxu0 0
        %4835 = vmatprep.subr.bf16.mxu0 0
        %4836 = vmatpush1.bf16.msra.mxu0 0
        %4837 = vmatprep.subr.bf16.mxu0 0
        %4838 = vmatpush1.bf16.msra.mxu0 0
        %4839 = vmatprep.subr.bf16.mxu0 0
        %4840 = vmatpush1.bf16.msra.mxu0 %v4821
        %4841 = vmatprep.subr.bf16.mxu0 0
        %4842 = vmatpush1.bf16.msra.mxu0 %v4820
        %4843 = vmatprep.subr.bf16.mxu0 0
        %4844 = vmatpush2.bf16.msra.mxu0 0
        %4845 = vmatprep.subr.bf16.mxu0 0
        %4846 = vmatpush2.bf16.msra.mxu0 0
        %4847 = vmatprep.subr.bf16.mxu0 0
        %4848 = vmatpush2.bf16.msra.mxu0 0
        %4849 = vmatprep.subr.bf16.mxu0 0
        %4850 = vmatpush2.bf16.msra.mxu0 0
        %4851 = vmatprep.subr.bf16.mxu0 0
        %4852 = vmatpush2.bf16.msra.mxu0 0
        %4853 = vmatprep.subr.bf16.mxu0 0
        %4854 = vmatpush2.bf16.msra.mxu0 0
        %4855 = vmatprep.subr.bf16.mxu0 0
        %4856 = vmatpush2.bf16.msra.mxu0 0
        %4857 = vmatprep.subr.bf16.mxu0 0
        %4858 = vmatpush2.bf16.msra.mxu0 0
        %4859 = vmatprep.mubr.bf16.mxu0 0
        %4860 = vmatmul.mubr.bf16.gmra.mxu0 %v4825
        %v4861 = vpop.f32.mrf.mxu0
        %v4862 = vadd.f32 %v4810, %v4861
        %v4863 = vpop.f32.mrf.mxu0
        %v4864 = vpop.f32.mrf.mxu0
        %v4865 = vpop.f32.mrf.mxu0
        %4866 = vdwg.mxu0
        %v4867 = vmul.f32 %v4862, 0.5
        %v4868 = vmul.f32 %v4862, 0.044715
        %v4869 = vmul.f32 %v4868, %v4862
        %v4870 = vmul.f32 %v4869, %v4862
        %v4871 = vadd.f32 %v4862, %v4870
        %v4872 = vmul.f32 %v4871, 0.7978845
        %v4873 = vtanh.pop %v4872
        %v4874 = vadd.f32 %v4873, 1.0
        %v4875 = vmul.f32 %v4867, %v4874
        %v4876 = vld [vmem:[%s83] sm:$0xf]
        %v4877 = vld [vmem:[%s83 + $0x4] sm:$0xf]
        %v4878 = vld [vmem:[%s83 + $0x8] sm:$0xf]
        %v4879 = vld [vmem:[%s83 + $0xc] sm:$0xf]
        %v4880 = vld [vmem:[%s83 + $0x10] sm:$0xf]
        %v4881 = vld [vmem:[%s83 + $0x14] sm:$0xf]
        %v4882 = vld [vmem:[%s83 + $0x18] sm:$0xf]
        %v4883 = vld [vmem:[%s83 + $0x1c] sm:$0xf]
        %v4884 = vld [vmem:[%s83 + $0x20] sm:$0xf]
        %v4885 = vld [vmem:[%s83 + $0x24] sm:$0xf]
        %v4886 = vld [vmem:[%s83 + $0x28] sm:$0xf]
        %v4887 = vld [vmem:[%s83 + $0x2c] sm:$0xf]
        %v4888 = vld [vmem:[%s83 + $0x30] sm:$0xf]
        %v4889 = vld [vmem:[%s83 + $0x34] sm:$0xf]
        %v4890 = vld [vmem:[%s83 + $0x38] sm:$0xf]
        %v4891 = vld [vmem:[%s83 + $0x3c] sm:$0xf]
        %v4892 = vpack.c.bf16 %v4875, %v4875
        %v4893 = vld [vmem:[%s85] sm:$0x1]
        %v4895 = vlaneseq
        %v4896 = vshrl.u32 %v4895, 7
        %v4897 = vsub.s32 0, %v4896
        %v4898 = vrot.slane %v4893, %v4897
        %v4916 = vunpack.c.l.b16 %v4876
        %v4917 = vunpack.c.l.b16 %v4877
        %v4918 = vunpack.c.l.b16 %v4878
        %v4919 = vunpack.c.l.b16 %v4879
        %v4920 = vunpack.c.l.b16 %v4880
        %v4921 = vunpack.c.l.b16 %v4881
        %v4922 = vunpack.c.l.b16 %v4882
        %v4923 = vunpack.c.l.b16 %v4883
        %v4924 = vunpack.c.l.b16 %v4884
        %v4925 = vunpack.c.l.b16 %v4885
        %v4926 = vunpack.c.l.b16 %v4886
        %v4927 = vunpack.c.l.b16 %v4887
        %v4928 = vunpack.c.l.b16 %v4888
        %v4929 = vunpack.c.l.b16 %v4889
        %v4930 = vunpack.c.l.b16 %v4890
        %v4931 = vunpack.c.l.b16 %v4891
        %v4932 = vpack.c.b16 %v4917, %v4916
        %v4933 = vpack.c.b16 %v4919, %v4918
        %v4934 = vpack.c.b16 %v4921, %v4920
        %v4935 = vpack.c.b16 %v4923, %v4922
        %v4936 = vpack.c.b16 %v4925, %v4924
        %v4937 = vpack.c.b16 %v4927, %v4926
        %v4938 = vpack.c.b16 %v4929, %v4928
        %v4939 = vpack.c.b16 %v4931, %v4930
        %4948 = vmatprep.subr.bf16.mxu0 0
        %4949 = vmatpush1.bf16.msra.mxu0 %v4939
        %4950 = vmatprep.subr.bf16.mxu0 0
        %4951 = vmatpush1.bf16.msra.mxu0 %v4938
        %4952 = vmatprep.subr.bf16.mxu0 0
        %4953 = vmatpush1.bf16.msra.mxu0 %v4937
        %4954 = vmatprep.subr.bf16.mxu0 0
        %4955 = vmatpush1.bf16.msra.mxu0 %v4936
        %4956 = vmatprep.subr.bf16.mxu0 0
        %4957 = vmatpush1.bf16.msra.mxu0 %v4935
        %4958 = vmatprep.subr.bf16.mxu0 0
        %4959 = vmatpush1.bf16.msra.mxu0 %v4934
        %4960 = vmatprep.subr.bf16.mxu0 0
        %4961 = vmatpush1.bf16.msra.mxu0 %v4933
        %4962 = vmatprep.subr.bf16.mxu0 0
        %4963 = vmatpush1.bf16.msra.mxu0 %v4932
        %4964 = vmatprep.subr.bf16.mxu0 0
        %4965 = vmatpush2.bf16.msra.mxu0 0
        %4966 = vmatprep.subr.bf16.mxu0 0
        %4967 = vmatpush2.bf16.msra.mxu0 0
        %4968 = vmatprep.subr.bf16.mxu0 0
        %4969 = vmatpush2.bf16.msra.mxu0 0
        %4970 = vmatprep.subr.bf16.mxu0 0
        %4971 = vmatpush2.bf16.msra.mxu0 0
        %4972 = vmatprep.subr.bf16.mxu0 0
        %4973 = vmatpush2.bf16.msra.mxu0 0
        %4974 = vmatprep.subr.bf16.mxu0 0
        %4975 = vmatpush2.bf16.msra.mxu0 0
        %4976 = vmatprep.subr.bf16.mxu0 0
        %4977 = vmatpush2.bf16.msra.mxu0 0
        %4978 = vmatprep.subr.bf16.mxu0 0
        %4979 = vmatpush2.bf16.msra.mxu0 0
        %4980 = vmatprep.mubr.bf16.mxu0 0
        %4981 = vmatmul.mubr.bf16.gmra.mxu0 %v4892
        %v4982 = vpop.f32.mrf.mxu0
        %v4983 = vadd.f32 %v4898, %v4982
        %v4984 = vpop.f32.mrf.mxu0
        %v4985 = vpop.f32.mrf.mxu0
        %v4986 = vpop.f32.mrf.mxu0
        %4987 = vdwg.mxu0
        %v4988 = vadd.f32 %v4983, %v4770
        %4989 = vst.msk [vmem:[%s1672] sm:$0xff] %vm1687, %v4988
        %s4990 = sand.u32 %s1032, 1
        %s4991 = scalar_lea.sflag [#allocation4], %s4990
        %s4992 = sand.u32 %s1032, 1
        %s4993 = smul.addr %s4992, 8
        %s4994 = scalar_lea.vmem [#allocation47], %s4993
        // Predicated region
        $region309: #{tpu_custom_call.1} parent=191 // pred_check
          %p4995 = pneg %p1042
        $region310: #{tpu_custom_call.1} parent=191 // pred_check_branch
          %4997 = sbr.rel (%p4995) target = $region312
        $region311: #{tpu_custom_call.1} parent=191 // pred_region
          %s4999 = ssub.s32 128, 128
          %5000 = vsyncadd %s4991, %s4999
          %s5001 = smul.addr %s116, 128
          %s5002 = scalar_lea.hbm %s87, %s5001
          %s5004 = sshll.u32 %s4994, 4
          %s5005 = int_to_ptr.vmem [resolvable:$true] %s5004
          %5007 = dma.vmem_to_hbm [thread:$0]  %s5005, 128, %s5002, %s4991
        $region312: #{tpu_custom_call.1} parent=191 // pred_fallthru
          _
      $region192: #{tpu_custom_call.1} parent=5 // pred_fallthru
        _
      %p5008 = scmp.le.s32.totalorder 2, %s111
      // Predicated region
      $region313: #{tpu_custom_call.1} parent=5 // pred_check
        %p5009 = pneg %p5008
      $region314: #{tpu_custom_call.1} parent=5 // pred_check_branch
        %5011 = sbr.rel (%p5009) target = $region316
      $region315: #{tpu_custom_call.1} parent=5 // pred_region
        %s5012 = ssub.s32 %s111, 2
        // Predicated region
        $region317: #{tpu_custom_call.1} parent=315 // pred_check
          %p5013 = pneg %p1048
        $region318: #{tpu_custom_call.1} parent=315 // pred_check_branch
          %5015 = sbr.rel (%p5013) target = $region320
        $region319: #{tpu_custom_call.1} parent=315 // pred_region
          %s5016 = sand.u32 %s1033, 1
          %s5017 = scalar_lea.sflag [#allocation4], %s5016
          %s5018 = sand.u32 %s1033, 1
          %s5019 = smul.addr %s5018, 8
          %s5020 = scalar_lea.vmem [#allocation47], %s5019
          %5021 = dma.done %s5017, 128
        $region320: #{tpu_custom_call.1} parent=315 // pred_fallthru
          _
      $region316: #{tpu_custom_call.1} parent=5 // pred_fallthru
        _
    $region6: #{tpu_custom_call.1} parent=1 // loop_footer
      %s115 = sadd.s32 1, %s111
    $region7: #{tpu_custom_call.1} parent=1 // loop_footer_branch
      %110 = sbr.rel target = $region3
    $region8: #{tpu_custom_call.1} parent=1 // loop_exit
      _
    %5022 = vsyncpa [#allocation3], 1
    %s5023 = scalar_lea.sflag [#allocation3], 1
    %5024 = vsyncpa %s5023, 1
    %5025 = vsyncpa [#allocation6], 1
    %5026 = vsyncpa [#allocation9], 1
    %5027 = vsyncpa [#allocation12], 1
    %5028 = vsyncpa [#allocation15], 1
    %5029 = vsyncpa [#allocation18], 1
    %5030 = vsyncpa [#allocation21], 1
    %5031 = vsyncpa [#allocation24], 1
    %5032 = vsyncpa [#allocation27], 1
    %5033 = vsyncpa [#allocation30], 1
    %5034 = vsyncpa [#allocation33], 1
    %5035 = vsyncpa [#allocation36], 1
    %5036 = vsyncpa [#allocation39], 1
    %5037 = vsyncpa [#allocation42], 1
    %5038 = vsyncpa [#allocation45], 1
    %5039 = vsyncpa [#allocation4], 1
    %s5040 = scalar_lea.sflag [#allocation4], 1
    %5041 = vsyncpa %s5040, 1

</llo_original>
